<compile_context>
chip_gen: v5e
topology: v5e:2x2
jax: 0.10.0
libtpu: 0.0.40
codegen_flags: <defaults>
</compile_context>

<pallas_src>
import jax
import jax.numpy as jnp
from jax import lax
from jax.experimental import pallas as pl
from jax.experimental.pallas import tpu as pltpu

NUM_CLASSES = 12


def _pad128(c):
    return ((c + 127) // 128) * 128


# ---------------------------------------------------------------------------
# Fused conv3x3 + bias + ReLU + 2x2 max-pool kernel (single K = 9*Cin matmul)
# ---------------------------------------------------------------------------

def _make_conv_pool_kernel(W, Cin, Cout, th):
    HW = th * W
    Wo = W // 2

    def kernel(x_ref, w_ref, b_ref, o_ref, col_ref):
        # x_ref  : (1, H+2, W+2, Cin) bf16 padded plane, resident per image
        # w_ref  : (9*Cin, Cout) bf16, rows ordered (tap, cin)
        # b_ref  : (1, Cout) f32
        # o_ref  : (1, th//2, Wo, Cout) bf16 pooled output band
        # col_ref: (th*W, 9*Cin) bf16 VMEM im2col scratch
        band = pl.program_id(1)
        r0 = band * th

        # im2col: copy each shifted patch into its Cin-wide column slice of
        # the scratch.  The patch keeps Cin as its minor dim, so the operand
        # feeding the MXU needs no relayout and v2's 8 accumulate-adds vanish.
        for di in range(3):
            for dj in range(3):
                tap = di * 3 + dj
                patch = x_ref[0, pl.ds(r0 + di, th), pl.ds(dj, W), :]
                col_ref[:, pl.ds(tap * Cin, Cin)] = patch.reshape(HW, Cin)

        # One K = 9*Cin MXU matmul, f32 accumulation.
        acc = jnp.dot(col_ref[...], w_ref[...],
                      preferred_element_type=jnp.float32)
        acc = acc + b_ref[...]           # (1, Cout) broadcasts over rows
        acc = jnp.maximum(acc, 0.0)      # ReLU

        # fused 2x2 / stride-2 max pool inside the band
        p = acc.reshape(th // 2, 2, Wo, 2, Cout)
        p = jnp.maximum(p[:, 0], p[:, 1])          # vertical pairs
        p = jnp.maximum(p[:, :, 0], p[:, :, 1])    # horizontal pairs
        o_ref[...] = p[None].astype(o_ref.dtype)   # single cast, pooled tile

    return kernel


def conv3x3_relu_pool(x_nhwc, w_k, bias, *, row_tile=16):
    """3x3 conv (stride 1, pad 1) + bias + ReLU + 2x2 max pool.  NHWC.

    w_k: (9*Cin, Cout) pre-converted weights; bias: (Cout,).
    """
    N, H, W, Cin = x_nhwc.shape
    Cout = w_k.shape[-1]
    assert H % 2 == 0 and W % 2 == 0, "even spatial dims required for the pool"

    # Row-band height: largest multiple of 16 dividing H (keeps the pooled
    # output block's sublane dim a multiple of 8), else the whole image.
    th = H
    for cand in range(min(row_tile, H), 15, -1):
        if cand % 16 == 0 and H % cand == 0:
            th = cand
            break

    xp = jnp.pad(x_nhwc.astype(jnp.bfloat16), ((0, 0), (1, 1), (1, 1), (0, 0)))
    bias2d = bias.reshape(1, Cout).astype(jnp.float32)
    Ho, Wo = H // 2, W // 2
    n_bands = H // th

    # VMEM budget: double-buffered padded plane + output band + im2col scratch
    # (minor dims are lane-padded to 128 by Mosaic).
    plane_b = (H + 2) * (W + 2) * _pad128(Cin) * 2
    out_b = (th // 2) * Wo * _pad128(Cout) * 2
    col_b = th * W * _pad128(9 * Cin) * 2
    need = 2 * plane_b + 2 * out_b + col_b + (8 << 20)
    vmem_limit = int(min(max(need, 32 << 20), 100 << 20))

    kernel = _make_conv_pool_kernel(W, Cin, Cout, th)
    return pl.pallas_call(
        kernel,
        out_shape=jax.ShapeDtypeStruct((N, Ho, Wo, Cout), jnp.bfloat16),
        grid=(N, n_bands),
        in_specs=[
            # padded plane of image n; resident across its row bands
            pl.BlockSpec((1, H + 2, W + 2, Cin), lambda n, b: (n, 0, 0, 0)),
            pl.BlockSpec((9 * Cin, Cout), lambda n, b: (0, 0)),
            pl.BlockSpec((1, Cout), lambda n, b: (0, 0)),
        ],
        out_specs=pl.BlockSpec((1, th // 2, Wo, Cout), lambda n, b: (n, b, 0, 0)),
        scratch_shapes=[pltpu.VMEM((th * W, 9 * Cin), jnp.bfloat16)],
        compiler_params=pltpu.CompilerParams(
            dimension_semantics=("parallel", "arbitrary"),
            vmem_limit_bytes=vmem_limit),
        cost_estimate=pl.CostEstimate(
            flops=2 * N * H * W * 9 * Cin * Cout,
            transcendentals=0,
            bytes_accessed=xp.size * 2 + w_k.size * 2 + N * Ho * Wo * Cout * 2),
    )(xp, w_k.astype(jnp.bfloat16), bias2d)


# ---------------------------------------------------------------------------
# Tiled matmul + bias (+ ReLU) kernel for the FC layers
# ---------------------------------------------------------------------------

def _make_linear_kernel(relu):
    def kernel(a_ref, w_ref, bias_ref, o_ref):
        # f32 output block is resident across the K axis -> accumulate in it.
        @pl.when(pl.program_id(1) == 0)
        def _():
            o_ref[...] = jnp.zeros_like(o_ref)

        o_ref[...] += jnp.dot(a_ref[...], w_ref[...],
                              preferred_element_type=jnp.float32)

        @pl.when(pl.program_id(1) == pl.num_programs(1) - 1)
        def _():
            out = o_ref[...] + bias_ref[...]
            if relu:
                out = jnp.maximum(out, 0.0)
            o_ref[...] = out

    return kernel


def _pick_tile(dim, candidates):
    for c in candidates:
        if c <= dim and dim % c == 0:
            return c
    return dim


def linear(a, w, bias, *, relu):
    """a: (M, K), w: (K, N) pre-transposed, bias: (N,) -> (M, N) f32.

    M/K-tiled; bf16 operands, f32 accumulation directly in the resident
    output block with pl.when init/finalize over the K (last, "arbitrary")
    grid axis.
    """
    M, K = a.shape
    K2, N = w.shape
    assert K == K2
    a = a.astype(jnp.bfloat16)
    w = w.astype(jnp.bfloat16)
    bias2d = bias.reshape(1, N).astype(jnp.float32)

    tm = M if M <= 256 else _pick_tile(M, (256, 128, 64, 32, 16, 8))
    # Large K tiles: fc1's real K is 268,800 -> tk=7680 gives ~35 grid steps
    # and ~7.9 MB weight DMAs instead of 525 steps of 0.5 MB.
    tk = K if K <= 1024 else _pick_tile(
        K, (7680, 5120, 2560, 1024, 512, 256, 128))
    # Guards against the "nothing divides" fallback blowing up VMEM.
    assert tm * N * 4 <= (16 << 20), f"linear: M={M} gives oversized out block"
    assert 2 * tk * N * 2 <= (24 << 20), f"linear: K={K} gives oversized weight block"
    n_m, n_k = M // tm, K // tk

    need = 2 * (tm * tk * 2 + tk * max(N, 128) * 2 + tm * max(N, 128) * 4) + (8 << 20)
    vmem_limit = int(min(max(need, 16 << 20), 31 << 20))

    kernel = _make_linear_kernel(relu)
    return pl.pallas_call(
        kernel,
        out_shape=jax.ShapeDtypeStruct((M, N), jnp.float32),
        grid=(n_m, n_k),
        in_specs=[
            pl.BlockSpec((tm, tk), lambda i, k: (i, k)),
            pl.BlockSpec((tk, N), lambda i, k: (k, 0)),
            pl.BlockSpec((1, N), lambda i, k: (0, 0)),
        ],
        out_specs=pl.BlockSpec((tm, N), lambda i, k: (i, 0)),
        compiler_params=pltpu.CompilerParams(
            dimension_semantics=("parallel", "arbitrary"),
            vmem_limit_bytes=vmem_limit),
        cost_estimate=pl.CostEstimate(
            flops=2 * M * K * N,
            transcendentals=0,
            bytes_accessed=a.size * 2 + w.size * 2 + M * N * 4),
    )(a, w, bias2d)


# ---------------------------------------------------------------------------
# Parameters: PyTorch layout -> one-time kernel-friendly conversion
# ---------------------------------------------------------------------------

def init_torch_params(key, H, W, num_classes=NUM_CLASSES):
    """Random parameters in PyTorch layout (what AnimalCNN.state_dict holds)."""
    ks = jax.random.split(key, 8)

    def u(k, shape, fan_in):
        bound = 1.0 / jnp.sqrt(fan_in)
        return jax.random.uniform(k, shape, jnp.float32, -bound, bound)

    fc1_in = 64 * (H // 4) * (W // 4)
    return {
        "conv1_w": u(ks[0], (32, 3, 3, 3), 3 * 9),
        "conv1_b": u(ks[1], (32,), 3 * 9),
        "conv2_w": u(ks[2], (64, 32, 3, 3), 32 * 9),
        "conv2_b": u(ks[3], (64,), 32 * 9),
        "fc1_w":   u(ks[4], (512, fc1_in), fc1_in),
        "fc1_b":   u(ks[5], (512,), fc1_in),
        "fc2_w":   u(ks[6], (num_classes, 512), 512),
        "fc2_b":   u(ks[7], (num_classes,), 512),
    }


def prepare_params(pt, H, W):
    """One-time offline conversion: bf16 weights, conv w -> (9*Cin, Cout) with
    rows ordered (tap, cin); fc1 w pre-transposed and row-permuted for the
    NHWC flatten; fc2 zero-padded to 128 lane-dense output columns."""
    Hq, Wq, C2 = H // 4, W // 4, 64

    def conv_w(w):  # (Cout, Cin, 3, 3) -> (9*Cin, Cout), rows (tap, cin)
        co, ci = w.shape[0], w.shape[1]
        return jnp.transpose(w, (2, 3, 1, 0)).reshape(9 * ci, co).astype(jnp.bfloat16)

    # fc1: columns are in NCHW-flatten (c,h,w) order; re-order rows of the
    # transposed weight to accept the NHWC flatten (h,w,c) order.
    fc1 = pt["fc1_w"].reshape(512, C2, Hq, Wq)
    fc1 = jnp.transpose(fc1, (2, 3, 1, 0)).reshape(Hq * Wq * C2, 512)

    # fc2: (12, 512) -> (512, 128), zero-padded output columns (lane-dense).
    nc = pt["fc2_w"].shape[0]
    fc2 = jnp.zeros((512, 128), jnp.float32).at[:, :nc].set(pt["fc2_w"].T)
    fc2_b = jnp.zeros((128,), jnp.float32).at[:nc].set(pt["fc2_b"])

    return {
        "conv1_wk": conv_w(pt["conv1_w"]), "conv1_b": pt["conv1_b"],
        "conv2_wk": conv_w(pt["conv2_w"]), "conv2_b": pt["conv2_b"],
        "fc1_w": fc1.astype(jnp.bfloat16), "fc1_b": pt["fc1_b"],
        "fc2_w": fc2.astype(jnp.bfloat16), "fc2_b": fc2_b,
    }


# ---------------------------------------------------------------------------
# Forward passes
# ---------------------------------------------------------------------------

def animal_cnn_forward(params, x_nchw):
    x = jnp.transpose(x_nchw, (0, 2, 3, 1))                 # NCHW -> NHWC
    x = conv3x3_relu_pool(x, params["conv1_wk"], params["conv1_b"])
    x = conv3x3_relu_pool(x, params["conv2_wk"], params["conv2_b"])
    x = x.reshape(x.shape[0], -1)                           # NHWC flatten (fc1 pre-permuted)
    x = linear(x, params["fc1_w"], params["fc1_b"], relu=True)
    x = linear(x, params["fc2_w"], params["fc2_b"], relu=False)
    return x[:, :NUM_CLASSES]                               # drop fc2 pad columns


def reference_forward(pt, x_nchw):
    """Pure-JAX f32 reference with exact PyTorch semantics (for validation)."""
    def conv(x, w, b):
        y = lax.conv_general_dilated(x, w, (1, 1), ((1, 1), (1, 1)),
                                     dimension_numbers=("NCHW", "OIHW", "NCHW"))
        return jax.nn.relu(y + b[None, :, None, None])

    def pool(x):
        return lax.reduce_window(x, -jnp.inf, lax.max,
                                 (1, 1, 2, 2), (1, 1, 2, 2), "VALID")

    x = pool(conv(x_nchw, pt["conv1_w"], pt["conv1_b"]))
    x = pool(conv(x, pt["conv2_w"], pt["conv2_b"]))
    x = x.reshape(x.shape[0], -1)                           # NCHW flatten (= view)
    x = jax.nn.relu(x @ pt["fc1_w"].T + pt["fc1_b"])
    return x @ pt["fc2_w"].T + pt["fc2_b"]


if __name__ == "__main__":
    key = jax.random.PRNGKey(0)
    k_params, k_x = jax.random.split(key)

    N, C_in, H, W = 2, 3, 16, 16
    pt_params = init_torch_params(k_params, H, W)
    params = prepare_params(pt_params, H, W)
    x = jax.random.normal(k_x, (N, C_in, H, W), jnp.float32)

    out = jax.block_until_ready(jax.jit(animal_cnn_forward)(params, x))
    assert out.shape == (N, NUM_CLASSES), out.shape
    assert out.dtype == jnp.float32

    ref = jax.block_until_ready(jax.jit(reference_forward)(pt_params, x))
    assert jnp.allclose(out, ref, atol=5e-2, rtol=5e-2), (
        "max abs diff vs reference: %f" % float(jnp.max(jnp.abs(out - ref))))

    print("KERNEL_OK")
</pallas_src>

<mosaic_0001>
module attributes {stable_mosaic.version = 11 : i64} {
  func.func @kernel(%arg0: i32, %arg1: i32, %arg2: memref<1x18x18x3xbf16, #tpu.memory_space<vmem>>, %arg3: memref<27x32xbf16, #tpu.memory_space<vmem>>, %arg4: memref<1x32xf32, #tpu.memory_space<vmem>>, %arg5: memref<1x8x8x32xbf16, #tpu.memory_space<vmem>>, %arg6: memref<256x27xbf16, #tpu.memory_space<vmem>>) attributes {dimension_semantics = [#tpu.dimension_semantics<parallel>, #tpu.dimension_semantics<arbitrary>], iteration_bounds = array<i64: 2, 1>, scalar_prefetch = 0 : i64, scratch_operands = 1 : i64, tpu.core_type = #tpu.core_type<tc>, window_params = [{transform_indices = @transform_0, window_bounds = array<i64: 1, 18, 18, 3>}, {pipeline_mode = #tpu.pipeline_mode<synchronous>, transform_indices = @transform_1, window_bounds = array<i64: 27, 32>}, {pipeline_mode = #tpu.pipeline_mode<synchronous>, transform_indices = @transform_2, window_bounds = array<i64: 1, 32>}, {transform_indices = @transform_3, window_bounds = array<i64: 1, 8, 8, 32>}]} {
    %c16_i32 = arith.constant 16 : i32
    %0 = arith.muli %arg1, %c16_i32 : i32
    %c0_i32 = arith.constant 0 : i32
    %1 = arith.addi %0, %c0_i32 : i32
    %c0 = arith.constant 0 : index
    %2 = arith.index_cast %1 : i32 to index
    %c0_0 = arith.constant 0 : index
    %c0_1 = arith.constant 0 : index
    %3 = vector.load %arg2[%c0, %2, %c0_0, %c0_1] : memref<1x18x18x3xbf16, #tpu.memory_space<vmem>>, vector<1x16x16x3xbf16>
    %4 = vector.shape_cast %3 : vector<1x16x16x3xbf16> to vector<16x16x3xbf16>
    %5 = vector.shape_cast %4 : vector<16x16x3xbf16> to vector<256x3xbf16>
    %c0_2 = arith.constant 0 : index
    %c0_3 = arith.constant 0 : index
    %6 = vector.load %arg6[%c0_2, %c0_3] : memref<256x27xbf16, #tpu.memory_space<vmem>>, vector<256x3xbf16>
    tpu.vector_store %arg6[%c0_2, %c0_3], %5 {strides = array<i32>} : memref<256x27xbf16, #tpu.memory_space<vmem>>, vector<256x3xbf16>,
    %c0_i32_4 = arith.constant 0 : i32
    %7 = arith.addi %0, %c0_i32_4 : i32
    %c0_5 = arith.constant 0 : index
    %8 = arith.index_cast %7 : i32 to index
    %c1 = arith.constant 1 : index
    %c0_6 = arith.constant 0 : index
    %9 = vector.load %arg2[%c0_5, %8, %c1, %c0_6] : memref<1x18x18x3xbf16, #tpu.memory_space<vmem>>, vector<1x16x16x3xbf16>
    %10 = vector.shape_cast %9 : vector<1x16x16x3xbf16> to vector<16x16x3xbf16>
    %11 = vector.shape_cast %10 : vector<16x16x3xbf16> to vector<256x3xbf16>
    %c0_7 = arith.constant 0 : index
    %c3 = arith.constant 3 : index
    %12 = vector.load %arg6[%c0_7, %c3] : memref<256x27xbf16, #tpu.memory_space<vmem>>, vector<256x3xbf16>
    tpu.vector_store %arg6[%c0_7, %c3], %11 {strides = array<i32>} : memref<256x27xbf16, #tpu.memory_space<vmem>>, vector<256x3xbf16>,
    %c0_i32_8 = arith.constant 0 : i32
    %13 = arith.addi %0, %c0_i32_8 : i32
    %c0_9 = arith.constant 0 : index
    %14 = arith.index_cast %13 : i32 to index
    %c2 = arith.constant 2 : index
    %c0_10 = arith.constant 0 : index
    %15 = vector.load %arg2[%c0_9, %14, %c2, %c0_10] : memref<1x18x18x3xbf16, #tpu.memory_space<vmem>>, vector<1x16x16x3xbf16>
    %16 = vector.shape_cast %15 : vector<1x16x16x3xbf16> to vector<16x16x3xbf16>
    %17 = vector.shape_cast %16 : vector<16x16x3xbf16> to vector<256x3xbf16>
    %c0_11 = arith.constant 0 : index
    %c6 = arith.constant 6 : index
    %18 = vector.load %arg6[%c0_11, %c6] : memref<256x27xbf16, #tpu.memory_space<vmem>>, vector<256x3xbf16>
    tpu.vector_store %arg6[%c0_11, %c6], %17 {strides = array<i32>} : memref<256x27xbf16, #tpu.memory_space<vmem>>, vector<256x3xbf16>,
    %c1_i32 = arith.constant 1 : i32
    %19 = arith.addi %0, %c1_i32 : i32
    %c0_12 = arith.constant 0 : index
    %20 = arith.index_cast %19 : i32 to index
    %c0_13 = arith.constant 0 : index
    %c0_14 = arith.constant 0 : index
    %21 = vector.load %arg2[%c0_12, %20, %c0_13, %c0_14] : memref<1x18x18x3xbf16, #tpu.memory_space<vmem>>, vector<1x16x16x3xbf16>
    %22 = vector.shape_cast %21 : vector<1x16x16x3xbf16> to vector<16x16x3xbf16>
    %23 = vector.shape_cast %22 : vector<16x16x3xbf16> to vector<256x3xbf16>
    %c0_15 = arith.constant 0 : index
    %c9 = arith.constant 9 : index
    %24 = vector.load %arg6[%c0_15, %c9] : memref<256x27xbf16, #tpu.memory_space<vmem>>, vector<256x3xbf16>
    tpu.vector_store %arg6[%c0_15, %c9], %23 {strides = array<i32>} : memref<256x27xbf16, #tpu.memory_space<vmem>>, vector<256x3xbf16>,
    %c1_i32_16 = arith.constant 1 : i32
    %25 = arith.addi %0, %c1_i32_16 : i32
    %c0_17 = arith.constant 0 : index
    %26 = arith.index_cast %25 : i32 to index
    %c1_18 = arith.constant 1 : index
    %c0_19 = arith.constant 0 : index
    %27 = vector.load %arg2[%c0_17, %26, %c1_18, %c0_19] : memref<1x18x18x3xbf16, #tpu.memory_space<vmem>>, vector<1x16x16x3xbf16>
    %28 = vector.shape_cast %27 : vector<1x16x16x3xbf16> to vector<16x16x3xbf16>
    %29 = vector.shape_cast %28 : vector<16x16x3xbf16> to vector<256x3xbf16>
    %c0_20 = arith.constant 0 : index
    %c12 = arith.constant 12 : index
    %30 = vector.load %arg6[%c0_20, %c12] : memref<256x27xbf16, #tpu.memory_space<vmem>>, vector<256x3xbf16>
    tpu.vector_store %arg6[%c0_20, %c12], %29 {strides = array<i32>} : memref<256x27xbf16, #tpu.memory_space<vmem>>, vector<256x3xbf16>,
    %c1_i32_21 = arith.constant 1 : i32
    %31 = arith.addi %0, %c1_i32_21 : i32
    %c0_22 = arith.constant 0 : index
    %32 = arith.index_cast %31 : i32 to index
    %c2_23 = arith.constant 2 : index
    %c0_24 = arith.constant 0 : index
    %33 = vector.load %arg2[%c0_22, %32, %c2_23, %c0_24] : memref<1x18x18x3xbf16, #tpu.memory_space<vmem>>, vector<1x16x16x3xbf16>
    %34 = vector.shape_cast %33 : vector<1x16x16x3xbf16> to vector<16x16x3xbf16>
    %35 = vector.shape_cast %34 : vector<16x16x3xbf16> to vector<256x3xbf16>
    %c0_25 = arith.constant 0 : index
    %c15 = arith.constant 15 : index
    %36 = vector.load %arg6[%c0_25, %c15] : memref<256x27xbf16, #tpu.memory_space<vmem>>, vector<256x3xbf16>
    tpu.vector_store %arg6[%c0_25, %c15], %35 {strides = array<i32>} : memref<256x27xbf16, #tpu.memory_space<vmem>>, vector<256x3xbf16>,
    %c2_i32 = arith.constant 2 : i32
    %37 = arith.addi %0, %c2_i32 : i32
    %c0_26 = arith.constant 0 : index
    %38 = arith.index_cast %37 : i32 to index
    %c0_27 = arith.constant 0 : index
    %c0_28 = arith.constant 0 : index
    %39 = vector.load %arg2[%c0_26, %38, %c0_27, %c0_28] : memref<1x18x18x3xbf16, #tpu.memory_space<vmem>>, vector<1x16x16x3xbf16>
    %40 = vector.shape_cast %39 : vector<1x16x16x3xbf16> to vector<16x16x3xbf16>
    %41 = vector.shape_cast %40 : vector<16x16x3xbf16> to vector<256x3xbf16>
    %c0_29 = arith.constant 0 : index
    %c18 = arith.constant 18 : index
    %42 = vector.load %arg6[%c0_29, %c18] : memref<256x27xbf16, #tpu.memory_space<vmem>>, vector<256x3xbf16>
    tpu.vector_store %arg6[%c0_29, %c18], %41 {strides = array<i32>} : memref<256x27xbf16, #tpu.memory_space<vmem>>, vector<256x3xbf16>,
    %c2_i32_30 = arith.constant 2 : i32
    %43 = arith.addi %0, %c2_i32_30 : i32
    %c0_31 = arith.constant 0 : index
    %44 = arith.index_cast %43 : i32 to index
    %c1_32 = arith.constant 1 : index
    %c0_33 = arith.constant 0 : index
    %45 = vector.load %arg2[%c0_31, %44, %c1_32, %c0_33] : memref<1x18x18x3xbf16, #tpu.memory_space<vmem>>, vector<1x16x16x3xbf16>
    %46 = vector.shape_cast %45 : vector<1x16x16x3xbf16> to vector<16x16x3xbf16>
    %47 = vector.shape_cast %46 : vector<16x16x3xbf16> to vector<256x3xbf16>
    %c0_34 = arith.constant 0 : index
    %c21 = arith.constant 21 : index
    %48 = vector.load %arg6[%c0_34, %c21] : memref<256x27xbf16, #tpu.memory_space<vmem>>, vector<256x3xbf16>
    tpu.vector_store %arg6[%c0_34, %c21], %47 {strides = array<i32>} : memref<256x27xbf16, #tpu.memory_space<vmem>>, vector<256x3xbf16>,
    %c2_i32_35 = arith.constant 2 : i32
    %49 = arith.addi %0, %c2_i32_35 : i32
    %c0_36 = arith.constant 0 : index
    %50 = arith.index_cast %49 : i32 to index
    %c2_37 = arith.constant 2 : index
    %c0_38 = arith.constant 0 : index
    %51 = vector.load %arg2[%c0_36, %50, %c2_37, %c0_38] : memref<1x18x18x3xbf16, #tpu.memory_space<vmem>>, vector<1x16x16x3xbf16>
    %52 = vector.shape_cast %51 : vector<1x16x16x3xbf16> to vector<16x16x3xbf16>
    %53 = vector.shape_cast %52 : vector<16x16x3xbf16> to vector<256x3xbf16>
    %c0_39 = arith.constant 0 : index
    %c24 = arith.constant 24 : index
    %54 = vector.load %arg6[%c0_39, %c24] : memref<256x27xbf16, #tpu.memory_space<vmem>>, vector<256x3xbf16>
    tpu.vector_store %arg6[%c0_39, %c24], %53 {strides = array<i32>} : memref<256x27xbf16, #tpu.memory_space<vmem>>, vector<256x3xbf16>,
    %c0_40 = arith.constant 0 : index
    %c0_41 = arith.constant 0 : index
    %55 = vector.load %arg6[%c0_40, %c0_41] : memref<256x27xbf16, #tpu.memory_space<vmem>>, vector<256x27xbf16>
    %c0_42 = arith.constant 0 : index
    %c0_43 = arith.constant 0 : index
    %56 = vector.load %arg3[%c0_42, %c0_43] : memref<27x32xbf16, #tpu.memory_space<vmem>>, vector<27x32xbf16>
    %cst = arith.constant dense<0.000000e+00> : vector<256x32xf32>
    %57 = tpu.matmul %55, %56, %cst {dimension_numbers = #tpu.dot_dimension_numbers<[1], [0], [0], [1], [0, 0, 1, 1], [], []>} : vector<256x27xbf16>, vector<27x32xbf16>, vector<256x32xf32> -> vector<256x32xf32>
    %c0_44 = arith.constant 0 : index
    %c0_45 = arith.constant 0 : index
    %58 = vector.load %arg4[%c0_44, %c0_45] : memref<1x32xf32, #tpu.memory_space<vmem>>, vector<1x32xf32>
    %59 = vector.broadcast %58 : vector<1x32xf32> to vector<256x32xf32>
    %60 = arith.addf %57, %59 : vector<256x32xf32>
    %cst_46 = arith.constant 0.000000e+00 : f32
    %61 = vector.broadcast %cst_46 : f32 to vector<256x32xf32>
    %62 = arith.maximumf %60, %61 : vector<256x32xf32>
    %63 = vector.shape_cast %62 : vector<256x32xf32> to vector<8x2x8x2x32xf32>
    %64 = vector.extract_strided_slice %63 {offsets = [0, 0, 0, 0, 0], sizes = [8, 1, 8, 2, 32], strides = [1, 1, 1, 1, 1]} : vector<8x2x8x2x32xf32> to vector<8x1x8x2x32xf32>
    %65 = vector.shape_cast %64 : vector<8x1x8x2x32xf32> to vector<8x8x2x32xf32>
    %66 = vector.extract_strided_slice %63 {offsets = [0, 1, 0, 0, 0], sizes = [8, 1, 8, 2, 32], strides = [1, 1, 1, 1, 1]} : vector<8x2x8x2x32xf32> to vector<8x1x8x2x32xf32>
    %67 = vector.shape_cast %66 : vector<8x1x8x2x32xf32> to vector<8x8x2x32xf32>
    %68 = arith.maximumf %65, %67 : vector<8x8x2x32xf32>
    %69 = vector.extract_strided_slice %68 {offsets = [0, 0, 0, 0], sizes = [8, 8, 1, 32], strides = [1, 1, 1, 1]} : vector<8x8x2x32xf32> to vector<8x8x1x32xf32>
    %70 = vector.shape_cast %69 : vector<8x8x1x32xf32> to vector<8x8x32xf32>
    %71 = vector.extract_strided_slice %68 {offsets = [0, 0, 1, 0], sizes = [8, 8, 1, 32], strides = [1, 1, 1, 1]} : vector<8x8x2x32xf32> to vector<8x8x1x32xf32>
    %72 = vector.shape_cast %71 : vector<8x8x1x32xf32> to vector<8x8x32xf32>
    %73 = arith.maximumf %70, %72 : vector<8x8x32xf32>
    %74 = vector.shape_cast %73 : vector<8x8x32xf32> to vector<1x8x8x32xf32>
    %75 = arith.truncf %74 : vector<1x8x8x32xf32> to vector<1x8x8x32xbf16>
    %c0_47 = arith.constant 0 : index
    %c0_48 = arith.constant 0 : index
    %c0_49 = arith.constant 0 : index
    %c0_50 = arith.constant 0 : index
    %76 = vector.load %arg5[%c0_47, %c0_48, %c0_49, %c0_50] : memref<1x8x8x32xbf16, #tpu.memory_space<vmem>>, vector<1x8x8x32xbf16>
    tpu.vector_store %arg5[%c0_47, %c0_48, %c0_49, %c0_50], %75 {strides = array<i32>} : memref<1x8x8x32xbf16, #tpu.memory_space<vmem>>, vector<1x8x8x32xbf16>,
    return
  }
  func.func @transform_0(%arg0: i32, %arg1: i32) -> (i32, i32, i32, i32) {
    %c0_i32 = arith.constant 0 : i32
    %c0_i32_0 = arith.constant 0 : i32
    %c0_i32_1 = arith.constant 0 : i32
    %c0_i32_2 = arith.constant 0 : i32
    return %arg0, %c0_i32, %c0_i32_0, %c0_i32_1 : i32, i32, i32, i32
  }
  func.func @transform_1(%arg0: i32, %arg1: i32) -> (i32, i32) {
    %c0_i32 = arith.constant 0 : i32
    %c0_i32_0 = arith.constant 0 : i32
    %c0_i32_1 = arith.constant 0 : i32
    return %c0_i32, %c0_i32_0 : i32, i32
  }
  func.func @transform_2(%arg0: i32, %arg1: i32) -> (i32, i32) {
    %c0_i32 = arith.constant 0 : i32
    %c0_i32_0 = arith.constant 0 : i32
    %c0_i32_1 = arith.constant 0 : i32
    return %c0_i32, %c0_i32_0 : i32, i32
  }
  func.func @transform_3(%arg0: i32, %arg1: i32) -> (i32, i32, i32, i32) {
    %c0_i32 = arith.constant 0 : i32
    %c0_i32_0 = arith.constant 0 : i32
    %c0_i32_1 = arith.constant 0 : i32
    return %arg0, %arg1, %c0_i32, %c0_i32_0 : i32, i32, i32, i32
  }
}

module attributes {stable_mosaic.version = 11 : i64} {
  func.func @kernel(%arg0: i32, %arg1: i32, %arg2: memref<1x10x10x32xbf16, #tpu.memory_space<vmem>>, %arg3: memref<288x64xbf16, #tpu.memory_space<vmem>>, %arg4: memref<1x64xf32, #tpu.memory_space<vmem>>, %arg5: memref<1x4x4x64xbf16, #tpu.memory_space<vmem>>, %arg6: memref<64x288xbf16, #tpu.memory_space<vmem>>) attributes {dimension_semantics = [#tpu.dimension_semantics<parallel>, #tpu.dimension_semantics<arbitrary>], iteration_bounds = array<i64: 2, 1>, scalar_prefetch = 0 : i64, scratch_operands = 1 : i64, tpu.core_type = #tpu.core_type<tc>, window_params = [{transform_indices = @transform_0, window_bounds = array<i64: 1, 10, 10, 32>}, {pipeline_mode = #tpu.pipeline_mode<synchronous>, transform_indices = @transform_1, window_bounds = array<i64: 288, 64>}, {pipeline_mode = #tpu.pipeline_mode<synchronous>, transform_indices = @transform_2, window_bounds = array<i64: 1, 64>}, {transform_indices = @transform_3, window_bounds = array<i64: 1, 4, 4, 64>}]} {
    %c8_i32 = arith.constant 8 : i32
    %0 = arith.muli %arg1, %c8_i32 : i32
    %c0_i32 = arith.constant 0 : i32
    %1 = arith.addi %0, %c0_i32 : i32
    %c0 = arith.constant 0 : index
    %2 = arith.index_cast %1 : i32 to index
    %c0_0 = arith.constant 0 : index
    %c0_1 = arith.constant 0 : index
    %3 = vector.load %arg2[%c0, %2, %c0_0, %c0_1] : memref<1x10x10x32xbf16, #tpu.memory_space<vmem>>, vector<1x8x8x32xbf16>
    %4 = vector.shape_cast %3 : vector<1x8x8x32xbf16> to vector<8x8x32xbf16>
    %5 = vector.shape_cast %4 : vector<8x8x32xbf16> to vector<64x32xbf16>
    %c0_2 = arith.constant 0 : index
    %c0_3 = arith.constant 0 : index
    %6 = vector.load %arg6[%c0_2, %c0_3] : memref<64x288xbf16, #tpu.memory_space<vmem>>, vector<64x32xbf16>
    tpu.vector_store %arg6[%c0_2, %c0_3], %5 {strides = array<i32>} : memref<64x288xbf16, #tpu.memory_space<vmem>>, vector<64x32xbf16>,
    %c0_i32_4 = arith.constant 0 : i32
    %7 = arith.addi %0, %c0_i32_4 : i32
    %c0_5 = arith.constant 0 : index
    %8 = arith.index_cast %7 : i32 to index
    %c1 = arith.constant 1 : index
    %c0_6 = arith.constant 0 : index
    %9 = vector.load %arg2[%c0_5, %8, %c1, %c0_6] : memref<1x10x10x32xbf16, #tpu.memory_space<vmem>>, vector<1x8x8x32xbf16>
    %10 = vector.shape_cast %9 : vector<1x8x8x32xbf16> to vector<8x8x32xbf16>
    %11 = vector.shape_cast %10 : vector<8x8x32xbf16> to vector<64x32xbf16>
    %c0_7 = arith.constant 0 : index
    %c32 = arith.constant 32 : index
    %12 = vector.load %arg6[%c0_7, %c32] : memref<64x288xbf16, #tpu.memory_space<vmem>>, vector<64x32xbf16>
    tpu.vector_store %arg6[%c0_7, %c32], %11 {strides = array<i32>} : memref<64x288xbf16, #tpu.memory_space<vmem>>, vector<64x32xbf16>,
    %c0_i32_8 = arith.constant 0 : i32
    %13 = arith.addi %0, %c0_i32_8 : i32
    %c0_9 = arith.constant 0 : index
    %14 = arith.index_cast %13 : i32 to index
    %c2 = arith.constant 2 : index
    %c0_10 = arith.constant 0 : index
    %15 = vector.load %arg2[%c0_9, %14, %c2, %c0_10] : memref<1x10x10x32xbf16, #tpu.memory_space<vmem>>, vector<1x8x8x32xbf16>
    %16 = vector.shape_cast %15 : vector<1x8x8x32xbf16> to vector<8x8x32xbf16>
    %17 = vector.shape_cast %16 : vector<8x8x32xbf16> to vector<64x32xbf16>
    %c0_11 = arith.constant 0 : index
    %c64 = arith.constant 64 : index
    %18 = vector.load %arg6[%c0_11, %c64] : memref<64x288xbf16, #tpu.memory_space<vmem>>, vector<64x32xbf16>
    tpu.vector_store %arg6[%c0_11, %c64], %17 {strides = array<i32>} : memref<64x288xbf16, #tpu.memory_space<vmem>>, vector<64x32xbf16>,
    %c1_i32 = arith.constant 1 : i32
    %19 = arith.addi %0, %c1_i32 : i32
    %c0_12 = arith.constant 0 : index
    %20 = arith.index_cast %19 : i32 to index
    %c0_13 = arith.constant 0 : index
    %c0_14 = arith.constant 0 : index
    %21 = vector.load %arg2[%c0_12, %20, %c0_13, %c0_14] : memref<1x10x10x32xbf16, #tpu.memory_space<vmem>>, vector<1x8x8x32xbf16>
    %22 = vector.shape_cast %21 : vector<1x8x8x32xbf16> to vector<8x8x32xbf16>
    %23 = vector.shape_cast %22 : vector<8x8x32xbf16> to vector<64x32xbf16>
    %c0_15 = arith.constant 0 : index
    %c96 = arith.constant 96 : index
    %24 = vector.load %arg6[%c0_15, %c96] : memref<64x288xbf16, #tpu.memory_space<vmem>>, vector<64x32xbf16>
    tpu.vector_store %arg6[%c0_15, %c96], %23 {strides = array<i32>} : memref<64x288xbf16, #tpu.memory_space<vmem>>, vector<64x32xbf16>,
    %c1_i32_16 = arith.constant 1 : i32
    %25 = arith.addi %0, %c1_i32_16 : i32
    %c0_17 = arith.constant 0 : index
    %26 = arith.index_cast %25 : i32 to index
    %c1_18 = arith.constant 1 : index
    %c0_19 = arith.constant 0 : index
    %27 = vector.load %arg2[%c0_17, %26, %c1_18, %c0_19] : memref<1x10x10x32xbf16, #tpu.memory_space<vmem>>, vector<1x8x8x32xbf16>
    %28 = vector.shape_cast %27 : vector<1x8x8x32xbf16> to vector<8x8x32xbf16>
    %29 = vector.shape_cast %28 : vector<8x8x32xbf16> to vector<64x32xbf16>
    %c0_20 = arith.constant 0 : index
    %c128 = arith.constant 128 : index
    %30 = vector.load %arg6[%c0_20, %c128] : memref<64x288xbf16, #tpu.memory_space<vmem>>, vector<64x32xbf16>
    tpu.vector_store %arg6[%c0_20, %c128], %29 {strides = array<i32>} : memref<64x288xbf16, #tpu.memory_space<vmem>>, vector<64x32xbf16>,
    %c1_i32_21 = arith.constant 1 : i32
    %31 = arith.addi %0, %c1_i32_21 : i32
    %c0_22 = arith.constant 0 : index
    %32 = arith.index_cast %31 : i32 to index
    %c2_23 = arith.constant 2 : index
    %c0_24 = arith.constant 0 : index
    %33 = vector.load %arg2[%c0_22, %32, %c2_23, %c0_24] : memref<1x10x10x32xbf16, #tpu.memory_space<vmem>>, vector<1x8x8x32xbf16>
    %34 = vector.shape_cast %33 : vector<1x8x8x32xbf16> to vector<8x8x32xbf16>
    %35 = vector.shape_cast %34 : vector<8x8x32xbf16> to vector<64x32xbf16>
    %c0_25 = arith.constant 0 : index
    %c160 = arith.constant 160 : index
    %36 = vector.load %arg6[%c0_25, %c160] : memref<64x288xbf16, #tpu.memory_space<vmem>>, vector<64x32xbf16>
    tpu.vector_store %arg6[%c0_25, %c160], %35 {strides = array<i32>} : memref<64x288xbf16, #tpu.memory_space<vmem>>, vector<64x32xbf16>,
    %c2_i32 = arith.constant 2 : i32
    %37 = arith.addi %0, %c2_i32 : i32
    %c0_26 = arith.constant 0 : index
    %38 = arith.index_cast %37 : i32 to index
    %c0_27 = arith.constant 0 : index
    %c0_28 = arith.constant 0 : index
    %39 = vector.load %arg2[%c0_26, %38, %c0_27, %c0_28] : memref<1x10x10x32xbf16, #tpu.memory_space<vmem>>, vector<1x8x8x32xbf16>
    %40 = vector.shape_cast %39 : vector<1x8x8x32xbf16> to vector<8x8x32xbf16>
    %41 = vector.shape_cast %40 : vector<8x8x32xbf16> to vector<64x32xbf16>
    %c0_29 = arith.constant 0 : index
    %c192 = arith.constant 192 : index
    %42 = vector.load %arg6[%c0_29, %c192] : memref<64x288xbf16, #tpu.memory_space<vmem>>, vector<64x32xbf16>
    tpu.vector_store %arg6[%c0_29, %c192], %41 {strides = array<i32>} : memref<64x288xbf16, #tpu.memory_space<vmem>>, vector<64x32xbf16>,
    %c2_i32_30 = arith.constant 2 : i32
    %43 = arith.addi %0, %c2_i32_30 : i32
    %c0_31 = arith.constant 0 : index
    %44 = arith.index_cast %43 : i32 to index
    %c1_32 = arith.constant 1 : index
    %c0_33 = arith.constant 0 : index
    %45 = vector.load %arg2[%c0_31, %44, %c1_32, %c0_33] : memref<1x10x10x32xbf16, #tpu.memory_space<vmem>>, vector<1x8x8x32xbf16>
    %46 = vector.shape_cast %45 : vector<1x8x8x32xbf16> to vector<8x8x32xbf16>
    %47 = vector.shape_cast %46 : vector<8x8x32xbf16> to vector<64x32xbf16>
    %c0_34 = arith.constant 0 : index
    %c224 = arith.constant 224 : index
    %48 = vector.load %arg6[%c0_34, %c224] : memref<64x288xbf16, #tpu.memory_space<vmem>>, vector<64x32xbf16>
    tpu.vector_store %arg6[%c0_34, %c224], %47 {strides = array<i32>} : memref<64x288xbf16, #tpu.memory_space<vmem>>, vector<64x32xbf16>,
    %c2_i32_35 = arith.constant 2 : i32
    %49 = arith.addi %0, %c2_i32_35 : i32
    %c0_36 = arith.constant 0 : index
    %50 = arith.index_cast %49 : i32 to index
    %c2_37 = arith.constant 2 : index
    %c0_38 = arith.constant 0 : index
    %51 = vector.load %arg2[%c0_36, %50, %c2_37, %c0_38] : memref<1x10x10x32xbf16, #tpu.memory_space<vmem>>, vector<1x8x8x32xbf16>
    %52 = vector.shape_cast %51 : vector<1x8x8x32xbf16> to vector<8x8x32xbf16>
    %53 = vector.shape_cast %52 : vector<8x8x32xbf16> to vector<64x32xbf16>
    %c0_39 = arith.constant 0 : index
    %c256 = arith.constant 256 : index
    %54 = vector.load %arg6[%c0_39, %c256] : memref<64x288xbf16, #tpu.memory_space<vmem>>, vector<64x32xbf16>
    tpu.vector_store %arg6[%c0_39, %c256], %53 {strides = array<i32>} : memref<64x288xbf16, #tpu.memory_space<vmem>>, vector<64x32xbf16>,
    %c0_40 = arith.constant 0 : index
    %c0_41 = arith.constant 0 : index
    %55 = vector.load %arg6[%c0_40, %c0_41] : memref<64x288xbf16, #tpu.memory_space<vmem>>, vector<64x288xbf16>
    %c0_42 = arith.constant 0 : index
    %c0_43 = arith.constant 0 : index
    %56 = vector.load %arg3[%c0_42, %c0_43] : memref<288x64xbf16, #tpu.memory_space<vmem>>, vector<288x64xbf16>
    %cst = arith.constant dense<0.000000e+00> : vector<64x64xf32>
    %57 = tpu.matmul %55, %56, %cst {dimension_numbers = #tpu.dot_dimension_numbers<[1], [0], [0], [1], [0, 0, 1, 1], [], []>} : vector<64x288xbf16>, vector<288x64xbf16>, vector<64x64xf32> -> vector<64x64xf32>
    %c0_44 = arith.constant 0 : index
    %c0_45 = arith.constant 0 : index
    %58 = vector.load %arg4[%c0_44, %c0_45] : memref<1x64xf32, #tpu.memory_space<vmem>>, vector<1x64xf32>
    %59 = vector.broadcast %58 : vector<1x64xf32> to vector<64x64xf32>
    %60 = arith.addf %57, %59 : vector<64x64xf32>
    %cst_46 = arith.constant 0.000000e+00 : f32
    %61 = vector.broadcast %cst_46 : f32 to vector<64x64xf32>
    %62 = arith.maximumf %60, %61 : vector<64x64xf32>
    %63 = vector.shape_cast %62 : vector<64x64xf32> to vector<4x2x4x2x64xf32>
    %64 = vector.extract_strided_slice %63 {offsets = [0, 0, 0, 0, 0], sizes = [4, 1, 4, 2, 64], strides = [1, 1, 1, 1, 1]} : vector<4x2x4x2x64xf32> to vector<4x1x4x2x64xf32>
    %65 = vector.shape_cast %64 : vector<4x1x4x2x64xf32> to vector<4x4x2x64xf32>
    %66 = vector.extract_strided_slice %63 {offsets = [0, 1, 0, 0, 0], sizes = [4, 1, 4, 2, 64], strides = [1, 1, 1, 1, 1]} : vector<4x2x4x2x64xf32> to vector<4x1x4x2x64xf32>
    %67 = vector.shape_cast %66 : vector<4x1x4x2x64xf32> to vector<4x4x2x64xf32>
    %68 = arith.maximumf %65, %67 : vector<4x4x2x64xf32>
    %69 = vector.extract_strided_slice %68 {offsets = [0, 0, 0, 0], sizes = [4, 4, 1, 64], strides = [1, 1, 1, 1]} : vector<4x4x2x64xf32> to vector<4x4x1x64xf32>
    %70 = vector.shape_cast %69 : vector<4x4x1x64xf32> to vector<4x4x64xf32>
    %71 = vector.extract_strided_slice %68 {offsets = [0, 0, 1, 0], sizes = [4, 4, 1, 64], strides = [1, 1, 1, 1]} : vector<4x4x2x64xf32> to vector<4x4x1x64xf32>
    %72 = vector.shape_cast %71 : vector<4x4x1x64xf32> to vector<4x4x64xf32>
    %73 = arith.maximumf %70, %72 : vector<4x4x64xf32>
    %74 = vector.shape_cast %73 : vector<4x4x64xf32> to vector<1x4x4x64xf32>
    %75 = arith.truncf %74 : vector<1x4x4x64xf32> to vector<1x4x4x64xbf16>
    %c0_47 = arith.constant 0 : index
    %c0_48 = arith.constant 0 : index
    %c0_49 = arith.constant 0 : index
    %c0_50 = arith.constant 0 : index
    %76 = vector.load %arg5[%c0_47, %c0_48, %c0_49, %c0_50] : memref<1x4x4x64xbf16, #tpu.memory_space<vmem>>, vector<1x4x4x64xbf16>
    tpu.vector_store %arg5[%c0_47, %c0_48, %c0_49, %c0_50], %75 {strides = array<i32>} : memref<1x4x4x64xbf16, #tpu.memory_space<vmem>>, vector<1x4x4x64xbf16>,
    return
  }
  func.func @transform_0(%arg0: i32, %arg1: i32) -> (i32, i32, i32, i32) {
    %c0_i32 = arith.constant 0 : i32
    %c0_i32_0 = arith.constant 0 : i32
    %c0_i32_1 = arith.constant 0 : i32
    %c0_i32_2 = arith.constant 0 : i32
    return %arg0, %c0_i32, %c0_i32_0, %c0_i32_1 : i32, i32, i32, i32
  }
  func.func @transform_1(%arg0: i32, %arg1: i32) -> (i32, i32) {
    %c0_i32 = arith.constant 0 : i32
    %c0_i32_0 = arith.constant 0 : i32
    %c0_i32_1 = arith.constant 0 : i32
    return %c0_i32, %c0_i32_0 : i32, i32
  }
  func.func @transform_2(%arg0: i32, %arg1: i32) -> (i32, i32) {
    %c0_i32 = arith.constant 0 : i32
    %c0_i32_0 = arith.constant 0 : i32
    %c0_i32_1 = arith.constant 0 : i32
    return %c0_i32, %c0_i32_0 : i32, i32
  }
  func.func @transform_3(%arg0: i32, %arg1: i32) -> (i32, i32, i32, i32) {
    %c0_i32 = arith.constant 0 : i32
    %c0_i32_0 = arith.constant 0 : i32
    %c0_i32_1 = arith.constant 0 : i32
    return %arg0, %arg1, %c0_i32, %c0_i32_0 : i32, i32, i32, i32
  }
}

module attributes {stable_mosaic.version = 11 : i64} {
  func.func @kernel(%arg0: i32, %arg1: i32, %arg2: memref<2x1024xbf16, #tpu.memory_space<vmem>>, %arg3: memref<1024x512xbf16, #tpu.memory_space<vmem>>, %arg4: memref<1x512xf32, #tpu.memory_space<vmem>>, %arg5: memref<2x512xf32, #tpu.memory_space<vmem>>) attributes {dimension_semantics = [#tpu.dimension_semantics<parallel>, #tpu.dimension_semantics<arbitrary>], iteration_bounds = array<i64: 1, 1>, scalar_prefetch = 0 : i64, scratch_operands = 0 : i64, tpu.core_type = #tpu.core_type<tc>, window_params = [{transform_indices = @transform_0, window_bounds = array<i64: 2, 1024>}, {transform_indices = @transform_1, window_bounds = array<i64: 1024, 512>}, {pipeline_mode = #tpu.pipeline_mode<synchronous>, transform_indices = @transform_2, window_bounds = array<i64: 1, 512>}, {transform_indices = @transform_3, window_bounds = array<i64: 2, 512>}]} {
    %c0_i32 = arith.constant 0 : i32
    %0 = arith.cmpi eq, %arg1, %c0_i32 : i32
    %1 = arith.extui %0 : i1 to i32
    %c0_i32_0 = arith.constant 0 : i32
    %2 = arith.cmpi ne, %1, %c0_i32_0 : i32
    scf.if %2 {
      %cst_10 = arith.constant 0.000000e+00 : f32
      %12 = vector.broadcast %cst_10 : f32 to vector<2x512xf32>
      %c0_11 = arith.constant 0 : index
      %c0_12 = arith.constant 0 : index
      %13 = vector.load %arg5[%c0_11, %c0_12] : memref<2x512xf32, #tpu.memory_space<vmem>>, vector<2x512xf32>
      tpu.vector_store %arg5[%c0_11, %c0_12], %12 {strides = array<i32>} : memref<2x512xf32, #tpu.memory_space<vmem>>, vector<2x512xf32>,
    } else {
    }
    %c0 = arith.constant 0 : index
    %c0_1 = arith.constant 0 : index
    %3 = vector.load %arg5[%c0, %c0_1] : memref<2x512xf32, #tpu.memory_space<vmem>>, vector<2x512xf32>
    %c0_2 = arith.constant 0 : index
    %c0_3 = arith.constant 0 : index
    %4 = vector.load %arg2[%c0_2, %c0_3] : memref<2x1024xbf16, #tpu.memory_space<vmem>>, vector<2x1024xbf16>
    %c0_4 = arith.constant 0 : index
    %c0_5 = arith.constant 0 : index
    %5 = vector.load %arg3[%c0_4, %c0_5] : memref<1024x512xbf16, #tpu.memory_space<vmem>>, vector<1024x512xbf16>
    %cst = arith.constant dense<0.000000e+00> : vector<2x512xf32>
    %6 = tpu.matmul %4, %5, %cst {dimension_numbers = #tpu.dot_dimension_numbers<[1], [0], [0], [1], [0, 0, 1, 1], [], []>} : vector<2x1024xbf16>, vector<1024x512xbf16>, vector<2x512xf32> -> vector<2x512xf32>
    %7 = arith.addf %3, %6 : vector<2x512xf32>
    %c0_6 = arith.constant 0 : index
    %c0_7 = arith.constant 0 : index
    %8 = vector.load %arg5[%c0_6, %c0_7] : memref<2x512xf32, #tpu.memory_space<vmem>>, vector<2x512xf32>
    tpu.vector_store %arg5[%c0_6, %c0_7], %7 {strides = array<i32>} : memref<2x512xf32, #tpu.memory_space<vmem>>, vector<2x512xf32>,
    %c0_i32_8 = arith.constant 0 : i32
    %9 = arith.cmpi eq, %arg1, %c0_i32_8 : i32
    %10 = arith.extui %9 : i1 to i32
    %c0_i32_9 = arith.constant 0 : i32
    %11 = arith.cmpi ne, %10, %c0_i32_9 : i32
    scf.if %11 {
      %c0_10 = arith.constant 0 : index
      %c0_11 = arith.constant 0 : index
      %12 = vector.load %arg5[%c0_10, %c0_11] : memref<2x512xf32, #tpu.memory_space<vmem>>, vector<2x512xf32>
      %c0_12 = arith.constant 0 : index
      %c0_13 = arith.constant 0 : index
      %13 = vector.load %arg4[%c0_12, %c0_13] : memref<1x512xf32, #tpu.memory_space<vmem>>, vector<1x512xf32>
      %14 = vector.broadcast %13 : vector<1x512xf32> to vector<2x512xf32>
      %15 = arith.addf %12, %14 : vector<2x512xf32>
      %cst_14 = arith.constant 0.000000e+00 : f32
      %16 = vector.broadcast %cst_14 : f32 to vector<2x512xf32>
      %17 = arith.maximumf %15, %16 : vector<2x512xf32>
      %c0_15 = arith.constant 0 : index
      %c0_16 = arith.constant 0 : index
      %18 = vector.load %arg5[%c0_15, %c0_16] : memref<2x512xf32, #tpu.memory_space<vmem>>, vector<2x512xf32>
      tpu.vector_store %arg5[%c0_15, %c0_16], %17 {strides = array<i32>} : memref<2x512xf32, #tpu.memory_space<vmem>>, vector<2x512xf32>,
    } else {
    }
    return
  }
  func.func @transform_0(%arg0: i32, %arg1: i32) -> (i32, i32) {
    %c0_i32 = arith.constant 0 : i32
    return %arg0, %arg1 : i32, i32
  }
  func.func @transform_1(%arg0: i32, %arg1: i32) -> (i32, i32) {
    %c0_i32 = arith.constant 0 : i32
    %c0_i32_0 = arith.constant 0 : i32
    return %arg1, %c0_i32 : i32, i32
  }
  func.func @transform_2(%arg0: i32, %arg1: i32) -> (i32, i32) {
    %c0_i32 = arith.constant 0 : i32
    %c0_i32_0 = arith.constant 0 : i32
    %c0_i32_1 = arith.constant 0 : i32
    return %c0_i32, %c0_i32_0 : i32, i32
  }
  func.func @transform_3(%arg0: i32, %arg1: i32) -> (i32, i32) {
    %c0_i32 = arith.constant 0 : i32
    %c0_i32_0 = arith.constant 0 : i32
    return %arg0, %c0_i32 : i32, i32
  }
}

module attributes {stable_mosaic.version = 11 : i64} {
  func.func @kernel(%arg0: i32, %arg1: i32, %arg2: memref<2x512xbf16, #tpu.memory_space<vmem>>, %arg3: memref<512x128xbf16, #tpu.memory_space<vmem>>, %arg4: memref<1x128xf32, #tpu.memory_space<vmem>>, %arg5: memref<2x128xf32, #tpu.memory_space<vmem>>) attributes {dimension_semantics = [#tpu.dimension_semantics<parallel>, #tpu.dimension_semantics<arbitrary>], iteration_bounds = array<i64: 1, 1>, scalar_prefetch = 0 : i64, scratch_operands = 0 : i64, tpu.core_type = #tpu.core_type<tc>, window_params = [{transform_indices = @transform_0, window_bounds = array<i64: 2, 512>}, {transform_indices = @transform_1, window_bounds = array<i64: 512, 128>}, {pipeline_mode = #tpu.pipeline_mode<synchronous>, transform_indices = @transform_2, window_bounds = array<i64: 1, 128>}, {transform_indices = @transform_3, window_bounds = array<i64: 2, 128>}]} {
    %c0_i32 = arith.constant 0 : i32
    %0 = arith.cmpi eq, %arg1, %c0_i32 : i32
    %1 = arith.extui %0 : i1 to i32
    %c0_i32_0 = arith.constant 0 : i32
    %2 = arith.cmpi ne, %1, %c0_i32_0 : i32
    scf.if %2 {
      %cst_10 = arith.constant 0.000000e+00 : f32
      %12 = vector.broadcast %cst_10 : f32 to vector<2x128xf32>
      %c0_11 = arith.constant 0 : index
      %c0_12 = arith.constant 0 : index
      %13 = vector.load %arg5[%c0_11, %c0_12] : memref<2x128xf32, #tpu.memory_space<vmem>>, vector<2x128xf32>
      tpu.vector_store %arg5[%c0_11, %c0_12], %12 {strides = array<i32>} : memref<2x128xf32, #tpu.memory_space<vmem>>, vector<2x128xf32>,
    } else {
    }
    %c0 = arith.constant 0 : index
    %c0_1 = arith.constant 0 : index
    %3 = vector.load %arg5[%c0, %c0_1] : memref<2x128xf32, #tpu.memory_space<vmem>>, vector<2x128xf32>
    %c0_2 = arith.constant 0 : index
    %c0_3 = arith.constant 0 : index
    %4 = vector.load %arg2[%c0_2, %c0_3] : memref<2x512xbf16, #tpu.memory_space<vmem>>, vector<2x512xbf16>
    %c0_4 = arith.constant 0 : index
    %c0_5 = arith.constant 0 : index
    %5 = vector.load %arg3[%c0_4, %c0_5] : memref<512x128xbf16, #tpu.memory_space<vmem>>, vector<512x128xbf16>
    %cst = arith.constant dense<0.000000e+00> : vector<2x128xf32>
    %6 = tpu.matmul %4, %5, %cst {dimension_numbers = #tpu.dot_dimension_numbers<[1], [0], [0], [1], [0, 0, 1, 1], [], []>} : vector<2x512xbf16>, vector<512x128xbf16>, vector<2x128xf32> -> vector<2x128xf32>
    %7 = arith.addf %3, %6 : vector<2x128xf32>
    %c0_6 = arith.constant 0 : index
    %c0_7 = arith.constant 0 : index
    %8 = vector.load %arg5[%c0_6, %c0_7] : memref<2x128xf32, #tpu.memory_space<vmem>>, vector<2x128xf32>
    tpu.vector_store %arg5[%c0_6, %c0_7], %7 {strides = array<i32>} : memref<2x128xf32, #tpu.memory_space<vmem>>, vector<2x128xf32>,
    %c0_i32_8 = arith.constant 0 : i32
    %9 = arith.cmpi eq, %arg1, %c0_i32_8 : i32
    %10 = arith.extui %9 : i1 to i32
    %c0_i32_9 = arith.constant 0 : i32
    %11 = arith.cmpi ne, %10, %c0_i32_9 : i32
    scf.if %11 {
      %c0_10 = arith.constant 0 : index
      %c0_11 = arith.constant 0 : index
      %12 = vector.load %arg5[%c0_10, %c0_11] : memref<2x128xf32, #tpu.memory_space<vmem>>, vector<2x128xf32>
      %c0_12 = arith.constant 0 : index
      %c0_13 = arith.constant 0 : index
      %13 = vector.load %arg4[%c0_12, %c0_13] : memref<1x128xf32, #tpu.memory_space<vmem>>, vector<1x128xf32>
      %14 = vector.broadcast %13 : vector<1x128xf32> to vector<2x128xf32>
      %15 = arith.addf %12, %14 : vector<2x128xf32>
      %c0_14 = arith.constant 0 : index
      %c0_15 = arith.constant 0 : index
      %16 = vector.load %arg5[%c0_14, %c0_15] : memref<2x128xf32, #tpu.memory_space<vmem>>, vector<2x128xf32>
      tpu.vector_store %arg5[%c0_14, %c0_15], %15 {strides = array<i32>} : memref<2x128xf32, #tpu.memory_space<vmem>>, vector<2x128xf32>,
    } else {
    }
    return
  }
  func.func @transform_0(%arg0: i32, %arg1: i32) -> (i32, i32) {
    %c0_i32 = arith.constant 0 : i32
    return %arg0, %arg1 : i32, i32
  }
  func.func @transform_1(%arg0: i32, %arg1: i32) -> (i32, i32) {
    %c0_i32 = arith.constant 0 : i32
    %c0_i32_0 = arith.constant 0 : i32
    return %arg1, %c0_i32 : i32, i32
  }
  func.func @transform_2(%arg0: i32, %arg1: i32) -> (i32, i32) {
    %c0_i32 = arith.constant 0 : i32
    %c0_i32_0 = arith.constant 0 : i32
    %c0_i32_1 = arith.constant 0 : i32
    return %c0_i32, %c0_i32_0 : i32, i32
  }
  func.func @transform_3(%arg0: i32, %arg1: i32) -> (i32, i32) {
    %c0_i32 = arith.constant 0 : i32
    %c0_i32_0 = arith.constant 0 : i32
    return %arg0, %c0_i32 : i32, i32
  }
}

</mosaic_0001>

<llo_original>
// kernel: animal_cnn_forward.7
$region0: #{animal_cnn_forward.7}
  #allocation0 [shape = 'u32[]', space=smem, size = 0x4, offset = 0x4, fixed_abs, tag = 'smem constant byte address 0x4 - core index']
  #allocation1 [shape = 'u32[72,128]{1,0:T(1,128)}', space=vmem, size = 0x9000, scoped, tag = 'internal scratch']
  %s0 = inlined_call_operand.vmem [shape: bf16[2,512], index: 0, kind: input, shape index: {}]
  %s1 = inlined_call_operand.vmem [shape: bf16[512,128], index: 1, kind: input, shape index: {}]
  %s2 = inlined_call_operand.vmem [shape: f32[1,128], index: 2, kind: input, shape index: {}]
  %s3 = inlined_call_operand.hbm [shape: f32[2,128], index: 3, kind: output, shape index: {}]
  %s4 = sld [smem:[#allocation0]]
  $region30: #{animal_cnn_forward.7} parent=0
    _
  %s6 = ssub.s32 1, %s4
  %s7 = scalar_select 0, %s6, %s4
  $region1: #{animal_cnn_forward.7} parent=0
    #allocation2 [shape = 'u8[1024]{0}', space=vmem, size = 0x400, scoped, tag = 'output window, operand 0, single buffered']
    #allocation3 [shape = 's32[1]{0}', space=sflag, size = 0x4, scoped, tag = 'scoped memory for animal_cnn_forward.7']
    %8 = vsyncpa [#allocation3], 0
    // Predicated region
    $region2: #{animal_cnn_forward.7} parent=1 // pred_check
      _
    $region3: #{animal_cnn_forward.7} parent=1 // pred_check_branch
      %10 = sbr.rel (0) target = $region5
    $region4: #{animal_cnn_forward.7} parent=1 // pred_region
      _
    $region5: #{animal_cnn_forward.7} parent=1 // pred_fallthru
      _
    // Predicated region
    $region6: #{animal_cnn_forward.7} parent=1 // pred_check
      _
    $region7: #{animal_cnn_forward.7} parent=1 // pred_check_branch
      %12 = sbr.rel (0) target = $region9
    $region8: #{animal_cnn_forward.7} parent=1 // pred_region
      _
    $region9: #{animal_cnn_forward.7} parent=1 // pred_fallthru
      _
    // Predicated region
    $region10: #{animal_cnn_forward.7} parent=1 // pred_check
      _
    $region11: #{animal_cnn_forward.7} parent=1 // pred_check_branch
      %14 = sbr.rel (0) target = $region13
    $region12: #{animal_cnn_forward.7} parent=1 // pred_region
      _
    $region13: #{animal_cnn_forward.7} parent=1 // pred_fallthru
      _
    %p15 = scmp.eq.s32.totalorder 0, 0
    // Predicated region
    $region14: #{animal_cnn_forward.7} parent=1 // pred_check
      %p16 = pneg %p15
    $region15: #{animal_cnn_forward.7} parent=1 // pred_check_branch
      %18 = sbr.rel (%p16) target = $region17
    $region16: #{animal_cnn_forward.7} parent=1 // pred_region
      %19 = vst [vmem:[#allocation2] sm:$0x3] 0.0
    $region17: #{animal_cnn_forward.7} parent=1 // pred_fallthru
      _
    %v20 = vld [vmem:[#allocation2] sm:$0x3]
    %v21 = vld [vmem:[%s0] sm:$0xf]
    %v22 = vld [vmem:[%s1] sm:$0xf]
    %v23 = vld [vmem:[%s1 + $0x4] sm:$0xf]
    %v24 = vld [vmem:[%s1 + $0x8] sm:$0xf]
    %v25 = vld [vmem:[%s1 + $0xc] sm:$0xf]
    %v26 = vld [vmem:[%s1 + $0x10] sm:$0xf]
    %v27 = vld [vmem:[%s1 + $0x14] sm:$0xf]
    %v28 = vld [vmem:[%s1 + $0x18] sm:$0xf]
    %v29 = vld [vmem:[%s1 + $0x1c] sm:$0xf]
    %v30 = vld [vmem:[%s1 + $0x20] sm:$0xf]
    %v31 = vld [vmem:[%s1 + $0x24] sm:$0xf]
    %v32 = vld [vmem:[%s1 + $0x28] sm:$0xf]
    %v33 = vld [vmem:[%s1 + $0x2c] sm:$0xf]
    %v34 = vld [vmem:[%s1 + $0x30] sm:$0xf]
    %v35 = vld [vmem:[%s1 + $0x34] sm:$0xf]
    %v36 = vld [vmem:[%s1 + $0x38] sm:$0xf]
    %v37 = vld [vmem:[%s1 + $0x3c] sm:$0xf]
    %v38 = vld [vmem:[%s1 + $0x40] sm:$0xf]
    %v39 = vld [vmem:[%s1 + $0x44] sm:$0xf]
    %v40 = vld [vmem:[%s1 + $0x48] sm:$0xf]
    %v41 = vld [vmem:[%s1 + $0x4c] sm:$0xf]
    %v42 = vld [vmem:[%s1 + $0x50] sm:$0xf]
    %v43 = vld [vmem:[%s1 + $0x54] sm:$0xf]
    %v44 = vld [vmem:[%s1 + $0x58] sm:$0xf]
    %v45 = vld [vmem:[%s1 + $0x5c] sm:$0xf]
    %v46 = vld [vmem:[%s1 + $0x60] sm:$0xf]
    %v47 = vld [vmem:[%s1 + $0x64] sm:$0xf]
    %v48 = vld [vmem:[%s1 + $0x68] sm:$0xf]
    %v49 = vld [vmem:[%s1 + $0x6c] sm:$0xf]
    %v50 = vld [vmem:[%s1 + $0x70] sm:$0xf]
    %v51 = vld [vmem:[%s1 + $0x74] sm:$0xf]
    %v52 = vld [vmem:[%s1 + $0x78] sm:$0xf]
    %v53 = vld [vmem:[%s1 + $0x7c] sm:$0xf]
    %v54 = vld [vmem:[%s1 + $0x80] sm:$0xf]
    %v55 = vld [vmem:[%s1 + $0x84] sm:$0xf]
    %v56 = vld [vmem:[%s1 + $0x88] sm:$0xf]
    %v57 = vld [vmem:[%s1 + $0x8c] sm:$0xf]
    %v58 = vld [vmem:[%s1 + $0x90] sm:$0xf]
    %v59 = vld [vmem:[%s1 + $0x94] sm:$0xf]
    %v60 = vld [vmem:[%s1 + $0x98] sm:$0xf]
    %v61 = vld [vmem:[%s1 + $0x9c] sm:$0xf]
    %v62 = vld [vmem:[%s1 + $0xa0] sm:$0xf]
    %v63 = vld [vmem:[%s1 + $0xa4] sm:$0xf]
    %v64 = vld [vmem:[%s1 + $0xa8] sm:$0xf]
    %v65 = vld [vmem:[%s1 + $0xac] sm:$0xf]
    %v66 = vld [vmem:[%s1 + $0xb0] sm:$0xf]
    %v67 = vld [vmem:[%s1 + $0xb4] sm:$0xf]
    %v68 = vld [vmem:[%s1 + $0xb8] sm:$0xf]
    %v69 = vld [vmem:[%s1 + $0xbc] sm:$0xf]
    %v70 = vld [vmem:[%s1 + $0xc0] sm:$0xf]
    %v71 = vld [vmem:[%s1 + $0xc4] sm:$0xf]
    %v72 = vld [vmem:[%s1 + $0xc8] sm:$0xf]
    %v73 = vld [vmem:[%s1 + $0xcc] sm:$0xf]
    %v74 = vld [vmem:[%s1 + $0xd0] sm:$0xf]
    %v75 = vld [vmem:[%s1 + $0xd4] sm:$0xf]
    %v76 = vld [vmem:[%s1 + $0xd8] sm:$0xf]
    %v77 = vld [vmem:[%s1 + $0xdc] sm:$0xf]
    %v78 = vld [vmem:[%s1 + $0xe0] sm:$0xf]
    %v79 = vld [vmem:[%s1 + $0xe4] sm:$0xf]
    %v80 = vld [vmem:[%s1 + $0xe8] sm:$0xf]
    %v81 = vld [vmem:[%s1 + $0xec] sm:$0xf]
    %v82 = vld [vmem:[%s1 + $0xf0] sm:$0xf]
    %v83 = vld [vmem:[%s1 + $0xf4] sm:$0xf]
    %v84 = vld [vmem:[%s1 + $0xf8] sm:$0xf]
    %v85 = vld [vmem:[%s1 + $0xfc] sm:$0xf]
    %87 = vst [vmem:[#allocation1] ss:$9 sm:$0xff] %v21
    %v88 = vld [vmem:[#allocation1] sm:$0xff]
    %v89 = vld [vmem:[#allocation1 + $0x9] sm:$0xff]
    %v90 = vld [vmem:[#allocation1 + $0x12] sm:$0xff]
    %v91 = vld [vmem:[#allocation1 + $0x1b] sm:$0xff]
    %v160 = vunpack.c.l.b16 %v22
    %v161 = vunpack.c.l.b16 %v23
    %v162 = vunpack.c.l.b16 %v24
    %v163 = vunpack.c.l.b16 %v25
    %v164 = vunpack.c.l.b16 %v26
    %v165 = vunpack.c.l.b16 %v27
    %v166 = vunpack.c.l.b16 %v28
    %v167 = vunpack.c.l.b16 %v29
    %v168 = vunpack.c.l.b16 %v30
    %v169 = vunpack.c.l.b16 %v31
    %v170 = vunpack.c.l.b16 %v32
    %v171 = vunpack.c.l.b16 %v33
    %v172 = vunpack.c.l.b16 %v34
    %v173 = vunpack.c.l.b16 %v35
    %v174 = vunpack.c.l.b16 %v36
    %v175 = vunpack.c.l.b16 %v37
    %v176 = vunpack.c.l.b16 %v38
    %v177 = vunpack.c.l.b16 %v39
    %v178 = vunpack.c.l.b16 %v40
    %v179 = vunpack.c.l.b16 %v41
    %v180 = vunpack.c.l.b16 %v42
    %v181 = vunpack.c.l.b16 %v43
    %v182 = vunpack.c.l.b16 %v44
    %v183 = vunpack.c.l.b16 %v45
    %v184 = vunpack.c.l.b16 %v46
    %v185 = vunpack.c.l.b16 %v47
    %v186 = vunpack.c.l.b16 %v48
    %v187 = vunpack.c.l.b16 %v49
    %v188 = vunpack.c.l.b16 %v50
    %v189 = vunpack.c.l.b16 %v51
    %v190 = vunpack.c.l.b16 %v52
    %v191 = vunpack.c.l.b16 %v53
    %v192 = vunpack.c.l.b16 %v54
    %v193 = vunpack.c.l.b16 %v55
    %v194 = vunpack.c.l.b16 %v56
    %v195 = vunpack.c.l.b16 %v57
    %v196 = vunpack.c.l.b16 %v58
    %v197 = vunpack.c.l.b16 %v59
    %v198 = vunpack.c.l.b16 %v60
    %v199 = vunpack.c.l.b16 %v61
    %v200 = vunpack.c.l.b16 %v62
    %v201 = vunpack.c.l.b16 %v63
    %v202 = vunpack.c.l.b16 %v64
    %v203 = vunpack.c.l.b16 %v65
    %v204 = vunpack.c.l.b16 %v66
    %v205 = vunpack.c.l.b16 %v67
    %v206 = vunpack.c.l.b16 %v68
    %v207 = vunpack.c.l.b16 %v69
    %v208 = vunpack.c.l.b16 %v70
    %v209 = vunpack.c.l.b16 %v71
    %v210 = vunpack.c.l.b16 %v72
    %v211 = vunpack.c.l.b16 %v73
    %v212 = vunpack.c.l.b16 %v74
    %v213 = vunpack.c.l.b16 %v75
    %v214 = vunpack.c.l.b16 %v76
    %v215 = vunpack.c.l.b16 %v77
    %v216 = vunpack.c.l.b16 %v78
    %v217 = vunpack.c.l.b16 %v79
    %v218 = vunpack.c.l.b16 %v80
    %v219 = vunpack.c.l.b16 %v81
    %v220 = vunpack.c.l.b16 %v82
    %v221 = vunpack.c.l.b16 %v83
    %v222 = vunpack.c.l.b16 %v84
    %v223 = vunpack.c.l.b16 %v85
    %v224 = vpack.c.b16 %v161, %v160
    %v225 = vpack.c.b16 %v163, %v162
    %v226 = vpack.c.b16 %v165, %v164
    %v227 = vpack.c.b16 %v167, %v166
    %v228 = vpack.c.b16 %v169, %v168
    %v229 = vpack.c.b16 %v171, %v170
    %v230 = vpack.c.b16 %v173, %v172
    %v231 = vpack.c.b16 %v175, %v174
    %v232 = vpack.c.b16 %v177, %v176
    %v233 = vpack.c.b16 %v179, %v178
    %v234 = vpack.c.b16 %v181, %v180
    %v235 = vpack.c.b16 %v183, %v182
    %v236 = vpack.c.b16 %v185, %v184
    %v237 = vpack.c.b16 %v187, %v186
    %v238 = vpack.c.b16 %v189, %v188
    %v239 = vpack.c.b16 %v191, %v190
    %v240 = vpack.c.b16 %v193, %v192
    %v241 = vpack.c.b16 %v195, %v194
    %v242 = vpack.c.b16 %v197, %v196
    %v243 = vpack.c.b16 %v199, %v198
    %v244 = vpack.c.b16 %v201, %v200
    %v245 = vpack.c.b16 %v203, %v202
    %v246 = vpack.c.b16 %v205, %v204
    %v247 = vpack.c.b16 %v207, %v206
    %v248 = vpack.c.b16 %v209, %v208
    %v249 = vpack.c.b16 %v211, %v210
    %v250 = vpack.c.b16 %v213, %v212
    %v251 = vpack.c.b16 %v215, %v214
    %v252 = vpack.c.b16 %v217, %v216
    %v253 = vpack.c.b16 %v219, %v218
    %v254 = vpack.c.b16 %v221, %v220
    %v255 = vpack.c.b16 %v223, %v222
    %288 = vmatpush.bf16.msra.mxu0 %v231
    %289 = vmatpush.bf16.msra.mxu0 %v230
    %290 = vmatpush.bf16.msra.mxu0 %v229
    %291 = vmatpush.bf16.msra.mxu0 %v228
    %292 = vmatpush.bf16.msra.mxu0 %v227
    %293 = vmatpush.bf16.msra.mxu0 %v226
    %294 = vmatpush.bf16.msra.mxu0 %v225
    %295 = vmatpush.bf16.msra.mxu0 %v224
    %296 = vmatmul.bf16.gmra.mxu0 %v88
    %v297 = vpop.f32.mrf.mxu0
    %v298 = vadd.f32 0.0, %v297
    %v299 = vpop.f32.mrf.mxu0
    %300 = vdwg.mxu0
    %301 = vmatpush.bf16.msra.mxu0 %v239
    %302 = vmatpush.bf16.msra.mxu0 %v238
    %303 = vmatpush.bf16.msra.mxu0 %v237
    %304 = vmatpush.bf16.msra.mxu0 %v236
    %305 = vmatpush.bf16.msra.mxu0 %v235
    %306 = vmatpush.bf16.msra.mxu0 %v234
    %307 = vmatpush.bf16.msra.mxu0 %v233
    %308 = vmatpush.bf16.msra.mxu0 %v232
    %309 = vmatmul.bf16.gmra.mxu0 %v89
    %v310 = vpop.f32.mrf.mxu0
    %v311 = vadd.f32 %v298, %v310
    %v312 = vpop.f32.mrf.mxu0
    %313 = vdwg.mxu0
    %314 = vmatpush.bf16.msra.mxu0 %v247
    %315 = vmatpush.bf16.msra.mxu0 %v246
    %316 = vmatpush.bf16.msra.mxu0 %v245
    %317 = vmatpush.bf16.msra.mxu0 %v244
    %318 = vmatpush.bf16.msra.mxu0 %v243
    %319 = vmatpush.bf16.msra.mxu0 %v242
    %320 = vmatpush.bf16.msra.mxu0 %v241
    %321 = vmatpush.bf16.msra.mxu0 %v240
    %322 = vmatmul.bf16.gmra.mxu0 %v90
    %v323 = vpop.f32.mrf.mxu0
    %v324 = vadd.f32 %v311, %v323
    %v325 = vpop.f32.mrf.mxu0
    %326 = vdwg.mxu0
    %327 = vmatpush.bf16.msra.mxu0 %v255
    %328 = vmatpush.bf16.msra.mxu0 %v254
    %329 = vmatpush.bf16.msra.mxu0 %v253
    %330 = vmatpush.bf16.msra.mxu0 %v252
    %331 = vmatpush.bf16.msra.mxu0 %v251
    %332 = vmatpush.bf16.msra.mxu0 %v250
    %333 = vmatpush.bf16.msra.mxu0 %v249
    %334 = vmatpush.bf16.msra.mxu0 %v248
    %335 = vmatmul.bf16.gmra.mxu0 %v91
    %v336 = vpop.f32.mrf.mxu0
    %v337 = vadd.f32 %v324, %v336
    %v338 = vpop.f32.mrf.mxu0
    %339 = vdwg.mxu0
    %v340 = vadd.f32 %v20, %v337
    %341 = vst [vmem:[#allocation2] sm:$0x3] %v340
    // Predicated region
    $region18: #{animal_cnn_forward.7} parent=1 // pred_check
      %p342 = pneg %p15
    $region19: #{animal_cnn_forward.7} parent=1 // pred_check_branch
      %344 = sbr.rel (%p342) target = $region21
    $region20: #{animal_cnn_forward.7} parent=1 // pred_region
      %v345 = vld [vmem:[#allocation2] sm:$0x3]
      %v346 = vld [vmem:[%s2] sm:$0x1]
      %v348 = vperm.slane %v346, 0
      %v350 = vadd.f32 %v345, %v348
      %351 = vst [vmem:[#allocation2] sm:$0x3] %v350
    $region21: #{animal_cnn_forward.7} parent=1 // pred_fallthru
      _
    // Predicated region
    $region22: #{animal_cnn_forward.7} parent=1 // pred_check
      _
    $region23: #{animal_cnn_forward.7} parent=1 // pred_check_branch
      %353 = sbr.rel (0) target = $region25
    $region24: #{animal_cnn_forward.7} parent=1 // pred_region
      %355 = vsyncadd [#allocation3], 0
      %s357 = sshll.u32 [#allocation2], 4
      %s358 = int_to_ptr.vmem [resolvable:$true] %s357
      %s359 = sshll.u32 %s3, 4
      %s360 = int_to_ptr.hbm [resolvable:$true] %s359
      %362 = dma.vmem_to_hbm [thread:$0]  %s358, 32, %s360, [#allocation3]
    $region25: #{animal_cnn_forward.7} parent=1 // pred_fallthru
      _
    // Predicated region
    $region26: #{animal_cnn_forward.7} parent=1 // pred_check
      _
    $region27: #{animal_cnn_forward.7} parent=1 // pred_check_branch
      %364 = sbr.rel (0) target = $region29
    $region28: #{animal_cnn_forward.7} parent=1 // pred_region
      %366 = dma.done [#allocation3], 32
    $region29: #{animal_cnn_forward.7} parent=1 // pred_fallthru
      _
    %367 = vsyncpa [#allocation3], 1

// kernel: animal_cnn_forward.5
$region0: #{animal_cnn_forward.5}
  #allocation0 [shape = 'u32[]', space=smem, size = 0x4, offset = 0x4, fixed_abs, tag = 'smem constant byte address 0x4 - core index']
  #allocation1 [shape = 'u32[72,128]{1,0:T(1,128)}', space=vmem, size = 0x9000, scoped, tag = 'internal scratch']
  #allocation2 [shape = 'bf16[64,288]{1,0:T(8,128)(2,1)}', space=vmem, size = 0xc000, scoped, tag = 'scratch operand']
  %s0 = inlined_call_operand.vmem [shape: bf16[2,10,10,32], index: 0, kind: input, shape index: {}]
  %s1 = inlined_call_operand.vmem [shape: bf16[288,64], index: 1, kind: input, shape index: {}]
  %s2 = inlined_call_operand.vmem [shape: f32[1,64], index: 2, kind: input, shape index: {}]
  %s3 = inlined_call_operand.vmem [shape: bf16[2,4,4,64], index: 3, kind: output, shape index: {}]
  %s4 = sld [smem:[#allocation0]]
  $region45: #{animal_cnn_forward.5} parent=0
    _
  %s6 = ssub.s32 1, %s4
  %s7 = scalar_select 0, %s6, %s4
  loop: start=0, step=1, limit=4
  $region2: #{animal_cnn_forward.5} parent=0 // loop_pre_header
    _
  $region3: #{animal_cnn_forward.5} parent=0 // loop_header
    %s9 = sphi 0, %s13
    %p10 = scmp.ge.s32.totalorder %s9, 4
    %s16 = sphi 0, %s28
    %s17 = sphi 0, %s24
    %s18 = sphi 0, %s16
    %s19 = sphi 0, %s17
    %s20 = sphi 0, %s18
    %s21 = sphi 0, %s19
    %s31 = sphi 0, %s33
    %s34 = sphi 0, %s31
    %s35 = sphi 0, %s34
    %s51 = sphi 0, %s35
    %s55 = sphi 0, %s55
    %s57 = sphi 0, %s55
    %s58 = sphi 0, %s57
    %s72 = sphi 0, %s58
    %s76 = sphi 0, %s76
    %s78 = sphi 0, %s76
    %s79 = sphi 0, %s78
    %s93 = sphi 0, %s79
    %s101 = sphi 0, %s103
    %s104 = sphi 0, %s101
    %s105 = sphi 0, %s104
    %s121 = sphi 0, %s105
  $region4: #{animal_cnn_forward.5} parent=0 // loop_header_branch
    %12 = sbr.rel (%p10) target = $region8
  $region5: #{animal_cnn_forward.5} parent=0 // loop_body
    %s14 = ssub.s32 %s9, 1
    %s15 = ssub.s32 %s9, 2
    %s22 = sadd.s32 1, %s17
    %p23 = scmp.ge.s32.totalorder %s22, 1
    %s24 = scalar_select %p23, 0, %s22
    %s25 = sadd.s32 1, %s16
    %s26 = scalar_select %p23, %s25, %s16
    %p27 = scmp.ge.s32.totalorder %s26, 2
    %s28 = scalar_select %p27, 0, %s26
    %s29 = ssub.s32 %s16, %s28
    %p30 = scmp.eq.s32.totalorder %s29, 0
    %s32 = sadd.s32 %s31, 1
    %s33 = scalar_select %p30, %s31, %s32
    %p36 = pneg %p30
    %p37 = scmp.eq.s32.totalorder %s9, 1
    %p38 = por %p36, %p37
    %p39 = scmp.ne.s32.totalorder %s31, %s34
    %p40 = scmp.eq.s32.totalorder %s9, 0
    %p41 = por %p39, %p40
    %p42 = scmp.ne.s32.totalorder %s31, %s34
    %p43 = scmp.eq.s32.totalorder %s14, 1
    %p44 = por %p42, %p43
    %p45 = scmp.ne.s32.totalorder %s34, %s35
    %p46 = scmp.eq.s32.totalorder %s14, 0
    %p47 = por %p45, %p46
    %p48 = scmp.ne.s32.totalorder %s34, %s35
    %p49 = scmp.eq.s32.totalorder %s15, 1
    %p50 = por %p48, %p49
    %p52 = scmp.ne.s32.totalorder %s35, %s51
    %p53 = scmp.eq.s32.totalorder %s15, 0
    %p54 = por %p52, %p53
    %s56 = sadd.s32 %s55, 1
    %p59 = scmp.eq.s32.totalorder %s9, 1
    %p60 = scmp.ne.s32.totalorder %s55, %s57
    %p61 = scmp.eq.s32.totalorder %s9, 0
    %p62 = por %p60, %p61
    %p63 = scmp.ne.s32.totalorder %s55, %s57
    %p64 = scmp.eq.s32.totalorder %s14, 1
    %p65 = por %p63, %p64
    %p66 = scmp.ne.s32.totalorder %s57, %s58
    %p67 = scmp.eq.s32.totalorder %s14, 0
    %p68 = por %p66, %p67
    %p69 = scmp.ne.s32.totalorder %s57, %s58
    %p70 = scmp.eq.s32.totalorder %s15, 1
    %p71 = por %p69, %p70
    %p73 = scmp.ne.s32.totalorder %s58, %s72
    %p74 = scmp.eq.s32.totalorder %s15, 0
    %p75 = por %p73, %p74
    %s77 = sadd.s32 %s76, 1
    %p80 = scmp.eq.s32.totalorder %s9, 1
    %p81 = scmp.ne.s32.totalorder %s76, %s78
    %p82 = scmp.eq.s32.totalorder %s9, 0
    %p83 = por %p81, %p82
    %p84 = scmp.ne.s32.totalorder %s76, %s78
    %p85 = scmp.eq.s32.totalorder %s14, 1
    %p86 = por %p84, %p85
    %p87 = scmp.ne.s32.totalorder %s78, %s79
    %p88 = scmp.eq.s32.totalorder %s14, 0
    %p89 = por %p87, %p88
    %p90 = scmp.ne.s32.totalorder %s78, %s79
    %p91 = scmp.eq.s32.totalorder %s15, 1
    %p92 = por %p90, %p91
    %p94 = scmp.ne.s32.totalorder %s79, %s93
    %p95 = scmp.eq.s32.totalorder %s15, 0
    %p96 = por %p94, %p95
    %s97 = ssub.s32 %s16, %s28
    %s98 = ssub.s32 %s17, %s24
    %s99 = sor.u32 %s97, %s98
    %p100 = scmp.eq.s32.totalorder %s99, 0
    %s102 = sadd.s32 %s101, 1
    %s103 = scalar_select %p100, %s101, %s102
    %p106 = pneg %p100
    %p107 = scmp.eq.s32.totalorder %s9, 1
    %p108 = por %p106, %p107
    %p109 = scmp.ne.s32.totalorder %s101, %s104
    %p110 = scmp.eq.s32.totalorder %s9, 0
    %p111 = por %p109, %p110
    %p112 = scmp.ne.s32.totalorder %s101, %s104
    %p113 = scmp.eq.s32.totalorder %s14, 1
    %p114 = por %p112, %p113
    %p115 = scmp.ne.s32.totalorder %s104, %s105
    %p116 = scmp.eq.s32.totalorder %s14, 0
    %p117 = por %p115, %p116
    %p118 = scmp.ne.s32.totalorder %s104, %s105
    %p119 = scmp.eq.s32.totalorder %s15, 1
    %p120 = por %p118, %p119
    %p122 = scmp.ne.s32.totalorder %s105, %s121
    %p123 = scmp.eq.s32.totalorder %s15, 0
    %p124 = por %p122, %p123
    %p125 = scmp.le.s32.totalorder 1, %s9
    %p126 = scmp.lt.s32.totalorder %s9, 3
    %p127 = pnand %p125, %p126
    %p128 = pneg %p127
    // Predicated region
    $region9: #{animal_cnn_forward.5} parent=5 // pred_check
      _
    $region10: #{animal_cnn_forward.5} parent=5 // pred_check_branch
      %130 = sbr.rel (%p127) target = $region12
    $region11: #{animal_cnn_forward.5} parent=5 // pred_region
      %s131 = ssub.s32 %s9, 1
      // Predicated region
      $region13: #{animal_cnn_forward.5} parent=11 // pred_check
        %p132 = pneg %p68
      $region14: #{animal_cnn_forward.5} parent=11 // pred_check_branch
        %134 = sbr.rel (%p132) target = $region16
      $region15: #{animal_cnn_forward.5} parent=11 // pred_region
        _
      $region16: #{animal_cnn_forward.5} parent=11 // pred_fallthru
        _
      // Predicated region
      $region17: #{animal_cnn_forward.5} parent=11 // pred_check
        %p135 = pneg %p89
      $region18: #{animal_cnn_forward.5} parent=11 // pred_check_branch
        %137 = sbr.rel (%p135) target = $region20
      $region19: #{animal_cnn_forward.5} parent=11 // pred_region
        _
      $region20: #{animal_cnn_forward.5} parent=11 // pred_fallthru
        _
    $region12: #{animal_cnn_forward.5} parent=5 // pred_fallthru
      _
    %p138 = scmp.lt.s32.totalorder %s9, 2
    // Predicated region
    $region21: #{animal_cnn_forward.5} parent=5 // pred_check
      %p139 = pneg %p138
    $region22: #{animal_cnn_forward.5} parent=5 // pred_check_branch
      %141 = sbr.rel (%p139) target = $region24
    $region23: #{animal_cnn_forward.5} parent=5 // pred_region
      // Predicated region
      $region25: #{animal_cnn_forward.5} parent=23 // pred_check
        %p142 = pneg %p41
      $region26: #{animal_cnn_forward.5} parent=23 // pred_check_branch
        %144 = sbr.rel (%p142) target = $region28
      $region27: #{animal_cnn_forward.5} parent=23 // pred_region
        %p145 = scmp.lt.s32.totalorder %s16, 1
        %s146 = scalar_select %p145, %s16, 1
        %s147 = smul.addr %s146, 20
        %s148 = smul.addr %s147, 4
        %s149 = scalar_lea.vmem %s0, %s148
      $region28: #{animal_cnn_forward.5} parent=23 // pred_fallthru
        _
    $region24: #{animal_cnn_forward.5} parent=5 // pred_fallthru
      _
    %p150 = scmp.le.s32.totalorder 1, %s9
    %p151 = scmp.lt.s32.totalorder %s9, 3
    %p152 = pnand %p150, %p151
    %p153 = pneg %p152
    // Predicated region
    $region29: #{animal_cnn_forward.5} parent=5 // pred_check
      _
    $region30: #{animal_cnn_forward.5} parent=5 // pred_check_branch
      %155 = sbr.rel (%p152) target = $region32
    $region31: #{animal_cnn_forward.5} parent=5 // pred_region
      %s156 = ssub.s32 %s9, 1
      %p157 = scmp.lt.s32.totalorder %s18, 1
      %s158 = scalar_select %p157, %s18, 1
      %s159 = smul.addr %s158, 20
      %s160 = smul.addr %s159, 4
      %s161 = scalar_lea.vmem %s0, %s160
      %p162 = pneg %p47
      %p163 = pneg %p44
      %p164 = pneg %p68
      %p165 = pneg %p65
      %p166 = pneg %p89
      %p167 = pneg %p86
      %p168 = pneg %p117
      %p169 = pneg %p114
      %s170 = smul.u32 4, %s19
      %p171 = scmp.lt.s32.totalorder %s18, 1
      %s172 = scalar_select %p171, %s18, 1
      %p173 = scmp.lt.s32.totalorder %s170, 3
      %s174 = scalar_select %p173, %s170, 3
      %s175 = smul.addr %s172, 4
      %s176 = sadd.s32 %s174, %s175
      %s177 = smul.addr %s176, 2
      %s178 = scalar_lea.vmem %s3, %s177
      %p179 = scmp.lt.s32.totalorder %s18, 1
      %s180 = scalar_select %p179, %s18, 1
      %s181 = smul.addr %s180, 20
      %s182 = smul.addr %s181, 4
      %s183 = scalar_lea.vmem %s0, %s182
      %s184 = smul.u32 4, %s19
      %p185 = scmp.lt.s32.totalorder %s18, 1
      %s186 = scalar_select %p185, %s18, 1
      %p187 = scmp.lt.s32.totalorder %s184, 3
      %s188 = scalar_select %p187, %s184, 3
      %s189 = smul.addr %s186, 4
      %s190 = sadd.s32 %s188, %s189
      %s191 = smul.addr %s190, 2
      %s192 = scalar_lea.vmem %s3, %s191
      %s193 = smul.u32 4, %s19
      %s195 = smul.u32 %s19, 8
      %s196 = smul.u32 %s195, 2
      %s197 = smul.addr %s196, 4
      %s198 = scalar_lea.vmem %s183, %s197
      %v199 = vld [vmem:[%s198] sm:$0xf]
      %v200 = vld [vmem:[%s198 + $0x8] sm:$0xf]
      %v201 = vld [vmem:[%s198 + $0x10] sm:$0xf]
      %v202 = vld [vmem:[%s198 + $0x18] sm:$0xf]
      %v203 = vld [vmem:[%s198 + $0x20] sm:$0xf]
      %v204 = vld [vmem:[%s198 + $0x28] sm:$0xf]
      %v205 = vld [vmem:[%s198 + $0x30] sm:$0xf]
      %v206 = vld [vmem:[%s198 + $0x38] sm:$0xf]
      %vm207 = vcmask 257024
      %208 = vst.msk [vmem:[#allocation2] sm:$0xf] %vm207, %v199
      %209 = vst.msk [vmem:[#allocation2 + $0xc] sm:$0xf] %vm207, %v200
      %210 = vst.msk [vmem:[#allocation2 + $0x18] sm:$0xf] %vm207, %v201
      %211 = vst.msk [vmem:[#allocation2 + $0x24] sm:$0xf] %vm207, %v202
      %212 = vst.msk [vmem:[#allocation2 + $0x30] sm:$0xf] %vm207, %v203
      %213 = vst.msk [vmem:[#allocation2 + $0x3c] sm:$0xf] %vm207, %v204
      %214 = vst.msk [vmem:[#allocation2 + $0x48] sm:$0xf] %vm207, %v205
      %215 = vst.msk [vmem:[#allocation2 + $0x54] sm:$0xf] %vm207, %v206
      %v216 = vld [vmem:[%s198] sm:$0xf]
      %v217 = vld [vmem:[%s198 + $0x4] sm:$0x1]
      %v218 = vld [vmem:[%s198 + $0x8] sm:$0xf]
      %v219 = vld [vmem:[%s198 + $0xc] sm:$0x1]
      %v220 = vld [vmem:[%s198 + $0x10] sm:$0xf]
      %v221 = vld [vmem:[%s198 + $0x14] sm:$0x1]
      %v222 = vld [vmem:[%s198 + $0x18] sm:$0xf]
      %v223 = vld [vmem:[%s198 + $0x1c] sm:$0x1]
      %v224 = vld [vmem:[%s198 + $0x20] sm:$0xf]
      %v225 = vld [vmem:[%s198 + $0x24] sm:$0x1]
      %v226 = vld [vmem:[%s198 + $0x28] sm:$0xf]
      %v227 = vld [vmem:[%s198 + $0x2c] sm:$0x1]
      %v228 = vld [vmem:[%s198 + $0x30] sm:$0xf]
      %v229 = vld [vmem:[%s198 + $0x34] sm:$0x1]
      %v230 = vld [vmem:[%s198 + $0x38] sm:$0xf]
      %v231 = vld [vmem:[%s198 + $0x3c] sm:$0x1]
      %vm232 = vsmask.f32 3328
      %vm233 = vsmask.f32 7440
      %vm234 = vmor %vm232, %vm233
      %v236 = vshrl.u32 %v216, 16
      %v238 = vrot.slane %v236, 4
      %v239 = vshll.u32 %v216, 16
      %v241 = vrot.slane %v239, 5
      %v242 = vor.u32 %v238, %v241
      %v243 = vrot.slane %v242, 4
      %v245 = vshll.u32 %v217, 16
      %v247 = vrot.slane %v245, 5
      %v248 = vsel %vm234, %v243, %v247
      %v250 = vshrl.u32 %v218, 16
      %v252 = vrot.slane %v250, 4
      %v253 = vshll.u32 %v218, 16
      %v255 = vrot.slane %v253, 5
      %v256 = vor.u32 %v252, %v255
      %v257 = vrot.slane %v256, 4
      %v259 = vshll.u32 %v219, 16
      %v261 = vrot.slane %v259, 5
      %v262 = vsel %vm234, %v257, %v261
      %v264 = vshrl.u32 %v220, 16
      %v266 = vrot.slane %v264, 4
      %v267 = vshll.u32 %v220, 16
      %v269 = vrot.slane %v267, 5
      %v270 = vor.u32 %v266, %v269
      %v271 = vrot.slane %v270, 4
      %v273 = vshll.u32 %v221, 16
      %v275 = vrot.slane %v273, 5
      %v276 = vsel %vm234, %v271, %v275
      %v278 = vshrl.u32 %v222, 16
      %v280 = vrot.slane %v278, 4
      %v281 = vshll.u32 %v222, 16
      %v283 = vrot.slane %v281, 5
      %v284 = vor.u32 %v280, %v283
      %v285 = vrot.slane %v284, 4
      %v287 = vshll.u32 %v223, 16
      %v289 = vrot.slane %v287, 5
      %v290 = vsel %vm234, %v285, %v289
      %v292 = vshrl.u32 %v224, 16
      %v294 = vrot.slane %v292, 4
      %v295 = vshll.u32 %v224, 16
      %v297 = vrot.slane %v295, 5
      %v298 = vor.u32 %v294, %v297
      %v299 = vrot.slane %v298, 4
      %v301 = vshll.u32 %v225, 16
      %v303 = vrot.slane %v301, 5
      %v304 = vsel %vm234, %v299, %v303
      %v306 = vshrl.u32 %v226, 16
      %v308 = vrot.slane %v306, 4
      %v309 = vshll.u32 %v226, 16
      %v311 = vrot.slane %v309, 5
      %v312 = vor.u32 %v308, %v311
      %v313 = vrot.slane %v312, 4
      %v315 = vshll.u32 %v227, 16
      %v317 = vrot.slane %v315, 5
      %v318 = vsel %vm234, %v313, %v317
      %v320 = vshrl.u32 %v228, 16
      %v322 = vrot.slane %v320, 4
      %v323 = vshll.u32 %v228, 16
      %v325 = vrot.slane %v323, 5
      %v326 = vor.u32 %v322, %v325
      %v327 = vrot.slane %v326, 4
      %v329 = vshll.u32 %v229, 16
      %v331 = vrot.slane %v329, 5
      %v332 = vsel %vm234, %v327, %v331
      %v334 = vshrl.u32 %v230, 16
      %v336 = vrot.slane %v334, 4
      %v337 = vshll.u32 %v230, 16
      %v339 = vrot.slane %v337, 5
      %v340 = vor.u32 %v336, %v339
      %v341 = vrot.slane %v340, 4
      %v343 = vshll.u32 %v231, 16
      %v345 = vrot.slane %v343, 5
      %v346 = vsel %vm234, %v341, %v345
      %347 = vrot.lane.b32.xlu0 %v248, 32
      %v348 = vpop.permute.xlu0 %347
      %349 = vrot.lane.b32.xlu0 %v262, 32
      %v350 = vpop.permute.xlu0 %349
      %351 = vrot.lane.b32.xlu0 %v276, 32
      %v352 = vpop.permute.xlu0 %351
      %353 = vrot.lane.b32.xlu0 %v290, 32
      %v354 = vpop.permute.xlu0 %353
      %355 = vrot.lane.b32.xlu0 %v304, 32
      %v356 = vpop.permute.xlu0 %355
      %357 = vrot.lane.b32.xlu0 %v318, 32
      %v358 = vpop.permute.xlu0 %357
      %359 = vrot.lane.b32.xlu0 %v332, 32
      %v360 = vpop.permute.xlu0 %359
      %361 = vrot.lane.b32.xlu0 %v346, 32
      %v362 = vpop.permute.xlu0 %361
      %vm371 = vcmask 519424
      %372 = vst.msk [vmem:[#allocation2] sm:$0xf] %vm371, %v348
      %373 = vst.msk [vmem:[#allocation2 + $0xc] sm:$0xf] %vm371, %v350
      %374 = vst.msk [vmem:[#allocation2 + $0x18] sm:$0xf] %vm371, %v352
      %375 = vst.msk [vmem:[#allocation2 + $0x24] sm:$0xf] %vm371, %v354
      %376 = vst.msk [vmem:[#allocation2 + $0x30] sm:$0xf] %vm371, %v356
      %377 = vst.msk [vmem:[#allocation2 + $0x3c] sm:$0xf] %vm371, %v358
      %378 = vst.msk [vmem:[#allocation2 + $0x48] sm:$0xf] %vm371, %v360
      %379 = vst.msk [vmem:[#allocation2 + $0x54] sm:$0xf] %vm371, %v362
      %v380 = vld [vmem:[%s198] sm:$0xe]
      %v381 = vld [vmem:[%s198 + $0x4] sm:$0x1]
      %v382 = vld [vmem:[%s198 + $0x8] sm:$0xe]
      %v383 = vld [vmem:[%s198 + $0xc] sm:$0x1]
      %v384 = vld [vmem:[%s198 + $0x10] sm:$0xe]
      %v385 = vld [vmem:[%s198 + $0x14] sm:$0x1]
      %v386 = vld [vmem:[%s198 + $0x18] sm:$0xe]
      %v387 = vld [vmem:[%s198 + $0x1c] sm:$0x1]
      %v388 = vld [vmem:[%s198 + $0x20] sm:$0xe]
      %v389 = vld [vmem:[%s198 + $0x24] sm:$0x1]
      %v390 = vld [vmem:[%s198 + $0x28] sm:$0xe]
      %v391 = vld [vmem:[%s198 + $0x2c] sm:$0x1]
      %v392 = vld [vmem:[%s198 + $0x30] sm:$0xe]
      %v393 = vld [vmem:[%s198 + $0x34] sm:$0x1]
      %v394 = vld [vmem:[%s198 + $0x38] sm:$0xe]
      %v395 = vld [vmem:[%s198 + $0x3c] sm:$0x1]
      %vm412 = vcmask 1042432
      %vm413 = vcmask 1046532
      %vm414 = vmor %vm412, %vm413
      %v415 = vrot.slane %v380, 5
      %v416 = vrot.slane %v415, 4
      %v417 = vrot.slane %v381, 5
      %v418 = vsel %vm414, %v416, %v417
      %v419 = vrot.slane %v382, 5
      %v420 = vrot.slane %v419, 4
      %v421 = vrot.slane %v383, 5
      %v422 = vsel %vm414, %v420, %v421
      %v423 = vrot.slane %v384, 5
      %v424 = vrot.slane %v423, 4
      %v425 = vrot.slane %v385, 5
      %v426 = vsel %vm414, %v424, %v425
      %v427 = vrot.slane %v386, 5
      %v428 = vrot.slane %v427, 4
      %v429 = vrot.slane %v387, 5
      %v430 = vsel %vm414, %v428, %v429
      %v431 = vrot.slane %v388, 5
      %v432 = vrot.slane %v431, 4
      %v433 = vrot.slane %v389, 5
      %v434 = vsel %vm414, %v432, %v433
      %v435 = vrot.slane %v390, 5
      %v436 = vrot.slane %v435, 4
      %v437 = vrot.slane %v391, 5
      %v438 = vsel %vm414, %v436, %v437
      %v439 = vrot.slane %v392, 5
      %v440 = vrot.slane %v439, 4
      %v441 = vrot.slane %v393, 5
      %v442 = vsel %vm414, %v440, %v441
      %v443 = vrot.slane %v394, 5
      %v444 = vrot.slane %v443, 4
      %v445 = vrot.slane %v395, 5
      %v446 = vsel %vm414, %v444, %v445
      %447 = vrot.lane.b32.xlu0 %v418, 64
      %v448 = vpop.permute.xlu0 %447
      %449 = vrot.lane.b32.xlu0 %v422, 64
      %v450 = vpop.permute.xlu0 %449
      %451 = vrot.lane.b32.xlu0 %v426, 64
      %v452 = vpop.permute.xlu0 %451
      %453 = vrot.lane.b32.xlu0 %v430, 64
      %v454 = vpop.permute.xlu0 %453
      %455 = vrot.lane.b32.xlu0 %v434, 64
      %v456 = vpop.permute.xlu0 %455
      %457 = vrot.lane.b32.xlu0 %v438, 64
      %v458 = vpop.permute.xlu0 %457
      %459 = vrot.lane.b32.xlu0 %v442, 64
      %v460 = vpop.permute.xlu0 %459
      %461 = vrot.lane.b32.xlu0 %v446, 64
      %v462 = vpop.permute.xlu0 %461
      %vm471 = vcmask 781824
      %472 = vst.msk [vmem:[#allocation2] sm:$0xf] %vm471, %v448
      %473 = vst.msk [vmem:[#allocation2 + $0xc] sm:$0xf] %vm471, %v450
      %474 = vst.msk [vmem:[#allocation2 + $0x18] sm:$0xf] %vm471, %v452
      %475 = vst.msk [vmem:[#allocation2 + $0x24] sm:$0xf] %vm471, %v454
      %476 = vst.msk [vmem:[#allocation2 + $0x30] sm:$0xf] %vm471, %v456
      %477 = vst.msk [vmem:[#allocation2 + $0x3c] sm:$0xf] %vm471, %v458
      %478 = vst.msk [vmem:[#allocation2 + $0x48] sm:$0xf] %vm471, %v460
      %479 = vst.msk [vmem:[#allocation2 + $0x54] sm:$0xf] %vm471, %v462
      %s480 = sadd.s32 %s195, 1
      %s481 = smul.u32 %s480, 2
      %s482 = smul.addr %s481, 4
      %s483 = scalar_lea.vmem %s183, %s482
      %v484 = vld [vmem:[%s483] sm:$0xf]
      %v485 = vld [vmem:[%s483 + $0x8] sm:$0xf]
      %v486 = vld [vmem:[%s483 + $0x10] sm:$0xf]
      %v487 = vld [vmem:[%s483 + $0x18] sm:$0xf]
      %v488 = vld [vmem:[%s483 + $0x20] sm:$0xf]
      %v489 = vld [vmem:[%s483 + $0x28] sm:$0xf]
      %v490 = vld [vmem:[%s483 + $0x30] sm:$0xf]
      %v491 = vld [vmem:[%s483 + $0x38] sm:$0xf]
      %500 = vrot.lane.b32.xlu0 %v484, 96
      %v501 = vpop.permute.xlu0 %500
      %502 = vrot.lane.b32.xlu0 %v485, 96
      %v503 = vpop.permute.xlu0 %502
      %504 = vrot.lane.b32.xlu0 %v486, 96
      %v505 = vpop.permute.xlu0 %504
      %506 = vrot.lane.b32.xlu0 %v487, 96
      %v507 = vpop.permute.xlu0 %506
      %508 = vrot.lane.b32.xlu0 %v488, 96
      %v509 = vpop.permute.xlu0 %508
      %510 = vrot.lane.b32.xlu0 %v489, 96
      %v511 = vpop.permute.xlu0 %510
      %512 = vrot.lane.b32.xlu0 %v490, 96
      %v513 = vpop.permute.xlu0 %512
      %514 = vrot.lane.b32.xlu0 %v491, 96
      %v515 = vpop.permute.xlu0 %514
      %vm524 = vcmask 1044224
      %525 = vst.msk [vmem:[#allocation2] sm:$0xf] %vm524, %v501
      %526 = vst.msk [vmem:[#allocation2 + $0xc] sm:$0xf] %vm524, %v503
      %527 = vst.msk [vmem:[#allocation2 + $0x18] sm:$0xf] %vm524, %v505
      %528 = vst.msk [vmem:[#allocation2 + $0x24] sm:$0xf] %vm524, %v507
      %529 = vst.msk [vmem:[#allocation2 + $0x30] sm:$0xf] %vm524, %v509
      %530 = vst.msk [vmem:[#allocation2 + $0x3c] sm:$0xf] %vm524, %v511
      %531 = vst.msk [vmem:[#allocation2 + $0x48] sm:$0xf] %vm524, %v513
      %532 = vst.msk [vmem:[#allocation2 + $0x54] sm:$0xf] %vm524, %v515
      %v533 = vld [vmem:[%s483] sm:$0xf]
      %v534 = vld [vmem:[%s483 + $0x4] sm:$0x1]
      %v535 = vld [vmem:[%s483 + $0x8] sm:$0xf]
      %v536 = vld [vmem:[%s483 + $0xc] sm:$0x1]
      %v537 = vld [vmem:[%s483 + $0x10] sm:$0xf]
      %v538 = vld [vmem:[%s483 + $0x14] sm:$0x1]
      %v539 = vld [vmem:[%s483 + $0x18] sm:$0xf]
      %v540 = vld [vmem:[%s483 + $0x1c] sm:$0x1]
      %v541 = vld [vmem:[%s483 + $0x20] sm:$0xf]
      %v542 = vld [vmem:[%s483 + $0x24] sm:$0x1]
      %v543 = vld [vmem:[%s483 + $0x28] sm:$0xf]
      %v544 = vld [vmem:[%s483 + $0x2c] sm:$0x1]
      %v545 = vld [vmem:[%s483 + $0x30] sm:$0xf]
      %v546 = vld [vmem:[%s483 + $0x34] sm:$0x1]
      %v547 = vld [vmem:[%s483 + $0x38] sm:$0xf]
      %v548 = vld [vmem:[%s483 + $0x3c] sm:$0x1]
      %v550 = vshrl.u32 %v533, 16
      %v552 = vrot.slane %v550, 4
      %v553 = vshll.u32 %v533, 16
      %v555 = vrot.slane %v553, 5
      %v556 = vor.u32 %v552, %v555
      %v557 = vrot.slane %v556, 4
      %v559 = vshll.u32 %v534, 16
      %v561 = vrot.slane %v559, 5
      %v562 = vsel %vm234, %v557, %v561
      %v564 = vshrl.u32 %v535, 16
      %v566 = vrot.slane %v564, 4
      %v567 = vshll.u32 %v535, 16
      %v569 = vrot.slane %v567, 5
      %v570 = vor.u32 %v566, %v569
      %v571 = vrot.slane %v570, 4
      %v573 = vshll.u32 %v536, 16
      %v575 = vrot.slane %v573, 5
      %v576 = vsel %vm234, %v571, %v575
      %v578 = vshrl.u32 %v537, 16
      %v580 = vrot.slane %v578, 4
      %v581 = vshll.u32 %v537, 16
      %v583 = vrot.slane %v581, 5
      %v584 = vor.u32 %v580, %v583
      %v585 = vrot.slane %v584, 4
      %v587 = vshll.u32 %v538, 16
      %v589 = vrot.slane %v587, 5
      %v590 = vsel %vm234, %v585, %v589
      %v592 = vshrl.u32 %v539, 16
      %v594 = vrot.slane %v592, 4
      %v595 = vshll.u32 %v539, 16
      %v597 = vrot.slane %v595, 5
      %v598 = vor.u32 %v594, %v597
      %v599 = vrot.slane %v598, 4
      %v601 = vshll.u32 %v540, 16
      %v603 = vrot.slane %v601, 5
      %v604 = vsel %vm234, %v599, %v603
      %v606 = vshrl.u32 %v541, 16
      %v608 = vrot.slane %v606, 4
      %v609 = vshll.u32 %v541, 16
      %v611 = vrot.slane %v609, 5
      %v612 = vor.u32 %v608, %v611
      %v613 = vrot.slane %v612, 4
      %v615 = vshll.u32 %v542, 16
      %v617 = vrot.slane %v615, 5
      %v618 = vsel %vm234, %v613, %v617
      %v620 = vshrl.u32 %v543, 16
      %v622 = vrot.slane %v620, 4
      %v623 = vshll.u32 %v543, 16
      %v625 = vrot.slane %v623, 5
      %v626 = vor.u32 %v622, %v625
      %v627 = vrot.slane %v626, 4
      %v629 = vshll.u32 %v544, 16
      %v631 = vrot.slane %v629, 5
      %v632 = vsel %vm234, %v627, %v631
      %v634 = vshrl.u32 %v545, 16
      %v636 = vrot.slane %v634, 4
      %v637 = vshll.u32 %v545, 16
      %v639 = vrot.slane %v637, 5
      %v640 = vor.u32 %v636, %v639
      %v641 = vrot.slane %v640, 4
      %v643 = vshll.u32 %v546, 16
      %v645 = vrot.slane %v643, 5
      %v646 = vsel %vm234, %v641, %v645
      %v648 = vshrl.u32 %v547, 16
      %v650 = vrot.slane %v648, 4
      %v651 = vshll.u32 %v547, 16
      %v653 = vrot.slane %v651, 5
      %v654 = vor.u32 %v650, %v653
      %v655 = vrot.slane %v654, 4
      %v657 = vshll.u32 %v548, 16
      %v659 = vrot.slane %v657, 5
      %v660 = vsel %vm234, %v655, %v659
      %669 = vst.msk [vmem:[#allocation2 + $0x4] sm:$0xf] %vm207, %v562
      %670 = vst.msk [vmem:[#allocation2 + $0x10] sm:$0xf] %vm207, %v576
      %671 = vst.msk [vmem:[#allocation2 + $0x1c] sm:$0xf] %vm207, %v590
      %672 = vst.msk [vmem:[#allocation2 + $0x28] sm:$0xf] %vm207, %v604
      %673 = vst.msk [vmem:[#allocation2 + $0x34] sm:$0xf] %vm207, %v618
      %674 = vst.msk [vmem:[#allocation2 + $0x40] sm:$0xf] %vm207, %v632
      %675 = vst.msk [vmem:[#allocation2 + $0x4c] sm:$0xf] %vm207, %v646
      %676 = vst.msk [vmem:[#allocation2 + $0x58] sm:$0xf] %vm207, %v660
      %v677 = vld [vmem:[%s483] sm:$0xe]
      %v678 = vld [vmem:[%s483 + $0x4] sm:$0x1]
      %v679 = vld [vmem:[%s483 + $0x8] sm:$0xe]
      %v680 = vld [vmem:[%s483 + $0xc] sm:$0x1]
      %v681 = vld [vmem:[%s483 + $0x10] sm:$0xe]
      %v682 = vld [vmem:[%s483 + $0x14] sm:$0x1]
      %v683 = vld [vmem:[%s483 + $0x18] sm:$0xe]
      %v684 = vld [vmem:[%s483 + $0x1c] sm:$0x1]
      %v685 = vld [vmem:[%s483 + $0x20] sm:$0xe]
      %v686 = vld [vmem:[%s483 + $0x24] sm:$0x1]
      %v687 = vld [vmem:[%s483 + $0x28] sm:$0xe]
      %v688 = vld [vmem:[%s483 + $0x2c] sm:$0x1]
      %v689 = vld [vmem:[%s483 + $0x30] sm:$0xe]
      %v690 = vld [vmem:[%s483 + $0x34] sm:$0x1]
      %v691 = vld [vmem:[%s483 + $0x38] sm:$0xe]
      %v692 = vld [vmem:[%s483 + $0x3c] sm:$0x1]
      %v709 = vrot.slane %v677, 5
      %v710 = vrot.slane %v709, 4
      %v711 = vrot.slane %v678, 5
      %v712 = vsel %vm414, %v710, %v711
      %v713 = vrot.slane %v679, 5
      %v714 = vrot.slane %v713, 4
      %v715 = vrot.slane %v680, 5
      %v716 = vsel %vm414, %v714, %v715
      %v717 = vrot.slane %v681, 5
      %v718 = vrot.slane %v717, 4
      %v719 = vrot.slane %v682, 5
      %v720 = vsel %vm414, %v718, %v719
      %v721 = vrot.slane %v683, 5
      %v722 = vrot.slane %v721, 4
      %v723 = vrot.slane %v684, 5
      %v724 = vsel %vm414, %v722, %v723
      %v725 = vrot.slane %v685, 5
      %v726 = vrot.slane %v725, 4
      %v727 = vrot.slane %v686, 5
      %v728 = vsel %vm414, %v726, %v727
      %v729 = vrot.slane %v687, 5
      %v730 = vrot.slane %v729, 4
      %v731 = vrot.slane %v688, 5
      %v732 = vsel %vm414, %v730, %v731
      %v733 = vrot.slane %v689, 5
      %v734 = vrot.slane %v733, 4
      %v735 = vrot.slane %v690, 5
      %v736 = vsel %vm414, %v734, %v735
      %v737 = vrot.slane %v691, 5
      %v738 = vrot.slane %v737, 4
      %v739 = vrot.slane %v692, 5
      %v740 = vsel %vm414, %v738, %v739
      %741 = vrot.lane.b32.xlu0 %v712, 32
      %v742 = vpop.permute.xlu0 %741
      %743 = vrot.lane.b32.xlu0 %v716, 32
      %v744 = vpop.permute.xlu0 %743
      %745 = vrot.lane.b32.xlu0 %v720, 32
      %v746 = vpop.permute.xlu0 %745
      %747 = vrot.lane.b32.xlu0 %v724, 32
      %v748 = vpop.permute.xlu0 %747
      %749 = vrot.lane.b32.xlu0 %v728, 32
      %v750 = vpop.permute.xlu0 %749
      %751 = vrot.lane.b32.xlu0 %v732, 32
      %v752 = vpop.permute.xlu0 %751
      %753 = vrot.lane.b32.xlu0 %v736, 32
      %v754 = vpop.permute.xlu0 %753
      %755 = vrot.lane.b32.xlu0 %v740, 32
      %v756 = vpop.permute.xlu0 %755
      %765 = vst.msk [vmem:[#allocation2 + $0x4] sm:$0xf] %vm371, %v742
      %766 = vst.msk [vmem:[#allocation2 + $0x10] sm:$0xf] %vm371, %v744
      %767 = vst.msk [vmem:[#allocation2 + $0x1c] sm:$0xf] %vm371, %v746
      %768 = vst.msk [vmem:[#allocation2 + $0x28] sm:$0xf] %vm371, %v748
      %769 = vst.msk [vmem:[#allocation2 + $0x34] sm:$0xf] %vm371, %v750
      %770 = vst.msk [vmem:[#allocation2 + $0x40] sm:$0xf] %vm371, %v752
      %771 = vst.msk [vmem:[#allocation2 + $0x4c] sm:$0xf] %vm371, %v754
      %772 = vst.msk [vmem:[#allocation2 + $0x58] sm:$0xf] %vm371, %v756
      %s773 = sadd.s32 %s195, 2
      %s774 = smul.u32 %s773, 2
      %s775 = smul.addr %s774, 4
      %s776 = scalar_lea.vmem %s183, %s775
      %v777 = vld [vmem:[%s776] sm:$0xf]
      %v778 = vld [vmem:[%s776 + $0x8] sm:$0xf]
      %v779 = vld [vmem:[%s776 + $0x10] sm:$0xf]
      %v780 = vld [vmem:[%s776 + $0x18] sm:$0xf]
      %v781 = vld [vmem:[%s776 + $0x20] sm:$0xf]
      %v782 = vld [vmem:[%s776 + $0x28] sm:$0xf]
      %v783 = vld [vmem:[%s776 + $0x30] sm:$0xf]
      %v784 = vld [vmem:[%s776 + $0x38] sm:$0xf]
      %793 = vrot.lane.b32.xlu0 %v777, 64
      %v794 = vpop.permute.xlu0 %793
      %795 = vrot.lane.b32.xlu0 %v778, 64
      %v796 = vpop.permute.xlu0 %795
      %797 = vrot.lane.b32.xlu0 %v779, 64
      %v798 = vpop.permute.xlu0 %797
      %799 = vrot.lane.b32.xlu0 %v780, 64
      %v800 = vpop.permute.xlu0 %799
      %801 = vrot.lane.b32.xlu0 %v781, 64
      %v802 = vpop.permute.xlu0 %801
      %803 = vrot.lane.b32.xlu0 %v782, 64
      %v804 = vpop.permute.xlu0 %803
      %805 = vrot.lane.b32.xlu0 %v783, 64
      %v806 = vpop.permute.xlu0 %805
      %807 = vrot.lane.b32.xlu0 %v784, 64
      %v808 = vpop.permute.xlu0 %807
      %817 = vst.msk [vmem:[#allocation2 + $0x4] sm:$0xf] %vm471, %v794
      %818 = vst.msk [vmem:[#allocation2 + $0x10] sm:$0xf] %vm471, %v796
      %819 = vst.msk [vmem:[#allocation2 + $0x1c] sm:$0xf] %vm471, %v798
      %820 = vst.msk [vmem:[#allocation2 + $0x28] sm:$0xf] %vm471, %v800
      %821 = vst.msk [vmem:[#allocation2 + $0x34] sm:$0xf] %vm471, %v802
      %822 = vst.msk [vmem:[#allocation2 + $0x40] sm:$0xf] %vm471, %v804
      %823 = vst.msk [vmem:[#allocation2 + $0x4c] sm:$0xf] %vm471, %v806
      %824 = vst.msk [vmem:[#allocation2 + $0x58] sm:$0xf] %vm471, %v808
      %v825 = vld [vmem:[%s776] sm:$0xf]
      %v826 = vld [vmem:[%s776 + $0x4] sm:$0x1]
      %v827 = vld [vmem:[%s776 + $0x8] sm:$0xf]
      %v828 = vld [vmem:[%s776 + $0xc] sm:$0x1]
      %v829 = vld [vmem:[%s776 + $0x10] sm:$0xf]
      %v830 = vld [vmem:[%s776 + $0x14] sm:$0x1]
      %v831 = vld [vmem:[%s776 + $0x18] sm:$0xf]
      %v832 = vld [vmem:[%s776 + $0x1c] sm:$0x1]
      %v833 = vld [vmem:[%s776 + $0x20] sm:$0xf]
      %v834 = vld [vmem:[%s776 + $0x24] sm:$0x1]
      %v835 = vld [vmem:[%s776 + $0x28] sm:$0xf]
      %v836 = vld [vmem:[%s776 + $0x2c] sm:$0x1]
      %v837 = vld [vmem:[%s776 + $0x30] sm:$0xf]
      %v838 = vld [vmem:[%s776 + $0x34] sm:$0x1]
      %v839 = vld [vmem:[%s776 + $0x38] sm:$0xf]
      %v840 = vld [vmem:[%s776 + $0x3c] sm:$0x1]
      %v842 = vshrl.u32 %v825, 16
      %v844 = vrot.slane %v842, 4
      %v845 = vshll.u32 %v825, 16
      %v847 = vrot.slane %v845, 5
      %v848 = vor.u32 %v844, %v847
      %v849 = vrot.slane %v848, 4
      %v851 = vshll.u32 %v826, 16
      %v853 = vrot.slane %v851, 5
      %v854 = vsel %vm234, %v849, %v853
      %v856 = vshrl.u32 %v827, 16
      %v858 = vrot.slane %v856, 4
      %v859 = vshll.u32 %v827, 16
      %v861 = vrot.slane %v859, 5
      %v862 = vor.u32 %v858, %v861
      %v863 = vrot.slane %v862, 4
      %v865 = vshll.u32 %v828, 16
      %v867 = vrot.slane %v865, 5
      %v868 = vsel %vm234, %v863, %v867
      %v870 = vshrl.u32 %v829, 16
      %v872 = vrot.slane %v870, 4
      %v873 = vshll.u32 %v829, 16
      %v875 = vrot.slane %v873, 5
      %v876 = vor.u32 %v872, %v875
      %v877 = vrot.slane %v876, 4
      %v879 = vshll.u32 %v830, 16
      %v881 = vrot.slane %v879, 5
      %v882 = vsel %vm234, %v877, %v881
      %v884 = vshrl.u32 %v831, 16
      %v886 = vrot.slane %v884, 4
      %v887 = vshll.u32 %v831, 16
      %v889 = vrot.slane %v887, 5
      %v890 = vor.u32 %v886, %v889
      %v891 = vrot.slane %v890, 4
      %v893 = vshll.u32 %v832, 16
      %v895 = vrot.slane %v893, 5
      %v896 = vsel %vm234, %v891, %v895
      %v898 = vshrl.u32 %v833, 16
      %v900 = vrot.slane %v898, 4
      %v901 = vshll.u32 %v833, 16
      %v903 = vrot.slane %v901, 5
      %v904 = vor.u32 %v900, %v903
      %v905 = vrot.slane %v904, 4
      %v907 = vshll.u32 %v834, 16
      %v909 = vrot.slane %v907, 5
      %v910 = vsel %vm234, %v905, %v909
      %v912 = vshrl.u32 %v835, 16
      %v914 = vrot.slane %v912, 4
      %v915 = vshll.u32 %v835, 16
      %v917 = vrot.slane %v915, 5
      %v918 = vor.u32 %v914, %v917
      %v919 = vrot.slane %v918, 4
      %v921 = vshll.u32 %v836, 16
      %v923 = vrot.slane %v921, 5
      %v924 = vsel %vm234, %v919, %v923
      %v926 = vshrl.u32 %v837, 16
      %v928 = vrot.slane %v926, 4
      %v929 = vshll.u32 %v837, 16
      %v931 = vrot.slane %v929, 5
      %v932 = vor.u32 %v928, %v931
      %v933 = vrot.slane %v932, 4
      %v935 = vshll.u32 %v838, 16
      %v937 = vrot.slane %v935, 5
      %v938 = vsel %vm234, %v933, %v937
      %v940 = vshrl.u32 %v839, 16
      %v942 = vrot.slane %v940, 4
      %v943 = vshll.u32 %v839, 16
      %v945 = vrot.slane %v943, 5
      %v946 = vor.u32 %v942, %v945
      %v947 = vrot.slane %v946, 4
      %v949 = vshll.u32 %v840, 16
      %v951 = vrot.slane %v949, 5
      %v952 = vsel %vm234, %v947, %v951
      %953 = vrot.lane.b32.xlu0 %v854, 96
      %v954 = vpop.permute.xlu0 %953
      %955 = vrot.lane.b32.xlu0 %v868, 96
      %v956 = vpop.permute.xlu0 %955
      %957 = vrot.lane.b32.xlu0 %v882, 96
      %v958 = vpop.permute.xlu0 %957
      %959 = vrot.lane.b32.xlu0 %v896, 96
      %v960 = vpop.permute.xlu0 %959
      %961 = vrot.lane.b32.xlu0 %v910, 96
      %v962 = vpop.permute.xlu0 %961
      %963 = vrot.lane.b32.xlu0 %v924, 96
      %v964 = vpop.permute.xlu0 %963
      %965 = vrot.lane.b32.xlu0 %v938, 96
      %v966 = vpop.permute.xlu0 %965
      %967 = vrot.lane.b32.xlu0 %v952, 96
      %v968 = vpop.permute.xlu0 %967
      %977 = vst.msk [vmem:[#allocation2 + $0x4] sm:$0xf] %vm524, %v954
      %978 = vst.msk [vmem:[#allocation2 + $0x10] sm:$0xf] %vm524, %v956
      %979 = vst.msk [vmem:[#allocation2 + $0x1c] sm:$0xf] %vm524, %v958
      %980 = vst.msk [vmem:[#allocation2 + $0x28] sm:$0xf] %vm524, %v960
      %981 = vst.msk [vmem:[#allocation2 + $0x34] sm:$0xf] %vm524, %v962
      %982 = vst.msk [vmem:[#allocation2 + $0x40] sm:$0xf] %vm524, %v964
      %983 = vst.msk [vmem:[#allocation2 + $0x4c] sm:$0xf] %vm524, %v966
      %984 = vst.msk [vmem:[#allocation2 + $0x58] sm:$0xf] %vm524, %v968
      %v985 = vld [vmem:[%s776] sm:$0xe]
      %v986 = vld [vmem:[%s776 + $0x4] sm:$0x1]
      %v987 = vld [vmem:[%s776 + $0x8] sm:$0xe]
      %v988 = vld [vmem:[%s776 + $0xc] sm:$0x1]
      %v989 = vld [vmem:[%s776 + $0x10] sm:$0xe]
      %v990 = vld [vmem:[%s776 + $0x14] sm:$0x1]
      %v991 = vld [vmem:[%s776 + $0x18] sm:$0xe]
      %v992 = vld [vmem:[%s776 + $0x1c] sm:$0x1]
      %v993 = vld [vmem:[%s776 + $0x20] sm:$0xe]
      %v994 = vld [vmem:[%s776 + $0x24] sm:$0x1]
      %v995 = vld [vmem:[%s776 + $0x28] sm:$0xe]
      %v996 = vld [vmem:[%s776 + $0x2c] sm:$0x1]
      %v997 = vld [vmem:[%s776 + $0x30] sm:$0xe]
      %v998 = vld [vmem:[%s776 + $0x34] sm:$0x1]
      %v999 = vld [vmem:[%s776 + $0x38] sm:$0xe]
      %v1000 = vld [vmem:[%s776 + $0x3c] sm:$0x1]
      %v1017 = vrot.slane %v985, 5
      %v1018 = vrot.slane %v1017, 4
      %v1019 = vrot.slane %v986, 5
      %v1020 = vsel %vm414, %v1018, %v1019
      %v1021 = vrot.slane %v987, 5
      %v1022 = vrot.slane %v1021, 4
      %v1023 = vrot.slane %v988, 5
      %v1024 = vsel %vm414, %v1022, %v1023
      %v1025 = vrot.slane %v989, 5
      %v1026 = vrot.slane %v1025, 4
      %v1027 = vrot.slane %v990, 5
      %v1028 = vsel %vm414, %v1026, %v1027
      %v1029 = vrot.slane %v991, 5
      %v1030 = vrot.slane %v1029, 4
      %v1031 = vrot.slane %v992, 5
      %v1032 = vsel %vm414, %v1030, %v1031
      %v1033 = vrot.slane %v993, 5
      %v1034 = vrot.slane %v1033, 4
      %v1035 = vrot.slane %v994, 5
      %v1036 = vsel %vm414, %v1034, %v1035
      %v1037 = vrot.slane %v995, 5
      %v1038 = vrot.slane %v1037, 4
      %v1039 = vrot.slane %v996, 5
      %v1040 = vsel %vm414, %v1038, %v1039
      %v1041 = vrot.slane %v997, 5
      %v1042 = vrot.slane %v1041, 4
      %v1043 = vrot.slane %v998, 5
      %v1044 = vsel %vm414, %v1042, %v1043
      %v1045 = vrot.slane %v999, 5
      %v1046 = vrot.slane %v1045, 4
      %v1047 = vrot.slane %v1000, 5
      %v1048 = vsel %vm414, %v1046, %v1047
      %1057 = vst.msk [vmem:[#allocation2 + $0x8] sm:$0xf] %vm207, %v1020
      %1058 = vst.msk [vmem:[#allocation2 + $0x14] sm:$0xf] %vm207, %v1024
      %1059 = vst.msk [vmem:[#allocation2 + $0x20] sm:$0xf] %vm207, %v1028
      %1060 = vst.msk [vmem:[#allocation2 + $0x2c] sm:$0xf] %vm207, %v1032
      %1061 = vst.msk [vmem:[#allocation2 + $0x38] sm:$0xf] %vm207, %v1036
      %1062 = vst.msk [vmem:[#allocation2 + $0x44] sm:$0xf] %vm207, %v1040
      %1063 = vst.msk [vmem:[#allocation2 + $0x50] sm:$0xf] %vm207, %v1044
      %1064 = vst.msk [vmem:[#allocation2 + $0x5c] sm:$0xf] %vm207, %v1048
      %v1065 = vld [vmem:[#allocation2] sm:$0xff]
      %v1066 = vld [vmem:[#allocation2 + $0x8] sm:$0xf]
      %v1067 = vld [vmem:[#allocation2 + $0xc] sm:$0xff]
      %v1068 = vld [vmem:[#allocation2 + $0x14] sm:$0xf]
      %v1069 = vld [vmem:[#allocation2 + $0x18] sm:$0xff]
      %v1070 = vld [vmem:[#allocation2 + $0x20] sm:$0xf]
      %v1071 = vld [vmem:[#allocation2 + $0x24] sm:$0xff]
      %v1072 = vld [vmem:[#allocation2 + $0x2c] sm:$0xf]
      %v1073 = vld [vmem:[#allocation2 + $0x30] sm:$0xff]
      %v1074 = vld [vmem:[#allocation2 + $0x38] sm:$0xf]
      %v1075 = vld [vmem:[#allocation2 + $0x3c] sm:$0xff]
      %v1076 = vld [vmem:[#allocation2 + $0x44] sm:$0xf]
      %v1077 = vld [vmem:[#allocation2 + $0x48] sm:$0xff]
      %v1078 = vld [vmem:[#allocation2 + $0x50] sm:$0xf]
      %v1079 = vld [vmem:[#allocation2 + $0x54] sm:$0xff]
      %v1080 = vld [vmem:[#allocation2 + $0x5c] sm:$0xf]
      %v1081 = vld [vmem:[%s1] sm:$0xf]
      %v1082 = vld [vmem:[%s1 + $0x4] sm:$0xf]
      %v1083 = vld [vmem:[%s1 + $0x8] sm:$0xf]
      %v1084 = vld [vmem:[%s1 + $0xc] sm:$0xf]
      %v1085 = vld [vmem:[%s1 + $0x10] sm:$0xf]
      %v1086 = vld [vmem:[%s1 + $0x14] sm:$0xf]
      %v1087 = vld [vmem:[%s1 + $0x18] sm:$0xf]
      %v1088 = vld [vmem:[%s1 + $0x1c] sm:$0xf]
      %v1089 = vld [vmem:[%s1 + $0x20] sm:$0xf]
      %v1090 = vld [vmem:[%s1 + $0x24] sm:$0xf]
      %v1091 = vld [vmem:[%s1 + $0x28] sm:$0xf]
      %v1092 = vld [vmem:[%s1 + $0x2c] sm:$0xf]
      %v1093 = vld [vmem:[%s1 + $0x30] sm:$0xf]
      %v1094 = vld [vmem:[%s1 + $0x34] sm:$0xf]
      %v1095 = vld [vmem:[%s1 + $0x38] sm:$0xf]
      %v1096 = vld [vmem:[%s1 + $0x3c] sm:$0xf]
      %v1097 = vld [vmem:[%s1 + $0x40] sm:$0xf]
      %v1098 = vld [vmem:[%s1 + $0x44] sm:$0xf]
      %v1099 = vld [vmem:[%s1 + $0x48] sm:$0xf]
      %v1100 = vld [vmem:[%s1 + $0x4c] sm:$0xf]
      %v1101 = vld [vmem:[%s1 + $0x50] sm:$0xf]
      %v1102 = vld [vmem:[%s1 + $0x54] sm:$0xf]
      %v1103 = vld [vmem:[%s1 + $0x58] sm:$0xf]
      %v1104 = vld [vmem:[%s1 + $0x5c] sm:$0xf]
      %v1105 = vld [vmem:[%s1 + $0x60] sm:$0xf]
      %v1106 = vld [vmem:[%s1 + $0x64] sm:$0xf]
      %v1107 = vld [vmem:[%s1 + $0x68] sm:$0xf]
      %v1108 = vld [vmem:[%s1 + $0x6c] sm:$0xf]
      %v1109 = vld [vmem:[%s1 + $0x70] sm:$0xf]
      %v1110 = vld [vmem:[%s1 + $0x74] sm:$0xf]
      %v1111 = vld [vmem:[%s1 + $0x78] sm:$0xf]
      %v1112 = vld [vmem:[%s1 + $0x7c] sm:$0xf]
      %v1113 = vld [vmem:[%s1 + $0x80] sm:$0xf]
      %v1114 = vld [vmem:[%s1 + $0x84] sm:$0xf]
      %v1115 = vld [vmem:[%s1 + $0x88] sm:$0xf]
      %v1116 = vld [vmem:[%s1 + $0x8c] sm:$0xf]
      %v1117 = vld [vmem:[%s2] sm:$0x1]
      %v1119 = vperm.slane %v1117, 0
      %v1137 = vunpack.c.l.b16 %v1065
      %v1138 = vunpack.c.h.b16 %v1065
      %v1139 = vunpack.c.l.b16 %v1066
      %v1140 = vunpack.c.l.b16 %v1067
      %v1141 = vunpack.c.h.b16 %v1067
      %v1142 = vunpack.c.l.b16 %v1068
      %v1143 = vunpack.c.l.b16 %v1069
      %v1144 = vunpack.c.h.b16 %v1069
      %v1145 = vunpack.c.l.b16 %v1070
      %v1146 = vunpack.c.l.b16 %v1071
      %v1147 = vunpack.c.h.b16 %v1071
      %v1148 = vunpack.c.l.b16 %v1072
      %v1149 = vunpack.c.l.b16 %v1073
      %v1150 = vunpack.c.h.b16 %v1073
      %v1151 = vunpack.c.l.b16 %v1074
      %v1152 = vunpack.c.l.b16 %v1075
      %v1153 = vunpack.c.h.b16 %v1075
      %v1154 = vunpack.c.l.b16 %v1076
      %v1155 = vunpack.c.l.b16 %v1077
      %v1156 = vunpack.c.h.b16 %v1077
      %v1157 = vunpack.c.l.b16 %v1078
      %v1158 = vunpack.c.l.b16 %v1079
      %v1159 = vunpack.c.h.b16 %v1079
      %v1160 = vunpack.c.l.b16 %v1080
      %v1161 = vpack.c.b16 %v1140, %v1137
      %v1162 = vpack.c.b16 %v1141, %v1138
      %v1163 = vpack.c.b16 %v1142, %v1139
      %v1164 = vpack.c.b16 %v1146, %v1143
      %v1165 = vpack.c.b16 %v1147, %v1144
      %v1166 = vpack.c.b16 %v1148, %v1145
      %v1167 = vpack.c.b16 %v1152, %v1149
      %v1168 = vpack.c.b16 %v1153, %v1150
      %v1169 = vpack.c.b16 %v1154, %v1151
      %v1170 = vpack.c.b16 %v1158, %v1155
      %v1171 = vpack.c.b16 %v1159, %v1156
      %v1172 = vpack.c.b16 %v1160, %v1157
      %v1217 = vunpack.c.l.b16 %v1081
      %v1218 = vunpack.c.l.b16 %v1082
      %v1219 = vunpack.c.l.b16 %v1083
      %v1220 = vunpack.c.l.b16 %v1084
      %v1221 = vunpack.c.l.b16 %v1085
      %v1222 = vunpack.c.l.b16 %v1086
      %v1223 = vunpack.c.l.b16 %v1087
      %v1224 = vunpack.c.l.b16 %v1088
      %v1225 = vunpack.c.l.b16 %v1089
      %v1226 = vunpack.c.l.b16 %v1090
      %v1227 = vunpack.c.l.b16 %v1091
      %v1228 = vunpack.c.l.b16 %v1092
      %v1229 = vunpack.c.l.b16 %v1093
      %v1230 = vunpack.c.l.b16 %v1094
      %v1231 = vunpack.c.l.b16 %v1095
      %v1232 = vunpack.c.l.b16 %v1096
      %v1233 = vunpack.c.l.b16 %v1097
      %v1234 = vunpack.c.l.b16 %v1098
      %v1235 = vunpack.c.l.b16 %v1099
      %v1236 = vunpack.c.l.b16 %v1100
      %v1237 = vunpack.c.l.b16 %v1101
      %v1238 = vunpack.c.l.b16 %v1102
      %v1239 = vunpack.c.l.b16 %v1103
      %v1240 = vunpack.c.l.b16 %v1104
      %v1241 = vunpack.c.l.b16 %v1105
      %v1242 = vunpack.c.l.b16 %v1106
      %v1243 = vunpack.c.l.b16 %v1107
      %v1244 = vunpack.c.l.b16 %v1108
      %v1245 = vunpack.c.l.b16 %v1109
      %v1246 = vunpack.c.l.b16 %v1110
      %v1247 = vunpack.c.l.b16 %v1111
      %v1248 = vunpack.c.l.b16 %v1112
      %v1249 = vunpack.c.l.b16 %v1113
      %v1250 = vunpack.c.l.b16 %v1114
      %v1251 = vunpack.c.l.b16 %v1115
      %v1252 = vunpack.c.l.b16 %v1116
      %v1253 = vpack.c.b16 %v1218, %v1217
      %v1254 = vpack.c.b16 %v1220, %v1219
      %v1255 = vpack.c.b16 %v1222, %v1221
      %v1256 = vpack.c.b16 %v1224, %v1223
      %v1257 = vpack.c.b16 %v1226, %v1225
      %v1258 = vpack.c.b16 %v1228, %v1227
      %v1259 = vpack.c.b16 %v1230, %v1229
      %v1260 = vpack.c.b16 %v1232, %v1231
      %v1261 = vpack.c.b16 %v1234, %v1233
      %v1262 = vpack.c.b16 %v1236, %v1235
      %v1263 = vpack.c.b16 %v1238, %v1237
      %v1264 = vpack.c.b16 %v1240, %v1239
      %v1265 = vpack.c.b16 %v1242, %v1241
      %v1266 = vpack.c.b16 %v1244, %v1243
      %v1267 = vpack.c.b16 %v1246, %v1245
      %v1268 = vpack.c.b16 %v1248, %v1247
      %v1269 = vpack.c.b16 %v1250, %v1249
      %v1270 = vpack.c.b16 %v1252, %v1251
      %vm1289 = vcmask 261120
      %v1291 = vsel %vm1289, %v1163, 0
      %v1294 = vsel %vm1289, %v1166, 0
      %v1297 = vsel %vm1289, %v1169, 0
      %v1300 = vsel %vm1289, %v1172, 0
      %1302 = vmatpush.bf16.msra.mxu0 %v1260
      %1303 = vmatpush.bf16.msra.mxu0 %v1259
      %1304 = vmatpush.bf16.msra.mxu0 %v1258
      %1305 = vmatpush.bf16.msra.mxu0 %v1257
      %1306 = vmatpush.bf16.msra.mxu0 %v1256
      %1307 = vmatpush.bf16.msra.mxu0 %v1255
      %1308 = vmatpush.bf16.msra.mxu0 %v1254
      %1309 = vmatpush.bf16.msra.mxu0 %v1253
      %1310 = vmatmul.bf16.gmra.mxu0 %v1161
      %v1311 = vpop.f32.mrf.mxu0
      %v1312 = vadd.f32 %v1119, %v1311
      %v1313 = vpop.f32.mrf.mxu0
      %v1314 = vadd.f32 %v1119, %v1313
      %1315 = vmatmul.bf16.gmra.mxu0 %v1164
      %v1316 = vpop.f32.mrf.mxu0
      %v1317 = vadd.f32 %v1119, %v1316
      %v1318 = vpop.f32.mrf.mxu0
      %v1319 = vadd.f32 %v1119, %v1318
      %1320 = vmatmul.bf16.gmra.mxu0 %v1167
      %v1321 = vpop.f32.mrf.mxu0
      %v1322 = vadd.f32 %v1119, %v1321
      %v1323 = vpop.f32.mrf.mxu0
      %v1324 = vadd.f32 %v1119, %v1323
      %1325 = vmatmul.bf16.gmra.mxu0 %v1170
      %v1326 = vpop.f32.mrf.mxu0
      %v1327 = vadd.f32 %v1119, %v1326
      %v1328 = vpop.f32.mrf.mxu0
      %v1329 = vadd.f32 %v1119, %v1328
      %1330 = vdwg.mxu0
      %1331 = vmatpush.bf16.msra.mxu0 %v1268
      %1332 = vmatpush.bf16.msra.mxu0 %v1267
      %1333 = vmatpush.bf16.msra.mxu0 %v1266
      %1334 = vmatpush.bf16.msra.mxu0 %v1265
      %1335 = vmatpush.bf16.msra.mxu0 %v1264
      %1336 = vmatpush.bf16.msra.mxu0 %v1263
      %1337 = vmatpush.bf16.msra.mxu0 %v1262
      %1338 = vmatpush.bf16.msra.mxu0 %v1261
      %1339 = vmatmul.bf16.gmra.mxu0 %v1162
      %v1340 = vpop.f32.mrf.mxu0
      %v1341 = vadd.f32 %v1312, %v1340
      %v1342 = vpop.f32.mrf.mxu0
      %v1343 = vadd.f32 %v1314, %v1342
      %1344 = vmatmul.bf16.gmra.mxu0 %v1165
      %v1345 = vpop.f32.mrf.mxu0
      %v1346 = vadd.f32 %v1317, %v1345
      %v1347 = vpop.f32.mrf.mxu0
      %v1348 = vadd.f32 %v1319, %v1347
      %1349 = vmatmul.bf16.gmra.mxu0 %v1168
      %v1350 = vpop.f32.mrf.mxu0
      %v1351 = vadd.f32 %v1322, %v1350
      %v1352 = vpop.f32.mrf.mxu0
      %v1353 = vadd.f32 %v1324, %v1352
      %1354 = vmatmul.bf16.gmra.mxu0 %v1171
      %v1355 = vpop.f32.mrf.mxu0
      %v1356 = vadd.f32 %v1327, %v1355
      %v1357 = vpop.f32.mrf.mxu0
      %v1358 = vadd.f32 %v1329, %v1357
      %1359 = vdwg.mxu0
      %1360 = vmatpush.bf16.msra.mxu0 0
      %1361 = vmatpush.bf16.msra.mxu0 0
      %1362 = vmatpush.bf16.msra.mxu0 0
      %1363 = vmatpush.bf16.msra.mxu0 0
      %1364 = vmatpush.bf16.msra.mxu0 0
      %1365 = vmatpush.bf16.msra.mxu0 0
      %1366 = vmatpush.bf16.msra.mxu0 %v1270
      %1367 = vmatpush.bf16.msra.mxu0 %v1269
      %1368 = vmatmul.bf16.gmra.mxu0 %v1291
      %v1369 = vpop.f32.mrf.mxu0
      %v1370 = vadd.f32 %v1341, %v1369
      %v1371 = vpop.f32.mrf.mxu0
      %v1372 = vadd.f32 %v1343, %v1371
      %1373 = vmatmul.bf16.gmra.mxu0 %v1294
      %v1374 = vpop.f32.mrf.mxu0
      %v1375 = vadd.f32 %v1346, %v1374
      %v1376 = vpop.f32.mrf.mxu0
      %v1377 = vadd.f32 %v1348, %v1376
      %1378 = vmatmul.bf16.gmra.mxu0 %v1297
      %v1379 = vpop.f32.mrf.mxu0
      %v1380 = vadd.f32 %v1351, %v1379
      %v1381 = vpop.f32.mrf.mxu0
      %v1382 = vadd.f32 %v1353, %v1381
      %1383 = vmatmul.bf16.gmra.mxu0 %v1300
      %v1384 = vpop.f32.mrf.mxu0
      %v1385 = vadd.f32 %v1356, %v1384
      %v1386 = vpop.f32.mrf.mxu0
      %v1387 = vadd.f32 %v1358, %v1386
      %1388 = vdwg.mxu0
      %v1389 = vmax.f32 %v1370, 0.0
      %v1390 = vmax.f32 %v1372, 0.0
      %v1391 = vmax.f32 %v1375, 0.0
      %v1392 = vmax.f32 %v1377, 0.0
      %v1393 = vmax.f32 %v1380, 0.0
      %v1394 = vmax.f32 %v1382, 0.0
      %v1395 = vmax.f32 %v1385, 0.0
      %v1396 = vmax.f32 %v1387, 0.0
      %v1405 = vrot.slane %v1389, 2
      %v1406 = vrot.slane %v1389, 4
      %v1407 = vrot.slane %v1389, 6
      %v1408 = vrot.slane %v1390, 2
      %v1409 = vrot.slane %v1390, 4
      %v1410 = vrot.slane %v1390, 6
      %v1411 = vrot.slane %v1391, 2
      %v1412 = vrot.slane %v1391, 4
      %v1413 = vrot.slane %v1391, 6
      %v1414 = vrot.slane %v1392, 2
      %v1415 = vrot.slane %v1392, 4
      %v1416 = vrot.slane %v1392, 6
      %v1417 = vrot.slane %v1393, 2
      %v1418 = vrot.slane %v1393, 4
      %v1419 = vrot.slane %v1393, 6
      %v1420 = vrot.slane %v1394, 2
      %v1421 = vrot.slane %v1394, 4
      %v1422 = vrot.slane %v1394, 6
      %v1423 = vrot.slane %v1395, 2
      %v1424 = vrot.slane %v1395, 4
      %v1425 = vrot.slane %v1395, 6
      %v1426 = vrot.slane %v1396, 2
      %v1427 = vrot.slane %v1396, 4
      %v1428 = vrot.slane %v1396, 6
      %v1453 = vmax.f32 %v1389, %v1390
      %v1454 = vmax.f32 %v1405, %v1408
      %v1455 = vmax.f32 %v1406, %v1409
      %v1456 = vmax.f32 %v1407, %v1410
      %v1457 = vmax.f32 %v1391, %v1392
      %v1458 = vmax.f32 %v1411, %v1414
      %v1459 = vmax.f32 %v1412, %v1415
      %v1460 = vmax.f32 %v1413, %v1416
      %v1461 = vmax.f32 %v1393, %v1394
      %v1462 = vmax.f32 %v1417, %v1420
      %v1463 = vmax.f32 %v1418, %v1421
      %v1464 = vmax.f32 %v1419, %v1422
      %v1465 = vmax.f32 %v1395, %v1396
      %v1466 = vmax.f32 %v1423, %v1426
      %v1467 = vmax.f32 %v1424, %v1427
      %v1468 = vmax.f32 %v1425, %v1428
      %v1485 = vrot.slane %v1453, 7
      %v1486 = vrot.slane %v1485, 2
      %v1487 = vrot.slane %v1454, 7
      %v1488 = vrot.slane %v1487, 2
      %v1489 = vrot.slane %v1455, 7
      %v1490 = vrot.slane %v1489, 2
      %v1491 = vrot.slane %v1456, 7
      %v1492 = vrot.slane %v1491, 2
      %v1493 = vrot.slane %v1457, 7
      %v1494 = vrot.slane %v1493, 2
      %v1495 = vrot.slane %v1458, 7
      %v1496 = vrot.slane %v1495, 2
      %v1497 = vrot.slane %v1459, 7
      %v1498 = vrot.slane %v1497, 2
      %v1499 = vrot.slane %v1460, 7
      %v1500 = vrot.slane %v1499, 2
      %v1501 = vrot.slane %v1461, 7
      %v1502 = vrot.slane %v1501, 2
      %v1503 = vrot.slane %v1462, 7
      %v1504 = vrot.slane %v1503, 2
      %v1505 = vrot.slane %v1463, 7
      %v1506 = vrot.slane %v1505, 2
      %v1507 = vrot.slane %v1464, 7
      %v1508 = vrot.slane %v1507, 2
      %v1509 = vrot.slane %v1465, 7
      %v1510 = vrot.slane %v1509, 2
      %v1511 = vrot.slane %v1466, 7
      %v1512 = vrot.slane %v1511, 2
      %v1513 = vrot.slane %v1467, 7
      %v1514 = vrot.slane %v1513, 2
      %v1515 = vrot.slane %v1468, 7
      %v1516 = vrot.slane %v1515, 2
      %v1533 = vmax.f32 %v1453, %v1486
      %v1534 = vmax.f32 %v1454, %v1488
      %v1535 = vmax.f32 %v1455, %v1490
      %v1536 = vmax.f32 %v1456, %v1492
      %v1537 = vmax.f32 %v1457, %v1494
      %v1538 = vmax.f32 %v1458, %v1496
      %v1539 = vmax.f32 %v1459, %v1498
      %v1540 = vmax.f32 %v1460, %v1500
      %v1541 = vmax.f32 %v1461, %v1502
      %v1542 = vmax.f32 %v1462, %v1504
      %v1543 = vmax.f32 %v1463, %v1506
      %v1544 = vmax.f32 %v1464, %v1508
      %v1545 = vmax.f32 %v1465, %v1510
      %v1546 = vmax.f32 %v1466, %v1512
      %v1547 = vmax.f32 %v1467, %v1514
      %v1548 = vmax.f32 %v1468, %v1516
      %v1549 = vpack.c.bf16 %v1533, %v1533
      %v1550 = vpack.c.bf16 %v1534, %v1534
      %v1551 = vpack.c.bf16 %v1535, %v1535
      %v1552 = vpack.c.bf16 %v1536, %v1536
      %v1553 = vpack.c.bf16 %v1537, %v1537
      %v1554 = vpack.c.bf16 %v1538, %v1538
      %v1555 = vpack.c.bf16 %v1539, %v1539
      %v1556 = vpack.c.bf16 %v1540, %v1540
      %v1557 = vpack.c.bf16 %v1541, %v1541
      %v1558 = vpack.c.bf16 %v1542, %v1542
      %v1559 = vpack.c.bf16 %v1543, %v1543
      %v1560 = vpack.c.bf16 %v1544, %v1544
      %v1561 = vpack.c.bf16 %v1545, %v1545
      %v1562 = vpack.c.bf16 %v1546, %v1546
      %v1563 = vpack.c.bf16 %v1547, %v1547
      %v1564 = vpack.c.bf16 %v1548, %v1548
      %v1581 = vrot.slane %v1549, 2
      %v1582 = vrot.slane %v1550, 2
      %v1583 = vrot.slane %v1551, 2
      %v1584 = vrot.slane %v1552, 2
      %v1585 = vrot.slane %v1553, 2
      %v1586 = vrot.slane %v1554, 2
      %v1587 = vrot.slane %v1555, 2
      %v1588 = vrot.slane %v1556, 2
      %v1589 = vrot.slane %v1557, 2
      %v1590 = vrot.slane %v1558, 2
      %v1591 = vrot.slane %v1559, 2
      %v1592 = vrot.slane %v1560, 2
      %v1593 = vrot.slane %v1561, 2
      %v1594 = vrot.slane %v1562, 2
      %v1595 = vrot.slane %v1563, 2
      %v1596 = vrot.slane %v1564, 2
      %vm1597 = vcmask 1041408
      %v1600 = vsel %vm1597, %v1549, %v1581
      %v1603 = vsel %vm1597, %v1550, %v1582
      %v1606 = vsel %vm1597, %v1551, %v1583
      %v1609 = vsel %vm1597, %v1552, %v1584
      %v1612 = vsel %vm1597, %v1553, %v1585
      %v1615 = vsel %vm1597, %v1554, %v1586
      %v1618 = vsel %vm1597, %v1555, %v1587
      %v1621 = vsel %vm1597, %v1556, %v1588
      %v1624 = vsel %vm1597, %v1557, %v1589
      %v1627 = vsel %vm1597, %v1558, %v1590
      %v1630 = vsel %vm1597, %v1559, %v1591
      %v1633 = vsel %vm1597, %v1560, %v1592
      %v1636 = vsel %vm1597, %v1561, %v1593
      %v1639 = vsel %vm1597, %v1562, %v1594
      %v1642 = vsel %vm1597, %v1563, %v1595
      %v1645 = vsel %vm1597, %v1564, %v1596
      %1646 = vst [vmem:[#allocation1] ss:$2 sm:$0xff] %v1600
      %v1647 = vld.sshfl [vmem:[#allocation1] sm:$0xff pattern:$0x75643120]
      %s1649 = scalar_lea.vmem [#allocation1], 16
      %1650 = vst [vmem:[%s1649] ss:$2 sm:$0xff] %v1603
      %v1651 = vld.sshfl [vmem:[#allocation1 + $0x10] sm:$0xff pattern:$0x75643120]
      %s1653 = scalar_lea.vmem [#allocation1], 32
      %1654 = vst [vmem:[%s1653] ss:$2 sm:$0xff] %v1606
      %v1655 = vld.sshfl [vmem:[#allocation1 + $0x20] sm:$0xff pattern:$0x75643120]
      %s1657 = scalar_lea.vmem [#allocation1], 48
      %1658 = vst [vmem:[%s1657] ss:$2 sm:$0xff] %v1609
      %v1659 = vld.sshfl [vmem:[#allocation1 + $0x30] sm:$0xff pattern:$0x75643120]
      %1661 = vst [vmem:[#allocation1] ss:$2 sm:$0xff] %v1612
      %v1662 = vld.sshfl [vmem:[#allocation1] sm:$0xff pattern:$0x75643120]
      %1664 = vst [vmem:[%s1649] ss:$2 sm:$0xff] %v1615
      %v1665 = vld.sshfl [vmem:[#allocation1 + $0x10] sm:$0xff pattern:$0x75643120]
      %1667 = vst [vmem:[%s1653] ss:$2 sm:$0xff] %v1618
      %v1668 = vld.sshfl [vmem:[#allocation1 + $0x20] sm:$0xff pattern:$0x75643120]
      %1670 = vst [vmem:[%s1657] ss:$2 sm:$0xff] %v1621
      %v1671 = vld.sshfl [vmem:[#allocation1 + $0x30] sm:$0xff pattern:$0x75643120]
      %1673 = vst [vmem:[#allocation1] ss:$2 sm:$0xff] %v1624
      %v1674 = vld.sshfl [vmem:[#allocation1] sm:$0xff pattern:$0x75643120]
      %1676 = vst [vmem:[%s1649] ss:$2 sm:$0xff] %v1627
      %v1677 = vld.sshfl [vmem:[#allocation1 + $0x10] sm:$0xff pattern:$0x75643120]
      %1679 = vst [vmem:[%s1653] ss:$2 sm:$0xff] %v1630
      %v1680 = vld.sshfl [vmem:[#allocation1 + $0x20] sm:$0xff pattern:$0x75643120]
      %1682 = vst [vmem:[%s1657] ss:$2 sm:$0xff] %v1633
      %v1683 = vld.sshfl [vmem:[#allocation1 + $0x30] sm:$0xff pattern:$0x75643120]
      %1685 = vst [vmem:[#allocation1] ss:$2 sm:$0xff] %v1636
      %v1686 = vld.sshfl [vmem:[#allocation1] sm:$0xff pattern:$0x75643120]
      %1688 = vst [vmem:[%s1649] ss:$2 sm:$0xff] %v1639
      %v1689 = vld.sshfl [vmem:[#allocation1 + $0x10] sm:$0xff pattern:$0x75643120]
      %1691 = vst [vmem:[%s1653] ss:$2 sm:$0xff] %v1642
      %v1692 = vld.sshfl [vmem:[#allocation1 + $0x20] sm:$0xff pattern:$0x75643120]
      %1694 = vst [vmem:[%s1657] ss:$2 sm:$0xff] %v1645
      %v1695 = vld.sshfl [vmem:[#allocation1 + $0x30] sm:$0xff pattern:$0x75643120]
      %v1697 = vunpack.c.l.b16 %v1647
      %v1698 = vunpack.c.l.b16 %v1651
      %v1699 = vunpack.c.l.b16 %v1655
      %v1700 = vunpack.c.l.b16 %v1659
      %v1701 = vunpack.c.l.b16 %v1662
      %v1702 = vunpack.c.l.b16 %v1665
      %v1703 = vunpack.c.l.b16 %v1668
      %v1704 = vunpack.c.l.b16 %v1671
      %v1705 = vunpack.c.l.b16 %v1674
      %v1706 = vunpack.c.l.b16 %v1677
      %v1707 = vunpack.c.l.b16 %v1680
      %v1708 = vunpack.c.l.b16 %v1683
      %v1709 = vunpack.c.l.b16 %v1686
      %v1710 = vunpack.c.l.b16 %v1689
      %v1711 = vunpack.c.l.b16 %v1692
      %v1712 = vunpack.c.l.b16 %v1695
      %v1713 = vrot.slane %v1698, 7
      %vm1714 = vcmask 1041409
      %v1715 = vsel %vm1714, %v1713, %v1697
      %v1716 = vrot.slane %v1699, 6
      %vm1717 = vcmask 1042434
      %v1718 = vsel %vm1717, %v1716, %v1715
      %v1719 = vrot.slane %v1700, 5
      %vm1720 = vcmask 1043459
      %v1721 = vsel %vm1720, %v1719, %v1718
      %v1722 = vrot.slane %v1702, 7
      %v1723 = vsel %vm1714, %v1722, %v1701
      %v1724 = vrot.slane %v1703, 6
      %v1725 = vsel %vm1717, %v1724, %v1723
      %v1726 = vrot.slane %v1704, 5
      %v1727 = vsel %vm1720, %v1726, %v1725
      %v1728 = vrot.slane %v1706, 7
      %v1729 = vsel %vm1714, %v1728, %v1705
      %v1730 = vrot.slane %v1707, 6
      %v1731 = vsel %vm1717, %v1730, %v1729
      %v1732 = vrot.slane %v1708, 5
      %v1733 = vsel %vm1720, %v1732, %v1731
      %v1734 = vrot.slane %v1710, 7
      %v1735 = vsel %vm1714, %v1734, %v1709
      %v1736 = vrot.slane %v1711, 6
      %v1737 = vsel %vm1717, %v1736, %v1735
      %v1738 = vrot.slane %v1712, 5
      %v1739 = vsel %vm1720, %v1738, %v1737
      %v1740 = vpack.c.b16 %v1721, %v1721
      %v1741 = vpack.c.b16 %v1727, %v1727
      %v1742 = vpack.c.b16 %v1733, %v1733
      %v1743 = vpack.c.b16 %v1739, %v1739
      %v1744 = vrot.slane %v1740, 2
      %v1745 = vrot.slane %v1741, 2
      %v1746 = vrot.slane %v1742, 2
      %v1747 = vrot.slane %v1743, 2
      %v1750 = vsel %vm1597, %v1740, %v1744
      %v1753 = vsel %vm1597, %v1741, %v1745
      %v1756 = vsel %vm1597, %v1742, %v1746
      %v1759 = vsel %vm1597, %v1743, %v1747
      %vm1764 = vcmask 517120
      %1765 = vst.msk [vmem:[%s192] sm:$0x3] %vm1764, %v1750
      %1766 = vst.msk [vmem:[%s192 + $0x2] sm:$0x3] %vm1764, %v1753
      %1767 = vst.msk [vmem:[%s192 + $0x4] sm:$0x3] %vm1764, %v1756
      %1768 = vst.msk [vmem:[%s192 + $0x6] sm:$0x3] %vm1764, %v1759
      %s1769 = smul.u32 4, %s19
      %p1770 = scmp.lt.s32.totalorder %s18, 1
      %s1771 = scalar_select %p1770, %s18, 1
      %p1772 = scmp.lt.s32.totalorder %s1769, 3
      %s1773 = scalar_select %p1772, %s1769, 3
      %s1774 = smul.addr %s1771, 4
      %s1775 = sadd.s32 %s1773, %s1774
      %s1776 = smul.addr %s1775, 2
      %s1777 = scalar_lea.vmem %s3, %s1776
      // Predicated region
      $region33: #{animal_cnn_forward.5} parent=31 // pred_check
        %p1778 = pneg %p114
      $region34: #{animal_cnn_forward.5} parent=31 // pred_check_branch
        %1780 = sbr.rel (%p1778) target = $region36
      $region35: #{animal_cnn_forward.5} parent=31 // pred_region
        %s1781 = smul.u32 4, %s19
      $region36: #{animal_cnn_forward.5} parent=31 // pred_fallthru
        _
    $region32: #{animal_cnn_forward.5} parent=5 // pred_fallthru
      _
    %p1782 = scmp.le.s32.totalorder 2, %s9
    // Predicated region
    $region37: #{animal_cnn_forward.5} parent=5 // pred_check
      %p1783 = pneg %p1782
    $region38: #{animal_cnn_forward.5} parent=5 // pred_check_branch
      %1785 = sbr.rel (%p1783) target = $region40
    $region39: #{animal_cnn_forward.5} parent=5 // pred_region
      %s1786 = ssub.s32 %s9, 2
      // Predicated region
      $region41: #{animal_cnn_forward.5} parent=39 // pred_check
        %p1787 = pneg %p120
      $region42: #{animal_cnn_forward.5} parent=39 // pred_check_branch
        %1789 = sbr.rel (%p1787) target = $region44
      $region43: #{animal_cnn_forward.5} parent=39 // pred_region
        %s1790 = smul.u32 4, %s21
        %p1791 = scmp.lt.s32.totalorder %s20, 1
        %s1792 = scalar_select %p1791, %s20, 1
        %p1793 = scmp.lt.s32.totalorder %s1790, 3
        %s1794 = scalar_select %p1793, %s1790, 3
        %s1795 = smul.addr %s1792, 4
        %s1796 = sadd.s32 %s1794, %s1795
        %s1797 = smul.addr %s1796, 2
        %s1798 = scalar_lea.vmem %s3, %s1797
      $region44: #{animal_cnn_forward.5} parent=39 // pred_fallthru
        _
    $region40: #{animal_cnn_forward.5} parent=5 // pred_fallthru
      _
  $region6: #{animal_cnn_forward.5} parent=0 // loop_footer
    %s13 = sadd.s32 1, %s9
  $region7: #{animal_cnn_forward.5} parent=0 // loop_footer_branch
    %8 = sbr.rel target = $region3
  $region8: #{animal_cnn_forward.5} parent=0 // loop_exit
    _

// kernel: animal_cnn_forward.6
$region0: #{animal_cnn_forward.6}
  #allocation0 [shape = 'u32[]', space=smem, size = 0x4, offset = 0x4, fixed_abs, tag = 'smem constant byte address 0x4 - core index']
  #allocation1 [shape = 'u32[72,128]{1,0:T(1,128)}', space=vmem, size = 0x9000, scoped, tag = 'internal scratch']
  %s0 = inlined_call_operand.vmem [shape: bf16[2,1024], index: 0, kind: input, shape index: {}]
  %s1 = inlined_call_operand.hbm [shape: bf16[1024,512], index: 1, kind: input, shape index: {}]
  %s2 = inlined_call_operand.vmem [shape: f32[1,512], index: 2, kind: input, shape index: {}]
  %s3 = inlined_call_operand.vmem [shape: f32[2,512], index: 3, kind: output, shape index: {}]
  %s4 = sld [smem:[#allocation0]]
  $region34: #{animal_cnn_forward.6} parent=0
    _
  %s6 = ssub.s32 1, %s4
  %s7 = scalar_select 0, %s6, %s4
  $region1: #{animal_cnn_forward.6} parent=0
    #allocation2 [shape = 'u8[1048576]{0}', space=vmem, size = 0x100000, scoped, tag = 'input window, operand 1, single buffered']
    #allocation3 [shape = 's32[1]{0}', space=sflag, size = 0x4, scoped, tag = 'scoped memory for animal_cnn_forward.6']
    %8 = vsyncpa [#allocation3], 0
    // Predicated region
    $region2: #{animal_cnn_forward.6} parent=1 // pred_check
      _
    $region3: #{animal_cnn_forward.6} parent=1 // pred_check_branch
      %10 = sbr.rel (0) target = $region5
    $region4: #{animal_cnn_forward.6} parent=1 // pred_region
      _
    $region5: #{animal_cnn_forward.6} parent=1 // pred_fallthru
      _
    // Predicated region
    $region6: #{animal_cnn_forward.6} parent=1 // pred_check
      _
    $region7: #{animal_cnn_forward.6} parent=1 // pred_check_branch
      %12 = sbr.rel (0) target = $region9
    $region8: #{animal_cnn_forward.6} parent=1 // pred_region
      %14 = vsyncadd [#allocation3], 0
      %s15 = sshll.u32 %s1, 4
      %s16 = int_to_ptr.hbm [resolvable:$true] %s15
      %s17 = sshll.u32 [#allocation2], 4
      %s18 = int_to_ptr.vmem [resolvable:$true] %s17
      %23 = dma.hbm_to_vmem [thread:$0]  %s16, 32768, %s18, [#allocation3], 256, 256, 16
    $region9: #{animal_cnn_forward.6} parent=1 // pred_fallthru
      _
    // Predicated region
    $region10: #{animal_cnn_forward.6} parent=1 // pred_check
      _
    $region11: #{animal_cnn_forward.6} parent=1 // pred_check_branch
      %25 = sbr.rel (0) target = $region13
    $region12: #{animal_cnn_forward.6} parent=1 // pred_region
      _
    $region13: #{animal_cnn_forward.6} parent=1 // pred_fallthru
      _
    // Predicated region
    $region14: #{animal_cnn_forward.6} parent=1 // pred_check
      _
    $region15: #{animal_cnn_forward.6} parent=1 // pred_check_branch
      %27 = sbr.rel (0) target = $region17
    $region16: #{animal_cnn_forward.6} parent=1 // pred_region
      %29 = dma.done [#allocation3], 32768
    $region17: #{animal_cnn_forward.6} parent=1 // pred_fallthru
      _
    %p30 = scmp.eq.s32.totalorder 0, 0
    // Predicated region
    $region18: #{animal_cnn_forward.6} parent=1 // pred_check
      %p31 = pneg %p30
    $region19: #{animal_cnn_forward.6} parent=1 // pred_check_branch
      %33 = sbr.rel (%p31) target = $region21
    $region20: #{animal_cnn_forward.6} parent=1 // pred_region
      %34 = vst [vmem:[%s3] sm:$0xff] 0.0
    $region21: #{animal_cnn_forward.6} parent=1 // pred_fallthru
      _
    %v35 = vld [vmem:[%s3] sm:$0xff]
    %v36 = vld [vmem:[%s0] sm:$0xff]
    %v37 = vld [vmem:[#allocation2] sm:$0xff]
    %v38 = vld [vmem:[#allocation2 + $0x8] sm:$0xff]
    %v39 = vld [vmem:[#allocation2 + $0x10] sm:$0xff]
    %v40 = vld [vmem:[#allocation2 + $0x18] sm:$0xff]
    %v41 = vld [vmem:[#allocation2 + $0x20] sm:$0xff]
    %v42 = vld [vmem:[#allocation2 + $0x28] sm:$0xff]
    %v43 = vld [vmem:[#allocation2 + $0x30] sm:$0xff]
    %v44 = vld [vmem:[#allocation2 + $0x38] sm:$0xff]
    %v45 = vld [vmem:[#allocation2 + $0x40] sm:$0xff]
    %v46 = vld [vmem:[#allocation2 + $0x48] sm:$0xff]
    %v47 = vld [vmem:[#allocation2 + $0x50] sm:$0xff]
    %v48 = vld [vmem:[#allocation2 + $0x58] sm:$0xff]
    %v49 = vld [vmem:[#allocation2 + $0x60] sm:$0xff]
    %v50 = vld [vmem:[#allocation2 + $0x68] sm:$0xff]
    %v51 = vld [vmem:[#allocation2 + $0x70] sm:$0xff]
    %v52 = vld [vmem:[#allocation2 + $0x78] sm:$0xff]
    %v53 = vld [vmem:[#allocation2 + $0x80] sm:$0xff]
    %v54 = vld [vmem:[#allocation2 + $0x88] sm:$0xff]
    %v55 = vld [vmem:[#allocation2 + $0x90] sm:$0xff]
    %v56 = vld [vmem:[#allocation2 + $0x98] sm:$0xff]
    %v57 = vld [vmem:[#allocation2 + $0xa0] sm:$0xff]
    %v58 = vld [vmem:[#allocation2 + $0xa8] sm:$0xff]
    %v59 = vld [vmem:[#allocation2 + $0xb0] sm:$0xff]
    %v60 = vld [vmem:[#allocation2 + $0xb8] sm:$0xff]
    %v61 = vld [vmem:[#allocation2 + $0xc0] sm:$0xff]
    %v62 = vld [vmem:[#allocation2 + $0xc8] sm:$0xff]
    %v63 = vld [vmem:[#allocation2 + $0xd0] sm:$0xff]
    %v64 = vld [vmem:[#allocation2 + $0xd8] sm:$0xff]
    %v65 = vld [vmem:[#allocation2 + $0xe0] sm:$0xff]
    %v66 = vld [vmem:[#allocation2 + $0xe8] sm:$0xff]
    %v67 = vld [vmem:[#allocation2 + $0xf0] sm:$0xff]
    %v68 = vld [vmem:[#allocation2 + $0xf8] sm:$0xff]
    %v69 = vld [vmem:[#allocation2 + $0x100] sm:$0xff]
    %v70 = vld [vmem:[#allocation2 + $0x108] sm:$0xff]
    %v71 = vld [vmem:[#allocation2 + $0x110] sm:$0xff]
    %v72 = vld [vmem:[#allocation2 + $0x118] sm:$0xff]
    %v73 = vld [vmem:[#allocation2 + $0x120] sm:$0xff]
    %v74 = vld [vmem:[#allocation2 + $0x128] sm:$0xff]
    %v75 = vld [vmem:[#allocation2 + $0x130] sm:$0xff]
    %v76 = vld [vmem:[#allocation2 + $0x138] sm:$0xff]
    %v77 = vld [vmem:[#allocation2 + $0x140] sm:$0xff]
    %v78 = vld [vmem:[#allocation2 + $0x148] sm:$0xff]
    %v79 = vld [vmem:[#allocation2 + $0x150] sm:$0xff]
    %v80 = vld [vmem:[#allocation2 + $0x158] sm:$0xff]
    %v81 = vld [vmem:[#allocation2 + $0x160] sm:$0xff]
    %v82 = vld [vmem:[#allocation2 + $0x168] sm:$0xff]
    %v83 = vld [vmem:[#allocation2 + $0x170] sm:$0xff]
    %v84 = vld [vmem:[#allocation2 + $0x178] sm:$0xff]
    %v85 = vld [vmem:[#allocation2 + $0x180] sm:$0xff]
    %v86 = vld [vmem:[#allocation2 + $0x188] sm:$0xff]
    %v87 = vld [vmem:[#allocation2 + $0x190] sm:$0xff]
    %v88 = vld [vmem:[#allocation2 + $0x198] sm:$0xff]
    %v89 = vld [vmem:[#allocation2 + $0x1a0] sm:$0xff]
    %v90 = vld [vmem:[#allocation2 + $0x1a8] sm:$0xff]
    %v91 = vld [vmem:[#allocation2 + $0x1b0] sm:$0xff]
    %v92 = vld [vmem:[#allocation2 + $0x1b8] sm:$0xff]
    %v93 = vld [vmem:[#allocation2 + $0x1c0] sm:$0xff]
    %v94 = vld [vmem:[#allocation2 + $0x1c8] sm:$0xff]
    %v95 = vld [vmem:[#allocation2 + $0x1d0] sm:$0xff]
    %v96 = vld [vmem:[#allocation2 + $0x1d8] sm:$0xff]
    %v97 = vld [vmem:[#allocation2 + $0x1e0] sm:$0xff]
    %v98 = vld [vmem:[#allocation2 + $0x1e8] sm:$0xff]
    %v99 = vld [vmem:[#allocation2 + $0x1f0] sm:$0xff]
    %v100 = vld [vmem:[#allocation2 + $0x1f8] sm:$0xff]
    %v101 = vld [vmem:[#allocation2 + $0x200] sm:$0xff]
    %v102 = vld [vmem:[#allocation2 + $0x208] sm:$0xff]
    %v103 = vld [vmem:[#allocation2 + $0x210] sm:$0xff]
    %v104 = vld [vmem:[#allocation2 + $0x218] sm:$0xff]
    %v105 = vld [vmem:[#allocation2 + $0x220] sm:$0xff]
    %v106 = vld [vmem:[#allocation2 + $0x228] sm:$0xff]
    %v107 = vld [vmem:[#allocation2 + $0x230] sm:$0xff]
    %v108 = vld [vmem:[#allocation2 + $0x238] sm:$0xff]
    %v109 = vld [vmem:[#allocation2 + $0x240] sm:$0xff]
    %v110 = vld [vmem:[#allocation2 + $0x248] sm:$0xff]
    %v111 = vld [vmem:[#allocation2 + $0x250] sm:$0xff]
    %v112 = vld [vmem:[#allocation2 + $0x258] sm:$0xff]
    %v113 = vld [vmem:[#allocation2 + $0x260] sm:$0xff]
    %v114 = vld [vmem:[#allocation2 + $0x268] sm:$0xff]
    %v115 = vld [vmem:[#allocation2 + $0x270] sm:$0xff]
    %v116 = vld [vmem:[#allocation2 + $0x278] sm:$0xff]
    %v117 = vld [vmem:[#allocation2 + $0x280] sm:$0xff]
    %v118 = vld [vmem:[#allocation2 + $0x288] sm:$0xff]
    %v119 = vld [vmem:[#allocation2 + $0x290] sm:$0xff]
    %v120 = vld [vmem:[#allocation2 + $0x298] sm:$0xff]
    %v121 = vld [vmem:[#allocation2 + $0x2a0] sm:$0xff]
    %v122 = vld [vmem:[#allocation2 + $0x2a8] sm:$0xff]
    %v123 = vld [vmem:[#allocation2 + $0x2b0] sm:$0xff]
    %v124 = vld [vmem:[#allocation2 + $0x2b8] sm:$0xff]
    %v125 = vld [vmem:[#allocation2 + $0x2c0] sm:$0xff]
    %v126 = vld [vmem:[#allocation2 + $0x2c8] sm:$0xff]
    %v127 = vld [vmem:[#allocation2 + $0x2d0] sm:$0xff]
    %v128 = vld [vmem:[#allocation2 + $0x2d8] sm:$0xff]
    %v129 = vld [vmem:[#allocation2 + $0x2e0] sm:$0xff]
    %v130 = vld [vmem:[#allocation2 + $0x2e8] sm:$0xff]
    %v131 = vld [vmem:[#allocation2 + $0x2f0] sm:$0xff]
    %v132 = vld [vmem:[#allocation2 + $0x2f8] sm:$0xff]
    %v133 = vld [vmem:[#allocation2 + $0x300] sm:$0xff]
    %v134 = vld [vmem:[#allocation2 + $0x308] sm:$0xff]
    %v135 = vld [vmem:[#allocation2 + $0x310] sm:$0xff]
    %v136 = vld [vmem:[#allocation2 + $0x318] sm:$0xff]
    %v137 = vld [vmem:[#allocation2 + $0x320] sm:$0xff]
    %v138 = vld [vmem:[#allocation2 + $0x328] sm:$0xff]
    %v139 = vld [vmem:[#allocation2 + $0x330] sm:$0xff]
    %v140 = vld [vmem:[#allocation2 + $0x338] sm:$0xff]
    %v141 = vld [vmem:[#allocation2 + $0x340] sm:$0xff]
    %v142 = vld [vmem:[#allocation2 + $0x348] sm:$0xff]
    %v143 = vld [vmem:[#allocation2 + $0x350] sm:$0xff]
    %v144 = vld [vmem:[#allocation2 + $0x358] sm:$0xff]
    %v145 = vld [vmem:[#allocation2 + $0x360] sm:$0xff]
    %v146 = vld [vmem:[#allocation2 + $0x368] sm:$0xff]
    %v147 = vld [vmem:[#allocation2 + $0x370] sm:$0xff]
    %v148 = vld [vmem:[#allocation2 + $0x378] sm:$0xff]
    %v149 = vld [vmem:[#allocation2 + $0x380] sm:$0xff]
    %v150 = vld [vmem:[#allocation2 + $0x388] sm:$0xff]
    %v151 = vld [vmem:[#allocation2 + $0x390] sm:$0xff]
    %v152 = vld [vmem:[#allocation2 + $0x398] sm:$0xff]
    %v153 = vld [vmem:[#allocation2 + $0x3a0] sm:$0xff]
    %v154 = vld [vmem:[#allocation2 + $0x3a8] sm:$0xff]
    %v155 = vld [vmem:[#allocation2 + $0x3b0] sm:$0xff]
    %v156 = vld [vmem:[#allocation2 + $0x3b8] sm:$0xff]
    %v157 = vld [vmem:[#allocation2 + $0x3c0] sm:$0xff]
    %v158 = vld [vmem:[#allocation2 + $0x3c8] sm:$0xff]
    %v159 = vld [vmem:[#allocation2 + $0x3d0] sm:$0xff]
    %v160 = vld [vmem:[#allocation2 + $0x3d8] sm:$0xff]
    %v161 = vld [vmem:[#allocation2 + $0x3e0] sm:$0xff]
    %v162 = vld [vmem:[#allocation2 + $0x3e8] sm:$0xff]
    %v163 = vld [vmem:[#allocation2 + $0x3f0] sm:$0xff]
    %v164 = vld [vmem:[#allocation2 + $0x3f8] sm:$0xff]
    %v165 = vld [vmem:[#allocation2 + $0x400] sm:$0xff]
    %v166 = vld [vmem:[#allocation2 + $0x408] sm:$0xff]
    %v167 = vld [vmem:[#allocation2 + $0x410] sm:$0xff]
    %v168 = vld [vmem:[#allocation2 + $0x418] sm:$0xff]
    %v169 = vld [vmem:[#allocation2 + $0x420] sm:$0xff]
    %v170 = vld [vmem:[#allocation2 + $0x428] sm:$0xff]
    %v171 = vld [vmem:[#allocation2 + $0x430] sm:$0xff]
    %v172 = vld [vmem:[#allocation2 + $0x438] sm:$0xff]
    %v173 = vld [vmem:[#allocation2 + $0x440] sm:$0xff]
    %v174 = vld [vmem:[#allocation2 + $0x448] sm:$0xff]
    %v175 = vld [vmem:[#allocation2 + $0x450] sm:$0xff]
    %v176 = vld [vmem:[#allocation2 + $0x458] sm:$0xff]
    %v177 = vld [vmem:[#allocation2 + $0x460] sm:$0xff]
    %v178 = vld [vmem:[#allocation2 + $0x468] sm:$0xff]
    %v179 = vld [vmem:[#allocation2 + $0x470] sm:$0xff]
    %v180 = vld [vmem:[#allocation2 + $0x478] sm:$0xff]
    %v181 = vld [vmem:[#allocation2 + $0x480] sm:$0xff]
    %v182 = vld [vmem:[#allocation2 + $0x488] sm:$0xff]
    %v183 = vld [vmem:[#allocation2 + $0x490] sm:$0xff]
    %v184 = vld [vmem:[#allocation2 + $0x498] sm:$0xff]
    %v185 = vld [vmem:[#allocation2 + $0x4a0] sm:$0xff]
    %v186 = vld [vmem:[#allocation2 + $0x4a8] sm:$0xff]
    %v187 = vld [vmem:[#allocation2 + $0x4b0] sm:$0xff]
    %v188 = vld [vmem:[#allocation2 + $0x4b8] sm:$0xff]
    %v189 = vld [vmem:[#allocation2 + $0x4c0] sm:$0xff]
    %v190 = vld [vmem:[#allocation2 + $0x4c8] sm:$0xff]
    %v191 = vld [vmem:[#allocation2 + $0x4d0] sm:$0xff]
    %v192 = vld [vmem:[#allocation2 + $0x4d8] sm:$0xff]
    %v193 = vld [vmem:[#allocation2 + $0x4e0] sm:$0xff]
    %v194 = vld [vmem:[#allocation2 + $0x4e8] sm:$0xff]
    %v195 = vld [vmem:[#allocation2 + $0x4f0] sm:$0xff]
    %v196 = vld [vmem:[#allocation2 + $0x4f8] sm:$0xff]
    %v197 = vld [vmem:[#allocation2 + $0x500] sm:$0xff]
    %v198 = vld [vmem:[#allocation2 + $0x508] sm:$0xff]
    %v199 = vld [vmem:[#allocation2 + $0x510] sm:$0xff]
    %v200 = vld [vmem:[#allocation2 + $0x518] sm:$0xff]
    %v201 = vld [vmem:[#allocation2 + $0x520] sm:$0xff]
    %v202 = vld [vmem:[#allocation2 + $0x528] sm:$0xff]
    %v203 = vld [vmem:[#allocation2 + $0x530] sm:$0xff]
    %v204 = vld [vmem:[#allocation2 + $0x538] sm:$0xff]
    %v205 = vld [vmem:[#allocation2 + $0x540] sm:$0xff]
    %v206 = vld [vmem:[#allocation2 + $0x548] sm:$0xff]
    %v207 = vld [vmem:[#allocation2 + $0x550] sm:$0xff]
    %v208 = vld [vmem:[#allocation2 + $0x558] sm:$0xff]
    %v209 = vld [vmem:[#allocation2 + $0x560] sm:$0xff]
    %v210 = vld [vmem:[#allocation2 + $0x568] sm:$0xff]
    %v211 = vld [vmem:[#allocation2 + $0x570] sm:$0xff]
    %v212 = vld [vmem:[#allocation2 + $0x578] sm:$0xff]
    %v213 = vld [vmem:[#allocation2 + $0x580] sm:$0xff]
    %v214 = vld [vmem:[#allocation2 + $0x588] sm:$0xff]
    %v215 = vld [vmem:[#allocation2 + $0x590] sm:$0xff]
    %v216 = vld [vmem:[#allocation2 + $0x598] sm:$0xff]
    %v217 = vld [vmem:[#allocation2 + $0x5a0] sm:$0xff]
    %v218 = vld [vmem:[#allocation2 + $0x5a8] sm:$0xff]
    %v219 = vld [vmem:[#allocation2 + $0x5b0] sm:$0xff]
    %v220 = vld [vmem:[#allocation2 + $0x5b8] sm:$0xff]
    %v221 = vld [vmem:[#allocation2 + $0x5c0] sm:$0xff]
    %v222 = vld [vmem:[#allocation2 + $0x5c8] sm:$0xff]
    %v223 = vld [vmem:[#allocation2 + $0x5d0] sm:$0xff]
    %v224 = vld [vmem:[#allocation2 + $0x5d8] sm:$0xff]
    %v225 = vld [vmem:[#allocation2 + $0x5e0] sm:$0xff]
    %v226 = vld [vmem:[#allocation2 + $0x5e8] sm:$0xff]
    %v227 = vld [vmem:[#allocation2 + $0x5f0] sm:$0xff]
    %v228 = vld [vmem:[#allocation2 + $0x5f8] sm:$0xff]
    %v229 = vld [vmem:[#allocation2 + $0x600] sm:$0xff]
    %v230 = vld [vmem:[#allocation2 + $0x608] sm:$0xff]
    %v231 = vld [vmem:[#allocation2 + $0x610] sm:$0xff]
    %v232 = vld [vmem:[#allocation2 + $0x618] sm:$0xff]
    %v233 = vld [vmem:[#allocation2 + $0x620] sm:$0xff]
    %v234 = vld [vmem:[#allocation2 + $0x628] sm:$0xff]
    %v235 = vld [vmem:[#allocation2 + $0x630] sm:$0xff]
    %v236 = vld [vmem:[#allocation2 + $0x638] sm:$0xff]
    %v237 = vld [vmem:[#allocation2 + $0x640] sm:$0xff]
    %v238 = vld [vmem:[#allocation2 + $0x648] sm:$0xff]
    %v239 = vld [vmem:[#allocation2 + $0x650] sm:$0xff]
    %v240 = vld [vmem:[#allocation2 + $0x658] sm:$0xff]
    %v241 = vld [vmem:[#allocation2 + $0x660] sm:$0xff]
    %v242 = vld [vmem:[#allocation2 + $0x668] sm:$0xff]
    %v243 = vld [vmem:[#allocation2 + $0x670] sm:$0xff]
    %v244 = vld [vmem:[#allocation2 + $0x678] sm:$0xff]
    %v245 = vld [vmem:[#allocation2 + $0x680] sm:$0xff]
    %v246 = vld [vmem:[#allocation2 + $0x688] sm:$0xff]
    %v247 = vld [vmem:[#allocation2 + $0x690] sm:$0xff]
    %v248 = vld [vmem:[#allocation2 + $0x698] sm:$0xff]
    %v249 = vld [vmem:[#allocation2 + $0x6a0] sm:$0xff]
    %v250 = vld [vmem:[#allocation2 + $0x6a8] sm:$0xff]
    %v251 = vld [vmem:[#allocation2 + $0x6b0] sm:$0xff]
    %v252 = vld [vmem:[#allocation2 + $0x6b8] sm:$0xff]
    %v253 = vld [vmem:[#allocation2 + $0x6c0] sm:$0xff]
    %v254 = vld [vmem:[#allocation2 + $0x6c8] sm:$0xff]
    %v255 = vld [vmem:[#allocation2 + $0x6d0] sm:$0xff]
    %v256 = vld [vmem:[#allocation2 + $0x6d8] sm:$0xff]
    %v257 = vld [vmem:[#allocation2 + $0x6e0] sm:$0xff]
    %v258 = vld [vmem:[#allocation2 + $0x6e8] sm:$0xff]
    %v259 = vld [vmem:[#allocation2 + $0x6f0] sm:$0xff]
    %v260 = vld [vmem:[#allocation2 + $0x6f8] sm:$0xff]
    %v261 = vld [vmem:[#allocation2 + $0x700] sm:$0xff]
    %v262 = vld [vmem:[#allocation2 + $0x708] sm:$0xff]
    %v263 = vld [vmem:[#allocation2 + $0x710] sm:$0xff]
    %v264 = vld [vmem:[#allocation2 + $0x718] sm:$0xff]
    %v265 = vld [vmem:[#allocation2 + $0x720] sm:$0xff]
    %v266 = vld [vmem:[#allocation2 + $0x728] sm:$0xff]
    %v267 = vld [vmem:[#allocation2 + $0x730] sm:$0xff]
    %v268 = vld [vmem:[#allocation2 + $0x738] sm:$0xff]
    %v269 = vld [vmem:[#allocation2 + $0x740] sm:$0xff]
    %v270 = vld [vmem:[#allocation2 + $0x748] sm:$0xff]
    %v271 = vld [vmem:[#allocation2 + $0x750] sm:$0xff]
    %v272 = vld [vmem:[#allocation2 + $0x758] sm:$0xff]
    %v273 = vld [vmem:[#allocation2 + $0x760] sm:$0xff]
    %v274 = vld [vmem:[#allocation2 + $0x768] sm:$0xff]
    %v275 = vld [vmem:[#allocation2 + $0x770] sm:$0xff]
    %v276 = vld [vmem:[#allocation2 + $0x778] sm:$0xff]
    %v277 = vld [vmem:[#allocation2 + $0x780] sm:$0xff]
    %v278 = vld [vmem:[#allocation2 + $0x788] sm:$0xff]
    %v279 = vld [vmem:[#allocation2 + $0x790] sm:$0xff]
    %v280 = vld [vmem:[#allocation2 + $0x798] sm:$0xff]
    %v281 = vld [vmem:[#allocation2 + $0x7a0] sm:$0xff]
    %v282 = vld [vmem:[#allocation2 + $0x7a8] sm:$0xff]
    %v283 = vld [vmem:[#allocation2 + $0x7b0] sm:$0xff]
    %v284 = vld [vmem:[#allocation2 + $0x7b8] sm:$0xff]
    %v285 = vld [vmem:[#allocation2 + $0x7c0] sm:$0xff]
    %v286 = vld [vmem:[#allocation2 + $0x7c8] sm:$0xff]
    %v287 = vld [vmem:[#allocation2 + $0x7d0] sm:$0xff]
    %v288 = vld [vmem:[#allocation2 + $0x7d8] sm:$0xff]
    %v289 = vld [vmem:[#allocation2 + $0x7e0] sm:$0xff]
    %v290 = vld [vmem:[#allocation2 + $0x7e8] sm:$0xff]
    %v291 = vld [vmem:[#allocation2 + $0x7f0] sm:$0xff]
    %v292 = vld [vmem:[#allocation2 + $0x7f8] sm:$0xff]
    %294 = vst [vmem:[#allocation1] ss:$9 sm:$0xff] %v36
    %v295 = vld [vmem:[#allocation1] sm:$0xff]
    %v296 = vld [vmem:[#allocation1 + $0x9] sm:$0xff]
    %v297 = vld [vmem:[#allocation1 + $0x12] sm:$0xff]
    %v298 = vld [vmem:[#allocation1 + $0x1b] sm:$0xff]
    %v299 = vld [vmem:[#allocation1 + $0x24] sm:$0xff]
    %v300 = vld [vmem:[#allocation1 + $0x2d] sm:$0xff]
    %v301 = vld [vmem:[#allocation1 + $0x36] sm:$0xff]
    %v302 = vld [vmem:[#allocation1 + $0x3f] sm:$0xff]
    %v567 = vunpack.c.l.b16 %v37
    %v568 = vunpack.c.h.b16 %v37
    %v569 = vunpack.c.l.b16 %v38
    %v570 = vunpack.c.h.b16 %v38
    %v571 = vunpack.c.l.b16 %v39
    %v572 = vunpack.c.h.b16 %v39
    %v573 = vunpack.c.l.b16 %v40
    %v574 = vunpack.c.h.b16 %v40
    %v575 = vunpack.c.l.b16 %v41
    %v576 = vunpack.c.h.b16 %v41
    %v577 = vunpack.c.l.b16 %v42
    %v578 = vunpack.c.h.b16 %v42
    %v579 = vunpack.c.l.b16 %v43
    %v580 = vunpack.c.h.b16 %v43
    %v581 = vunpack.c.l.b16 %v44
    %v582 = vunpack.c.h.b16 %v44
    %v583 = vunpack.c.l.b16 %v45
    %v584 = vunpack.c.h.b16 %v45
    %v585 = vunpack.c.l.b16 %v46
    %v586 = vunpack.c.h.b16 %v46
    %v587 = vunpack.c.l.b16 %v47
    %v588 = vunpack.c.h.b16 %v47
    %v589 = vunpack.c.l.b16 %v48
    %v590 = vunpack.c.h.b16 %v48
    %v591 = vunpack.c.l.b16 %v49
    %v592 = vunpack.c.h.b16 %v49
    %v593 = vunpack.c.l.b16 %v50
    %v594 = vunpack.c.h.b16 %v50
    %v595 = vunpack.c.l.b16 %v51
    %v596 = vunpack.c.h.b16 %v51
    %v597 = vunpack.c.l.b16 %v52
    %v598 = vunpack.c.h.b16 %v52
    %v599 = vunpack.c.l.b16 %v53
    %v600 = vunpack.c.h.b16 %v53
    %v601 = vunpack.c.l.b16 %v54
    %v602 = vunpack.c.h.b16 %v54
    %v603 = vunpack.c.l.b16 %v55
    %v604 = vunpack.c.h.b16 %v55
    %v605 = vunpack.c.l.b16 %v56
    %v606 = vunpack.c.h.b16 %v56
    %v607 = vunpack.c.l.b16 %v57
    %v608 = vunpack.c.h.b16 %v57
    %v609 = vunpack.c.l.b16 %v58
    %v610 = vunpack.c.h.b16 %v58
    %v611 = vunpack.c.l.b16 %v59
    %v612 = vunpack.c.h.b16 %v59
    %v613 = vunpack.c.l.b16 %v60
    %v614 = vunpack.c.h.b16 %v60
    %v615 = vunpack.c.l.b16 %v61
    %v616 = vunpack.c.h.b16 %v61
    %v617 = vunpack.c.l.b16 %v62
    %v618 = vunpack.c.h.b16 %v62
    %v619 = vunpack.c.l.b16 %v63
    %v620 = vunpack.c.h.b16 %v63
    %v621 = vunpack.c.l.b16 %v64
    %v622 = vunpack.c.h.b16 %v64
    %v623 = vunpack.c.l.b16 %v65
    %v624 = vunpack.c.h.b16 %v65
    %v625 = vunpack.c.l.b16 %v66
    %v626 = vunpack.c.h.b16 %v66
    %v627 = vunpack.c.l.b16 %v67
    %v628 = vunpack.c.h.b16 %v67
    %v629 = vunpack.c.l.b16 %v68
    %v630 = vunpack.c.h.b16 %v68
    %v631 = vunpack.c.l.b16 %v69
    %v632 = vunpack.c.h.b16 %v69
    %v633 = vunpack.c.l.b16 %v70
    %v634 = vunpack.c.h.b16 %v70
    %v635 = vunpack.c.l.b16 %v71
    %v636 = vunpack.c.h.b16 %v71
    %v637 = vunpack.c.l.b16 %v72
    %v638 = vunpack.c.h.b16 %v72
    %v639 = vunpack.c.l.b16 %v73
    %v640 = vunpack.c.h.b16 %v73
    %v641 = vunpack.c.l.b16 %v74
    %v642 = vunpack.c.h.b16 %v74
    %v643 = vunpack.c.l.b16 %v75
    %v644 = vunpack.c.h.b16 %v75
    %v645 = vunpack.c.l.b16 %v76
    %v646 = vunpack.c.h.b16 %v76
    %v647 = vunpack.c.l.b16 %v77
    %v648 = vunpack.c.h.b16 %v77
    %v649 = vunpack.c.l.b16 %v78
    %v650 = vunpack.c.h.b16 %v78
    %v651 = vunpack.c.l.b16 %v79
    %v652 = vunpack.c.h.b16 %v79
    %v653 = vunpack.c.l.b16 %v80
    %v654 = vunpack.c.h.b16 %v80
    %v655 = vunpack.c.l.b16 %v81
    %v656 = vunpack.c.h.b16 %v81
    %v657 = vunpack.c.l.b16 %v82
    %v658 = vunpack.c.h.b16 %v82
    %v659 = vunpack.c.l.b16 %v83
    %v660 = vunpack.c.h.b16 %v83
    %v661 = vunpack.c.l.b16 %v84
    %v662 = vunpack.c.h.b16 %v84
    %v663 = vunpack.c.l.b16 %v85
    %v664 = vunpack.c.h.b16 %v85
    %v665 = vunpack.c.l.b16 %v86
    %v666 = vunpack.c.h.b16 %v86
    %v667 = vunpack.c.l.b16 %v87
    %v668 = vunpack.c.h.b16 %v87
    %v669 = vunpack.c.l.b16 %v88
    %v670 = vunpack.c.h.b16 %v88
    %v671 = vunpack.c.l.b16 %v89
    %v672 = vunpack.c.h.b16 %v89
    %v673 = vunpack.c.l.b16 %v90
    %v674 = vunpack.c.h.b16 %v90
    %v675 = vunpack.c.l.b16 %v91
    %v676 = vunpack.c.h.b16 %v91
    %v677 = vunpack.c.l.b16 %v92
    %v678 = vunpack.c.h.b16 %v92
    %v679 = vunpack.c.l.b16 %v93
    %v680 = vunpack.c.h.b16 %v93
    %v681 = vunpack.c.l.b16 %v94
    %v682 = vunpack.c.h.b16 %v94
    %v683 = vunpack.c.l.b16 %v95
    %v684 = vunpack.c.h.b16 %v95
    %v685 = vunpack.c.l.b16 %v96
    %v686 = vunpack.c.h.b16 %v96
    %v687 = vunpack.c.l.b16 %v97
    %v688 = vunpack.c.h.b16 %v97
    %v689 = vunpack.c.l.b16 %v98
    %v690 = vunpack.c.h.b16 %v98
    %v691 = vunpack.c.l.b16 %v99
    %v692 = vunpack.c.h.b16 %v99
    %v693 = vunpack.c.l.b16 %v100
    %v694 = vunpack.c.h.b16 %v100
    %v695 = vunpack.c.l.b16 %v101
    %v696 = vunpack.c.h.b16 %v101
    %v697 = vunpack.c.l.b16 %v102
    %v698 = vunpack.c.h.b16 %v102
    %v699 = vunpack.c.l.b16 %v103
    %v700 = vunpack.c.h.b16 %v103
    %v701 = vunpack.c.l.b16 %v104
    %v702 = vunpack.c.h.b16 %v104
    %v703 = vunpack.c.l.b16 %v105
    %v704 = vunpack.c.h.b16 %v105
    %v705 = vunpack.c.l.b16 %v106
    %v706 = vunpack.c.h.b16 %v106
    %v707 = vunpack.c.l.b16 %v107
    %v708 = vunpack.c.h.b16 %v107
    %v709 = vunpack.c.l.b16 %v108
    %v710 = vunpack.c.h.b16 %v108
    %v711 = vunpack.c.l.b16 %v109
    %v712 = vunpack.c.h.b16 %v109
    %v713 = vunpack.c.l.b16 %v110
    %v714 = vunpack.c.h.b16 %v110
    %v715 = vunpack.c.l.b16 %v111
    %v716 = vunpack.c.h.b16 %v111
    %v717 = vunpack.c.l.b16 %v112
    %v718 = vunpack.c.h.b16 %v112
    %v719 = vunpack.c.l.b16 %v113
    %v720 = vunpack.c.h.b16 %v113
    %v721 = vunpack.c.l.b16 %v114
    %v722 = vunpack.c.h.b16 %v114
    %v723 = vunpack.c.l.b16 %v115
    %v724 = vunpack.c.h.b16 %v115
    %v725 = vunpack.c.l.b16 %v116
    %v726 = vunpack.c.h.b16 %v116
    %v727 = vunpack.c.l.b16 %v117
    %v728 = vunpack.c.h.b16 %v117
    %v729 = vunpack.c.l.b16 %v118
    %v730 = vunpack.c.h.b16 %v118
    %v731 = vunpack.c.l.b16 %v119
    %v732 = vunpack.c.h.b16 %v119
    %v733 = vunpack.c.l.b16 %v120
    %v734 = vunpack.c.h.b16 %v120
    %v735 = vunpack.c.l.b16 %v121
    %v736 = vunpack.c.h.b16 %v121
    %v737 = vunpack.c.l.b16 %v122
    %v738 = vunpack.c.h.b16 %v122
    %v739 = vunpack.c.l.b16 %v123
    %v740 = vunpack.c.h.b16 %v123
    %v741 = vunpack.c.l.b16 %v124
    %v742 = vunpack.c.h.b16 %v124
    %v743 = vunpack.c.l.b16 %v125
    %v744 = vunpack.c.h.b16 %v125
    %v745 = vunpack.c.l.b16 %v126
    %v746 = vunpack.c.h.b16 %v126
    %v747 = vunpack.c.l.b16 %v127
    %v748 = vunpack.c.h.b16 %v127
    %v749 = vunpack.c.l.b16 %v128
    %v750 = vunpack.c.h.b16 %v128
    %v751 = vunpack.c.l.b16 %v129
    %v752 = vunpack.c.h.b16 %v129
    %v753 = vunpack.c.l.b16 %v130
    %v754 = vunpack.c.h.b16 %v130
    %v755 = vunpack.c.l.b16 %v131
    %v756 = vunpack.c.h.b16 %v131
    %v757 = vunpack.c.l.b16 %v132
    %v758 = vunpack.c.h.b16 %v132
    %v759 = vunpack.c.l.b16 %v133
    %v760 = vunpack.c.h.b16 %v133
    %v761 = vunpack.c.l.b16 %v134
    %v762 = vunpack.c.h.b16 %v134
    %v763 = vunpack.c.l.b16 %v135
    %v764 = vunpack.c.h.b16 %v135
    %v765 = vunpack.c.l.b16 %v136
    %v766 = vunpack.c.h.b16 %v136
    %v767 = vunpack.c.l.b16 %v137
    %v768 = vunpack.c.h.b16 %v137
    %v769 = vunpack.c.l.b16 %v138
    %v770 = vunpack.c.h.b16 %v138
    %v771 = vunpack.c.l.b16 %v139
    %v772 = vunpack.c.h.b16 %v139
    %v773 = vunpack.c.l.b16 %v140
    %v774 = vunpack.c.h.b16 %v140
    %v775 = vunpack.c.l.b16 %v141
    %v776 = vunpack.c.h.b16 %v141
    %v777 = vunpack.c.l.b16 %v142
    %v778 = vunpack.c.h.b16 %v142
    %v779 = vunpack.c.l.b16 %v143
    %v780 = vunpack.c.h.b16 %v143
    %v781 = vunpack.c.l.b16 %v144
    %v782 = vunpack.c.h.b16 %v144
    %v783 = vunpack.c.l.b16 %v145
    %v784 = vunpack.c.h.b16 %v145
    %v785 = vunpack.c.l.b16 %v146
    %v786 = vunpack.c.h.b16 %v146
    %v787 = vunpack.c.l.b16 %v147
    %v788 = vunpack.c.h.b16 %v147
    %v789 = vunpack.c.l.b16 %v148
    %v790 = vunpack.c.h.b16 %v148
    %v791 = vunpack.c.l.b16 %v149
    %v792 = vunpack.c.h.b16 %v149
    %v793 = vunpack.c.l.b16 %v150
    %v794 = vunpack.c.h.b16 %v150
    %v795 = vunpack.c.l.b16 %v151
    %v796 = vunpack.c.h.b16 %v151
    %v797 = vunpack.c.l.b16 %v152
    %v798 = vunpack.c.h.b16 %v152
    %v799 = vunpack.c.l.b16 %v153
    %v800 = vunpack.c.h.b16 %v153
    %v801 = vunpack.c.l.b16 %v154
    %v802 = vunpack.c.h.b16 %v154
    %v803 = vunpack.c.l.b16 %v155
    %v804 = vunpack.c.h.b16 %v155
    %v805 = vunpack.c.l.b16 %v156
    %v806 = vunpack.c.h.b16 %v156
    %v807 = vunpack.c.l.b16 %v157
    %v808 = vunpack.c.h.b16 %v157
    %v809 = vunpack.c.l.b16 %v158
    %v810 = vunpack.c.h.b16 %v158
    %v811 = vunpack.c.l.b16 %v159
    %v812 = vunpack.c.h.b16 %v159
    %v813 = vunpack.c.l.b16 %v160
    %v814 = vunpack.c.h.b16 %v160
    %v815 = vunpack.c.l.b16 %v161
    %v816 = vunpack.c.h.b16 %v161
    %v817 = vunpack.c.l.b16 %v162
    %v818 = vunpack.c.h.b16 %v162
    %v819 = vunpack.c.l.b16 %v163
    %v820 = vunpack.c.h.b16 %v163
    %v821 = vunpack.c.l.b16 %v164
    %v822 = vunpack.c.h.b16 %v164
    %v823 = vunpack.c.l.b16 %v165
    %v824 = vunpack.c.h.b16 %v165
    %v825 = vunpack.c.l.b16 %v166
    %v826 = vunpack.c.h.b16 %v166
    %v827 = vunpack.c.l.b16 %v167
    %v828 = vunpack.c.h.b16 %v167
    %v829 = vunpack.c.l.b16 %v168
    %v830 = vunpack.c.h.b16 %v168
    %v831 = vunpack.c.l.b16 %v169
    %v832 = vunpack.c.h.b16 %v169
    %v833 = vunpack.c.l.b16 %v170
    %v834 = vunpack.c.h.b16 %v170
    %v835 = vunpack.c.l.b16 %v171
    %v836 = vunpack.c.h.b16 %v171
    %v837 = vunpack.c.l.b16 %v172
    %v838 = vunpack.c.h.b16 %v172
    %v839 = vunpack.c.l.b16 %v173
    %v840 = vunpack.c.h.b16 %v173
    %v841 = vunpack.c.l.b16 %v174
    %v842 = vunpack.c.h.b16 %v174
    %v843 = vunpack.c.l.b16 %v175
    %v844 = vunpack.c.h.b16 %v175
    %v845 = vunpack.c.l.b16 %v176
    %v846 = vunpack.c.h.b16 %v176
    %v847 = vunpack.c.l.b16 %v177
    %v848 = vunpack.c.h.b16 %v177
    %v849 = vunpack.c.l.b16 %v178
    %v850 = vunpack.c.h.b16 %v178
    %v851 = vunpack.c.l.b16 %v179
    %v852 = vunpack.c.h.b16 %v179
    %v853 = vunpack.c.l.b16 %v180
    %v854 = vunpack.c.h.b16 %v180
    %v855 = vunpack.c.l.b16 %v181
    %v856 = vunpack.c.h.b16 %v181
    %v857 = vunpack.c.l.b16 %v182
    %v858 = vunpack.c.h.b16 %v182
    %v859 = vunpack.c.l.b16 %v183
    %v860 = vunpack.c.h.b16 %v183
    %v861 = vunpack.c.l.b16 %v184
    %v862 = vunpack.c.h.b16 %v184
    %v863 = vunpack.c.l.b16 %v185
    %v864 = vunpack.c.h.b16 %v185
    %v865 = vunpack.c.l.b16 %v186
    %v866 = vunpack.c.h.b16 %v186
    %v867 = vunpack.c.l.b16 %v187
    %v868 = vunpack.c.h.b16 %v187
    %v869 = vunpack.c.l.b16 %v188
    %v870 = vunpack.c.h.b16 %v188
    %v871 = vunpack.c.l.b16 %v189
    %v872 = vunpack.c.h.b16 %v189
    %v873 = vunpack.c.l.b16 %v190
    %v874 = vunpack.c.h.b16 %v190
    %v875 = vunpack.c.l.b16 %v191
    %v876 = vunpack.c.h.b16 %v191
    %v877 = vunpack.c.l.b16 %v192
    %v878 = vunpack.c.h.b16 %v192
    %v879 = vunpack.c.l.b16 %v193
    %v880 = vunpack.c.h.b16 %v193
    %v881 = vunpack.c.l.b16 %v194
    %v882 = vunpack.c.h.b16 %v194
    %v883 = vunpack.c.l.b16 %v195
    %v884 = vunpack.c.h.b16 %v195
    %v885 = vunpack.c.l.b16 %v196
    %v886 = vunpack.c.h.b16 %v196
    %v887 = vunpack.c.l.b16 %v197
    %v888 = vunpack.c.h.b16 %v197
    %v889 = vunpack.c.l.b16 %v198
    %v890 = vunpack.c.h.b16 %v198
    %v891 = vunpack.c.l.b16 %v199
    %v892 = vunpack.c.h.b16 %v199
    %v893 = vunpack.c.l.b16 %v200
    %v894 = vunpack.c.h.b16 %v200
    %v895 = vunpack.c.l.b16 %v201
    %v896 = vunpack.c.h.b16 %v201
    %v897 = vunpack.c.l.b16 %v202
    %v898 = vunpack.c.h.b16 %v202
    %v899 = vunpack.c.l.b16 %v203
    %v900 = vunpack.c.h.b16 %v203
    %v901 = vunpack.c.l.b16 %v204
    %v902 = vunpack.c.h.b16 %v204
    %v903 = vunpack.c.l.b16 %v205
    %v904 = vunpack.c.h.b16 %v205
    %v905 = vunpack.c.l.b16 %v206
    %v906 = vunpack.c.h.b16 %v206
    %v907 = vunpack.c.l.b16 %v207
    %v908 = vunpack.c.h.b16 %v207
    %v909 = vunpack.c.l.b16 %v208
    %v910 = vunpack.c.h.b16 %v208
    %v911 = vunpack.c.l.b16 %v209
    %v912 = vunpack.c.h.b16 %v209
    %v913 = vunpack.c.l.b16 %v210
    %v914 = vunpack.c.h.b16 %v210
    %v915 = vunpack.c.l.b16 %v211
    %v916 = vunpack.c.h.b16 %v211
    %v917 = vunpack.c.l.b16 %v212
    %v918 = vunpack.c.h.b16 %v212
    %v919 = vunpack.c.l.b16 %v213
    %v920 = vunpack.c.h.b16 %v213
    %v921 = vunpack.c.l.b16 %v214
    %v922 = vunpack.c.h.b16 %v214
    %v923 = vunpack.c.l.b16 %v215
    %v924 = vunpack.c.h.b16 %v215
    %v925 = vunpack.c.l.b16 %v216
    %v926 = vunpack.c.h.b16 %v216
    %v927 = vunpack.c.l.b16 %v217
    %v928 = vunpack.c.h.b16 %v217
    %v929 = vunpack.c.l.b16 %v218
    %v930 = vunpack.c.h.b16 %v218
    %v931 = vunpack.c.l.b16 %v219
    %v932 = vunpack.c.h.b16 %v219
    %v933 = vunpack.c.l.b16 %v220
    %v934 = vunpack.c.h.b16 %v220
    %v935 = vunpack.c.l.b16 %v221
    %v936 = vunpack.c.h.b16 %v221
    %v937 = vunpack.c.l.b16 %v222
    %v938 = vunpack.c.h.b16 %v222
    %v939 = vunpack.c.l.b16 %v223
    %v940 = vunpack.c.h.b16 %v223
    %v941 = vunpack.c.l.b16 %v224
    %v942 = vunpack.c.h.b16 %v224
    %v943 = vunpack.c.l.b16 %v225
    %v944 = vunpack.c.h.b16 %v225
    %v945 = vunpack.c.l.b16 %v226
    %v946 = vunpack.c.h.b16 %v226
    %v947 = vunpack.c.l.b16 %v227
    %v948 = vunpack.c.h.b16 %v227
    %v949 = vunpack.c.l.b16 %v228
    %v950 = vunpack.c.h.b16 %v228
    %v951 = vunpack.c.l.b16 %v229
    %v952 = vunpack.c.h.b16 %v229
    %v953 = vunpack.c.l.b16 %v230
    %v954 = vunpack.c.h.b16 %v230
    %v955 = vunpack.c.l.b16 %v231
    %v956 = vunpack.c.h.b16 %v231
    %v957 = vunpack.c.l.b16 %v232
    %v958 = vunpack.c.h.b16 %v232
    %v959 = vunpack.c.l.b16 %v233
    %v960 = vunpack.c.h.b16 %v233
    %v961 = vunpack.c.l.b16 %v234
    %v962 = vunpack.c.h.b16 %v234
    %v963 = vunpack.c.l.b16 %v235
    %v964 = vunpack.c.h.b16 %v235
    %v965 = vunpack.c.l.b16 %v236
    %v966 = vunpack.c.h.b16 %v236
    %v967 = vunpack.c.l.b16 %v237
    %v968 = vunpack.c.h.b16 %v237
    %v969 = vunpack.c.l.b16 %v238
    %v970 = vunpack.c.h.b16 %v238
    %v971 = vunpack.c.l.b16 %v239
    %v972 = vunpack.c.h.b16 %v239
    %v973 = vunpack.c.l.b16 %v240
    %v974 = vunpack.c.h.b16 %v240
    %v975 = vunpack.c.l.b16 %v241
    %v976 = vunpack.c.h.b16 %v241
    %v977 = vunpack.c.l.b16 %v242
    %v978 = vunpack.c.h.b16 %v242
    %v979 = vunpack.c.l.b16 %v243
    %v980 = vunpack.c.h.b16 %v243
    %v981 = vunpack.c.l.b16 %v244
    %v982 = vunpack.c.h.b16 %v244
    %v983 = vunpack.c.l.b16 %v245
    %v984 = vunpack.c.h.b16 %v245
    %v985 = vunpack.c.l.b16 %v246
    %v986 = vunpack.c.h.b16 %v246
    %v987 = vunpack.c.l.b16 %v247
    %v988 = vunpack.c.h.b16 %v247
    %v989 = vunpack.c.l.b16 %v248
    %v990 = vunpack.c.h.b16 %v248
    %v991 = vunpack.c.l.b16 %v249
    %v992 = vunpack.c.h.b16 %v249
    %v993 = vunpack.c.l.b16 %v250
    %v994 = vunpack.c.h.b16 %v250
    %v995 = vunpack.c.l.b16 %v251
    %v996 = vunpack.c.h.b16 %v251
    %v997 = vunpack.c.l.b16 %v252
    %v998 = vunpack.c.h.b16 %v252
    %v999 = vunpack.c.l.b16 %v253
    %v1000 = vunpack.c.h.b16 %v253
    %v1001 = vunpack.c.l.b16 %v254
    %v1002 = vunpack.c.h.b16 %v254
    %v1003 = vunpack.c.l.b16 %v255
    %v1004 = vunpack.c.h.b16 %v255
    %v1005 = vunpack.c.l.b16 %v256
    %v1006 = vunpack.c.h.b16 %v256
    %v1007 = vunpack.c.l.b16 %v257
    %v1008 = vunpack.c.h.b16 %v257
    %v1009 = vunpack.c.l.b16 %v258
    %v1010 = vunpack.c.h.b16 %v258
    %v1011 = vunpack.c.l.b16 %v259
    %v1012 = vunpack.c.h.b16 %v259
    %v1013 = vunpack.c.l.b16 %v260
    %v1014 = vunpack.c.h.b16 %v260
    %v1015 = vunpack.c.l.b16 %v261
    %v1016 = vunpack.c.h.b16 %v261
    %v1017 = vunpack.c.l.b16 %v262
    %v1018 = vunpack.c.h.b16 %v262
    %v1019 = vunpack.c.l.b16 %v263
    %v1020 = vunpack.c.h.b16 %v263
    %v1021 = vunpack.c.l.b16 %v264
    %v1022 = vunpack.c.h.b16 %v264
    %v1023 = vunpack.c.l.b16 %v265
    %v1024 = vunpack.c.h.b16 %v265
    %v1025 = vunpack.c.l.b16 %v266
    %v1026 = vunpack.c.h.b16 %v266
    %v1027 = vunpack.c.l.b16 %v267
    %v1028 = vunpack.c.h.b16 %v267
    %v1029 = vunpack.c.l.b16 %v268
    %v1030 = vunpack.c.h.b16 %v268
    %v1031 = vunpack.c.l.b16 %v269
    %v1032 = vunpack.c.h.b16 %v269
    %v1033 = vunpack.c.l.b16 %v270
    %v1034 = vunpack.c.h.b16 %v270
    %v1035 = vunpack.c.l.b16 %v271
    %v1036 = vunpack.c.h.b16 %v271
    %v1037 = vunpack.c.l.b16 %v272
    %v1038 = vunpack.c.h.b16 %v272
    %v1039 = vunpack.c.l.b16 %v273
    %v1040 = vunpack.c.h.b16 %v273
    %v1041 = vunpack.c.l.b16 %v274
    %v1042 = vunpack.c.h.b16 %v274
    %v1043 = vunpack.c.l.b16 %v275
    %v1044 = vunpack.c.h.b16 %v275
    %v1045 = vunpack.c.l.b16 %v276
    %v1046 = vunpack.c.h.b16 %v276
    %v1047 = vunpack.c.l.b16 %v277
    %v1048 = vunpack.c.h.b16 %v277
    %v1049 = vunpack.c.l.b16 %v278
    %v1050 = vunpack.c.h.b16 %v278
    %v1051 = vunpack.c.l.b16 %v279
    %v1052 = vunpack.c.h.b16 %v279
    %v1053 = vunpack.c.l.b16 %v280
    %v1054 = vunpack.c.h.b16 %v280
    %v1055 = vunpack.c.l.b16 %v281
    %v1056 = vunpack.c.h.b16 %v281
    %v1057 = vunpack.c.l.b16 %v282
    %v1058 = vunpack.c.h.b16 %v282
    %v1059 = vunpack.c.l.b16 %v283
    %v1060 = vunpack.c.h.b16 %v283
    %v1061 = vunpack.c.l.b16 %v284
    %v1062 = vunpack.c.h.b16 %v284
    %v1063 = vunpack.c.l.b16 %v285
    %v1064 = vunpack.c.h.b16 %v285
    %v1065 = vunpack.c.l.b16 %v286
    %v1066 = vunpack.c.h.b16 %v286
    %v1067 = vunpack.c.l.b16 %v287
    %v1068 = vunpack.c.h.b16 %v287
    %v1069 = vunpack.c.l.b16 %v288
    %v1070 = vunpack.c.h.b16 %v288
    %v1071 = vunpack.c.l.b16 %v289
    %v1072 = vunpack.c.h.b16 %v289
    %v1073 = vunpack.c.l.b16 %v290
    %v1074 = vunpack.c.h.b16 %v290
    %v1075 = vunpack.c.l.b16 %v291
    %v1076 = vunpack.c.h.b16 %v291
    %v1077 = vunpack.c.l.b16 %v292
    %v1078 = vunpack.c.h.b16 %v292
    %v1079 = vpack.c.b16 %v571, %v567
    %v1080 = vpack.c.b16 %v572, %v568
    %v1081 = vpack.c.b16 %v573, %v569
    %v1082 = vpack.c.b16 %v574, %v570
    %v1083 = vpack.c.b16 %v579, %v575
    %v1084 = vpack.c.b16 %v580, %v576
    %v1085 = vpack.c.b16 %v581, %v577
    %v1086 = vpack.c.b16 %v582, %v578
    %v1087 = vpack.c.b16 %v587, %v583
    %v1088 = vpack.c.b16 %v588, %v584
    %v1089 = vpack.c.b16 %v589, %v585
    %v1090 = vpack.c.b16 %v590, %v586
    %v1091 = vpack.c.b16 %v595, %v591
    %v1092 = vpack.c.b16 %v596, %v592
    %v1093 = vpack.c.b16 %v597, %v593
    %v1094 = vpack.c.b16 %v598, %v594
    %v1095 = vpack.c.b16 %v603, %v599
    %v1096 = vpack.c.b16 %v604, %v600
    %v1097 = vpack.c.b16 %v605, %v601
    %v1098 = vpack.c.b16 %v606, %v602
    %v1099 = vpack.c.b16 %v611, %v607
    %v1100 = vpack.c.b16 %v612, %v608
    %v1101 = vpack.c.b16 %v613, %v609
    %v1102 = vpack.c.b16 %v614, %v610
    %v1103 = vpack.c.b16 %v619, %v615
    %v1104 = vpack.c.b16 %v620, %v616
    %v1105 = vpack.c.b16 %v621, %v617
    %v1106 = vpack.c.b16 %v622, %v618
    %v1107 = vpack.c.b16 %v627, %v623
    %v1108 = vpack.c.b16 %v628, %v624
    %v1109 = vpack.c.b16 %v629, %v625
    %v1110 = vpack.c.b16 %v630, %v626
    %v1111 = vpack.c.b16 %v635, %v631
    %v1112 = vpack.c.b16 %v636, %v632
    %v1113 = vpack.c.b16 %v637, %v633
    %v1114 = vpack.c.b16 %v638, %v634
    %v1115 = vpack.c.b16 %v643, %v639
    %v1116 = vpack.c.b16 %v644, %v640
    %v1117 = vpack.c.b16 %v645, %v641
    %v1118 = vpack.c.b16 %v646, %v642
    %v1119 = vpack.c.b16 %v651, %v647
    %v1120 = vpack.c.b16 %v652, %v648
    %v1121 = vpack.c.b16 %v653, %v649
    %v1122 = vpack.c.b16 %v654, %v650
    %v1123 = vpack.c.b16 %v659, %v655
    %v1124 = vpack.c.b16 %v660, %v656
    %v1125 = vpack.c.b16 %v661, %v657
    %v1126 = vpack.c.b16 %v662, %v658
    %v1127 = vpack.c.b16 %v667, %v663
    %v1128 = vpack.c.b16 %v668, %v664
    %v1129 = vpack.c.b16 %v669, %v665
    %v1130 = vpack.c.b16 %v670, %v666
    %v1131 = vpack.c.b16 %v675, %v671
    %v1132 = vpack.c.b16 %v676, %v672
    %v1133 = vpack.c.b16 %v677, %v673
    %v1134 = vpack.c.b16 %v678, %v674
    %v1135 = vpack.c.b16 %v683, %v679
    %v1136 = vpack.c.b16 %v684, %v680
    %v1137 = vpack.c.b16 %v685, %v681
    %v1138 = vpack.c.b16 %v686, %v682
    %v1139 = vpack.c.b16 %v691, %v687
    %v1140 = vpack.c.b16 %v692, %v688
    %v1141 = vpack.c.b16 %v693, %v689
    %v1142 = vpack.c.b16 %v694, %v690
    %v1143 = vpack.c.b16 %v699, %v695
    %v1144 = vpack.c.b16 %v700, %v696
    %v1145 = vpack.c.b16 %v701, %v697
    %v1146 = vpack.c.b16 %v702, %v698
    %v1147 = vpack.c.b16 %v707, %v703
    %v1148 = vpack.c.b16 %v708, %v704
    %v1149 = vpack.c.b16 %v709, %v705
    %v1150 = vpack.c.b16 %v710, %v706
    %v1151 = vpack.c.b16 %v715, %v711
    %v1152 = vpack.c.b16 %v716, %v712
    %v1153 = vpack.c.b16 %v717, %v713
    %v1154 = vpack.c.b16 %v718, %v714
    %v1155 = vpack.c.b16 %v723, %v719
    %v1156 = vpack.c.b16 %v724, %v720
    %v1157 = vpack.c.b16 %v725, %v721
    %v1158 = vpack.c.b16 %v726, %v722
    %v1159 = vpack.c.b16 %v731, %v727
    %v1160 = vpack.c.b16 %v732, %v728
    %v1161 = vpack.c.b16 %v733, %v729
    %v1162 = vpack.c.b16 %v734, %v730
    %v1163 = vpack.c.b16 %v739, %v735
    %v1164 = vpack.c.b16 %v740, %v736
    %v1165 = vpack.c.b16 %v741, %v737
    %v1166 = vpack.c.b16 %v742, %v738
    %v1167 = vpack.c.b16 %v747, %v743
    %v1168 = vpack.c.b16 %v748, %v744
    %v1169 = vpack.c.b16 %v749, %v745
    %v1170 = vpack.c.b16 %v750, %v746
    %v1171 = vpack.c.b16 %v755, %v751
    %v1172 = vpack.c.b16 %v756, %v752
    %v1173 = vpack.c.b16 %v757, %v753
    %v1174 = vpack.c.b16 %v758, %v754
    %v1175 = vpack.c.b16 %v763, %v759
    %v1176 = vpack.c.b16 %v764, %v760
    %v1177 = vpack.c.b16 %v765, %v761
    %v1178 = vpack.c.b16 %v766, %v762
    %v1179 = vpack.c.b16 %v771, %v767
    %v1180 = vpack.c.b16 %v772, %v768
    %v1181 = vpack.c.b16 %v773, %v769
    %v1182 = vpack.c.b16 %v774, %v770
    %v1183 = vpack.c.b16 %v779, %v775
    %v1184 = vpack.c.b16 %v780, %v776
    %v1185 = vpack.c.b16 %v781, %v777
    %v1186 = vpack.c.b16 %v782, %v778
    %v1187 = vpack.c.b16 %v787, %v783
    %v1188 = vpack.c.b16 %v788, %v784
    %v1189 = vpack.c.b16 %v789, %v785
    %v1190 = vpack.c.b16 %v790, %v786
    %v1191 = vpack.c.b16 %v795, %v791
    %v1192 = vpack.c.b16 %v796, %v792
    %v1193 = vpack.c.b16 %v797, %v793
    %v1194 = vpack.c.b16 %v798, %v794
    %v1195 = vpack.c.b16 %v803, %v799
    %v1196 = vpack.c.b16 %v804, %v800
    %v1197 = vpack.c.b16 %v805, %v801
    %v1198 = vpack.c.b16 %v806, %v802
    %v1199 = vpack.c.b16 %v811, %v807
    %v1200 = vpack.c.b16 %v812, %v808
    %v1201 = vpack.c.b16 %v813, %v809
    %v1202 = vpack.c.b16 %v814, %v810
    %v1203 = vpack.c.b16 %v819, %v815
    %v1204 = vpack.c.b16 %v820, %v816
    %v1205 = vpack.c.b16 %v821, %v817
    %v1206 = vpack.c.b16 %v822, %v818
    %v1207 = vpack.c.b16 %v827, %v823
    %v1208 = vpack.c.b16 %v828, %v824
    %v1209 = vpack.c.b16 %v829, %v825
    %v1210 = vpack.c.b16 %v830, %v826
    %v1211 = vpack.c.b16 %v835, %v831
    %v1212 = vpack.c.b16 %v836, %v832
    %v1213 = vpack.c.b16 %v837, %v833
    %v1214 = vpack.c.b16 %v838, %v834
    %v1215 = vpack.c.b16 %v843, %v839
    %v1216 = vpack.c.b16 %v844, %v840
    %v1217 = vpack.c.b16 %v845, %v841
    %v1218 = vpack.c.b16 %v846, %v842
    %v1219 = vpack.c.b16 %v851, %v847
    %v1220 = vpack.c.b16 %v852, %v848
    %v1221 = vpack.c.b16 %v853, %v849
    %v1222 = vpack.c.b16 %v854, %v850
    %v1223 = vpack.c.b16 %v859, %v855
    %v1224 = vpack.c.b16 %v860, %v856
    %v1225 = vpack.c.b16 %v861, %v857
    %v1226 = vpack.c.b16 %v862, %v858
    %v1227 = vpack.c.b16 %v867, %v863
    %v1228 = vpack.c.b16 %v868, %v864
    %v1229 = vpack.c.b16 %v869, %v865
    %v1230 = vpack.c.b16 %v870, %v866
    %v1231 = vpack.c.b16 %v875, %v871
    %v1232 = vpack.c.b16 %v876, %v872
    %v1233 = vpack.c.b16 %v877, %v873
    %v1234 = vpack.c.b16 %v878, %v874
    %v1235 = vpack.c.b16 %v883, %v879
    %v1236 = vpack.c.b16 %v884, %v880
    %v1237 = vpack.c.b16 %v885, %v881
    %v1238 = vpack.c.b16 %v886, %v882
    %v1239 = vpack.c.b16 %v891, %v887
    %v1240 = vpack.c.b16 %v892, %v888
    %v1241 = vpack.c.b16 %v893, %v889
    %v1242 = vpack.c.b16 %v894, %v890
    %v1243 = vpack.c.b16 %v899, %v895
    %v1244 = vpack.c.b16 %v900, %v896
    %v1245 = vpack.c.b16 %v901, %v897
    %v1246 = vpack.c.b16 %v902, %v898
    %v1247 = vpack.c.b16 %v907, %v903
    %v1248 = vpack.c.b16 %v908, %v904
    %v1249 = vpack.c.b16 %v909, %v905
    %v1250 = vpack.c.b16 %v910, %v906
    %v1251 = vpack.c.b16 %v915, %v911
    %v1252 = vpack.c.b16 %v916, %v912
    %v1253 = vpack.c.b16 %v917, %v913
    %v1254 = vpack.c.b16 %v918, %v914
    %v1255 = vpack.c.b16 %v923, %v919
    %v1256 = vpack.c.b16 %v924, %v920
    %v1257 = vpack.c.b16 %v925, %v921
    %v1258 = vpack.c.b16 %v926, %v922
    %v1259 = vpack.c.b16 %v931, %v927
    %v1260 = vpack.c.b16 %v932, %v928
    %v1261 = vpack.c.b16 %v933, %v929
    %v1262 = vpack.c.b16 %v934, %v930
    %v1263 = vpack.c.b16 %v939, %v935
    %v1264 = vpack.c.b16 %v940, %v936
    %v1265 = vpack.c.b16 %v941, %v937
    %v1266 = vpack.c.b16 %v942, %v938
    %v1267 = vpack.c.b16 %v947, %v943
    %v1268 = vpack.c.b16 %v948, %v944
    %v1269 = vpack.c.b16 %v949, %v945
    %v1270 = vpack.c.b16 %v950, %v946
    %v1271 = vpack.c.b16 %v955, %v951
    %v1272 = vpack.c.b16 %v956, %v952
    %v1273 = vpack.c.b16 %v957, %v953
    %v1274 = vpack.c.b16 %v958, %v954
    %v1275 = vpack.c.b16 %v963, %v959
    %v1276 = vpack.c.b16 %v964, %v960
    %v1277 = vpack.c.b16 %v965, %v961
    %v1278 = vpack.c.b16 %v966, %v962
    %v1279 = vpack.c.b16 %v971, %v967
    %v1280 = vpack.c.b16 %v972, %v968
    %v1281 = vpack.c.b16 %v973, %v969
    %v1282 = vpack.c.b16 %v974, %v970
    %v1283 = vpack.c.b16 %v979, %v975
    %v1284 = vpack.c.b16 %v980, %v976
    %v1285 = vpack.c.b16 %v981, %v977
    %v1286 = vpack.c.b16 %v982, %v978
    %v1287 = vpack.c.b16 %v987, %v983
    %v1288 = vpack.c.b16 %v988, %v984
    %v1289 = vpack.c.b16 %v989, %v985
    %v1290 = vpack.c.b16 %v990, %v986
    %v1291 = vpack.c.b16 %v995, %v991
    %v1292 = vpack.c.b16 %v996, %v992
    %v1293 = vpack.c.b16 %v997, %v993
    %v1294 = vpack.c.b16 %v998, %v994
    %v1295 = vpack.c.b16 %v1003, %v999
    %v1296 = vpack.c.b16 %v1004, %v1000
    %v1297 = vpack.c.b16 %v1005, %v1001
    %v1298 = vpack.c.b16 %v1006, %v1002
    %v1299 = vpack.c.b16 %v1011, %v1007
    %v1300 = vpack.c.b16 %v1012, %v1008
    %v1301 = vpack.c.b16 %v1013, %v1009
    %v1302 = vpack.c.b16 %v1014, %v1010
    %v1303 = vpack.c.b16 %v1019, %v1015
    %v1304 = vpack.c.b16 %v1020, %v1016
    %v1305 = vpack.c.b16 %v1021, %v1017
    %v1306 = vpack.c.b16 %v1022, %v1018
    %v1307 = vpack.c.b16 %v1027, %v1023
    %v1308 = vpack.c.b16 %v1028, %v1024
    %v1309 = vpack.c.b16 %v1029, %v1025
    %v1310 = vpack.c.b16 %v1030, %v1026
    %v1311 = vpack.c.b16 %v1035, %v1031
    %v1312 = vpack.c.b16 %v1036, %v1032
    %v1313 = vpack.c.b16 %v1037, %v1033
    %v1314 = vpack.c.b16 %v1038, %v1034
    %v1315 = vpack.c.b16 %v1043, %v1039
    %v1316 = vpack.c.b16 %v1044, %v1040
    %v1317 = vpack.c.b16 %v1045, %v1041
    %v1318 = vpack.c.b16 %v1046, %v1042
    %v1319 = vpack.c.b16 %v1051, %v1047
    %v1320 = vpack.c.b16 %v1052, %v1048
    %v1321 = vpack.c.b16 %v1053, %v1049
    %v1322 = vpack.c.b16 %v1054, %v1050
    %v1323 = vpack.c.b16 %v1059, %v1055
    %v1324 = vpack.c.b16 %v1060, %v1056
    %v1325 = vpack.c.b16 %v1061, %v1057
    %v1326 = vpack.c.b16 %v1062, %v1058
    %v1327 = vpack.c.b16 %v1067, %v1063
    %v1328 = vpack.c.b16 %v1068, %v1064
    %v1329 = vpack.c.b16 %v1069, %v1065
    %v1330 = vpack.c.b16 %v1070, %v1066
    %v1331 = vpack.c.b16 %v1075, %v1071
    %v1332 = vpack.c.b16 %v1076, %v1072
    %v1333 = vpack.c.b16 %v1077, %v1073
    %v1334 = vpack.c.b16 %v1078, %v1074
    %1591 = vmatpush.bf16.msra.mxu0 %v1107
    %1592 = vmatpush.bf16.msra.mxu0 %v1103
    %1593 = vmatpush.bf16.msra.mxu0 %v1099
    %1594 = vmatpush.bf16.msra.mxu0 %v1095
    %1595 = vmatpush.bf16.msra.mxu0 %v1091
    %1596 = vmatpush.bf16.msra.mxu0 %v1087
    %1597 = vmatpush.bf16.msra.mxu0 %v1083
    %1598 = vmatpush.bf16.msra.mxu0 %v1079
    %1599 = vmatmul.bf16.gmra.mxu0 %v295
    %v1600 = vpop.f32.mrf.mxu0
    %v1601 = vadd.f32 0.0, %v1600
    %v1602 = vpop.f32.mrf.mxu0
    %1603 = vdwg.mxu0
    %1604 = vmatpush.bf16.msra.mxu0 %v1139
    %1605 = vmatpush.bf16.msra.mxu0 %v1135
    %1606 = vmatpush.bf16.msra.mxu0 %v1131
    %1607 = vmatpush.bf16.msra.mxu0 %v1127
    %1608 = vmatpush.bf16.msra.mxu0 %v1123
    %1609 = vmatpush.bf16.msra.mxu0 %v1119
    %1610 = vmatpush.bf16.msra.mxu0 %v1115
    %1611 = vmatpush.bf16.msra.mxu0 %v1111
    %1612 = vmatmul.bf16.gmra.mxu0 %v296
    %v1613 = vpop.f32.mrf.mxu0
    %v1614 = vadd.f32 %v1601, %v1613
    %v1615 = vpop.f32.mrf.mxu0
    %1616 = vdwg.mxu0
    %1617 = vmatpush.bf16.msra.mxu0 %v1171
    %1618 = vmatpush.bf16.msra.mxu0 %v1167
    %1619 = vmatpush.bf16.msra.mxu0 %v1163
    %1620 = vmatpush.bf16.msra.mxu0 %v1159
    %1621 = vmatpush.bf16.msra.mxu0 %v1155
    %1622 = vmatpush.bf16.msra.mxu0 %v1151
    %1623 = vmatpush.bf16.msra.mxu0 %v1147
    %1624 = vmatpush.bf16.msra.mxu0 %v1143
    %1625 = vmatmul.bf16.gmra.mxu0 %v297
    %v1626 = vpop.f32.mrf.mxu0
    %v1627 = vadd.f32 %v1614, %v1626
    %v1628 = vpop.f32.mrf.mxu0
    %1629 = vdwg.mxu0
    %1630 = vmatpush.bf16.msra.mxu0 %v1203
    %1631 = vmatpush.bf16.msra.mxu0 %v1199
    %1632 = vmatpush.bf16.msra.mxu0 %v1195
    %1633 = vmatpush.bf16.msra.mxu0 %v1191
    %1634 = vmatpush.bf16.msra.mxu0 %v1187
    %1635 = vmatpush.bf16.msra.mxu0 %v1183
    %1636 = vmatpush.bf16.msra.mxu0 %v1179
    %1637 = vmatpush.bf16.msra.mxu0 %v1175
    %1638 = vmatmul.bf16.gmra.mxu0 %v298
    %v1639 = vpop.f32.mrf.mxu0
    %v1640 = vadd.f32 %v1627, %v1639
    %v1641 = vpop.f32.mrf.mxu0
    %1642 = vdwg.mxu0
    %1643 = vmatpush.bf16.msra.mxu0 %v1235
    %1644 = vmatpush.bf16.msra.mxu0 %v1231
    %1645 = vmatpush.bf16.msra.mxu0 %v1227
    %1646 = vmatpush.bf16.msra.mxu0 %v1223
    %1647 = vmatpush.bf16.msra.mxu0 %v1219
    %1648 = vmatpush.bf16.msra.mxu0 %v1215
    %1649 = vmatpush.bf16.msra.mxu0 %v1211
    %1650 = vmatpush.bf16.msra.mxu0 %v1207
    %1651 = vmatmul.bf16.gmra.mxu0 %v299
    %v1652 = vpop.f32.mrf.mxu0
    %v1653 = vadd.f32 %v1640, %v1652
    %v1654 = vpop.f32.mrf.mxu0
    %1655 = vdwg.mxu0
    %1656 = vmatpush.bf16.msra.mxu0 %v1267
    %1657 = vmatpush.bf16.msra.mxu0 %v1263
    %1658 = vmatpush.bf16.msra.mxu0 %v1259
    %1659 = vmatpush.bf16.msra.mxu0 %v1255
    %1660 = vmatpush.bf16.msra.mxu0 %v1251
    %1661 = vmatpush.bf16.msra.mxu0 %v1247
    %1662 = vmatpush.bf16.msra.mxu0 %v1243
    %1663 = vmatpush.bf16.msra.mxu0 %v1239
    %1664 = vmatmul.bf16.gmra.mxu0 %v300
    %v1665 = vpop.f32.mrf.mxu0
    %v1666 = vadd.f32 %v1653, %v1665
    %v1667 = vpop.f32.mrf.mxu0
    %1668 = vdwg.mxu0
    %1669 = vmatpush.bf16.msra.mxu0 %v1299
    %1670 = vmatpush.bf16.msra.mxu0 %v1295
    %1671 = vmatpush.bf16.msra.mxu0 %v1291
    %1672 = vmatpush.bf16.msra.mxu0 %v1287
    %1673 = vmatpush.bf16.msra.mxu0 %v1283
    %1674 = vmatpush.bf16.msra.mxu0 %v1279
    %1675 = vmatpush.bf16.msra.mxu0 %v1275
    %1676 = vmatpush.bf16.msra.mxu0 %v1271
    %1677 = vmatmul.bf16.gmra.mxu0 %v301
    %v1678 = vpop.f32.mrf.mxu0
    %v1679 = vadd.f32 %v1666, %v1678
    %v1680 = vpop.f32.mrf.mxu0
    %1681 = vdwg.mxu0
    %1682 = vmatpush.bf16.msra.mxu0 %v1331
    %1683 = vmatpush.bf16.msra.mxu0 %v1327
    %1684 = vmatpush.bf16.msra.mxu0 %v1323
    %1685 = vmatpush.bf16.msra.mxu0 %v1319
    %1686 = vmatpush.bf16.msra.mxu0 %v1315
    %1687 = vmatpush.bf16.msra.mxu0 %v1311
    %1688 = vmatpush.bf16.msra.mxu0 %v1307
    %1689 = vmatpush.bf16.msra.mxu0 %v1303
    %1690 = vmatmul.bf16.gmra.mxu0 %v302
    %v1691 = vpop.f32.mrf.mxu0
    %v1692 = vadd.f32 %v1679, %v1691
    %v1693 = vpop.f32.mrf.mxu0
    %1694 = vdwg.mxu0
    %1695 = vmatpush.bf16.msra.mxu0 %v1108
    %1696 = vmatpush.bf16.msra.mxu0 %v1104
    %1697 = vmatpush.bf16.msra.mxu0 %v1100
    %1698 = vmatpush.bf16.msra.mxu0 %v1096
    %1699 = vmatpush.bf16.msra.mxu0 %v1092
    %1700 = vmatpush.bf16.msra.mxu0 %v1088
    %1701 = vmatpush.bf16.msra.mxu0 %v1084
    %1702 = vmatpush.bf16.msra.mxu0 %v1080
    %1703 = vmatmul.bf16.gmra.mxu0 %v295
    %v1704 = vpop.f32.mrf.mxu0
    %v1705 = vadd.f32 0.0, %v1704
    %v1706 = vpop.f32.mrf.mxu0
    %1707 = vdwg.mxu0
    %1708 = vmatpush.bf16.msra.mxu0 %v1140
    %1709 = vmatpush.bf16.msra.mxu0 %v1136
    %1710 = vmatpush.bf16.msra.mxu0 %v1132
    %1711 = vmatpush.bf16.msra.mxu0 %v1128
    %1712 = vmatpush.bf16.msra.mxu0 %v1124
    %1713 = vmatpush.bf16.msra.mxu0 %v1120
    %1714 = vmatpush.bf16.msra.mxu0 %v1116
    %1715 = vmatpush.bf16.msra.mxu0 %v1112
    %1716 = vmatmul.bf16.gmra.mxu0 %v296
    %v1717 = vpop.f32.mrf.mxu0
    %v1718 = vadd.f32 %v1705, %v1717
    %v1719 = vpop.f32.mrf.mxu0
    %1720 = vdwg.mxu0
    %1721 = vmatpush.bf16.msra.mxu0 %v1172
    %1722 = vmatpush.bf16.msra.mxu0 %v1168
    %1723 = vmatpush.bf16.msra.mxu0 %v1164
    %1724 = vmatpush.bf16.msra.mxu0 %v1160
    %1725 = vmatpush.bf16.msra.mxu0 %v1156
    %1726 = vmatpush.bf16.msra.mxu0 %v1152
    %1727 = vmatpush.bf16.msra.mxu0 %v1148
    %1728 = vmatpush.bf16.msra.mxu0 %v1144
    %1729 = vmatmul.bf16.gmra.mxu0 %v297
    %v1730 = vpop.f32.mrf.mxu0
    %v1731 = vadd.f32 %v1718, %v1730
    %v1732 = vpop.f32.mrf.mxu0
    %1733 = vdwg.mxu0
    %1734 = vmatpush.bf16.msra.mxu0 %v1204
    %1735 = vmatpush.bf16.msra.mxu0 %v1200
    %1736 = vmatpush.bf16.msra.mxu0 %v1196
    %1737 = vmatpush.bf16.msra.mxu0 %v1192
    %1738 = vmatpush.bf16.msra.mxu0 %v1188
    %1739 = vmatpush.bf16.msra.mxu0 %v1184
    %1740 = vmatpush.bf16.msra.mxu0 %v1180
    %1741 = vmatpush.bf16.msra.mxu0 %v1176
    %1742 = vmatmul.bf16.gmra.mxu0 %v298
    %v1743 = vpop.f32.mrf.mxu0
    %v1744 = vadd.f32 %v1731, %v1743
    %v1745 = vpop.f32.mrf.mxu0
    %1746 = vdwg.mxu0
    %1747 = vmatpush.bf16.msra.mxu0 %v1236
    %1748 = vmatpush.bf16.msra.mxu0 %v1232
    %1749 = vmatpush.bf16.msra.mxu0 %v1228
    %1750 = vmatpush.bf16.msra.mxu0 %v1224
    %1751 = vmatpush.bf16.msra.mxu0 %v1220
    %1752 = vmatpush.bf16.msra.mxu0 %v1216
    %1753 = vmatpush.bf16.msra.mxu0 %v1212
    %1754 = vmatpush.bf16.msra.mxu0 %v1208
    %1755 = vmatmul.bf16.gmra.mxu0 %v299
    %v1756 = vpop.f32.mrf.mxu0
    %v1757 = vadd.f32 %v1744, %v1756
    %v1758 = vpop.f32.mrf.mxu0
    %1759 = vdwg.mxu0
    %1760 = vmatpush.bf16.msra.mxu0 %v1268
    %1761 = vmatpush.bf16.msra.mxu0 %v1264
    %1762 = vmatpush.bf16.msra.mxu0 %v1260
    %1763 = vmatpush.bf16.msra.mxu0 %v1256
    %1764 = vmatpush.bf16.msra.mxu0 %v1252
    %1765 = vmatpush.bf16.msra.mxu0 %v1248
    %1766 = vmatpush.bf16.msra.mxu0 %v1244
    %1767 = vmatpush.bf16.msra.mxu0 %v1240
    %1768 = vmatmul.bf16.gmra.mxu0 %v300
    %v1769 = vpop.f32.mrf.mxu0
    %v1770 = vadd.f32 %v1757, %v1769
    %v1771 = vpop.f32.mrf.mxu0
    %1772 = vdwg.mxu0
    %1773 = vmatpush.bf16.msra.mxu0 %v1300
    %1774 = vmatpush.bf16.msra.mxu0 %v1296
    %1775 = vmatpush.bf16.msra.mxu0 %v1292
    %1776 = vmatpush.bf16.msra.mxu0 %v1288
    %1777 = vmatpush.bf16.msra.mxu0 %v1284
    %1778 = vmatpush.bf16.msra.mxu0 %v1280
    %1779 = vmatpush.bf16.msra.mxu0 %v1276
    %1780 = vmatpush.bf16.msra.mxu0 %v1272
    %1781 = vmatmul.bf16.gmra.mxu0 %v301
    %v1782 = vpop.f32.mrf.mxu0
    %v1783 = vadd.f32 %v1770, %v1782
    %v1784 = vpop.f32.mrf.mxu0
    %1785 = vdwg.mxu0
    %1786 = vmatpush.bf16.msra.mxu0 %v1332
    %1787 = vmatpush.bf16.msra.mxu0 %v1328
    %1788 = vmatpush.bf16.msra.mxu0 %v1324
    %1789 = vmatpush.bf16.msra.mxu0 %v1320
    %1790 = vmatpush.bf16.msra.mxu0 %v1316
    %1791 = vmatpush.bf16.msra.mxu0 %v1312
    %1792 = vmatpush.bf16.msra.mxu0 %v1308
    %1793 = vmatpush.bf16.msra.mxu0 %v1304
    %1794 = vmatmul.bf16.gmra.mxu0 %v302
    %v1795 = vpop.f32.mrf.mxu0
    %v1796 = vadd.f32 %v1783, %v1795
    %v1797 = vpop.f32.mrf.mxu0
    %1798 = vdwg.mxu0
    %1799 = vmatpush.bf16.msra.mxu0 %v1109
    %1800 = vmatpush.bf16.msra.mxu0 %v1105
    %1801 = vmatpush.bf16.msra.mxu0 %v1101
    %1802 = vmatpush.bf16.msra.mxu0 %v1097
    %1803 = vmatpush.bf16.msra.mxu0 %v1093
    %1804 = vmatpush.bf16.msra.mxu0 %v1089
    %1805 = vmatpush.bf16.msra.mxu0 %v1085
    %1806 = vmatpush.bf16.msra.mxu0 %v1081
    %1807 = vmatmul.bf16.gmra.mxu0 %v295
    %v1808 = vpop.f32.mrf.mxu0
    %v1809 = vadd.f32 0.0, %v1808
    %v1810 = vpop.f32.mrf.mxu0
    %1811 = vdwg.mxu0
    %1812 = vmatpush.bf16.msra.mxu0 %v1141
    %1813 = vmatpush.bf16.msra.mxu0 %v1137
    %1814 = vmatpush.bf16.msra.mxu0 %v1133
    %1815 = vmatpush.bf16.msra.mxu0 %v1129
    %1816 = vmatpush.bf16.msra.mxu0 %v1125
    %1817 = vmatpush.bf16.msra.mxu0 %v1121
    %1818 = vmatpush.bf16.msra.mxu0 %v1117
    %1819 = vmatpush.bf16.msra.mxu0 %v1113
    %1820 = vmatmul.bf16.gmra.mxu0 %v296
    %v1821 = vpop.f32.mrf.mxu0
    %v1822 = vadd.f32 %v1809, %v1821
    %v1823 = vpop.f32.mrf.mxu0
    %1824 = vdwg.mxu0
    %1825 = vmatpush.bf16.msra.mxu0 %v1173
    %1826 = vmatpush.bf16.msra.mxu0 %v1169
    %1827 = vmatpush.bf16.msra.mxu0 %v1165
    %1828 = vmatpush.bf16.msra.mxu0 %v1161
    %1829 = vmatpush.bf16.msra.mxu0 %v1157
    %1830 = vmatpush.bf16.msra.mxu0 %v1153
    %1831 = vmatpush.bf16.msra.mxu0 %v1149
    %1832 = vmatpush.bf16.msra.mxu0 %v1145
    %1833 = vmatmul.bf16.gmra.mxu0 %v297
    %v1834 = vpop.f32.mrf.mxu0
    %v1835 = vadd.f32 %v1822, %v1834
    %v1836 = vpop.f32.mrf.mxu0
    %1837 = vdwg.mxu0
    %1838 = vmatpush.bf16.msra.mxu0 %v1205
    %1839 = vmatpush.bf16.msra.mxu0 %v1201
    %1840 = vmatpush.bf16.msra.mxu0 %v1197
    %1841 = vmatpush.bf16.msra.mxu0 %v1193
    %1842 = vmatpush.bf16.msra.mxu0 %v1189
    %1843 = vmatpush.bf16.msra.mxu0 %v1185
    %1844 = vmatpush.bf16.msra.mxu0 %v1181
    %1845 = vmatpush.bf16.msra.mxu0 %v1177
    %1846 = vmatmul.bf16.gmra.mxu0 %v298
    %v1847 = vpop.f32.mrf.mxu0
    %v1848 = vadd.f32 %v1835, %v1847
    %v1849 = vpop.f32.mrf.mxu0
    %1850 = vdwg.mxu0
    %1851 = vmatpush.bf16.msra.mxu0 %v1237
    %1852 = vmatpush.bf16.msra.mxu0 %v1233
    %1853 = vmatpush.bf16.msra.mxu0 %v1229
    %1854 = vmatpush.bf16.msra.mxu0 %v1225
    %1855 = vmatpush.bf16.msra.mxu0 %v1221
    %1856 = vmatpush.bf16.msra.mxu0 %v1217
    %1857 = vmatpush.bf16.msra.mxu0 %v1213
    %1858 = vmatpush.bf16.msra.mxu0 %v1209
    %1859 = vmatmul.bf16.gmra.mxu0 %v299
    %v1860 = vpop.f32.mrf.mxu0
    %v1861 = vadd.f32 %v1848, %v1860
    %v1862 = vpop.f32.mrf.mxu0
    %1863 = vdwg.mxu0
    %1864 = vmatpush.bf16.msra.mxu0 %v1269
    %1865 = vmatpush.bf16.msra.mxu0 %v1265
    %1866 = vmatpush.bf16.msra.mxu0 %v1261
    %1867 = vmatpush.bf16.msra.mxu0 %v1257
    %1868 = vmatpush.bf16.msra.mxu0 %v1253
    %1869 = vmatpush.bf16.msra.mxu0 %v1249
    %1870 = vmatpush.bf16.msra.mxu0 %v1245
    %1871 = vmatpush.bf16.msra.mxu0 %v1241
    %1872 = vmatmul.bf16.gmra.mxu0 %v300
    %v1873 = vpop.f32.mrf.mxu0
    %v1874 = vadd.f32 %v1861, %v1873
    %v1875 = vpop.f32.mrf.mxu0
    %1876 = vdwg.mxu0
    %1877 = vmatpush.bf16.msra.mxu0 %v1301
    %1878 = vmatpush.bf16.msra.mxu0 %v1297
    %1879 = vmatpush.bf16.msra.mxu0 %v1293
    %1880 = vmatpush.bf16.msra.mxu0 %v1289
    %1881 = vmatpush.bf16.msra.mxu0 %v1285
    %1882 = vmatpush.bf16.msra.mxu0 %v1281
    %1883 = vmatpush.bf16.msra.mxu0 %v1277
    %1884 = vmatpush.bf16.msra.mxu0 %v1273
    %1885 = vmatmul.bf16.gmra.mxu0 %v301
    %v1886 = vpop.f32.mrf.mxu0
    %v1887 = vadd.f32 %v1874, %v1886
    %v1888 = vpop.f32.mrf.mxu0
    %1889 = vdwg.mxu0
    %1890 = vmatpush.bf16.msra.mxu0 %v1333
    %1891 = vmatpush.bf16.msra.mxu0 %v1329
    %1892 = vmatpush.bf16.msra.mxu0 %v1325
    %1893 = vmatpush.bf16.msra.mxu0 %v1321
    %1894 = vmatpush.bf16.msra.mxu0 %v1317
    %1895 = vmatpush.bf16.msra.mxu0 %v1313
    %1896 = vmatpush.bf16.msra.mxu0 %v1309
    %1897 = vmatpush.bf16.msra.mxu0 %v1305
    %1898 = vmatmul.bf16.gmra.mxu0 %v302
    %v1899 = vpop.f32.mrf.mxu0
    %v1900 = vadd.f32 %v1887, %v1899
    %v1901 = vpop.f32.mrf.mxu0
    %1902 = vdwg.mxu0
    %1903 = vmatpush.bf16.msra.mxu0 %v1110
    %1904 = vmatpush.bf16.msra.mxu0 %v1106
    %1905 = vmatpush.bf16.msra.mxu0 %v1102
    %1906 = vmatpush.bf16.msra.mxu0 %v1098
    %1907 = vmatpush.bf16.msra.mxu0 %v1094
    %1908 = vmatpush.bf16.msra.mxu0 %v1090
    %1909 = vmatpush.bf16.msra.mxu0 %v1086
    %1910 = vmatpush.bf16.msra.mxu0 %v1082
    %1911 = vmatmul.bf16.gmra.mxu0 %v295
    %v1912 = vpop.f32.mrf.mxu0
    %v1913 = vadd.f32 0.0, %v1912
    %v1914 = vpop.f32.mrf.mxu0
    %1915 = vdwg.mxu0
    %1916 = vmatpush.bf16.msra.mxu0 %v1142
    %1917 = vmatpush.bf16.msra.mxu0 %v1138
    %1918 = vmatpush.bf16.msra.mxu0 %v1134
    %1919 = vmatpush.bf16.msra.mxu0 %v1130
    %1920 = vmatpush.bf16.msra.mxu0 %v1126
    %1921 = vmatpush.bf16.msra.mxu0 %v1122
    %1922 = vmatpush.bf16.msra.mxu0 %v1118
    %1923 = vmatpush.bf16.msra.mxu0 %v1114
    %1924 = vmatmul.bf16.gmra.mxu0 %v296
    %v1925 = vpop.f32.mrf.mxu0
    %v1926 = vadd.f32 %v1913, %v1925
    %v1927 = vpop.f32.mrf.mxu0
    %1928 = vdwg.mxu0
    %1929 = vmatpush.bf16.msra.mxu0 %v1174
    %1930 = vmatpush.bf16.msra.mxu0 %v1170
    %1931 = vmatpush.bf16.msra.mxu0 %v1166
    %1932 = vmatpush.bf16.msra.mxu0 %v1162
    %1933 = vmatpush.bf16.msra.mxu0 %v1158
    %1934 = vmatpush.bf16.msra.mxu0 %v1154
    %1935 = vmatpush.bf16.msra.mxu0 %v1150
    %1936 = vmatpush.bf16.msra.mxu0 %v1146
    %1937 = vmatmul.bf16.gmra.mxu0 %v297
    %v1938 = vpop.f32.mrf.mxu0
    %v1939 = vadd.f32 %v1926, %v1938
    %v1940 = vpop.f32.mrf.mxu0
    %1941 = vdwg.mxu0
    %1942 = vmatpush.bf16.msra.mxu0 %v1206
    %1943 = vmatpush.bf16.msra.mxu0 %v1202
    %1944 = vmatpush.bf16.msra.mxu0 %v1198
    %1945 = vmatpush.bf16.msra.mxu0 %v1194
    %1946 = vmatpush.bf16.msra.mxu0 %v1190
    %1947 = vmatpush.bf16.msra.mxu0 %v1186
    %1948 = vmatpush.bf16.msra.mxu0 %v1182
    %1949 = vmatpush.bf16.msra.mxu0 %v1178
    %1950 = vmatmul.bf16.gmra.mxu0 %v298
    %v1951 = vpop.f32.mrf.mxu0
    %v1952 = vadd.f32 %v1939, %v1951
    %v1953 = vpop.f32.mrf.mxu0
    %1954 = vdwg.mxu0
    %1955 = vmatpush.bf16.msra.mxu0 %v1238
    %1956 = vmatpush.bf16.msra.mxu0 %v1234
    %1957 = vmatpush.bf16.msra.mxu0 %v1230
    %1958 = vmatpush.bf16.msra.mxu0 %v1226
    %1959 = vmatpush.bf16.msra.mxu0 %v1222
    %1960 = vmatpush.bf16.msra.mxu0 %v1218
    %1961 = vmatpush.bf16.msra.mxu0 %v1214
    %1962 = vmatpush.bf16.msra.mxu0 %v1210
    %1963 = vmatmul.bf16.gmra.mxu0 %v299
    %v1964 = vpop.f32.mrf.mxu0
    %v1965 = vadd.f32 %v1952, %v1964
    %v1966 = vpop.f32.mrf.mxu0
    %1967 = vdwg.mxu0
    %1968 = vmatpush.bf16.msra.mxu0 %v1270
    %1969 = vmatpush.bf16.msra.mxu0 %v1266
    %1970 = vmatpush.bf16.msra.mxu0 %v1262
    %1971 = vmatpush.bf16.msra.mxu0 %v1258
    %1972 = vmatpush.bf16.msra.mxu0 %v1254
    %1973 = vmatpush.bf16.msra.mxu0 %v1250
    %1974 = vmatpush.bf16.msra.mxu0 %v1246
    %1975 = vmatpush.bf16.msra.mxu0 %v1242
    %1976 = vmatmul.bf16.gmra.mxu0 %v300
    %v1977 = vpop.f32.mrf.mxu0
    %v1978 = vadd.f32 %v1965, %v1977
    %v1979 = vpop.f32.mrf.mxu0
    %1980 = vdwg.mxu0
    %1981 = vmatpush.bf16.msra.mxu0 %v1302
    %1982 = vmatpush.bf16.msra.mxu0 %v1298
    %1983 = vmatpush.bf16.msra.mxu0 %v1294
    %1984 = vmatpush.bf16.msra.mxu0 %v1290
    %1985 = vmatpush.bf16.msra.mxu0 %v1286
    %1986 = vmatpush.bf16.msra.mxu0 %v1282
    %1987 = vmatpush.bf16.msra.mxu0 %v1278
    %1988 = vmatpush.bf16.msra.mxu0 %v1274
    %1989 = vmatmul.bf16.gmra.mxu0 %v301
    %v1990 = vpop.f32.mrf.mxu0
    %v1991 = vadd.f32 %v1978, %v1990
    %v1992 = vpop.f32.mrf.mxu0
    %1993 = vdwg.mxu0
    %1994 = vmatpush.bf16.msra.mxu0 %v1334
    %1995 = vmatpush.bf16.msra.mxu0 %v1330
    %1996 = vmatpush.bf16.msra.mxu0 %v1326
    %1997 = vmatpush.bf16.msra.mxu0 %v1322
    %1998 = vmatpush.bf16.msra.mxu0 %v1318
    %1999 = vmatpush.bf16.msra.mxu0 %v1314
    %2000 = vmatpush.bf16.msra.mxu0 %v1310
    %2001 = vmatpush.bf16.msra.mxu0 %v1306
    %2002 = vmatmul.bf16.gmra.mxu0 %v302
    %v2003 = vpop.f32.mrf.mxu0
    %v2004 = vadd.f32 %v1991, %v2003
    %v2005 = vpop.f32.mrf.mxu0
    %2006 = vdwg.mxu0
    %v2011 = vrot.slane %v1796, 6
    %v2012 = vrot.slane %v1900, 4
    %v2013 = vrot.slane %v2004, 2
    %vm2014 = vcmask 1041408
    %v2015 = vsel %vm2014, %v1692, %v2011
    %vm2016 = vcmask 1045508
    %v2017 = vsel %vm2016, %v2012, %v2013
    %vm2018 = vcmask 1043456
    %v2019 = vsel %vm2018, %v2015, %v2017
    %v2021 = vadd.f32 %v35, %v2019
    %2022 = vst [vmem:[%s3] sm:$0xff] %v2021
    // Predicated region
    $region22: #{animal_cnn_forward.6} parent=1 // pred_check
      %p2023 = pneg %p30
    $region23: #{animal_cnn_forward.6} parent=1 // pred_check_branch
      %2025 = sbr.rel (%p2023) target = $region25
    $region24: #{animal_cnn_forward.6} parent=1 // pred_region
      %v2026 = vld [vmem:[%s3] sm:$0xff]
      %v2027 = vld [vmem:[%s2] sm:$0xf]
      %v2029 = vperm.slane %v2027, 0
      %v2030 = vperm.slane %v2027, 1
      %v2031 = vperm.slane %v2027, 2
      %v2032 = vperm.slane %v2027, 3
      %v2033 = vrot.slane %v2030, 6
      %v2034 = vrot.slane %v2031, 4
      %v2035 = vrot.slane %v2032, 2
      %v2036 = vsel %vm2014, %v2029, %v2033
      %v2037 = vsel %vm2016, %v2034, %v2035
      %v2038 = vsel %vm2018, %v2036, %v2037
      %v2040 = vadd.f32 %v2026, %v2038
      %v2041 = vmax.f32 %v2040, 0.0
      %2042 = vst [vmem:[%s3] sm:$0xff] %v2041
    $region25: #{animal_cnn_forward.6} parent=1 // pred_fallthru
      _
    // Predicated region
    $region26: #{animal_cnn_forward.6} parent=1 // pred_check
      _
    $region27: #{animal_cnn_forward.6} parent=1 // pred_check_branch
      %2044 = sbr.rel (0) target = $region29
    $region28: #{animal_cnn_forward.6} parent=1 // pred_region
      _
    $region29: #{animal_cnn_forward.6} parent=1 // pred_fallthru
      _
    // Predicated region
    $region30: #{animal_cnn_forward.6} parent=1 // pred_check
      _
    $region31: #{animal_cnn_forward.6} parent=1 // pred_check_branch
      %2046 = sbr.rel (0) target = $region33
    $region32: #{animal_cnn_forward.6} parent=1 // pred_region
      _
    $region33: #{animal_cnn_forward.6} parent=1 // pred_fallthru
      _
    %2047 = vsyncpa [#allocation3], 1

// kernel: animal_cnn_forward.4
$region0: #{animal_cnn_forward.4}
  #allocation0 [shape = 'u32[]', space=smem, size = 0x4, offset = 0x4, fixed_abs, tag = 'smem constant byte address 0x4 - core index']
  #allocation1 [shape = 'u32[72,128]{1,0:T(1,128)}', space=vmem, size = 0x9000, scoped, tag = 'internal scratch']
  #allocation2 [shape = 'bf16[256,27]{1,0:T(8,128)(2,1)}', space=vmem, size = 0x10000, scoped, tag = 'scratch operand']
  %s0 = inlined_call_operand.vmem [shape: bf16[2,18,18,3], index: 0, kind: input, shape index: {}]
  %s1 = inlined_call_operand.vmem [shape: bf16[27,32], index: 1, kind: input, shape index: {}]
  %s2 = inlined_call_operand.vmem [shape: f32[1,32], index: 2, kind: input, shape index: {}]
  %s3 = inlined_call_operand.vmem [shape: bf16[2,8,8,32], index: 3, kind: output, shape index: {}]
  %s4 = sld [smem:[#allocation0]]
  $region45: #{animal_cnn_forward.4} parent=0
    _
  %s6 = ssub.s32 1, %s4
  %s7 = scalar_select 0, %s6, %s4
  loop: start=0, step=1, limit=4
  $region2: #{animal_cnn_forward.4} parent=0 // loop_pre_header
    _
  $region3: #{animal_cnn_forward.4} parent=0 // loop_header
    %s9 = sphi 0, %s13
    %p10 = scmp.ge.s32.totalorder %s9, 4
    %s16 = sphi 0, %s28
    %s17 = sphi 0, %s24
    %s18 = sphi 0, %s16
    %s19 = sphi 0, %s17
    %s20 = sphi 0, %s18
    %s21 = sphi 0, %s19
    %s31 = sphi 0, %s33
    %s34 = sphi 0, %s31
    %s35 = sphi 0, %s34
    %s51 = sphi 0, %s35
    %s55 = sphi 0, %s55
    %s57 = sphi 0, %s55
    %s58 = sphi 0, %s57
    %s72 = sphi 0, %s58
    %s76 = sphi 0, %s76
    %s78 = sphi 0, %s76
    %s79 = sphi 0, %s78
    %s93 = sphi 0, %s79
    %s101 = sphi 0, %s103
    %s104 = sphi 0, %s101
    %s105 = sphi 0, %s104
    %s121 = sphi 0, %s105
  $region4: #{animal_cnn_forward.4} parent=0 // loop_header_branch
    %12 = sbr.rel (%p10) target = $region8
  $region5: #{animal_cnn_forward.4} parent=0 // loop_body
    %s14 = ssub.s32 %s9, 1
    %s15 = ssub.s32 %s9, 2
    %s22 = sadd.s32 1, %s17
    %p23 = scmp.ge.s32.totalorder %s22, 1
    %s24 = scalar_select %p23, 0, %s22
    %s25 = sadd.s32 1, %s16
    %s26 = scalar_select %p23, %s25, %s16
    %p27 = scmp.ge.s32.totalorder %s26, 2
    %s28 = scalar_select %p27, 0, %s26
    %s29 = ssub.s32 %s16, %s28
    %p30 = scmp.eq.s32.totalorder %s29, 0
    %s32 = sadd.s32 %s31, 1
    %s33 = scalar_select %p30, %s31, %s32
    %p36 = pneg %p30
    %p37 = scmp.eq.s32.totalorder %s9, 1
    %p38 = por %p36, %p37
    %p39 = scmp.ne.s32.totalorder %s31, %s34
    %p40 = scmp.eq.s32.totalorder %s9, 0
    %p41 = por %p39, %p40
    %p42 = scmp.ne.s32.totalorder %s31, %s34
    %p43 = scmp.eq.s32.totalorder %s14, 1
    %p44 = por %p42, %p43
    %p45 = scmp.ne.s32.totalorder %s34, %s35
    %p46 = scmp.eq.s32.totalorder %s14, 0
    %p47 = por %p45, %p46
    %p48 = scmp.ne.s32.totalorder %s34, %s35
    %p49 = scmp.eq.s32.totalorder %s15, 1
    %p50 = por %p48, %p49
    %p52 = scmp.ne.s32.totalorder %s35, %s51
    %p53 = scmp.eq.s32.totalorder %s15, 0
    %p54 = por %p52, %p53
    %s56 = sadd.s32 %s55, 1
    %p59 = scmp.eq.s32.totalorder %s9, 1
    %p60 = scmp.ne.s32.totalorder %s55, %s57
    %p61 = scmp.eq.s32.totalorder %s9, 0
    %p62 = por %p60, %p61
    %p63 = scmp.ne.s32.totalorder %s55, %s57
    %p64 = scmp.eq.s32.totalorder %s14, 1
    %p65 = por %p63, %p64
    %p66 = scmp.ne.s32.totalorder %s57, %s58
    %p67 = scmp.eq.s32.totalorder %s14, 0
    %p68 = por %p66, %p67
    %p69 = scmp.ne.s32.totalorder %s57, %s58
    %p70 = scmp.eq.s32.totalorder %s15, 1
    %p71 = por %p69, %p70
    %p73 = scmp.ne.s32.totalorder %s58, %s72
    %p74 = scmp.eq.s32.totalorder %s15, 0
    %p75 = por %p73, %p74
    %s77 = sadd.s32 %s76, 1
    %p80 = scmp.eq.s32.totalorder %s9, 1
    %p81 = scmp.ne.s32.totalorder %s76, %s78
    %p82 = scmp.eq.s32.totalorder %s9, 0
    %p83 = por %p81, %p82
    %p84 = scmp.ne.s32.totalorder %s76, %s78
    %p85 = scmp.eq.s32.totalorder %s14, 1
    %p86 = por %p84, %p85
    %p87 = scmp.ne.s32.totalorder %s78, %s79
    %p88 = scmp.eq.s32.totalorder %s14, 0
    %p89 = por %p87, %p88
    %p90 = scmp.ne.s32.totalorder %s78, %s79
    %p91 = scmp.eq.s32.totalorder %s15, 1
    %p92 = por %p90, %p91
    %p94 = scmp.ne.s32.totalorder %s79, %s93
    %p95 = scmp.eq.s32.totalorder %s15, 0
    %p96 = por %p94, %p95
    %s97 = ssub.s32 %s16, %s28
    %s98 = ssub.s32 %s17, %s24
    %s99 = sor.u32 %s97, %s98
    %p100 = scmp.eq.s32.totalorder %s99, 0
    %s102 = sadd.s32 %s101, 1
    %s103 = scalar_select %p100, %s101, %s102
    %p106 = pneg %p100
    %p107 = scmp.eq.s32.totalorder %s9, 1
    %p108 = por %p106, %p107
    %p109 = scmp.ne.s32.totalorder %s101, %s104
    %p110 = scmp.eq.s32.totalorder %s9, 0
    %p111 = por %p109, %p110
    %p112 = scmp.ne.s32.totalorder %s101, %s104
    %p113 = scmp.eq.s32.totalorder %s14, 1
    %p114 = por %p112, %p113
    %p115 = scmp.ne.s32.totalorder %s104, %s105
    %p116 = scmp.eq.s32.totalorder %s14, 0
    %p117 = por %p115, %p116
    %p118 = scmp.ne.s32.totalorder %s104, %s105
    %p119 = scmp.eq.s32.totalorder %s15, 1
    %p120 = por %p118, %p119
    %p122 = scmp.ne.s32.totalorder %s105, %s121
    %p123 = scmp.eq.s32.totalorder %s15, 0
    %p124 = por %p122, %p123
    %p125 = scmp.le.s32.totalorder 1, %s9
    %p126 = scmp.lt.s32.totalorder %s9, 3
    %p127 = pnand %p125, %p126
    %p128 = pneg %p127
    // Predicated region
    $region9: #{animal_cnn_forward.4} parent=5 // pred_check
      _
    $region10: #{animal_cnn_forward.4} parent=5 // pred_check_branch
      %130 = sbr.rel (%p127) target = $region12
    $region11: #{animal_cnn_forward.4} parent=5 // pred_region
      %s131 = ssub.s32 %s9, 1
      // Predicated region
      $region13: #{animal_cnn_forward.4} parent=11 // pred_check
        %p132 = pneg %p68
      $region14: #{animal_cnn_forward.4} parent=11 // pred_check_branch
        %134 = sbr.rel (%p132) target = $region16
      $region15: #{animal_cnn_forward.4} parent=11 // pred_region
        _
      $region16: #{animal_cnn_forward.4} parent=11 // pred_fallthru
        _
      // Predicated region
      $region17: #{animal_cnn_forward.4} parent=11 // pred_check
        %p135 = pneg %p89
      $region18: #{animal_cnn_forward.4} parent=11 // pred_check_branch
        %137 = sbr.rel (%p135) target = $region20
      $region19: #{animal_cnn_forward.4} parent=11 // pred_region
        _
      $region20: #{animal_cnn_forward.4} parent=11 // pred_fallthru
        _
    $region12: #{animal_cnn_forward.4} parent=5 // pred_fallthru
      _
    %p138 = scmp.lt.s32.totalorder %s9, 2
    // Predicated region
    $region21: #{animal_cnn_forward.4} parent=5 // pred_check
      %p139 = pneg %p138
    $region22: #{animal_cnn_forward.4} parent=5 // pred_check_branch
      %141 = sbr.rel (%p139) target = $region24
    $region23: #{animal_cnn_forward.4} parent=5 // pred_region
      // Predicated region
      $region25: #{animal_cnn_forward.4} parent=23 // pred_check
        %p142 = pneg %p41
      $region26: #{animal_cnn_forward.4} parent=23 // pred_check_branch
        %144 = sbr.rel (%p142) target = $region28
      $region27: #{animal_cnn_forward.4} parent=23 // pred_region
        %p145 = scmp.lt.s32.totalorder %s16, 1
        %s146 = scalar_select %p145, %s16, 1
        %s147 = smul.addr %s146, 54
        %s148 = smul.addr %s147, 4
        %s149 = scalar_lea.vmem %s0, %s148
      $region28: #{animal_cnn_forward.4} parent=23 // pred_fallthru
        _
    $region24: #{animal_cnn_forward.4} parent=5 // pred_fallthru
      _
    %p150 = scmp.le.s32.totalorder 1, %s9
    %p151 = scmp.lt.s32.totalorder %s9, 3
    %p152 = pnand %p150, %p151
    %p153 = pneg %p152
    // Predicated region
    $region29: #{animal_cnn_forward.4} parent=5 // pred_check
      _
    $region30: #{animal_cnn_forward.4} parent=5 // pred_check_branch
      %155 = sbr.rel (%p152) target = $region32
    $region31: #{animal_cnn_forward.4} parent=5 // pred_region
      %s156 = ssub.s32 %s9, 1
      %p157 = scmp.lt.s32.totalorder %s18, 1
      %s158 = scalar_select %p157, %s18, 1
      %s159 = smul.addr %s158, 54
      %s160 = smul.addr %s159, 4
      %s161 = scalar_lea.vmem %s0, %s160
      %p162 = pneg %p47
      %p163 = pneg %p44
      %p164 = pneg %p68
      %p165 = pneg %p65
      %p166 = pneg %p89
      %p167 = pneg %p86
      %p168 = pneg %p117
      %p169 = pneg %p114
      %s170 = smul.u32 8, %s19
      %p171 = scmp.lt.s32.totalorder %s18, 1
      %s172 = scalar_select %p171, %s18, 1
      %p173 = scmp.lt.s32.totalorder %s170, 7
      %s174 = scalar_select %p173, %s170, 7
      %s175 = smul.addr %s172, 8
      %s176 = sadd.s32 %s174, %s175
      %s177 = smul.addr %s176, 4
      %s178 = scalar_lea.vmem %s3, %s177
      %p179 = scmp.lt.s32.totalorder %s18, 1
      %s180 = scalar_select %p179, %s18, 1
      %s181 = smul.addr %s180, 54
      %s182 = smul.addr %s181, 4
      %s183 = scalar_lea.vmem %s0, %s182
      %s184 = smul.u32 8, %s19
      %p185 = scmp.lt.s32.totalorder %s18, 1
      %s186 = scalar_select %p185, %s18, 1
      %p187 = scmp.lt.s32.totalorder %s184, 7
      %s188 = scalar_select %p187, %s184, 7
      %s189 = smul.addr %s186, 8
      %s190 = sadd.s32 %s188, %s189
      %s191 = smul.addr %s190, 4
      %s192 = scalar_lea.vmem %s3, %s191
      %s193 = smul.u32 8, %s19
      %s195 = smul.u32 %s19, 16
      %s196 = smul.u32 %s195, 3
      %s197 = smul.addr %s196, 4
      %s198 = scalar_lea.vmem %s183, %s197
      %v199 = vld [vmem:[%s198] sm:$0xf]
      %v200 = vld [vmem:[%s198 + $0x4] sm:$0xf]
      %v201 = vld [vmem:[%s198 + $0xc] sm:$0xf]
      %v202 = vld [vmem:[%s198 + $0x10] sm:$0xf]
      %v203 = vld [vmem:[%s198 + $0x18] sm:$0xf]
      %v204 = vld [vmem:[%s198 + $0x1c] sm:$0xf]
      %v205 = vld [vmem:[%s198 + $0x24] sm:$0xf]
      %v206 = vld [vmem:[%s198 + $0x28] sm:$0xf]
      %v207 = vld [vmem:[%s198 + $0x30] sm:$0xf]
      %v208 = vld [vmem:[%s198 + $0x34] sm:$0xf]
      %v209 = vld [vmem:[%s198 + $0x3c] sm:$0xf]
      %v210 = vld [vmem:[%s198 + $0x40] sm:$0xf]
      %v211 = vld [vmem:[%s198 + $0x48] sm:$0xf]
      %v212 = vld [vmem:[%s198 + $0x4c] sm:$0xf]
      %v213 = vld [vmem:[%s198 + $0x54] sm:$0xf]
      %v214 = vld [vmem:[%s198 + $0x58] sm:$0xf]
      %v215 = vld [vmem:[%s198 + $0x60] sm:$0xf]
      %v216 = vld [vmem:[%s198 + $0x64] sm:$0xf]
      %v217 = vld [vmem:[%s198 + $0x6c] sm:$0xf]
      %v218 = vld [vmem:[%s198 + $0x70] sm:$0xf]
      %v219 = vld [vmem:[%s198 + $0x78] sm:$0xf]
      %v220 = vld [vmem:[%s198 + $0x7c] sm:$0xf]
      %v221 = vld [vmem:[%s198 + $0x84] sm:$0xf]
      %v222 = vld [vmem:[%s198 + $0x88] sm:$0xf]
      %v223 = vld [vmem:[%s198 + $0x90] sm:$0xf]
      %v224 = vld [vmem:[%s198 + $0x94] sm:$0xf]
      %v225 = vld [vmem:[%s198 + $0x9c] sm:$0xf]
      %v226 = vld [vmem:[%s198 + $0xa0] sm:$0xf]
      %v227 = vld [vmem:[%s198 + $0xa8] sm:$0xf]
      %v228 = vld [vmem:[%s198 + $0xac] sm:$0xf]
      %v229 = vld [vmem:[%s198 + $0xb4] sm:$0xf]
      %v230 = vld [vmem:[%s198 + $0xb8] sm:$0xf]
      %vm231 = vcmask 19456
      %232 = vst.msk [vmem:[#allocation2] sm:$0xf] %vm231, %v199
      %233 = vst.msk [vmem:[#allocation2 + $0x4] sm:$0xf] %vm231, %v200
      %234 = vst.msk [vmem:[#allocation2 + $0x8] sm:$0xf] %vm231, %v201
      %235 = vst.msk [vmem:[#allocation2 + $0xc] sm:$0xf] %vm231, %v202
      %236 = vst.msk [vmem:[#allocation2 + $0x10] sm:$0xf] %vm231, %v203
      %237 = vst.msk [vmem:[#allocation2 + $0x14] sm:$0xf] %vm231, %v204
      %238 = vst.msk [vmem:[#allocation2 + $0x18] sm:$0xf] %vm231, %v205
      %239 = vst.msk [vmem:[#allocation2 + $0x1c] sm:$0xf] %vm231, %v206
      %240 = vst.msk [vmem:[#allocation2 + $0x20] sm:$0xf] %vm231, %v207
      %241 = vst.msk [vmem:[#allocation2 + $0x24] sm:$0xf] %vm231, %v208
      %242 = vst.msk [vmem:[#allocation2 + $0x28] sm:$0xf] %vm231, %v209
      %243 = vst.msk [vmem:[#allocation2 + $0x2c] sm:$0xf] %vm231, %v210
      %244 = vst.msk [vmem:[#allocation2 + $0x30] sm:$0xf] %vm231, %v211
      %245 = vst.msk [vmem:[#allocation2 + $0x34] sm:$0xf] %vm231, %v212
      %246 = vst.msk [vmem:[#allocation2 + $0x38] sm:$0xf] %vm231, %v213
      %247 = vst.msk [vmem:[#allocation2 + $0x3c] sm:$0xf] %vm231, %v214
      %248 = vst.msk [vmem:[#allocation2 + $0x40] sm:$0xf] %vm231, %v215
      %249 = vst.msk [vmem:[#allocation2 + $0x44] sm:$0xf] %vm231, %v216
      %250 = vst.msk [vmem:[#allocation2 + $0x48] sm:$0xf] %vm231, %v217
      %251 = vst.msk [vmem:[#allocation2 + $0x4c] sm:$0xf] %vm231, %v218
      %252 = vst.msk [vmem:[#allocation2 + $0x50] sm:$0xf] %vm231, %v219
      %253 = vst.msk [vmem:[#allocation2 + $0x54] sm:$0xf] %vm231, %v220
      %254 = vst.msk [vmem:[#allocation2 + $0x58] sm:$0xf] %vm231, %v221
      %255 = vst.msk [vmem:[#allocation2 + $0x5c] sm:$0xf] %vm231, %v222
      %256 = vst.msk [vmem:[#allocation2 + $0x60] sm:$0xf] %vm231, %v223
      %257 = vst.msk [vmem:[#allocation2 + $0x64] sm:$0xf] %vm231, %v224
      %258 = vst.msk [vmem:[#allocation2 + $0x68] sm:$0xf] %vm231, %v225
      %259 = vst.msk [vmem:[#allocation2 + $0x6c] sm:$0xf] %vm231, %v226
      %260 = vst.msk [vmem:[#allocation2 + $0x70] sm:$0xf] %vm231, %v227
      %261 = vst.msk [vmem:[#allocation2 + $0x74] sm:$0xf] %vm231, %v228
      %262 = vst.msk [vmem:[#allocation2 + $0x78] sm:$0xf] %vm231, %v229
      %263 = vst.msk [vmem:[#allocation2 + $0x7c] sm:$0xf] %vm231, %v230
      %v264 = vld [vmem:[%s198] sm:$0xf]
      %v265 = vld [vmem:[%s198 + $0x4] sm:$0xf]
      %v266 = vld [vmem:[%s198 + $0x8] sm:$0x1]
      %v267 = vld [vmem:[%s198 + $0xc] sm:$0xf]
      %v268 = vld [vmem:[%s198 + $0x10] sm:$0xf]
      %v269 = vld [vmem:[%s198 + $0x14] sm:$0x1]
      %v270 = vld [vmem:[%s198 + $0x18] sm:$0xf]
      %v271 = vld [vmem:[%s198 + $0x1c] sm:$0xf]
      %v272 = vld [vmem:[%s198 + $0x20] sm:$0x1]
      %v273 = vld [vmem:[%s198 + $0x24] sm:$0xf]
      %v274 = vld [vmem:[%s198 + $0x28] sm:$0xf]
      %v275 = vld [vmem:[%s198 + $0x2c] sm:$0x1]
      %v276 = vld [vmem:[%s198 + $0x30] sm:$0xf]
      %v277 = vld [vmem:[%s198 + $0x34] sm:$0xf]
      %v278 = vld [vmem:[%s198 + $0x38] sm:$0x1]
      %v279 = vld [vmem:[%s198 + $0x3c] sm:$0xf]
      %v280 = vld [vmem:[%s198 + $0x40] sm:$0xf]
      %v281 = vld [vmem:[%s198 + $0x44] sm:$0x1]
      %v282 = vld [vmem:[%s198 + $0x48] sm:$0xf]
      %v283 = vld [vmem:[%s198 + $0x4c] sm:$0xf]
      %v284 = vld [vmem:[%s198 + $0x50] sm:$0x1]
      %v285 = vld [vmem:[%s198 + $0x54] sm:$0xf]
      %v286 = vld [vmem:[%s198 + $0x58] sm:$0xf]
      %v287 = vld [vmem:[%s198 + $0x5c] sm:$0x1]
      %v288 = vld [vmem:[%s198 + $0x60] sm:$0xf]
      %v289 = vld [vmem:[%s198 + $0x64] sm:$0xf]
      %v290 = vld [vmem:[%s198 + $0x68] sm:$0x1]
      %v291 = vld [vmem:[%s198 + $0x6c] sm:$0xf]
      %v292 = vld [vmem:[%s198 + $0x70] sm:$0xf]
      %v293 = vld [vmem:[%s198 + $0x74] sm:$0x1]
      %v294 = vld [vmem:[%s198 + $0x78] sm:$0xf]
      %v295 = vld [vmem:[%s198 + $0x7c] sm:$0xf]
      %v296 = vld [vmem:[%s198 + $0x80] sm:$0x1]
      %v297 = vld [vmem:[%s198 + $0x84] sm:$0xf]
      %v298 = vld [vmem:[%s198 + $0x88] sm:$0xf]
      %v299 = vld [vmem:[%s198 + $0x8c] sm:$0x1]
      %v300 = vld [vmem:[%s198 + $0x90] sm:$0xf]
      %v301 = vld [vmem:[%s198 + $0x94] sm:$0xf]
      %v302 = vld [vmem:[%s198 + $0x98] sm:$0x1]
      %v303 = vld [vmem:[%s198 + $0x9c] sm:$0xf]
      %v304 = vld [vmem:[%s198 + $0xa0] sm:$0xf]
      %v305 = vld [vmem:[%s198 + $0xa4] sm:$0x1]
      %v306 = vld [vmem:[%s198 + $0xa8] sm:$0xf]
      %v307 = vld [vmem:[%s198 + $0xac] sm:$0xf]
      %v308 = vld [vmem:[%s198 + $0xb0] sm:$0x1]
      %v309 = vld [vmem:[%s198 + $0xb4] sm:$0xf]
      %v310 = vld [vmem:[%s198 + $0xb8] sm:$0xf]
      %v311 = vld [vmem:[%s198 + $0xbc] sm:$0x1]
      %vm312 = vsmask.f32 3328
      %vm313 = vsmask.f32 7440
      %vm314 = vmor %vm312, %vm313
      %v316 = vshrl.u32 %v264, 16
      %v318 = vrot.slane %v316, 4
      %v319 = vshll.u32 %v264, 16
      %v321 = vrot.slane %v319, 5
      %v322 = vor.u32 %v318, %v321
      %v323 = vrot.slane %v322, 4
      %v325 = vshll.u32 %v265, 16
      %v327 = vrot.slane %v325, 5
      %v328 = vsel %vm314, %v323, %v327
      %v329 = vshrl.u32 %v265, 16
      %v331 = vrot.slane %v329, 4
      %v332 = vor.u32 %v331, %v327
      %v333 = vrot.slane %v332, 4
      %v335 = vshll.u32 %v266, 16
      %v337 = vrot.slane %v335, 5
      %v338 = vsel %vm314, %v333, %v337
      %v340 = vshrl.u32 %v267, 16
      %v342 = vrot.slane %v340, 4
      %v343 = vshll.u32 %v267, 16
      %v345 = vrot.slane %v343, 5
      %v346 = vor.u32 %v342, %v345
      %v347 = vrot.slane %v346, 4
      %v349 = vshll.u32 %v268, 16
      %v351 = vrot.slane %v349, 5
      %v352 = vsel %vm314, %v347, %v351
      %v353 = vshrl.u32 %v268, 16
      %v355 = vrot.slane %v353, 4
      %v356 = vor.u32 %v355, %v351
      %v357 = vrot.slane %v356, 4
      %v359 = vshll.u32 %v269, 16
      %v361 = vrot.slane %v359, 5
      %v362 = vsel %vm314, %v357, %v361
      %v364 = vshrl.u32 %v270, 16
      %v366 = vrot.slane %v364, 4
      %v367 = vshll.u32 %v270, 16
      %v369 = vrot.slane %v367, 5
      %v370 = vor.u32 %v366, %v369
      %v371 = vrot.slane %v370, 4
      %v373 = vshll.u32 %v271, 16
      %v375 = vrot.slane %v373, 5
      %v376 = vsel %vm314, %v371, %v375
      %v377 = vshrl.u32 %v271, 16
      %v379 = vrot.slane %v377, 4
      %v380 = vor.u32 %v379, %v375
      %v381 = vrot.slane %v380, 4
      %v383 = vshll.u32 %v272, 16
      %v385 = vrot.slane %v383, 5
      %v386 = vsel %vm314, %v381, %v385
      %v388 = vshrl.u32 %v273, 16
      %v390 = vrot.slane %v388, 4
      %v391 = vshll.u32 %v273, 16
      %v393 = vrot.slane %v391, 5
      %v394 = vor.u32 %v390, %v393
      %v395 = vrot.slane %v394, 4
      %v397 = vshll.u32 %v274, 16
      %v399 = vrot.slane %v397, 5
      %v400 = vsel %vm314, %v395, %v399
      %v401 = vshrl.u32 %v274, 16
      %v403 = vrot.slane %v401, 4
      %v404 = vor.u32 %v403, %v399
      %v405 = vrot.slane %v404, 4
      %v407 = vshll.u32 %v275, 16
      %v409 = vrot.slane %v407, 5
      %v410 = vsel %vm314, %v405, %v409
      %v412 = vshrl.u32 %v276, 16
      %v414 = vrot.slane %v412, 4
      %v415 = vshll.u32 %v276, 16
      %v417 = vrot.slane %v415, 5
      %v418 = vor.u32 %v414, %v417
      %v419 = vrot.slane %v418, 4
      %v421 = vshll.u32 %v277, 16
      %v423 = vrot.slane %v421, 5
      %v424 = vsel %vm314, %v419, %v423
      %v425 = vshrl.u32 %v277, 16
      %v427 = vrot.slane %v425, 4
      %v428 = vor.u32 %v427, %v423
      %v429 = vrot.slane %v428, 4
      %v431 = vshll.u32 %v278, 16
      %v433 = vrot.slane %v431, 5
      %v434 = vsel %vm314, %v429, %v433
      %v436 = vshrl.u32 %v279, 16
      %v438 = vrot.slane %v436, 4
      %v439 = vshll.u32 %v279, 16
      %v441 = vrot.slane %v439, 5
      %v442 = vor.u32 %v438, %v441
      %v443 = vrot.slane %v442, 4
      %v445 = vshll.u32 %v280, 16
      %v447 = vrot.slane %v445, 5
      %v448 = vsel %vm314, %v443, %v447
      %v449 = vshrl.u32 %v280, 16
      %v451 = vrot.slane %v449, 4
      %v452 = vor.u32 %v451, %v447
      %v453 = vrot.slane %v452, 4
      %v455 = vshll.u32 %v281, 16
      %v457 = vrot.slane %v455, 5
      %v458 = vsel %vm314, %v453, %v457
      %v460 = vshrl.u32 %v282, 16
      %v462 = vrot.slane %v460, 4
      %v463 = vshll.u32 %v282, 16
      %v465 = vrot.slane %v463, 5
      %v466 = vor.u32 %v462, %v465
      %v467 = vrot.slane %v466, 4
      %v469 = vshll.u32 %v283, 16
      %v471 = vrot.slane %v469, 5
      %v472 = vsel %vm314, %v467, %v471
      %v473 = vshrl.u32 %v283, 16
      %v475 = vrot.slane %v473, 4
      %v476 = vor.u32 %v475, %v471
      %v477 = vrot.slane %v476, 4
      %v479 = vshll.u32 %v284, 16
      %v481 = vrot.slane %v479, 5
      %v482 = vsel %vm314, %v477, %v481
      %v484 = vshrl.u32 %v285, 16
      %v486 = vrot.slane %v484, 4
      %v487 = vshll.u32 %v285, 16
      %v489 = vrot.slane %v487, 5
      %v490 = vor.u32 %v486, %v489
      %v491 = vrot.slane %v490, 4
      %v493 = vshll.u32 %v286, 16
      %v495 = vrot.slane %v493, 5
      %v496 = vsel %vm314, %v491, %v495
      %v497 = vshrl.u32 %v286, 16
      %v499 = vrot.slane %v497, 4
      %v500 = vor.u32 %v499, %v495
      %v501 = vrot.slane %v500, 4
      %v503 = vshll.u32 %v287, 16
      %v505 = vrot.slane %v503, 5
      %v506 = vsel %vm314, %v501, %v505
      %v508 = vshrl.u32 %v288, 16
      %v510 = vrot.slane %v508, 4
      %v511 = vshll.u32 %v288, 16
      %v513 = vrot.slane %v511, 5
      %v514 = vor.u32 %v510, %v513
      %v515 = vrot.slane %v514, 4
      %v517 = vshll.u32 %v289, 16
      %v519 = vrot.slane %v517, 5
      %v520 = vsel %vm314, %v515, %v519
      %v521 = vshrl.u32 %v289, 16
      %v523 = vrot.slane %v521, 4
      %v524 = vor.u32 %v523, %v519
      %v525 = vrot.slane %v524, 4
      %v527 = vshll.u32 %v290, 16
      %v529 = vrot.slane %v527, 5
      %v530 = vsel %vm314, %v525, %v529
      %v532 = vshrl.u32 %v291, 16
      %v534 = vrot.slane %v532, 4
      %v535 = vshll.u32 %v291, 16
      %v537 = vrot.slane %v535, 5
      %v538 = vor.u32 %v534, %v537
      %v539 = vrot.slane %v538, 4
      %v541 = vshll.u32 %v292, 16
      %v543 = vrot.slane %v541, 5
      %v544 = vsel %vm314, %v539, %v543
      %v545 = vshrl.u32 %v292, 16
      %v547 = vrot.slane %v545, 4
      %v548 = vor.u32 %v547, %v543
      %v549 = vrot.slane %v548, 4
      %v551 = vshll.u32 %v293, 16
      %v553 = vrot.slane %v551, 5
      %v554 = vsel %vm314, %v549, %v553
      %v556 = vshrl.u32 %v294, 16
      %v558 = vrot.slane %v556, 4
      %v559 = vshll.u32 %v294, 16
      %v561 = vrot.slane %v559, 5
      %v562 = vor.u32 %v558, %v561
      %v563 = vrot.slane %v562, 4
      %v565 = vshll.u32 %v295, 16
      %v567 = vrot.slane %v565, 5
      %v568 = vsel %vm314, %v563, %v567
      %v569 = vshrl.u32 %v295, 16
      %v571 = vrot.slane %v569, 4
      %v572 = vor.u32 %v571, %v567
      %v573 = vrot.slane %v572, 4
      %v575 = vshll.u32 %v296, 16
      %v577 = vrot.slane %v575, 5
      %v578 = vsel %vm314, %v573, %v577
      %v580 = vshrl.u32 %v297, 16
      %v582 = vrot.slane %v580, 4
      %v583 = vshll.u32 %v297, 16
      %v585 = vrot.slane %v583, 5
      %v586 = vor.u32 %v582, %v585
      %v587 = vrot.slane %v586, 4
      %v589 = vshll.u32 %v298, 16
      %v591 = vrot.slane %v589, 5
      %v592 = vsel %vm314, %v587, %v591
      %v593 = vshrl.u32 %v298, 16
      %v595 = vrot.slane %v593, 4
      %v596 = vor.u32 %v595, %v591
      %v597 = vrot.slane %v596, 4
      %v599 = vshll.u32 %v299, 16
      %v601 = vrot.slane %v599, 5
      %v602 = vsel %vm314, %v597, %v601
      %v604 = vshrl.u32 %v300, 16
      %v606 = vrot.slane %v604, 4
      %v607 = vshll.u32 %v300, 16
      %v609 = vrot.slane %v607, 5
      %v610 = vor.u32 %v606, %v609
      %v611 = vrot.slane %v610, 4
      %v613 = vshll.u32 %v301, 16
      %v615 = vrot.slane %v613, 5
      %v616 = vsel %vm314, %v611, %v615
      %v617 = vshrl.u32 %v301, 16
      %v619 = vrot.slane %v617, 4
      %v620 = vor.u32 %v619, %v615
      %v621 = vrot.slane %v620, 4
      %v623 = vshll.u32 %v302, 16
      %v625 = vrot.slane %v623, 5
      %v626 = vsel %vm314, %v621, %v625
      %v628 = vshrl.u32 %v303, 16
      %v630 = vrot.slane %v628, 4
      %v631 = vshll.u32 %v303, 16
      %v633 = vrot.slane %v631, 5
      %v634 = vor.u32 %v630, %v633
      %v635 = vrot.slane %v634, 4
      %v637 = vshll.u32 %v304, 16
      %v639 = vrot.slane %v637, 5
      %v640 = vsel %vm314, %v635, %v639
      %v641 = vshrl.u32 %v304, 16
      %v643 = vrot.slane %v641, 4
      %v644 = vor.u32 %v643, %v639
      %v645 = vrot.slane %v644, 4
      %v647 = vshll.u32 %v305, 16
      %v649 = vrot.slane %v647, 5
      %v650 = vsel %vm314, %v645, %v649
      %v652 = vshrl.u32 %v306, 16
      %v654 = vrot.slane %v652, 4
      %v655 = vshll.u32 %v306, 16
      %v657 = vrot.slane %v655, 5
      %v658 = vor.u32 %v654, %v657
      %v659 = vrot.slane %v658, 4
      %v661 = vshll.u32 %v307, 16
      %v663 = vrot.slane %v661, 5
      %v664 = vsel %vm314, %v659, %v663
      %v665 = vshrl.u32 %v307, 16
      %v667 = vrot.slane %v665, 4
      %v668 = vor.u32 %v667, %v663
      %v669 = vrot.slane %v668, 4
      %v671 = vshll.u32 %v308, 16
      %v673 = vrot.slane %v671, 5
      %v674 = vsel %vm314, %v669, %v673
      %v676 = vshrl.u32 %v309, 16
      %v678 = vrot.slane %v676, 4
      %v679 = vshll.u32 %v309, 16
      %v681 = vrot.slane %v679, 5
      %v682 = vor.u32 %v678, %v681
      %v683 = vrot.slane %v682, 4
      %v685 = vshll.u32 %v310, 16
      %v687 = vrot.slane %v685, 5
      %v688 = vsel %vm314, %v683, %v687
      %v689 = vshrl.u32 %v310, 16
      %v691 = vrot.slane %v689, 4
      %v692 = vor.u32 %v691, %v687
      %v693 = vrot.slane %v692, 4
      %v695 = vshll.u32 %v311, 16
      %v697 = vrot.slane %v695, 5
      %v698 = vsel %vm314, %v693, %v697
      %699 = vrot.lane.b32.xlu0 %v328, 3
      %v700 = vpop.permute.xlu0 %699
      %701 = vrot.lane.b32.xlu0 %v338, 3
      %v702 = vpop.permute.xlu0 %701
      %703 = vrot.lane.b32.xlu0 %v352, 3
      %v704 = vpop.permute.xlu0 %703
      %705 = vrot.lane.b32.xlu0 %v362, 3
      %v706 = vpop.permute.xlu0 %705
      %707 = vrot.lane.b32.xlu0 %v376, 3
      %v708 = vpop.permute.xlu0 %707
      %709 = vrot.lane.b32.xlu0 %v386, 3
      %v710 = vpop.permute.xlu0 %709
      %711 = vrot.lane.b32.xlu0 %v400, 3
      %v712 = vpop.permute.xlu0 %711
      %713 = vrot.lane.b32.xlu0 %v410, 3
      %v714 = vpop.permute.xlu0 %713
      %715 = vrot.lane.b32.xlu0 %v424, 3
      %v716 = vpop.permute.xlu0 %715
      %717 = vrot.lane.b32.xlu0 %v434, 3
      %v718 = vpop.permute.xlu0 %717
      %719 = vrot.lane.b32.xlu0 %v448, 3
      %v720 = vpop.permute.xlu0 %719
      %721 = vrot.lane.b32.xlu0 %v458, 3
      %v722 = vpop.permute.xlu0 %721
      %723 = vrot.lane.b32.xlu0 %v472, 3
      %v724 = vpop.permute.xlu0 %723
      %725 = vrot.lane.b32.xlu0 %v482, 3
      %v726 = vpop.permute.xlu0 %725
      %727 = vrot.lane.b32.xlu0 %v496, 3
      %v728 = vpop.permute.xlu0 %727
      %729 = vrot.lane.b32.xlu0 %v506, 3
      %v730 = vpop.permute.xlu0 %729
      %731 = vrot.lane.b32.xlu0 %v520, 3
      %v732 = vpop.permute.xlu0 %731
      %733 = vrot.lane.b32.xlu0 %v530, 3
      %v734 = vpop.permute.xlu0 %733
      %735 = vrot.lane.b32.xlu0 %v544, 3
      %v736 = vpop.permute.xlu0 %735
      %737 = vrot.lane.b32.xlu0 %v554, 3
      %v738 = vpop.permute.xlu0 %737
      %739 = vrot.lane.b32.xlu0 %v568, 3
      %v740 = vpop.permute.xlu0 %739
      %741 = vrot.lane.b32.xlu0 %v578, 3
      %v742 = vpop.permute.xlu0 %741
      %743 = vrot.lane.b32.xlu0 %v592, 3
      %v744 = vpop.permute.xlu0 %743
      %745 = vrot.lane.b32.xlu0 %v602, 3
      %v746 = vpop.permute.xlu0 %745
      %747 = vrot.lane.b32.xlu0 %v616, 3
      %v748 = vpop.permute.xlu0 %747
      %749 = vrot.lane.b32.xlu0 %v626, 3
      %v750 = vpop.permute.xlu0 %749
      %751 = vrot.lane.b32.xlu0 %v640, 3
      %v752 = vpop.permute.xlu0 %751
      %753 = vrot.lane.b32.xlu0 %v650, 3
      %v754 = vpop.permute.xlu0 %753
      %755 = vrot.lane.b32.xlu0 %v664, 3
      %v756 = vpop.permute.xlu0 %755
      %757 = vrot.lane.b32.xlu0 %v674, 3
      %v758 = vpop.permute.xlu0 %757
      %759 = vrot.lane.b32.xlu0 %v688, 3
      %v760 = vpop.permute.xlu0 %759
      %761 = vrot.lane.b32.xlu0 %v698, 3
      %v762 = vpop.permute.xlu0 %761
      %vm795 = vcmask 44056
      %796 = vst.msk [vmem:[#allocation2] sm:$0xf] %vm795, %v700
      %797 = vst.msk [vmem:[#allocation2 + $0x4] sm:$0xf] %vm795, %v702
      %798 = vst.msk [vmem:[#allocation2 + $0x8] sm:$0xf] %vm795, %v704
      %799 = vst.msk [vmem:[#allocation2 + $0xc] sm:$0xf] %vm795, %v706
      %800 = vst.msk [vmem:[#allocation2 + $0x10] sm:$0xf] %vm795, %v708
      %801 = vst.msk [vmem:[#allocation2 + $0x14] sm:$0xf] %vm795, %v710
      %802 = vst.msk [vmem:[#allocation2 + $0x18] sm:$0xf] %vm795, %v712
      %803 = vst.msk [vmem:[#allocation2 + $0x1c] sm:$0xf] %vm795, %v714
      %804 = vst.msk [vmem:[#allocation2 + $0x20] sm:$0xf] %vm795, %v716
      %805 = vst.msk [vmem:[#allocation2 + $0x24] sm:$0xf] %vm795, %v718
      %806 = vst.msk [vmem:[#allocation2 + $0x28] sm:$0xf] %vm795, %v720
      %807 = vst.msk [vmem:[#allocation2 + $0x2c] sm:$0xf] %vm795, %v722
      %808 = vst.msk [vmem:[#allocation2 + $0x30] sm:$0xf] %vm795, %v724
      %809 = vst.msk [vmem:[#allocation2 + $0x34] sm:$0xf] %vm795, %v726
      %810 = vst.msk [vmem:[#allocation2 + $0x38] sm:$0xf] %vm795, %v728
      %811 = vst.msk [vmem:[#allocation2 + $0x3c] sm:$0xf] %vm795, %v730
      %812 = vst.msk [vmem:[#allocation2 + $0x40] sm:$0xf] %vm795, %v732
      %813 = vst.msk [vmem:[#allocation2 + $0x44] sm:$0xf] %vm795, %v734
      %814 = vst.msk [vmem:[#allocation2 + $0x48] sm:$0xf] %vm795, %v736
      %815 = vst.msk [vmem:[#allocation2 + $0x4c] sm:$0xf] %vm795, %v738
      %816 = vst.msk [vmem:[#allocation2 + $0x50] sm:$0xf] %vm795, %v740
      %817 = vst.msk [vmem:[#allocation2 + $0x54] sm:$0xf] %vm795, %v742
      %818 = vst.msk [vmem:[#allocation2 + $0x58] sm:$0xf] %vm795, %v744
      %819 = vst.msk [vmem:[#allocation2 + $0x5c] sm:$0xf] %vm795, %v746
      %820 = vst.msk [vmem:[#allocation2 + $0x60] sm:$0xf] %vm795, %v748
      %821 = vst.msk [vmem:[#allocation2 + $0x64] sm:$0xf] %vm795, %v750
      %822 = vst.msk [vmem:[#allocation2 + $0x68] sm:$0xf] %vm795, %v752
      %823 = vst.msk [vmem:[#allocation2 + $0x6c] sm:$0xf] %vm795, %v754
      %824 = vst.msk [vmem:[#allocation2 + $0x70] sm:$0xf] %vm795, %v756
      %825 = vst.msk [vmem:[#allocation2 + $0x74] sm:$0xf] %vm795, %v758
      %826 = vst.msk [vmem:[#allocation2 + $0x78] sm:$0xf] %vm795, %v760
      %827 = vst.msk [vmem:[#allocation2 + $0x7c] sm:$0xf] %vm795, %v762
      %v828 = vld [vmem:[%s198] sm:$0xe]
      %v829 = vld [vmem:[%s198 + $0x4] sm:$0xf]
      %v830 = vld [vmem:[%s198 + $0x8] sm:$0x1]
      %v831 = vld [vmem:[%s198 + $0xc] sm:$0xe]
      %v832 = vld [vmem:[%s198 + $0x10] sm:$0xf]
      %v833 = vld [vmem:[%s198 + $0x14] sm:$0x1]
      %v834 = vld [vmem:[%s198 + $0x18] sm:$0xe]
      %v835 = vld [vmem:[%s198 + $0x1c] sm:$0xf]
      %v836 = vld [vmem:[%s198 + $0x20] sm:$0x1]
      %v837 = vld [vmem:[%s198 + $0x24] sm:$0xe]
      %v838 = vld [vmem:[%s198 + $0x28] sm:$0xf]
      %v839 = vld [vmem:[%s198 + $0x2c] sm:$0x1]
      %v840 = vld [vmem:[%s198 + $0x30] sm:$0xe]
      %v841 = vld [vmem:[%s198 + $0x34] sm:$0xf]
      %v842 = vld [vmem:[%s198 + $0x38] sm:$0x1]
      %v843 = vld [vmem:[%s198 + $0x3c] sm:$0xe]
      %v844 = vld [vmem:[%s198 + $0x40] sm:$0xf]
      %v845 = vld [vmem:[%s198 + $0x44] sm:$0x1]
      %v846 = vld [vmem:[%s198 + $0x48] sm:$0xe]
      %v847 = vld [vmem:[%s198 + $0x4c] sm:$0xf]
      %v848 = vld [vmem:[%s198 + $0x50] sm:$0x1]
      %v849 = vld [vmem:[%s198 + $0x54] sm:$0xe]
      %v850 = vld [vmem:[%s198 + $0x58] sm:$0xf]
      %v851 = vld [vmem:[%s198 + $0x5c] sm:$0x1]
      %v852 = vld [vmem:[%s198 + $0x60] sm:$0xe]
      %v853 = vld [vmem:[%s198 + $0x64] sm:$0xf]
      %v854 = vld [vmem:[%s198 + $0x68] sm:$0x1]
      %v855 = vld [vmem:[%s198 + $0x6c] sm:$0xe]
      %v856 = vld [vmem:[%s198 + $0x70] sm:$0xf]
      %v857 = vld [vmem:[%s198 + $0x74] sm:$0x1]
      %v858 = vld [vmem:[%s198 + $0x78] sm:$0xe]
      %v859 = vld [vmem:[%s198 + $0x7c] sm:$0xf]
      %v860 = vld [vmem:[%s198 + $0x80] sm:$0x1]
      %v861 = vld [vmem:[%s198 + $0x84] sm:$0xe]
      %v862 = vld [vmem:[%s198 + $0x88] sm:$0xf]
      %v863 = vld [vmem:[%s198 + $0x8c] sm:$0x1]
      %v864 = vld [vmem:[%s198 + $0x90] sm:$0xe]
      %v865 = vld [vmem:[%s198 + $0x94] sm:$0xf]
      %v866 = vld [vmem:[%s198 + $0x98] sm:$0x1]
      %v867 = vld [vmem:[%s198 + $0x9c] sm:$0xe]
      %v868 = vld [vmem:[%s198 + $0xa0] sm:$0xf]
      %v869 = vld [vmem:[%s198 + $0xa4] sm:$0x1]
      %v870 = vld [vmem:[%s198 + $0xa8] sm:$0xe]
      %v871 = vld [vmem:[%s198 + $0xac] sm:$0xf]
      %v872 = vld [vmem:[%s198 + $0xb0] sm:$0x1]
      %v873 = vld [vmem:[%s198 + $0xb4] sm:$0xe]
      %v874 = vld [vmem:[%s198 + $0xb8] sm:$0xf]
      %v875 = vld [vmem:[%s198 + $0xbc] sm:$0x1]
      %vm924 = vcmask 1042432
      %vm925 = vcmask 1046532
      %vm926 = vmor %vm924, %vm925
      %v927 = vrot.slane %v828, 5
      %v928 = vrot.slane %v927, 4
      %v929 = vrot.slane %v829, 5
      %v930 = vsel %vm926, %v928, %v929
      %v931 = vrot.slane %v929, 4
      %v932 = vrot.slane %v830, 5
      %v933 = vsel %vm926, %v931, %v932
      %v934 = vrot.slane %v831, 5
      %v935 = vrot.slane %v934, 4
      %v936 = vrot.slane %v832, 5
      %v937 = vsel %vm926, %v935, %v936
      %v938 = vrot.slane %v936, 4
      %v939 = vrot.slane %v833, 5
      %v940 = vsel %vm926, %v938, %v939
      %v941 = vrot.slane %v834, 5
      %v942 = vrot.slane %v941, 4
      %v943 = vrot.slane %v835, 5
      %v944 = vsel %vm926, %v942, %v943
      %v945 = vrot.slane %v943, 4
      %v946 = vrot.slane %v836, 5
      %v947 = vsel %vm926, %v945, %v946
      %v948 = vrot.slane %v837, 5
      %v949 = vrot.slane %v948, 4
      %v950 = vrot.slane %v838, 5
      %v951 = vsel %vm926, %v949, %v950
      %v952 = vrot.slane %v950, 4
      %v953 = vrot.slane %v839, 5
      %v954 = vsel %vm926, %v952, %v953
      %v955 = vrot.slane %v840, 5
      %v956 = vrot.slane %v955, 4
      %v957 = vrot.slane %v841, 5
      %v958 = vsel %vm926, %v956, %v957
      %v959 = vrot.slane %v957, 4
      %v960 = vrot.slane %v842, 5
      %v961 = vsel %vm926, %v959, %v960
      %v962 = vrot.slane %v843, 5
      %v963 = vrot.slane %v962, 4
      %v964 = vrot.slane %v844, 5
      %v965 = vsel %vm926, %v963, %v964
      %v966 = vrot.slane %v964, 4
      %v967 = vrot.slane %v845, 5
      %v968 = vsel %vm926, %v966, %v967
      %v969 = vrot.slane %v846, 5
      %v970 = vrot.slane %v969, 4
      %v971 = vrot.slane %v847, 5
      %v972 = vsel %vm926, %v970, %v971
      %v973 = vrot.slane %v971, 4
      %v974 = vrot.slane %v848, 5
      %v975 = vsel %vm926, %v973, %v974
      %v976 = vrot.slane %v849, 5
      %v977 = vrot.slane %v976, 4
      %v978 = vrot.slane %v850, 5
      %v979 = vsel %vm926, %v977, %v978
      %v980 = vrot.slane %v978, 4
      %v981 = vrot.slane %v851, 5
      %v982 = vsel %vm926, %v980, %v981
      %v983 = vrot.slane %v852, 5
      %v984 = vrot.slane %v983, 4
      %v985 = vrot.slane %v853, 5
      %v986 = vsel %vm926, %v984, %v985
      %v987 = vrot.slane %v985, 4
      %v988 = vrot.slane %v854, 5
      %v989 = vsel %vm926, %v987, %v988
      %v990 = vrot.slane %v855, 5
      %v991 = vrot.slane %v990, 4
      %v992 = vrot.slane %v856, 5
      %v993 = vsel %vm926, %v991, %v992
      %v994 = vrot.slane %v992, 4
      %v995 = vrot.slane %v857, 5
      %v996 = vsel %vm926, %v994, %v995
      %v997 = vrot.slane %v858, 5
      %v998 = vrot.slane %v997, 4
      %v999 = vrot.slane %v859, 5
      %v1000 = vsel %vm926, %v998, %v999
      %v1001 = vrot.slane %v999, 4
      %v1002 = vrot.slane %v860, 5
      %v1003 = vsel %vm926, %v1001, %v1002
      %v1004 = vrot.slane %v861, 5
      %v1005 = vrot.slane %v1004, 4
      %v1006 = vrot.slane %v862, 5
      %v1007 = vsel %vm926, %v1005, %v1006
      %v1008 = vrot.slane %v1006, 4
      %v1009 = vrot.slane %v863, 5
      %v1010 = vsel %vm926, %v1008, %v1009
      %v1011 = vrot.slane %v864, 5
      %v1012 = vrot.slane %v1011, 4
      %v1013 = vrot.slane %v865, 5
      %v1014 = vsel %vm926, %v1012, %v1013
      %v1015 = vrot.slane %v1013, 4
      %v1016 = vrot.slane %v866, 5
      %v1017 = vsel %vm926, %v1015, %v1016
      %v1018 = vrot.slane %v867, 5
      %v1019 = vrot.slane %v1018, 4
      %v1020 = vrot.slane %v868, 5
      %v1021 = vsel %vm926, %v1019, %v1020
      %v1022 = vrot.slane %v1020, 4
      %v1023 = vrot.slane %v869, 5
      %v1024 = vsel %vm926, %v1022, %v1023
      %v1025 = vrot.slane %v870, 5
      %v1026 = vrot.slane %v1025, 4
      %v1027 = vrot.slane %v871, 5
      %v1028 = vsel %vm926, %v1026, %v1027
      %v1029 = vrot.slane %v1027, 4
      %v1030 = vrot.slane %v872, 5
      %v1031 = vsel %vm926, %v1029, %v1030
      %v1032 = vrot.slane %v873, 5
      %v1033 = vrot.slane %v1032, 4
      %v1034 = vrot.slane %v874, 5
      %v1035 = vsel %vm926, %v1033, %v1034
      %v1036 = vrot.slane %v1034, 4
      %v1037 = vrot.slane %v875, 5
      %v1038 = vsel %vm926, %v1036, %v1037
      %1039 = vrot.lane.b32.xlu0 %v930, 6
      %v1040 = vpop.permute.xlu0 %1039
      %1041 = vrot.lane.b32.xlu0 %v933, 6
      %v1042 = vpop.permute.xlu0 %1041
      %1043 = vrot.lane.b32.xlu0 %v937, 6
      %v1044 = vpop.permute.xlu0 %1043
      %1045 = vrot.lane.b32.xlu0 %v940, 6
      %v1046 = vpop.permute.xlu0 %1045
      %1047 = vrot.lane.b32.xlu0 %v944, 6
      %v1048 = vpop.permute.xlu0 %1047
      %1049 = vrot.lane.b32.xlu0 %v947, 6
      %v1050 = vpop.permute.xlu0 %1049
      %1051 = vrot.lane.b32.xlu0 %v951, 6
      %v1052 = vpop.permute.xlu0 %1051
      %1053 = vrot.lane.b32.xlu0 %v954, 6
      %v1054 = vpop.permute.xlu0 %1053
      %1055 = vrot.lane.b32.xlu0 %v958, 6
      %v1056 = vpop.permute.xlu0 %1055
      %1057 = vrot.lane.b32.xlu0 %v961, 6
      %v1058 = vpop.permute.xlu0 %1057
      %1059 = vrot.lane.b32.xlu0 %v965, 6
      %v1060 = vpop.permute.xlu0 %1059
      %1061 = vrot.lane.b32.xlu0 %v968, 6
      %v1062 = vpop.permute.xlu0 %1061
      %1063 = vrot.lane.b32.xlu0 %v972, 6
      %v1064 = vpop.permute.xlu0 %1063
      %1065 = vrot.lane.b32.xlu0 %v975, 6
      %v1066 = vpop.permute.xlu0 %1065
      %1067 = vrot.lane.b32.xlu0 %v979, 6
      %v1068 = vpop.permute.xlu0 %1067
      %1069 = vrot.lane.b32.xlu0 %v982, 6
      %v1070 = vpop.permute.xlu0 %1069
      %1071 = vrot.lane.b32.xlu0 %v986, 6
      %v1072 = vpop.permute.xlu0 %1071
      %1073 = vrot.lane.b32.xlu0 %v989, 6
      %v1074 = vpop.permute.xlu0 %1073
      %1075 = vrot.lane.b32.xlu0 %v993, 6
      %v1076 = vpop.permute.xlu0 %1075
      %1077 = vrot.lane.b32.xlu0 %v996, 6
      %v1078 = vpop.permute.xlu0 %1077
      %1079 = vrot.lane.b32.xlu0 %v1000, 6
      %v1080 = vpop.permute.xlu0 %1079
      %1081 = vrot.lane.b32.xlu0 %v1003, 6
      %v1082 = vpop.permute.xlu0 %1081
      %1083 = vrot.lane.b32.xlu0 %v1007, 6
      %v1084 = vpop.permute.xlu0 %1083
      %1085 = vrot.lane.b32.xlu0 %v1010, 6
      %v1086 = vpop.permute.xlu0 %1085
      %1087 = vrot.lane.b32.xlu0 %v1014, 6
      %v1088 = vpop.permute.xlu0 %1087
      %1089 = vrot.lane.b32.xlu0 %v1017, 6
      %v1090 = vpop.permute.xlu0 %1089
      %1091 = vrot.lane.b32.xlu0 %v1021, 6
      %v1092 = vpop.permute.xlu0 %1091
      %1093 = vrot.lane.b32.xlu0 %v1024, 6
      %v1094 = vpop.permute.xlu0 %1093
      %1095 = vrot.lane.b32.xlu0 %v1028, 6
      %v1096 = vpop.permute.xlu0 %1095
      %1097 = vrot.lane.b32.xlu0 %v1031, 6
      %v1098 = vpop.permute.xlu0 %1097
      %1099 = vrot.lane.b32.xlu0 %v1035, 6
      %v1100 = vpop.permute.xlu0 %1099
      %1101 = vrot.lane.b32.xlu0 %v1038, 6
      %v1102 = vpop.permute.xlu0 %1101
      %vm1135 = vcmask 68656
      %1136 = vst.msk [vmem:[#allocation2] sm:$0xf] %vm1135, %v1040
      %1137 = vst.msk [vmem:[#allocation2 + $0x4] sm:$0xf] %vm1135, %v1042
      %1138 = vst.msk [vmem:[#allocation2 + $0x8] sm:$0xf] %vm1135, %v1044
      %1139 = vst.msk [vmem:[#allocation2 + $0xc] sm:$0xf] %vm1135, %v1046
      %1140 = vst.msk [vmem:[#allocation2 + $0x10] sm:$0xf] %vm1135, %v1048
      %1141 = vst.msk [vmem:[#allocation2 + $0x14] sm:$0xf] %vm1135, %v1050
      %1142 = vst.msk [vmem:[#allocation2 + $0x18] sm:$0xf] %vm1135, %v1052
      %1143 = vst.msk [vmem:[#allocation2 + $0x1c] sm:$0xf] %vm1135, %v1054
      %1144 = vst.msk [vmem:[#allocation2 + $0x20] sm:$0xf] %vm1135, %v1056
      %1145 = vst.msk [vmem:[#allocation2 + $0x24] sm:$0xf] %vm1135, %v1058
      %1146 = vst.msk [vmem:[#allocation2 + $0x28] sm:$0xf] %vm1135, %v1060
      %1147 = vst.msk [vmem:[#allocation2 + $0x2c] sm:$0xf] %vm1135, %v1062
      %1148 = vst.msk [vmem:[#allocation2 + $0x30] sm:$0xf] %vm1135, %v1064
      %1149 = vst.msk [vmem:[#allocation2 + $0x34] sm:$0xf] %vm1135, %v1066
      %1150 = vst.msk [vmem:[#allocation2 + $0x38] sm:$0xf] %vm1135, %v1068
      %1151 = vst.msk [vmem:[#allocation2 + $0x3c] sm:$0xf] %vm1135, %v1070
      %1152 = vst.msk [vmem:[#allocation2 + $0x40] sm:$0xf] %vm1135, %v1072
      %1153 = vst.msk [vmem:[#allocation2 + $0x44] sm:$0xf] %vm1135, %v1074
      %1154 = vst.msk [vmem:[#allocation2 + $0x48] sm:$0xf] %vm1135, %v1076
      %1155 = vst.msk [vmem:[#allocation2 + $0x4c] sm:$0xf] %vm1135, %v1078
      %1156 = vst.msk [vmem:[#allocation2 + $0x50] sm:$0xf] %vm1135, %v1080
      %1157 = vst.msk [vmem:[#allocation2 + $0x54] sm:$0xf] %vm1135, %v1082
      %1158 = vst.msk [vmem:[#allocation2 + $0x58] sm:$0xf] %vm1135, %v1084
      %1159 = vst.msk [vmem:[#allocation2 + $0x5c] sm:$0xf] %vm1135, %v1086
      %1160 = vst.msk [vmem:[#allocation2 + $0x60] sm:$0xf] %vm1135, %v1088
      %1161 = vst.msk [vmem:[#allocation2 + $0x64] sm:$0xf] %vm1135, %v1090
      %1162 = vst.msk [vmem:[#allocation2 + $0x68] sm:$0xf] %vm1135, %v1092
      %1163 = vst.msk [vmem:[#allocation2 + $0x6c] sm:$0xf] %vm1135, %v1094
      %1164 = vst.msk [vmem:[#allocation2 + $0x70] sm:$0xf] %vm1135, %v1096
      %1165 = vst.msk [vmem:[#allocation2 + $0x74] sm:$0xf] %vm1135, %v1098
      %1166 = vst.msk [vmem:[#allocation2 + $0x78] sm:$0xf] %vm1135, %v1100
      %1167 = vst.msk [vmem:[#allocation2 + $0x7c] sm:$0xf] %vm1135, %v1102
      %s1168 = sadd.s32 %s195, 1
      %s1169 = smul.u32 %s1168, 3
      %s1170 = smul.addr %s1169, 4
      %s1171 = scalar_lea.vmem %s183, %s1170
      %v1172 = vld [vmem:[%s1171] sm:$0xf]
      %v1173 = vld [vmem:[%s1171 + $0x4] sm:$0xf]
      %v1174 = vld [vmem:[%s1171 + $0xc] sm:$0xf]
      %v1175 = vld [vmem:[%s1171 + $0x10] sm:$0xf]
      %v1176 = vld [vmem:[%s1171 + $0x18] sm:$0xf]
      %v1177 = vld [vmem:[%s1171 + $0x1c] sm:$0xf]
      %v1178 = vld [vmem:[%s1171 + $0x24] sm:$0xf]
      %v1179 = vld [vmem:[%s1171 + $0x28] sm:$0xf]
      %v1180 = vld [vmem:[%s1171 + $0x30] sm:$0xf]
      %v1181 = vld [vmem:[%s1171 + $0x34] sm:$0xf]
      %v1182 = vld [vmem:[%s1171 + $0x3c] sm:$0xf]
      %v1183 = vld [vmem:[%s1171 + $0x40] sm:$0xf]
      %v1184 = vld [vmem:[%s1171 + $0x48] sm:$0xf]
      %v1185 = vld [vmem:[%s1171 + $0x4c] sm:$0xf]
      %v1186 = vld [vmem:[%s1171 + $0x54] sm:$0xf]
      %v1187 = vld [vmem:[%s1171 + $0x58] sm:$0xf]
      %v1188 = vld [vmem:[%s1171 + $0x60] sm:$0xf]
      %v1189 = vld [vmem:[%s1171 + $0x64] sm:$0xf]
      %v1190 = vld [vmem:[%s1171 + $0x6c] sm:$0xf]
      %v1191 = vld [vmem:[%s1171 + $0x70] sm:$0xf]
      %v1192 = vld [vmem:[%s1171 + $0x78] sm:$0xf]
      %v1193 = vld [vmem:[%s1171 + $0x7c] sm:$0xf]
      %v1194 = vld [vmem:[%s1171 + $0x84] sm:$0xf]
      %v1195 = vld [vmem:[%s1171 + $0x88] sm:$0xf]
      %v1196 = vld [vmem:[%s1171 + $0x90] sm:$0xf]
      %v1197 = vld [vmem:[%s1171 + $0x94] sm:$0xf]
      %v1198 = vld [vmem:[%s1171 + $0x9c] sm:$0xf]
      %v1199 = vld [vmem:[%s1171 + $0xa0] sm:$0xf]
      %v1200 = vld [vmem:[%s1171 + $0xa8] sm:$0xf]
      %v1201 = vld [vmem:[%s1171 + $0xac] sm:$0xf]
      %v1202 = vld [vmem:[%s1171 + $0xb4] sm:$0xf]
      %v1203 = vld [vmem:[%s1171 + $0xb8] sm:$0xf]
      %1236 = vrot.lane.b32.xlu0 %v1172, 9
      %v1237 = vpop.permute.xlu0 %1236
      %1238 = vrot.lane.b32.xlu0 %v1173, 9
      %v1239 = vpop.permute.xlu0 %1238
      %1240 = vrot.lane.b32.xlu0 %v1174, 9
      %v1241 = vpop.permute.xlu0 %1240
      %1242 = vrot.lane.b32.xlu0 %v1175, 9
      %v1243 = vpop.permute.xlu0 %1242
      %1244 = vrot.lane.b32.xlu0 %v1176, 9
      %v1245 = vpop.permute.xlu0 %1244
      %1246 = vrot.lane.b32.xlu0 %v1177, 9
      %v1247 = vpop.permute.xlu0 %1246
      %1248 = vrot.lane.b32.xlu0 %v1178, 9
      %v1249 = vpop.permute.xlu0 %1248
      %1250 = vrot.lane.b32.xlu0 %v1179, 9
      %v1251 = vpop.permute.xlu0 %1250
      %1252 = vrot.lane.b32.xlu0 %v1180, 9
      %v1253 = vpop.permute.xlu0 %1252
      %1254 = vrot.lane.b32.xlu0 %v1181, 9
      %v1255 = vpop.permute.xlu0 %1254
      %1256 = vrot.lane.b32.xlu0 %v1182, 9
      %v1257 = vpop.permute.xlu0 %1256
      %1258 = vrot.lane.b32.xlu0 %v1183, 9
      %v1259 = vpop.permute.xlu0 %1258
      %1260 = vrot.lane.b32.xlu0 %v1184, 9
      %v1261 = vpop.permute.xlu0 %1260
      %1262 = vrot.lane.b32.xlu0 %v1185, 9
      %v1263 = vpop.permute.xlu0 %1262
      %1264 = vrot.lane.b32.xlu0 %v1186, 9
      %v1265 = vpop.permute.xlu0 %1264
      %1266 = vrot.lane.b32.xlu0 %v1187, 9
      %v1267 = vpop.permute.xlu0 %1266
      %1268 = vrot.lane.b32.xlu0 %v1188, 9
      %v1269 = vpop.permute.xlu0 %1268
      %1270 = vrot.lane.b32.xlu0 %v1189, 9
      %v1271 = vpop.permute.xlu0 %1270
      %1272 = vrot.lane.b32.xlu0 %v1190, 9
      %v1273 = vpop.permute.xlu0 %1272
      %1274 = vrot.lane.b32.xlu0 %v1191, 9
      %v1275 = vpop.permute.xlu0 %1274
      %1276 = vrot.lane.b32.xlu0 %v1192, 9
      %v1277 = vpop.permute.xlu0 %1276
      %1278 = vrot.lane.b32.xlu0 %v1193, 9
      %v1279 = vpop.permute.xlu0 %1278
      %1280 = vrot.lane.b32.xlu0 %v1194, 9
      %v1281 = vpop.permute.xlu0 %1280
      %1282 = vrot.lane.b32.xlu0 %v1195, 9
      %v1283 = vpop.permute.xlu0 %1282
      %1284 = vrot.lane.b32.xlu0 %v1196, 9
      %v1285 = vpop.permute.xlu0 %1284
      %1286 = vrot.lane.b32.xlu0 %v1197, 9
      %v1287 = vpop.permute.xlu0 %1286
      %1288 = vrot.lane.b32.xlu0 %v1198, 9
      %v1289 = vpop.permute.xlu0 %1288
      %1290 = vrot.lane.b32.xlu0 %v1199, 9
      %v1291 = vpop.permute.xlu0 %1290
      %1292 = vrot.lane.b32.xlu0 %v1200, 9
      %v1293 = vpop.permute.xlu0 %1292
      %1294 = vrot.lane.b32.xlu0 %v1201, 9
      %v1295 = vpop.permute.xlu0 %1294
      %1296 = vrot.lane.b32.xlu0 %v1202, 9
      %v1297 = vpop.permute.xlu0 %1296
      %1298 = vrot.lane.b32.xlu0 %v1203, 9
      %v1299 = vpop.permute.xlu0 %1298
      %vm1332 = vcmask 93256
      %1333 = vst.msk [vmem:[#allocation2] sm:$0xf] %vm1332, %v1237
      %1334 = vst.msk [vmem:[#allocation2 + $0x4] sm:$0xf] %vm1332, %v1239
      %1335 = vst.msk [vmem:[#allocation2 + $0x8] sm:$0xf] %vm1332, %v1241
      %1336 = vst.msk [vmem:[#allocation2 + $0xc] sm:$0xf] %vm1332, %v1243
      %1337 = vst.msk [vmem:[#allocation2 + $0x10] sm:$0xf] %vm1332, %v1245
      %1338 = vst.msk [vmem:[#allocation2 + $0x14] sm:$0xf] %vm1332, %v1247
      %1339 = vst.msk [vmem:[#allocation2 + $0x18] sm:$0xf] %vm1332, %v1249
      %1340 = vst.msk [vmem:[#allocation2 + $0x1c] sm:$0xf] %vm1332, %v1251
      %1341 = vst.msk [vmem:[#allocation2 + $0x20] sm:$0xf] %vm1332, %v1253
      %1342 = vst.msk [vmem:[#allocation2 + $0x24] sm:$0xf] %vm1332, %v1255
      %1343 = vst.msk [vmem:[#allocation2 + $0x28] sm:$0xf] %vm1332, %v1257
      %1344 = vst.msk [vmem:[#allocation2 + $0x2c] sm:$0xf] %vm1332, %v1259
      %1345 = vst.msk [vmem:[#allocation2 + $0x30] sm:$0xf] %vm1332, %v1261
      %1346 = vst.msk [vmem:[#allocation2 + $0x34] sm:$0xf] %vm1332, %v1263
      %1347 = vst.msk [vmem:[#allocation2 + $0x38] sm:$0xf] %vm1332, %v1265
      %1348 = vst.msk [vmem:[#allocation2 + $0x3c] sm:$0xf] %vm1332, %v1267
      %1349 = vst.msk [vmem:[#allocation2 + $0x40] sm:$0xf] %vm1332, %v1269
      %1350 = vst.msk [vmem:[#allocation2 + $0x44] sm:$0xf] %vm1332, %v1271
      %1351 = vst.msk [vmem:[#allocation2 + $0x48] sm:$0xf] %vm1332, %v1273
      %1352 = vst.msk [vmem:[#allocation2 + $0x4c] sm:$0xf] %vm1332, %v1275
      %1353 = vst.msk [vmem:[#allocation2 + $0x50] sm:$0xf] %vm1332, %v1277
      %1354 = vst.msk [vmem:[#allocation2 + $0x54] sm:$0xf] %vm1332, %v1279
      %1355 = vst.msk [vmem:[#allocation2 + $0x58] sm:$0xf] %vm1332, %v1281
      %1356 = vst.msk [vmem:[#allocation2 + $0x5c] sm:$0xf] %vm1332, %v1283
      %1357 = vst.msk [vmem:[#allocation2 + $0x60] sm:$0xf] %vm1332, %v1285
      %1358 = vst.msk [vmem:[#allocation2 + $0x64] sm:$0xf] %vm1332, %v1287
      %1359 = vst.msk [vmem:[#allocation2 + $0x68] sm:$0xf] %vm1332, %v1289
      %1360 = vst.msk [vmem:[#allocation2 + $0x6c] sm:$0xf] %vm1332, %v1291
      %1361 = vst.msk [vmem:[#allocation2 + $0x70] sm:$0xf] %vm1332, %v1293
      %1362 = vst.msk [vmem:[#allocation2 + $0x74] sm:$0xf] %vm1332, %v1295
      %1363 = vst.msk [vmem:[#allocation2 + $0x78] sm:$0xf] %vm1332, %v1297
      %1364 = vst.msk [vmem:[#allocation2 + $0x7c] sm:$0xf] %vm1332, %v1299
      %v1365 = vld [vmem:[%s1171] sm:$0xf]
      %v1366 = vld [vmem:[%s1171 + $0x4] sm:$0xf]
      %v1367 = vld [vmem:[%s1171 + $0x8] sm:$0x1]
      %v1368 = vld [vmem:[%s1171 + $0xc] sm:$0xf]
      %v1369 = vld [vmem:[%s1171 + $0x10] sm:$0xf]
      %v1370 = vld [vmem:[%s1171 + $0x14] sm:$0x1]
      %v1371 = vld [vmem:[%s1171 + $0x18] sm:$0xf]
      %v1372 = vld [vmem:[%s1171 + $0x1c] sm:$0xf]
      %v1373 = vld [vmem:[%s1171 + $0x20] sm:$0x1]
      %v1374 = vld [vmem:[%s1171 + $0x24] sm:$0xf]
      %v1375 = vld [vmem:[%s1171 + $0x28] sm:$0xf]
      %v1376 = vld [vmem:[%s1171 + $0x2c] sm:$0x1]
      %v1377 = vld [vmem:[%s1171 + $0x30] sm:$0xf]
      %v1378 = vld [vmem:[%s1171 + $0x34] sm:$0xf]
      %v1379 = vld [vmem:[%s1171 + $0x38] sm:$0x1]
      %v1380 = vld [vmem:[%s1171 + $0x3c] sm:$0xf]
      %v1381 = vld [vmem:[%s1171 + $0x40] sm:$0xf]
      %v1382 = vld [vmem:[%s1171 + $0x44] sm:$0x1]
      %v1383 = vld [vmem:[%s1171 + $0x48] sm:$0xf]
      %v1384 = vld [vmem:[%s1171 + $0x4c] sm:$0xf]
      %v1385 = vld [vmem:[%s1171 + $0x50] sm:$0x1]
      %v1386 = vld [vmem:[%s1171 + $0x54] sm:$0xf]
      %v1387 = vld [vmem:[%s1171 + $0x58] sm:$0xf]
      %v1388 = vld [vmem:[%s1171 + $0x5c] sm:$0x1]
      %v1389 = vld [vmem:[%s1171 + $0x60] sm:$0xf]
      %v1390 = vld [vmem:[%s1171 + $0x64] sm:$0xf]
      %v1391 = vld [vmem:[%s1171 + $0x68] sm:$0x1]
      %v1392 = vld [vmem:[%s1171 + $0x6c] sm:$0xf]
      %v1393 = vld [vmem:[%s1171 + $0x70] sm:$0xf]
      %v1394 = vld [vmem:[%s1171 + $0x74] sm:$0x1]
      %v1395 = vld [vmem:[%s1171 + $0x78] sm:$0xf]
      %v1396 = vld [vmem:[%s1171 + $0x7c] sm:$0xf]
      %v1397 = vld [vmem:[%s1171 + $0x80] sm:$0x1]
      %v1398 = vld [vmem:[%s1171 + $0x84] sm:$0xf]
      %v1399 = vld [vmem:[%s1171 + $0x88] sm:$0xf]
      %v1400 = vld [vmem:[%s1171 + $0x8c] sm:$0x1]
      %v1401 = vld [vmem:[%s1171 + $0x90] sm:$0xf]
      %v1402 = vld [vmem:[%s1171 + $0x94] sm:$0xf]
      %v1403 = vld [vmem:[%s1171 + $0x98] sm:$0x1]
      %v1404 = vld [vmem:[%s1171 + $0x9c] sm:$0xf]
      %v1405 = vld [vmem:[%s1171 + $0xa0] sm:$0xf]
      %v1406 = vld [vmem:[%s1171 + $0xa4] sm:$0x1]
      %v1407 = vld [vmem:[%s1171 + $0xa8] sm:$0xf]
      %v1408 = vld [vmem:[%s1171 + $0xac] sm:$0xf]
      %v1409 = vld [vmem:[%s1171 + $0xb0] sm:$0x1]
      %v1410 = vld [vmem:[%s1171 + $0xb4] sm:$0xf]
      %v1411 = vld [vmem:[%s1171 + $0xb8] sm:$0xf]
      %v1412 = vld [vmem:[%s1171 + $0xbc] sm:$0x1]
      %v1414 = vshrl.u32 %v1365, 16
      %v1416 = vrot.slane %v1414, 4
      %v1417 = vshll.u32 %v1365, 16
      %v1419 = vrot.slane %v1417, 5
      %v1420 = vor.u32 %v1416, %v1419
      %v1421 = vrot.slane %v1420, 4
      %v1423 = vshll.u32 %v1366, 16
      %v1425 = vrot.slane %v1423, 5
      %v1426 = vsel %vm314, %v1421, %v1425
      %v1427 = vshrl.u32 %v1366, 16
      %v1429 = vrot.slane %v1427, 4
      %v1430 = vor.u32 %v1429, %v1425
      %v1431 = vrot.slane %v1430, 4
      %v1433 = vshll.u32 %v1367, 16
      %v1435 = vrot.slane %v1433, 5
      %v1436 = vsel %vm314, %v1431, %v1435
      %v1438 = vshrl.u32 %v1368, 16
      %v1440 = vrot.slane %v1438, 4
      %v1441 = vshll.u32 %v1368, 16
      %v1443 = vrot.slane %v1441, 5
      %v1444 = vor.u32 %v1440, %v1443
      %v1445 = vrot.slane %v1444, 4
      %v1447 = vshll.u32 %v1369, 16
      %v1449 = vrot.slane %v1447, 5
      %v1450 = vsel %vm314, %v1445, %v1449
      %v1451 = vshrl.u32 %v1369, 16
      %v1453 = vrot.slane %v1451, 4
      %v1454 = vor.u32 %v1453, %v1449
      %v1455 = vrot.slane %v1454, 4
      %v1457 = vshll.u32 %v1370, 16
      %v1459 = vrot.slane %v1457, 5
      %v1460 = vsel %vm314, %v1455, %v1459
      %v1462 = vshrl.u32 %v1371, 16
      %v1464 = vrot.slane %v1462, 4
      %v1465 = vshll.u32 %v1371, 16
      %v1467 = vrot.slane %v1465, 5
      %v1468 = vor.u32 %v1464, %v1467
      %v1469 = vrot.slane %v1468, 4
      %v1471 = vshll.u32 %v1372, 16
      %v1473 = vrot.slane %v1471, 5
      %v1474 = vsel %vm314, %v1469, %v1473
      %v1475 = vshrl.u32 %v1372, 16
      %v1477 = vrot.slane %v1475, 4
      %v1478 = vor.u32 %v1477, %v1473
      %v1479 = vrot.slane %v1478, 4
      %v1481 = vshll.u32 %v1373, 16
      %v1483 = vrot.slane %v1481, 5
      %v1484 = vsel %vm314, %v1479, %v1483
      %v1486 = vshrl.u32 %v1374, 16
      %v1488 = vrot.slane %v1486, 4
      %v1489 = vshll.u32 %v1374, 16
      %v1491 = vrot.slane %v1489, 5
      %v1492 = vor.u32 %v1488, %v1491
      %v1493 = vrot.slane %v1492, 4
      %v1495 = vshll.u32 %v1375, 16
      %v1497 = vrot.slane %v1495, 5
      %v1498 = vsel %vm314, %v1493, %v1497
      %v1499 = vshrl.u32 %v1375, 16
      %v1501 = vrot.slane %v1499, 4
      %v1502 = vor.u32 %v1501, %v1497
      %v1503 = vrot.slane %v1502, 4
      %v1505 = vshll.u32 %v1376, 16
      %v1507 = vrot.slane %v1505, 5
      %v1508 = vsel %vm314, %v1503, %v1507
      %v1510 = vshrl.u32 %v1377, 16
      %v1512 = vrot.slane %v1510, 4
      %v1513 = vshll.u32 %v1377, 16
      %v1515 = vrot.slane %v1513, 5
      %v1516 = vor.u32 %v1512, %v1515
      %v1517 = vrot.slane %v1516, 4
      %v1519 = vshll.u32 %v1378, 16
      %v1521 = vrot.slane %v1519, 5
      %v1522 = vsel %vm314, %v1517, %v1521
      %v1523 = vshrl.u32 %v1378, 16
      %v1525 = vrot.slane %v1523, 4
      %v1526 = vor.u32 %v1525, %v1521
      %v1527 = vrot.slane %v1526, 4
      %v1529 = vshll.u32 %v1379, 16
      %v1531 = vrot.slane %v1529, 5
      %v1532 = vsel %vm314, %v1527, %v1531
      %v1534 = vshrl.u32 %v1380, 16
      %v1536 = vrot.slane %v1534, 4
      %v1537 = vshll.u32 %v1380, 16
      %v1539 = vrot.slane %v1537, 5
      %v1540 = vor.u32 %v1536, %v1539
      %v1541 = vrot.slane %v1540, 4
      %v1543 = vshll.u32 %v1381, 16
      %v1545 = vrot.slane %v1543, 5
      %v1546 = vsel %vm314, %v1541, %v1545
      %v1547 = vshrl.u32 %v1381, 16
      %v1549 = vrot.slane %v1547, 4
      %v1550 = vor.u32 %v1549, %v1545
      %v1551 = vrot.slane %v1550, 4
      %v1553 = vshll.u32 %v1382, 16
      %v1555 = vrot.slane %v1553, 5
      %v1556 = vsel %vm314, %v1551, %v1555
      %v1558 = vshrl.u32 %v1383, 16
      %v1560 = vrot.slane %v1558, 4
      %v1561 = vshll.u32 %v1383, 16
      %v1563 = vrot.slane %v1561, 5
      %v1564 = vor.u32 %v1560, %v1563
      %v1565 = vrot.slane %v1564, 4
      %v1567 = vshll.u32 %v1384, 16
      %v1569 = vrot.slane %v1567, 5
      %v1570 = vsel %vm314, %v1565, %v1569
      %v1571 = vshrl.u32 %v1384, 16
      %v1573 = vrot.slane %v1571, 4
      %v1574 = vor.u32 %v1573, %v1569
      %v1575 = vrot.slane %v1574, 4
      %v1577 = vshll.u32 %v1385, 16
      %v1579 = vrot.slane %v1577, 5
      %v1580 = vsel %vm314, %v1575, %v1579
      %v1582 = vshrl.u32 %v1386, 16
      %v1584 = vrot.slane %v1582, 4
      %v1585 = vshll.u32 %v1386, 16
      %v1587 = vrot.slane %v1585, 5
      %v1588 = vor.u32 %v1584, %v1587
      %v1589 = vrot.slane %v1588, 4
      %v1591 = vshll.u32 %v1387, 16
      %v1593 = vrot.slane %v1591, 5
      %v1594 = vsel %vm314, %v1589, %v1593
      %v1595 = vshrl.u32 %v1387, 16
      %v1597 = vrot.slane %v1595, 4
      %v1598 = vor.u32 %v1597, %v1593
      %v1599 = vrot.slane %v1598, 4
      %v1601 = vshll.u32 %v1388, 16
      %v1603 = vrot.slane %v1601, 5
      %v1604 = vsel %vm314, %v1599, %v1603
      %v1606 = vshrl.u32 %v1389, 16
      %v1608 = vrot.slane %v1606, 4
      %v1609 = vshll.u32 %v1389, 16
      %v1611 = vrot.slane %v1609, 5
      %v1612 = vor.u32 %v1608, %v1611
      %v1613 = vrot.slane %v1612, 4
      %v1615 = vshll.u32 %v1390, 16
      %v1617 = vrot.slane %v1615, 5
      %v1618 = vsel %vm314, %v1613, %v1617
      %v1619 = vshrl.u32 %v1390, 16
      %v1621 = vrot.slane %v1619, 4
      %v1622 = vor.u32 %v1621, %v1617
      %v1623 = vrot.slane %v1622, 4
      %v1625 = vshll.u32 %v1391, 16
      %v1627 = vrot.slane %v1625, 5
      %v1628 = vsel %vm314, %v1623, %v1627
      %v1630 = vshrl.u32 %v1392, 16
      %v1632 = vrot.slane %v1630, 4
      %v1633 = vshll.u32 %v1392, 16
      %v1635 = vrot.slane %v1633, 5
      %v1636 = vor.u32 %v1632, %v1635
      %v1637 = vrot.slane %v1636, 4
      %v1639 = vshll.u32 %v1393, 16
      %v1641 = vrot.slane %v1639, 5
      %v1642 = vsel %vm314, %v1637, %v1641
      %v1643 = vshrl.u32 %v1393, 16
      %v1645 = vrot.slane %v1643, 4
      %v1646 = vor.u32 %v1645, %v1641
      %v1647 = vrot.slane %v1646, 4
      %v1649 = vshll.u32 %v1394, 16
      %v1651 = vrot.slane %v1649, 5
      %v1652 = vsel %vm314, %v1647, %v1651
      %v1654 = vshrl.u32 %v1395, 16
      %v1656 = vrot.slane %v1654, 4
      %v1657 = vshll.u32 %v1395, 16
      %v1659 = vrot.slane %v1657, 5
      %v1660 = vor.u32 %v1656, %v1659
      %v1661 = vrot.slane %v1660, 4
      %v1663 = vshll.u32 %v1396, 16
      %v1665 = vrot.slane %v1663, 5
      %v1666 = vsel %vm314, %v1661, %v1665
      %v1667 = vshrl.u32 %v1396, 16
      %v1669 = vrot.slane %v1667, 4
      %v1670 = vor.u32 %v1669, %v1665
      %v1671 = vrot.slane %v1670, 4
      %v1673 = vshll.u32 %v1397, 16
      %v1675 = vrot.slane %v1673, 5
      %v1676 = vsel %vm314, %v1671, %v1675
      %v1678 = vshrl.u32 %v1398, 16
      %v1680 = vrot.slane %v1678, 4
      %v1681 = vshll.u32 %v1398, 16
      %v1683 = vrot.slane %v1681, 5
      %v1684 = vor.u32 %v1680, %v1683
      %v1685 = vrot.slane %v1684, 4
      %v1687 = vshll.u32 %v1399, 16
      %v1689 = vrot.slane %v1687, 5
      %v1690 = vsel %vm314, %v1685, %v1689
      %v1691 = vshrl.u32 %v1399, 16
      %v1693 = vrot.slane %v1691, 4
      %v1694 = vor.u32 %v1693, %v1689
      %v1695 = vrot.slane %v1694, 4
      %v1697 = vshll.u32 %v1400, 16
      %v1699 = vrot.slane %v1697, 5
      %v1700 = vsel %vm314, %v1695, %v1699
      %v1702 = vshrl.u32 %v1401, 16
      %v1704 = vrot.slane %v1702, 4
      %v1705 = vshll.u32 %v1401, 16
      %v1707 = vrot.slane %v1705, 5
      %v1708 = vor.u32 %v1704, %v1707
      %v1709 = vrot.slane %v1708, 4
      %v1711 = vshll.u32 %v1402, 16
      %v1713 = vrot.slane %v1711, 5
      %v1714 = vsel %vm314, %v1709, %v1713
      %v1715 = vshrl.u32 %v1402, 16
      %v1717 = vrot.slane %v1715, 4
      %v1718 = vor.u32 %v1717, %v1713
      %v1719 = vrot.slane %v1718, 4
      %v1721 = vshll.u32 %v1403, 16
      %v1723 = vrot.slane %v1721, 5
      %v1724 = vsel %vm314, %v1719, %v1723
      %v1726 = vshrl.u32 %v1404, 16
      %v1728 = vrot.slane %v1726, 4
      %v1729 = vshll.u32 %v1404, 16
      %v1731 = vrot.slane %v1729, 5
      %v1732 = vor.u32 %v1728, %v1731
      %v1733 = vrot.slane %v1732, 4
      %v1735 = vshll.u32 %v1405, 16
      %v1737 = vrot.slane %v1735, 5
      %v1738 = vsel %vm314, %v1733, %v1737
      %v1739 = vshrl.u32 %v1405, 16
      %v1741 = vrot.slane %v1739, 4
      %v1742 = vor.u32 %v1741, %v1737
      %v1743 = vrot.slane %v1742, 4
      %v1745 = vshll.u32 %v1406, 16
      %v1747 = vrot.slane %v1745, 5
      %v1748 = vsel %vm314, %v1743, %v1747
      %v1750 = vshrl.u32 %v1407, 16
      %v1752 = vrot.slane %v1750, 4
      %v1753 = vshll.u32 %v1407, 16
      %v1755 = vrot.slane %v1753, 5
      %v1756 = vor.u32 %v1752, %v1755
      %v1757 = vrot.slane %v1756, 4
      %v1759 = vshll.u32 %v1408, 16
      %v1761 = vrot.slane %v1759, 5
      %v1762 = vsel %vm314, %v1757, %v1761
      %v1763 = vshrl.u32 %v1408, 16
      %v1765 = vrot.slane %v1763, 4
      %v1766 = vor.u32 %v1765, %v1761
      %v1767 = vrot.slane %v1766, 4
      %v1769 = vshll.u32 %v1409, 16
      %v1771 = vrot.slane %v1769, 5
      %v1772 = vsel %vm314, %v1767, %v1771
      %v1774 = vshrl.u32 %v1410, 16
      %v1776 = vrot.slane %v1774, 4
      %v1777 = vshll.u32 %v1410, 16
      %v1779 = vrot.slane %v1777, 5
      %v1780 = vor.u32 %v1776, %v1779
      %v1781 = vrot.slane %v1780, 4
      %v1783 = vshll.u32 %v1411, 16
      %v1785 = vrot.slane %v1783, 5
      %v1786 = vsel %vm314, %v1781, %v1785
      %v1787 = vshrl.u32 %v1411, 16
      %v1789 = vrot.slane %v1787, 4
      %v1790 = vor.u32 %v1789, %v1785
      %v1791 = vrot.slane %v1790, 4
      %v1793 = vshll.u32 %v1412, 16
      %v1795 = vrot.slane %v1793, 5
      %v1796 = vsel %vm314, %v1791, %v1795
      %1797 = vrot.lane.b32.xlu0 %v1426, 12
      %v1798 = vpop.permute.xlu0 %1797
      %1799 = vrot.lane.b32.xlu0 %v1436, 12
      %v1800 = vpop.permute.xlu0 %1799
      %1801 = vrot.lane.b32.xlu0 %v1450, 12
      %v1802 = vpop.permute.xlu0 %1801
      %1803 = vrot.lane.b32.xlu0 %v1460, 12
      %v1804 = vpop.permute.xlu0 %1803
      %1805 = vrot.lane.b32.xlu0 %v1474, 12
      %v1806 = vpop.permute.xlu0 %1805
      %1807 = vrot.lane.b32.xlu0 %v1484, 12
      %v1808 = vpop.permute.xlu0 %1807
      %1809 = vrot.lane.b32.xlu0 %v1498, 12
      %v1810 = vpop.permute.xlu0 %1809
      %1811 = vrot.lane.b32.xlu0 %v1508, 12
      %v1812 = vpop.permute.xlu0 %1811
      %1813 = vrot.lane.b32.xlu0 %v1522, 12
      %v1814 = vpop.permute.xlu0 %1813
      %1815 = vrot.lane.b32.xlu0 %v1532, 12
      %v1816 = vpop.permute.xlu0 %1815
      %1817 = vrot.lane.b32.xlu0 %v1546, 12
      %v1818 = vpop.permute.xlu0 %1817
      %1819 = vrot.lane.b32.xlu0 %v1556, 12
      %v1820 = vpop.permute.xlu0 %1819
      %1821 = vrot.lane.b32.xlu0 %v1570, 12
      %v1822 = vpop.permute.xlu0 %1821
      %1823 = vrot.lane.b32.xlu0 %v1580, 12
      %v1824 = vpop.permute.xlu0 %1823
      %1825 = vrot.lane.b32.xlu0 %v1594, 12
      %v1826 = vpop.permute.xlu0 %1825
      %1827 = vrot.lane.b32.xlu0 %v1604, 12
      %v1828 = vpop.permute.xlu0 %1827
      %1829 = vrot.lane.b32.xlu0 %v1618, 12
      %v1830 = vpop.permute.xlu0 %1829
      %1831 = vrot.lane.b32.xlu0 %v1628, 12
      %v1832 = vpop.permute.xlu0 %1831
      %1833 = vrot.lane.b32.xlu0 %v1642, 12
      %v1834 = vpop.permute.xlu0 %1833
      %1835 = vrot.lane.b32.xlu0 %v1652, 12
      %v1836 = vpop.permute.xlu0 %1835
      %1837 = vrot.lane.b32.xlu0 %v1666, 12
      %v1838 = vpop.permute.xlu0 %1837
      %1839 = vrot.lane.b32.xlu0 %v1676, 12
      %v1840 = vpop.permute.xlu0 %1839
      %1841 = vrot.lane.b32.xlu0 %v1690, 12
      %v1842 = vpop.permute.xlu0 %1841
      %1843 = vrot.lane.b32.xlu0 %v1700, 12
      %v1844 = vpop.permute.xlu0 %1843
      %1845 = vrot.lane.b32.xlu0 %v1714, 12
      %v1846 = vpop.permute.xlu0 %1845
      %1847 = vrot.lane.b32.xlu0 %v1724, 12
      %v1848 = vpop.permute.xlu0 %1847
      %1849 = vrot.lane.b32.xlu0 %v1738, 12
      %v1850 = vpop.permute.xlu0 %1849
      %1851 = vrot.lane.b32.xlu0 %v1748, 12
      %v1852 = vpop.permute.xlu0 %1851
      %1853 = vrot.lane.b32.xlu0 %v1762, 12
      %v1854 = vpop.permute.xlu0 %1853
      %1855 = vrot.lane.b32.xlu0 %v1772, 12
      %v1856 = vpop.permute.xlu0 %1855
      %1857 = vrot.lane.b32.xlu0 %v1786, 12
      %v1858 = vpop.permute.xlu0 %1857
      %1859 = vrot.lane.b32.xlu0 %v1796, 12
      %v1860 = vpop.permute.xlu0 %1859
      %vm1893 = vcmask 117856
      %1894 = vst.msk [vmem:[#allocation2] sm:$0xf] %vm1893, %v1798
      %1895 = vst.msk [vmem:[#allocation2 + $0x4] sm:$0xf] %vm1893, %v1800
      %1896 = vst.msk [vmem:[#allocation2 + $0x8] sm:$0xf] %vm1893, %v1802
      %1897 = vst.msk [vmem:[#allocation2 + $0xc] sm:$0xf] %vm1893, %v1804
      %1898 = vst.msk [vmem:[#allocation2 + $0x10] sm:$0xf] %vm1893, %v1806
      %1899 = vst.msk [vmem:[#allocation2 + $0x14] sm:$0xf] %vm1893, %v1808
      %1900 = vst.msk [vmem:[#allocation2 + $0x18] sm:$0xf] %vm1893, %v1810
      %1901 = vst.msk [vmem:[#allocation2 + $0x1c] sm:$0xf] %vm1893, %v1812
      %1902 = vst.msk [vmem:[#allocation2 + $0x20] sm:$0xf] %vm1893, %v1814
      %1903 = vst.msk [vmem:[#allocation2 + $0x24] sm:$0xf] %vm1893, %v1816
      %1904 = vst.msk [vmem:[#allocation2 + $0x28] sm:$0xf] %vm1893, %v1818
      %1905 = vst.msk [vmem:[#allocation2 + $0x2c] sm:$0xf] %vm1893, %v1820
      %1906 = vst.msk [vmem:[#allocation2 + $0x30] sm:$0xf] %vm1893, %v1822
      %1907 = vst.msk [vmem:[#allocation2 + $0x34] sm:$0xf] %vm1893, %v1824
      %1908 = vst.msk [vmem:[#allocation2 + $0x38] sm:$0xf] %vm1893, %v1826
      %1909 = vst.msk [vmem:[#allocation2 + $0x3c] sm:$0xf] %vm1893, %v1828
      %1910 = vst.msk [vmem:[#allocation2 + $0x40] sm:$0xf] %vm1893, %v1830
      %1911 = vst.msk [vmem:[#allocation2 + $0x44] sm:$0xf] %vm1893, %v1832
      %1912 = vst.msk [vmem:[#allocation2 + $0x48] sm:$0xf] %vm1893, %v1834
      %1913 = vst.msk [vmem:[#allocation2 + $0x4c] sm:$0xf] %vm1893, %v1836
      %1914 = vst.msk [vmem:[#allocation2 + $0x50] sm:$0xf] %vm1893, %v1838
      %1915 = vst.msk [vmem:[#allocation2 + $0x54] sm:$0xf] %vm1893, %v1840
      %1916 = vst.msk [vmem:[#allocation2 + $0x58] sm:$0xf] %vm1893, %v1842
      %1917 = vst.msk [vmem:[#allocation2 + $0x5c] sm:$0xf] %vm1893, %v1844
      %1918 = vst.msk [vmem:[#allocation2 + $0x60] sm:$0xf] %vm1893, %v1846
      %1919 = vst.msk [vmem:[#allocation2 + $0x64] sm:$0xf] %vm1893, %v1848
      %1920 = vst.msk [vmem:[#allocation2 + $0x68] sm:$0xf] %vm1893, %v1850
      %1921 = vst.msk [vmem:[#allocation2 + $0x6c] sm:$0xf] %vm1893, %v1852
      %1922 = vst.msk [vmem:[#allocation2 + $0x70] sm:$0xf] %vm1893, %v1854
      %1923 = vst.msk [vmem:[#allocation2 + $0x74] sm:$0xf] %vm1893, %v1856
      %1924 = vst.msk [vmem:[#allocation2 + $0x78] sm:$0xf] %vm1893, %v1858
      %1925 = vst.msk [vmem:[#allocation2 + $0x7c] sm:$0xf] %vm1893, %v1860
      %v1926 = vld [vmem:[%s1171] sm:$0xe]
      %v1927 = vld [vmem:[%s1171 + $0x4] sm:$0xf]
      %v1928 = vld [vmem:[%s1171 + $0x8] sm:$0x1]
      %v1929 = vld [vmem:[%s1171 + $0xc] sm:$0xe]
      %v1930 = vld [vmem:[%s1171 + $0x10] sm:$0xf]
      %v1931 = vld [vmem:[%s1171 + $0x14] sm:$0x1]
      %v1932 = vld [vmem:[%s1171 + $0x18] sm:$0xe]
      %v1933 = vld [vmem:[%s1171 + $0x1c] sm:$0xf]
      %v1934 = vld [vmem:[%s1171 + $0x20] sm:$0x1]
      %v1935 = vld [vmem:[%s1171 + $0x24] sm:$0xe]
      %v1936 = vld [vmem:[%s1171 + $0x28] sm:$0xf]
      %v1937 = vld [vmem:[%s1171 + $0x2c] sm:$0x1]
      %v1938 = vld [vmem:[%s1171 + $0x30] sm:$0xe]
      %v1939 = vld [vmem:[%s1171 + $0x34] sm:$0xf]
      %v1940 = vld [vmem:[%s1171 + $0x38] sm:$0x1]
      %v1941 = vld [vmem:[%s1171 + $0x3c] sm:$0xe]
      %v1942 = vld [vmem:[%s1171 + $0x40] sm:$0xf]
      %v1943 = vld [vmem:[%s1171 + $0x44] sm:$0x1]
      %v1944 = vld [vmem:[%s1171 + $0x48] sm:$0xe]
      %v1945 = vld [vmem:[%s1171 + $0x4c] sm:$0xf]
      %v1946 = vld [vmem:[%s1171 + $0x50] sm:$0x1]
      %v1947 = vld [vmem:[%s1171 + $0x54] sm:$0xe]
      %v1948 = vld [vmem:[%s1171 + $0x58] sm:$0xf]
      %v1949 = vld [vmem:[%s1171 + $0x5c] sm:$0x1]
      %v1950 = vld [vmem:[%s1171 + $0x60] sm:$0xe]
      %v1951 = vld [vmem:[%s1171 + $0x64] sm:$0xf]
      %v1952 = vld [vmem:[%s1171 + $0x68] sm:$0x1]
      %v1953 = vld [vmem:[%s1171 + $0x6c] sm:$0xe]
      %v1954 = vld [vmem:[%s1171 + $0x70] sm:$0xf]
      %v1955 = vld [vmem:[%s1171 + $0x74] sm:$0x1]
      %v1956 = vld [vmem:[%s1171 + $0x78] sm:$0xe]
      %v1957 = vld [vmem:[%s1171 + $0x7c] sm:$0xf]
      %v1958 = vld [vmem:[%s1171 + $0x80] sm:$0x1]
      %v1959 = vld [vmem:[%s1171 + $0x84] sm:$0xe]
      %v1960 = vld [vmem:[%s1171 + $0x88] sm:$0xf]
      %v1961 = vld [vmem:[%s1171 + $0x8c] sm:$0x1]
      %v1962 = vld [vmem:[%s1171 + $0x90] sm:$0xe]
      %v1963 = vld [vmem:[%s1171 + $0x94] sm:$0xf]
      %v1964 = vld [vmem:[%s1171 + $0x98] sm:$0x1]
      %v1965 = vld [vmem:[%s1171 + $0x9c] sm:$0xe]
      %v1966 = vld [vmem:[%s1171 + $0xa0] sm:$0xf]
      %v1967 = vld [vmem:[%s1171 + $0xa4] sm:$0x1]
      %v1968 = vld [vmem:[%s1171 + $0xa8] sm:$0xe]
      %v1969 = vld [vmem:[%s1171 + $0xac] sm:$0xf]
      %v1970 = vld [vmem:[%s1171 + $0xb0] sm:$0x1]
      %v1971 = vld [vmem:[%s1171 + $0xb4] sm:$0xe]
      %v1972 = vld [vmem:[%s1171 + $0xb8] sm:$0xf]
      %v1973 = vld [vmem:[%s1171 + $0xbc] sm:$0x1]
      %v2022 = vrot.slane %v1926, 5
      %v2023 = vrot.slane %v2022, 4
      %v2024 = vrot.slane %v1927, 5
      %v2025 = vsel %vm926, %v2023, %v2024
      %v2026 = vrot.slane %v2024, 4
      %v2027 = vrot.slane %v1928, 5
      %v2028 = vsel %vm926, %v2026, %v2027
      %v2029 = vrot.slane %v1929, 5
      %v2030 = vrot.slane %v2029, 4
      %v2031 = vrot.slane %v1930, 5
      %v2032 = vsel %vm926, %v2030, %v2031
      %v2033 = vrot.slane %v2031, 4
      %v2034 = vrot.slane %v1931, 5
      %v2035 = vsel %vm926, %v2033, %v2034
      %v2036 = vrot.slane %v1932, 5
      %v2037 = vrot.slane %v2036, 4
      %v2038 = vrot.slane %v1933, 5
      %v2039 = vsel %vm926, %v2037, %v2038
      %v2040 = vrot.slane %v2038, 4
      %v2041 = vrot.slane %v1934, 5
      %v2042 = vsel %vm926, %v2040, %v2041
      %v2043 = vrot.slane %v1935, 5
      %v2044 = vrot.slane %v2043, 4
      %v2045 = vrot.slane %v1936, 5
      %v2046 = vsel %vm926, %v2044, %v2045
      %v2047 = vrot.slane %v2045, 4
      %v2048 = vrot.slane %v1937, 5
      %v2049 = vsel %vm926, %v2047, %v2048
      %v2050 = vrot.slane %v1938, 5
      %v2051 = vrot.slane %v2050, 4
      %v2052 = vrot.slane %v1939, 5
      %v2053 = vsel %vm926, %v2051, %v2052
      %v2054 = vrot.slane %v2052, 4
      %v2055 = vrot.slane %v1940, 5
      %v2056 = vsel %vm926, %v2054, %v2055
      %v2057 = vrot.slane %v1941, 5
      %v2058 = vrot.slane %v2057, 4
      %v2059 = vrot.slane %v1942, 5
      %v2060 = vsel %vm926, %v2058, %v2059
      %v2061 = vrot.slane %v2059, 4
      %v2062 = vrot.slane %v1943, 5
      %v2063 = vsel %vm926, %v2061, %v2062
      %v2064 = vrot.slane %v1944, 5
      %v2065 = vrot.slane %v2064, 4
      %v2066 = vrot.slane %v1945, 5
      %v2067 = vsel %vm926, %v2065, %v2066
      %v2068 = vrot.slane %v2066, 4
      %v2069 = vrot.slane %v1946, 5
      %v2070 = vsel %vm926, %v2068, %v2069
      %v2071 = vrot.slane %v1947, 5
      %v2072 = vrot.slane %v2071, 4
      %v2073 = vrot.slane %v1948, 5
      %v2074 = vsel %vm926, %v2072, %v2073
      %v2075 = vrot.slane %v2073, 4
      %v2076 = vrot.slane %v1949, 5
      %v2077 = vsel %vm926, %v2075, %v2076
      %v2078 = vrot.slane %v1950, 5
      %v2079 = vrot.slane %v2078, 4
      %v2080 = vrot.slane %v1951, 5
      %v2081 = vsel %vm926, %v2079, %v2080
      %v2082 = vrot.slane %v2080, 4
      %v2083 = vrot.slane %v1952, 5
      %v2084 = vsel %vm926, %v2082, %v2083
      %v2085 = vrot.slane %v1953, 5
      %v2086 = vrot.slane %v2085, 4
      %v2087 = vrot.slane %v1954, 5
      %v2088 = vsel %vm926, %v2086, %v2087
      %v2089 = vrot.slane %v2087, 4
      %v2090 = vrot.slane %v1955, 5
      %v2091 = vsel %vm926, %v2089, %v2090
      %v2092 = vrot.slane %v1956, 5
      %v2093 = vrot.slane %v2092, 4
      %v2094 = vrot.slane %v1957, 5
      %v2095 = vsel %vm926, %v2093, %v2094
      %v2096 = vrot.slane %v2094, 4
      %v2097 = vrot.slane %v1958, 5
      %v2098 = vsel %vm926, %v2096, %v2097
      %v2099 = vrot.slane %v1959, 5
      %v2100 = vrot.slane %v2099, 4
      %v2101 = vrot.slane %v1960, 5
      %v2102 = vsel %vm926, %v2100, %v2101
      %v2103 = vrot.slane %v2101, 4
      %v2104 = vrot.slane %v1961, 5
      %v2105 = vsel %vm926, %v2103, %v2104
      %v2106 = vrot.slane %v1962, 5
      %v2107 = vrot.slane %v2106, 4
      %v2108 = vrot.slane %v1963, 5
      %v2109 = vsel %vm926, %v2107, %v2108
      %v2110 = vrot.slane %v2108, 4
      %v2111 = vrot.slane %v1964, 5
      %v2112 = vsel %vm926, %v2110, %v2111
      %v2113 = vrot.slane %v1965, 5
      %v2114 = vrot.slane %v2113, 4
      %v2115 = vrot.slane %v1966, 5
      %v2116 = vsel %vm926, %v2114, %v2115
      %v2117 = vrot.slane %v2115, 4
      %v2118 = vrot.slane %v1967, 5
      %v2119 = vsel %vm926, %v2117, %v2118
      %v2120 = vrot.slane %v1968, 5
      %v2121 = vrot.slane %v2120, 4
      %v2122 = vrot.slane %v1969, 5
      %v2123 = vsel %vm926, %v2121, %v2122
      %v2124 = vrot.slane %v2122, 4
      %v2125 = vrot.slane %v1970, 5
      %v2126 = vsel %vm926, %v2124, %v2125
      %v2127 = vrot.slane %v1971, 5
      %v2128 = vrot.slane %v2127, 4
      %v2129 = vrot.slane %v1972, 5
      %v2130 = vsel %vm926, %v2128, %v2129
      %v2131 = vrot.slane %v2129, 4
      %v2132 = vrot.slane %v1973, 5
      %v2133 = vsel %vm926, %v2131, %v2132
      %2134 = vrot.lane.b32.xlu0 %v2025, 15
      %v2135 = vpop.permute.xlu0 %2134
      %2136 = vrot.lane.b32.xlu0 %v2028, 15
      %v2137 = vpop.permute.xlu0 %2136
      %2138 = vrot.lane.b32.xlu0 %v2032, 15
      %v2139 = vpop.permute.xlu0 %2138
      %2140 = vrot.lane.b32.xlu0 %v2035, 15
      %v2141 = vpop.permute.xlu0 %2140
      %2142 = vrot.lane.b32.xlu0 %v2039, 15
      %v2143 = vpop.permute.xlu0 %2142
      %2144 = vrot.lane.b32.xlu0 %v2042, 15
      %v2145 = vpop.permute.xlu0 %2144
      %2146 = vrot.lane.b32.xlu0 %v2046, 15
      %v2147 = vpop.permute.xlu0 %2146
      %2148 = vrot.lane.b32.xlu0 %v2049, 15
      %v2149 = vpop.permute.xlu0 %2148
      %2150 = vrot.lane.b32.xlu0 %v2053, 15
      %v2151 = vpop.permute.xlu0 %2150
      %2152 = vrot.lane.b32.xlu0 %v2056, 15
      %v2153 = vpop.permute.xlu0 %2152
      %2154 = vrot.lane.b32.xlu0 %v2060, 15
      %v2155 = vpop.permute.xlu0 %2154
      %2156 = vrot.lane.b32.xlu0 %v2063, 15
      %v2157 = vpop.permute.xlu0 %2156
      %2158 = vrot.lane.b32.xlu0 %v2067, 15
      %v2159 = vpop.permute.xlu0 %2158
      %2160 = vrot.lane.b32.xlu0 %v2070, 15
      %v2161 = vpop.permute.xlu0 %2160
      %2162 = vrot.lane.b32.xlu0 %v2074, 15
      %v2163 = vpop.permute.xlu0 %2162
      %2164 = vrot.lane.b32.xlu0 %v2077, 15
      %v2165 = vpop.permute.xlu0 %2164
      %2166 = vrot.lane.b32.xlu0 %v2081, 15
      %v2167 = vpop.permute.xlu0 %2166
      %2168 = vrot.lane.b32.xlu0 %v2084, 15
      %v2169 = vpop.permute.xlu0 %2168
      %2170 = vrot.lane.b32.xlu0 %v2088, 15
      %v2171 = vpop.permute.xlu0 %2170
      %2172 = vrot.lane.b32.xlu0 %v2091, 15
      %v2173 = vpop.permute.xlu0 %2172
      %2174 = vrot.lane.b32.xlu0 %v2095, 15
      %v2175 = vpop.permute.xlu0 %2174
      %2176 = vrot.lane.b32.xlu0 %v2098, 15
      %v2177 = vpop.permute.xlu0 %2176
      %2178 = vrot.lane.b32.xlu0 %v2102, 15
      %v2179 = vpop.permute.xlu0 %2178
      %2180 = vrot.lane.b32.xlu0 %v2105, 15
      %v2181 = vpop.permute.xlu0 %2180
      %2182 = vrot.lane.b32.xlu0 %v2109, 15
      %v2183 = vpop.permute.xlu0 %2182
      %2184 = vrot.lane.b32.xlu0 %v2112, 15
      %v2185 = vpop.permute.xlu0 %2184
      %2186 = vrot.lane.b32.xlu0 %v2116, 15
      %v2187 = vpop.permute.xlu0 %2186
      %2188 = vrot.lane.b32.xlu0 %v2119, 15
      %v2189 = vpop.permute.xlu0 %2188
      %2190 = vrot.lane.b32.xlu0 %v2123, 15
      %v2191 = vpop.permute.xlu0 %2190
      %2192 = vrot.lane.b32.xlu0 %v2126, 15
      %v2193 = vpop.permute.xlu0 %2192
      %2194 = vrot.lane.b32.xlu0 %v2130, 15
      %v2195 = vpop.permute.xlu0 %2194
      %2196 = vrot.lane.b32.xlu0 %v2133, 15
      %v2197 = vpop.permute.xlu0 %2196
      %vm2230 = vcmask 142456
      %2231 = vst.msk [vmem:[#allocation2] sm:$0xf] %vm2230, %v2135
      %2232 = vst.msk [vmem:[#allocation2 + $0x4] sm:$0xf] %vm2230, %v2137
      %2233 = vst.msk [vmem:[#allocation2 + $0x8] sm:$0xf] %vm2230, %v2139
      %2234 = vst.msk [vmem:[#allocation2 + $0xc] sm:$0xf] %vm2230, %v2141
      %2235 = vst.msk [vmem:[#allocation2 + $0x10] sm:$0xf] %vm2230, %v2143
      %2236 = vst.msk [vmem:[#allocation2 + $0x14] sm:$0xf] %vm2230, %v2145
      %2237 = vst.msk [vmem:[#allocation2 + $0x18] sm:$0xf] %vm2230, %v2147
      %2238 = vst.msk [vmem:[#allocation2 + $0x1c] sm:$0xf] %vm2230, %v2149
      %2239 = vst.msk [vmem:[#allocation2 + $0x20] sm:$0xf] %vm2230, %v2151
      %2240 = vst.msk [vmem:[#allocation2 + $0x24] sm:$0xf] %vm2230, %v2153
      %2241 = vst.msk [vmem:[#allocation2 + $0x28] sm:$0xf] %vm2230, %v2155
      %2242 = vst.msk [vmem:[#allocation2 + $0x2c] sm:$0xf] %vm2230, %v2157
      %2243 = vst.msk [vmem:[#allocation2 + $0x30] sm:$0xf] %vm2230, %v2159
      %2244 = vst.msk [vmem:[#allocation2 + $0x34] sm:$0xf] %vm2230, %v2161
      %2245 = vst.msk [vmem:[#allocation2 + $0x38] sm:$0xf] %vm2230, %v2163
      %2246 = vst.msk [vmem:[#allocation2 + $0x3c] sm:$0xf] %vm2230, %v2165
      %2247 = vst.msk [vmem:[#allocation2 + $0x40] sm:$0xf] %vm2230, %v2167
      %2248 = vst.msk [vmem:[#allocation2 + $0x44] sm:$0xf] %vm2230, %v2169
      %2249 = vst.msk [vmem:[#allocation2 + $0x48] sm:$0xf] %vm2230, %v2171
      %2250 = vst.msk [vmem:[#allocation2 + $0x4c] sm:$0xf] %vm2230, %v2173
      %2251 = vst.msk [vmem:[#allocation2 + $0x50] sm:$0xf] %vm2230, %v2175
      %2252 = vst.msk [vmem:[#allocation2 + $0x54] sm:$0xf] %vm2230, %v2177
      %2253 = vst.msk [vmem:[#allocation2 + $0x58] sm:$0xf] %vm2230, %v2179
      %2254 = vst.msk [vmem:[#allocation2 + $0x5c] sm:$0xf] %vm2230, %v2181
      %2255 = vst.msk [vmem:[#allocation2 + $0x60] sm:$0xf] %vm2230, %v2183
      %2256 = vst.msk [vmem:[#allocation2 + $0x64] sm:$0xf] %vm2230, %v2185
      %2257 = vst.msk [vmem:[#allocation2 + $0x68] sm:$0xf] %vm2230, %v2187
      %2258 = vst.msk [vmem:[#allocation2 + $0x6c] sm:$0xf] %vm2230, %v2189
      %2259 = vst.msk [vmem:[#allocation2 + $0x70] sm:$0xf] %vm2230, %v2191
      %2260 = vst.msk [vmem:[#allocation2 + $0x74] sm:$0xf] %vm2230, %v2193
      %2261 = vst.msk [vmem:[#allocation2 + $0x78] sm:$0xf] %vm2230, %v2195
      %2262 = vst.msk [vmem:[#allocation2 + $0x7c] sm:$0xf] %vm2230, %v2197
      %s2263 = sadd.s32 %s195, 2
      %s2264 = smul.u32 %s2263, 3
      %s2265 = smul.addr %s2264, 4
      %s2266 = scalar_lea.vmem %s183, %s2265
      %v2267 = vld [vmem:[%s2266] sm:$0xf]
      %v2268 = vld [vmem:[%s2266 + $0x4] sm:$0xf]
      %v2269 = vld [vmem:[%s2266 + $0xc] sm:$0xf]
      %v2270 = vld [vmem:[%s2266 + $0x10] sm:$0xf]
      %v2271 = vld [vmem:[%s2266 + $0x18] sm:$0xf]
      %v2272 = vld [vmem:[%s2266 + $0x1c] sm:$0xf]
      %v2273 = vld [vmem:[%s2266 + $0x24] sm:$0xf]
      %v2274 = vld [vmem:[%s2266 + $0x28] sm:$0xf]
      %v2275 = vld [vmem:[%s2266 + $0x30] sm:$0xf]
      %v2276 = vld [vmem:[%s2266 + $0x34] sm:$0xf]
      %v2277 = vld [vmem:[%s2266 + $0x3c] sm:$0xf]
      %v2278 = vld [vmem:[%s2266 + $0x40] sm:$0xf]
      %v2279 = vld [vmem:[%s2266 + $0x48] sm:$0xf]
      %v2280 = vld [vmem:[%s2266 + $0x4c] sm:$0xf]
      %v2281 = vld [vmem:[%s2266 + $0x54] sm:$0xf]
      %v2282 = vld [vmem:[%s2266 + $0x58] sm:$0xf]
      %v2283 = vld [vmem:[%s2266 + $0x60] sm:$0xf]
      %v2284 = vld [vmem:[%s2266 + $0x64] sm:$0xf]
      %v2285 = vld [vmem:[%s2266 + $0x6c] sm:$0xf]
      %v2286 = vld [vmem:[%s2266 + $0x70] sm:$0xf]
      %v2287 = vld [vmem:[%s2266 + $0x78] sm:$0xf]
      %v2288 = vld [vmem:[%s2266 + $0x7c] sm:$0xf]
      %v2289 = vld [vmem:[%s2266 + $0x84] sm:$0xf]
      %v2290 = vld [vmem:[%s2266 + $0x88] sm:$0xf]
      %v2291 = vld [vmem:[%s2266 + $0x90] sm:$0xf]
      %v2292 = vld [vmem:[%s2266 + $0x94] sm:$0xf]
      %v2293 = vld [vmem:[%s2266 + $0x9c] sm:$0xf]
      %v2294 = vld [vmem:[%s2266 + $0xa0] sm:$0xf]
      %v2295 = vld [vmem:[%s2266 + $0xa8] sm:$0xf]
      %v2296 = vld [vmem:[%s2266 + $0xac] sm:$0xf]
      %v2297 = vld [vmem:[%s2266 + $0xb4] sm:$0xf]
      %v2298 = vld [vmem:[%s2266 + $0xb8] sm:$0xf]
      %2331 = vrot.lane.b32.xlu0 %v2267, 18
      %v2332 = vpop.permute.xlu0 %2331
      %2333 = vrot.lane.b32.xlu0 %v2268, 18
      %v2334 = vpop.permute.xlu0 %2333
      %2335 = vrot.lane.b32.xlu0 %v2269, 18
      %v2336 = vpop.permute.xlu0 %2335
      %2337 = vrot.lane.b32.xlu0 %v2270, 18
      %v2338 = vpop.permute.xlu0 %2337
      %2339 = vrot.lane.b32.xlu0 %v2271, 18
      %v2340 = vpop.permute.xlu0 %2339
      %2341 = vrot.lane.b32.xlu0 %v2272, 18
      %v2342 = vpop.permute.xlu0 %2341
      %2343 = vrot.lane.b32.xlu0 %v2273, 18
      %v2344 = vpop.permute.xlu0 %2343
      %2345 = vrot.lane.b32.xlu0 %v2274, 18
      %v2346 = vpop.permute.xlu0 %2345
      %2347 = vrot.lane.b32.xlu0 %v2275, 18
      %v2348 = vpop.permute.xlu0 %2347
      %2349 = vrot.lane.b32.xlu0 %v2276, 18
      %v2350 = vpop.permute.xlu0 %2349
      %2351 = vrot.lane.b32.xlu0 %v2277, 18
      %v2352 = vpop.permute.xlu0 %2351
      %2353 = vrot.lane.b32.xlu0 %v2278, 18
      %v2354 = vpop.permute.xlu0 %2353
      %2355 = vrot.lane.b32.xlu0 %v2279, 18
      %v2356 = vpop.permute.xlu0 %2355
      %2357 = vrot.lane.b32.xlu0 %v2280, 18
      %v2358 = vpop.permute.xlu0 %2357
      %2359 = vrot.lane.b32.xlu0 %v2281, 18
      %v2360 = vpop.permute.xlu0 %2359
      %2361 = vrot.lane.b32.xlu0 %v2282, 18
      %v2362 = vpop.permute.xlu0 %2361
      %2363 = vrot.lane.b32.xlu0 %v2283, 18
      %v2364 = vpop.permute.xlu0 %2363
      %2365 = vrot.lane.b32.xlu0 %v2284, 18
      %v2366 = vpop.permute.xlu0 %2365
      %2367 = vrot.lane.b32.xlu0 %v2285, 18
      %v2368 = vpop.permute.xlu0 %2367
      %2369 = vrot.lane.b32.xlu0 %v2286, 18
      %v2370 = vpop.permute.xlu0 %2369
      %2371 = vrot.lane.b32.xlu0 %v2287, 18
      %v2372 = vpop.permute.xlu0 %2371
      %2373 = vrot.lane.b32.xlu0 %v2288, 18
      %v2374 = vpop.permute.xlu0 %2373
      %2375 = vrot.lane.b32.xlu0 %v2289, 18
      %v2376 = vpop.permute.xlu0 %2375
      %2377 = vrot.lane.b32.xlu0 %v2290, 18
      %v2378 = vpop.permute.xlu0 %2377
      %2379 = vrot.lane.b32.xlu0 %v2291, 18
      %v2380 = vpop.permute.xlu0 %2379
      %2381 = vrot.lane.b32.xlu0 %v2292, 18
      %v2382 = vpop.permute.xlu0 %2381
      %2383 = vrot.lane.b32.xlu0 %v2293, 18
      %v2384 = vpop.permute.xlu0 %2383
      %2385 = vrot.lane.b32.xlu0 %v2294, 18
      %v2386 = vpop.permute.xlu0 %2385
      %2387 = vrot.lane.b32.xlu0 %v2295, 18
      %v2388 = vpop.permute.xlu0 %2387
      %2389 = vrot.lane.b32.xlu0 %v2296, 18
      %v2390 = vpop.permute.xlu0 %2389
      %2391 = vrot.lane.b32.xlu0 %v2297, 18
      %v2392 = vpop.permute.xlu0 %2391
      %2393 = vrot.lane.b32.xlu0 %v2298, 18
      %v2394 = vpop.permute.xlu0 %2393
      %vm2427 = vcmask 167056
      %2428 = vst.msk [vmem:[#allocation2] sm:$0xf] %vm2427, %v2332
      %2429 = vst.msk [vmem:[#allocation2 + $0x4] sm:$0xf] %vm2427, %v2334
      %2430 = vst.msk [vmem:[#allocation2 + $0x8] sm:$0xf] %vm2427, %v2336
      %2431 = vst.msk [vmem:[#allocation2 + $0xc] sm:$0xf] %vm2427, %v2338
      %2432 = vst.msk [vmem:[#allocation2 + $0x10] sm:$0xf] %vm2427, %v2340
      %2433 = vst.msk [vmem:[#allocation2 + $0x14] sm:$0xf] %vm2427, %v2342
      %2434 = vst.msk [vmem:[#allocation2 + $0x18] sm:$0xf] %vm2427, %v2344
      %2435 = vst.msk [vmem:[#allocation2 + $0x1c] sm:$0xf] %vm2427, %v2346
      %2436 = vst.msk [vmem:[#allocation2 + $0x20] sm:$0xf] %vm2427, %v2348
      %2437 = vst.msk [vmem:[#allocation2 + $0x24] sm:$0xf] %vm2427, %v2350
      %2438 = vst.msk [vmem:[#allocation2 + $0x28] sm:$0xf] %vm2427, %v2352
      %2439 = vst.msk [vmem:[#allocation2 + $0x2c] sm:$0xf] %vm2427, %v2354
      %2440 = vst.msk [vmem:[#allocation2 + $0x30] sm:$0xf] %vm2427, %v2356
      %2441 = vst.msk [vmem:[#allocation2 + $0x34] sm:$0xf] %vm2427, %v2358
      %2442 = vst.msk [vmem:[#allocation2 + $0x38] sm:$0xf] %vm2427, %v2360
      %2443 = vst.msk [vmem:[#allocation2 + $0x3c] sm:$0xf] %vm2427, %v2362
      %2444 = vst.msk [vmem:[#allocation2 + $0x40] sm:$0xf] %vm2427, %v2364
      %2445 = vst.msk [vmem:[#allocation2 + $0x44] sm:$0xf] %vm2427, %v2366
      %2446 = vst.msk [vmem:[#allocation2 + $0x48] sm:$0xf] %vm2427, %v2368
      %2447 = vst.msk [vmem:[#allocation2 + $0x4c] sm:$0xf] %vm2427, %v2370
      %2448 = vst.msk [vmem:[#allocation2 + $0x50] sm:$0xf] %vm2427, %v2372
      %2449 = vst.msk [vmem:[#allocation2 + $0x54] sm:$0xf] %vm2427, %v2374
      %2450 = vst.msk [vmem:[#allocation2 + $0x58] sm:$0xf] %vm2427, %v2376
      %2451 = vst.msk [vmem:[#allocation2 + $0x5c] sm:$0xf] %vm2427, %v2378
      %2452 = vst.msk [vmem:[#allocation2 + $0x60] sm:$0xf] %vm2427, %v2380
      %2453 = vst.msk [vmem:[#allocation2 + $0x64] sm:$0xf] %vm2427, %v2382
      %2454 = vst.msk [vmem:[#allocation2 + $0x68] sm:$0xf] %vm2427, %v2384
      %2455 = vst.msk [vmem:[#allocation2 + $0x6c] sm:$0xf] %vm2427, %v2386
      %2456 = vst.msk [vmem:[#allocation2 + $0x70] sm:$0xf] %vm2427, %v2388
      %2457 = vst.msk [vmem:[#allocation2 + $0x74] sm:$0xf] %vm2427, %v2390
      %2458 = vst.msk [vmem:[#allocation2 + $0x78] sm:$0xf] %vm2427, %v2392
      %2459 = vst.msk [vmem:[#allocation2 + $0x7c] sm:$0xf] %vm2427, %v2394
      %v2460 = vld [vmem:[%s2266] sm:$0xf]
      %v2461 = vld [vmem:[%s2266 + $0x4] sm:$0xf]
      %v2462 = vld [vmem:[%s2266 + $0x8] sm:$0x1]
      %v2463 = vld [vmem:[%s2266 + $0xc] sm:$0xf]
      %v2464 = vld [vmem:[%s2266 + $0x10] sm:$0xf]
      %v2465 = vld [vmem:[%s2266 + $0x14] sm:$0x1]
      %v2466 = vld [vmem:[%s2266 + $0x18] sm:$0xf]
      %v2467 = vld [vmem:[%s2266 + $0x1c] sm:$0xf]
      %v2468 = vld [vmem:[%s2266 + $0x20] sm:$0x1]
      %v2469 = vld [vmem:[%s2266 + $0x24] sm:$0xf]
      %v2470 = vld [vmem:[%s2266 + $0x28] sm:$0xf]
      %v2471 = vld [vmem:[%s2266 + $0x2c] sm:$0x1]
      %v2472 = vld [vmem:[%s2266 + $0x30] sm:$0xf]
      %v2473 = vld [vmem:[%s2266 + $0x34] sm:$0xf]
      %v2474 = vld [vmem:[%s2266 + $0x38] sm:$0x1]
      %v2475 = vld [vmem:[%s2266 + $0x3c] sm:$0xf]
      %v2476 = vld [vmem:[%s2266 + $0x40] sm:$0xf]
      %v2477 = vld [vmem:[%s2266 + $0x44] sm:$0x1]
      %v2478 = vld [vmem:[%s2266 + $0x48] sm:$0xf]
      %v2479 = vld [vmem:[%s2266 + $0x4c] sm:$0xf]
      %v2480 = vld [vmem:[%s2266 + $0x50] sm:$0x1]
      %v2481 = vld [vmem:[%s2266 + $0x54] sm:$0xf]
      %v2482 = vld [vmem:[%s2266 + $0x58] sm:$0xf]
      %v2483 = vld [vmem:[%s2266 + $0x5c] sm:$0x1]
      %v2484 = vld [vmem:[%s2266 + $0x60] sm:$0xf]
      %v2485 = vld [vmem:[%s2266 + $0x64] sm:$0xf]
      %v2486 = vld [vmem:[%s2266 + $0x68] sm:$0x1]
      %v2487 = vld [vmem:[%s2266 + $0x6c] sm:$0xf]
      %v2488 = vld [vmem:[%s2266 + $0x70] sm:$0xf]
      %v2489 = vld [vmem:[%s2266 + $0x74] sm:$0x1]
      %v2490 = vld [vmem:[%s2266 + $0x78] sm:$0xf]
      %v2491 = vld [vmem:[%s2266 + $0x7c] sm:$0xf]
      %v2492 = vld [vmem:[%s2266 + $0x80] sm:$0x1]
      %v2493 = vld [vmem:[%s2266 + $0x84] sm:$0xf]
      %v2494 = vld [vmem:[%s2266 + $0x88] sm:$0xf]
      %v2495 = vld [vmem:[%s2266 + $0x8c] sm:$0x1]
      %v2496 = vld [vmem:[%s2266 + $0x90] sm:$0xf]
      %v2497 = vld [vmem:[%s2266 + $0x94] sm:$0xf]
      %v2498 = vld [vmem:[%s2266 + $0x98] sm:$0x1]
      %v2499 = vld [vmem:[%s2266 + $0x9c] sm:$0xf]
      %v2500 = vld [vmem:[%s2266 + $0xa0] sm:$0xf]
      %v2501 = vld [vmem:[%s2266 + $0xa4] sm:$0x1]
      %v2502 = vld [vmem:[%s2266 + $0xa8] sm:$0xf]
      %v2503 = vld [vmem:[%s2266 + $0xac] sm:$0xf]
      %v2504 = vld [vmem:[%s2266 + $0xb0] sm:$0x1]
      %v2505 = vld [vmem:[%s2266 + $0xb4] sm:$0xf]
      %v2506 = vld [vmem:[%s2266 + $0xb8] sm:$0xf]
      %v2507 = vld [vmem:[%s2266 + $0xbc] sm:$0x1]
      %v2509 = vshrl.u32 %v2460, 16
      %v2511 = vrot.slane %v2509, 4
      %v2512 = vshll.u32 %v2460, 16
      %v2514 = vrot.slane %v2512, 5
      %v2515 = vor.u32 %v2511, %v2514
      %v2516 = vrot.slane %v2515, 4
      %v2518 = vshll.u32 %v2461, 16
      %v2520 = vrot.slane %v2518, 5
      %v2521 = vsel %vm314, %v2516, %v2520
      %v2522 = vshrl.u32 %v2461, 16
      %v2524 = vrot.slane %v2522, 4
      %v2525 = vor.u32 %v2524, %v2520
      %v2526 = vrot.slane %v2525, 4
      %v2528 = vshll.u32 %v2462, 16
      %v2530 = vrot.slane %v2528, 5
      %v2531 = vsel %vm314, %v2526, %v2530
      %v2533 = vshrl.u32 %v2463, 16
      %v2535 = vrot.slane %v2533, 4
      %v2536 = vshll.u32 %v2463, 16
      %v2538 = vrot.slane %v2536, 5
      %v2539 = vor.u32 %v2535, %v2538
      %v2540 = vrot.slane %v2539, 4
      %v2542 = vshll.u32 %v2464, 16
      %v2544 = vrot.slane %v2542, 5
      %v2545 = vsel %vm314, %v2540, %v2544
      %v2546 = vshrl.u32 %v2464, 16
      %v2548 = vrot.slane %v2546, 4
      %v2549 = vor.u32 %v2548, %v2544
      %v2550 = vrot.slane %v2549, 4
      %v2552 = vshll.u32 %v2465, 16
      %v2554 = vrot.slane %v2552, 5
      %v2555 = vsel %vm314, %v2550, %v2554
      %v2557 = vshrl.u32 %v2466, 16
      %v2559 = vrot.slane %v2557, 4
      %v2560 = vshll.u32 %v2466, 16
      %v2562 = vrot.slane %v2560, 5
      %v2563 = vor.u32 %v2559, %v2562
      %v2564 = vrot.slane %v2563, 4
      %v2566 = vshll.u32 %v2467, 16
      %v2568 = vrot.slane %v2566, 5
      %v2569 = vsel %vm314, %v2564, %v2568
      %v2570 = vshrl.u32 %v2467, 16
      %v2572 = vrot.slane %v2570, 4
      %v2573 = vor.u32 %v2572, %v2568
      %v2574 = vrot.slane %v2573, 4
      %v2576 = vshll.u32 %v2468, 16
      %v2578 = vrot.slane %v2576, 5
      %v2579 = vsel %vm314, %v2574, %v2578
      %v2581 = vshrl.u32 %v2469, 16
      %v2583 = vrot.slane %v2581, 4
      %v2584 = vshll.u32 %v2469, 16
      %v2586 = vrot.slane %v2584, 5
      %v2587 = vor.u32 %v2583, %v2586
      %v2588 = vrot.slane %v2587, 4
      %v2590 = vshll.u32 %v2470, 16
      %v2592 = vrot.slane %v2590, 5
      %v2593 = vsel %vm314, %v2588, %v2592
      %v2594 = vshrl.u32 %v2470, 16
      %v2596 = vrot.slane %v2594, 4
      %v2597 = vor.u32 %v2596, %v2592
      %v2598 = vrot.slane %v2597, 4
      %v2600 = vshll.u32 %v2471, 16
      %v2602 = vrot.slane %v2600, 5
      %v2603 = vsel %vm314, %v2598, %v2602
      %v2605 = vshrl.u32 %v2472, 16
      %v2607 = vrot.slane %v2605, 4
      %v2608 = vshll.u32 %v2472, 16
      %v2610 = vrot.slane %v2608, 5
      %v2611 = vor.u32 %v2607, %v2610
      %v2612 = vrot.slane %v2611, 4
      %v2614 = vshll.u32 %v2473, 16
      %v2616 = vrot.slane %v2614, 5
      %v2617 = vsel %vm314, %v2612, %v2616
      %v2618 = vshrl.u32 %v2473, 16
      %v2620 = vrot.slane %v2618, 4
      %v2621 = vor.u32 %v2620, %v2616
      %v2622 = vrot.slane %v2621, 4
      %v2624 = vshll.u32 %v2474, 16
      %v2626 = vrot.slane %v2624, 5
      %v2627 = vsel %vm314, %v2622, %v2626
      %v2629 = vshrl.u32 %v2475, 16
      %v2631 = vrot.slane %v2629, 4
      %v2632 = vshll.u32 %v2475, 16
      %v2634 = vrot.slane %v2632, 5
      %v2635 = vor.u32 %v2631, %v2634
      %v2636 = vrot.slane %v2635, 4
      %v2638 = vshll.u32 %v2476, 16
      %v2640 = vrot.slane %v2638, 5
      %v2641 = vsel %vm314, %v2636, %v2640
      %v2642 = vshrl.u32 %v2476, 16
      %v2644 = vrot.slane %v2642, 4
      %v2645 = vor.u32 %v2644, %v2640
      %v2646 = vrot.slane %v2645, 4
      %v2648 = vshll.u32 %v2477, 16
      %v2650 = vrot.slane %v2648, 5
      %v2651 = vsel %vm314, %v2646, %v2650
      %v2653 = vshrl.u32 %v2478, 16
      %v2655 = vrot.slane %v2653, 4
      %v2656 = vshll.u32 %v2478, 16
      %v2658 = vrot.slane %v2656, 5
      %v2659 = vor.u32 %v2655, %v2658
      %v2660 = vrot.slane %v2659, 4
      %v2662 = vshll.u32 %v2479, 16
      %v2664 = vrot.slane %v2662, 5
      %v2665 = vsel %vm314, %v2660, %v2664
      %v2666 = vshrl.u32 %v2479, 16
      %v2668 = vrot.slane %v2666, 4
      %v2669 = vor.u32 %v2668, %v2664
      %v2670 = vrot.slane %v2669, 4
      %v2672 = vshll.u32 %v2480, 16
      %v2674 = vrot.slane %v2672, 5
      %v2675 = vsel %vm314, %v2670, %v2674
      %v2677 = vshrl.u32 %v2481, 16
      %v2679 = vrot.slane %v2677, 4
      %v2680 = vshll.u32 %v2481, 16
      %v2682 = vrot.slane %v2680, 5
      %v2683 = vor.u32 %v2679, %v2682
      %v2684 = vrot.slane %v2683, 4
      %v2686 = vshll.u32 %v2482, 16
      %v2688 = vrot.slane %v2686, 5
      %v2689 = vsel %vm314, %v2684, %v2688
      %v2690 = vshrl.u32 %v2482, 16
      %v2692 = vrot.slane %v2690, 4
      %v2693 = vor.u32 %v2692, %v2688
      %v2694 = vrot.slane %v2693, 4
      %v2696 = vshll.u32 %v2483, 16
      %v2698 = vrot.slane %v2696, 5
      %v2699 = vsel %vm314, %v2694, %v2698
      %v2701 = vshrl.u32 %v2484, 16
      %v2703 = vrot.slane %v2701, 4
      %v2704 = vshll.u32 %v2484, 16
      %v2706 = vrot.slane %v2704, 5
      %v2707 = vor.u32 %v2703, %v2706
      %v2708 = vrot.slane %v2707, 4
      %v2710 = vshll.u32 %v2485, 16
      %v2712 = vrot.slane %v2710, 5
      %v2713 = vsel %vm314, %v2708, %v2712
      %v2714 = vshrl.u32 %v2485, 16
      %v2716 = vrot.slane %v2714, 4
      %v2717 = vor.u32 %v2716, %v2712
      %v2718 = vrot.slane %v2717, 4
      %v2720 = vshll.u32 %v2486, 16
      %v2722 = vrot.slane %v2720, 5
      %v2723 = vsel %vm314, %v2718, %v2722
      %v2725 = vshrl.u32 %v2487, 16
      %v2727 = vrot.slane %v2725, 4
      %v2728 = vshll.u32 %v2487, 16
      %v2730 = vrot.slane %v2728, 5
      %v2731 = vor.u32 %v2727, %v2730
      %v2732 = vrot.slane %v2731, 4
      %v2734 = vshll.u32 %v2488, 16
      %v2736 = vrot.slane %v2734, 5
      %v2737 = vsel %vm314, %v2732, %v2736
      %v2738 = vshrl.u32 %v2488, 16
      %v2740 = vrot.slane %v2738, 4
      %v2741 = vor.u32 %v2740, %v2736
      %v2742 = vrot.slane %v2741, 4
      %v2744 = vshll.u32 %v2489, 16
      %v2746 = vrot.slane %v2744, 5
      %v2747 = vsel %vm314, %v2742, %v2746
      %v2749 = vshrl.u32 %v2490, 16
      %v2751 = vrot.slane %v2749, 4
      %v2752 = vshll.u32 %v2490, 16
      %v2754 = vrot.slane %v2752, 5
      %v2755 = vor.u32 %v2751, %v2754
      %v2756 = vrot.slane %v2755, 4
      %v2758 = vshll.u32 %v2491, 16
      %v2760 = vrot.slane %v2758, 5
      %v2761 = vsel %vm314, %v2756, %v2760
      %v2762 = vshrl.u32 %v2491, 16
      %v2764 = vrot.slane %v2762, 4
      %v2765 = vor.u32 %v2764, %v2760
      %v2766 = vrot.slane %v2765, 4
      %v2768 = vshll.u32 %v2492, 16
      %v2770 = vrot.slane %v2768, 5
      %v2771 = vsel %vm314, %v2766, %v2770
      %v2773 = vshrl.u32 %v2493, 16
      %v2775 = vrot.slane %v2773, 4
      %v2776 = vshll.u32 %v2493, 16
      %v2778 = vrot.slane %v2776, 5
      %v2779 = vor.u32 %v2775, %v2778
      %v2780 = vrot.slane %v2779, 4
      %v2782 = vshll.u32 %v2494, 16
      %v2784 = vrot.slane %v2782, 5
      %v2785 = vsel %vm314, %v2780, %v2784
      %v2786 = vshrl.u32 %v2494, 16
      %v2788 = vrot.slane %v2786, 4
      %v2789 = vor.u32 %v2788, %v2784
      %v2790 = vrot.slane %v2789, 4
      %v2792 = vshll.u32 %v2495, 16
      %v2794 = vrot.slane %v2792, 5
      %v2795 = vsel %vm314, %v2790, %v2794
      %v2797 = vshrl.u32 %v2496, 16
      %v2799 = vrot.slane %v2797, 4
      %v2800 = vshll.u32 %v2496, 16
      %v2802 = vrot.slane %v2800, 5
      %v2803 = vor.u32 %v2799, %v2802
      %v2804 = vrot.slane %v2803, 4
      %v2806 = vshll.u32 %v2497, 16
      %v2808 = vrot.slane %v2806, 5
      %v2809 = vsel %vm314, %v2804, %v2808
      %v2810 = vshrl.u32 %v2497, 16
      %v2812 = vrot.slane %v2810, 4
      %v2813 = vor.u32 %v2812, %v2808
      %v2814 = vrot.slane %v2813, 4
      %v2816 = vshll.u32 %v2498, 16
      %v2818 = vrot.slane %v2816, 5
      %v2819 = vsel %vm314, %v2814, %v2818
      %v2821 = vshrl.u32 %v2499, 16
      %v2823 = vrot.slane %v2821, 4
      %v2824 = vshll.u32 %v2499, 16
      %v2826 = vrot.slane %v2824, 5
      %v2827 = vor.u32 %v2823, %v2826
      %v2828 = vrot.slane %v2827, 4
      %v2830 = vshll.u32 %v2500, 16
      %v2832 = vrot.slane %v2830, 5
      %v2833 = vsel %vm314, %v2828, %v2832
      %v2834 = vshrl.u32 %v2500, 16
      %v2836 = vrot.slane %v2834, 4
      %v2837 = vor.u32 %v2836, %v2832
      %v2838 = vrot.slane %v2837, 4
      %v2840 = vshll.u32 %v2501, 16
      %v2842 = vrot.slane %v2840, 5
      %v2843 = vsel %vm314, %v2838, %v2842
      %v2845 = vshrl.u32 %v2502, 16
      %v2847 = vrot.slane %v2845, 4
      %v2848 = vshll.u32 %v2502, 16
      %v2850 = vrot.slane %v2848, 5
      %v2851 = vor.u32 %v2847, %v2850
      %v2852 = vrot.slane %v2851, 4
      %v2854 = vshll.u32 %v2503, 16
      %v2856 = vrot.slane %v2854, 5
      %v2857 = vsel %vm314, %v2852, %v2856
      %v2858 = vshrl.u32 %v2503, 16
      %v2860 = vrot.slane %v2858, 4
      %v2861 = vor.u32 %v2860, %v2856
      %v2862 = vrot.slane %v2861, 4
      %v2864 = vshll.u32 %v2504, 16
      %v2866 = vrot.slane %v2864, 5
      %v2867 = vsel %vm314, %v2862, %v2866
      %v2869 = vshrl.u32 %v2505, 16
      %v2871 = vrot.slane %v2869, 4
      %v2872 = vshll.u32 %v2505, 16
      %v2874 = vrot.slane %v2872, 5
      %v2875 = vor.u32 %v2871, %v2874
      %v2876 = vrot.slane %v2875, 4
      %v2878 = vshll.u32 %v2506, 16
      %v2880 = vrot.slane %v2878, 5
      %v2881 = vsel %vm314, %v2876, %v2880
      %v2882 = vshrl.u32 %v2506, 16
      %v2884 = vrot.slane %v2882, 4
      %v2885 = vor.u32 %v2884, %v2880
      %v2886 = vrot.slane %v2885, 4
      %v2888 = vshll.u32 %v2507, 16
      %v2890 = vrot.slane %v2888, 5
      %v2891 = vsel %vm314, %v2886, %v2890
      %2892 = vrot.lane.b32.xlu0 %v2521, 21
      %v2893 = vpop.permute.xlu0 %2892
      %2894 = vrot.lane.b32.xlu0 %v2531, 21
      %v2895 = vpop.permute.xlu0 %2894
      %2896 = vrot.lane.b32.xlu0 %v2545, 21
      %v2897 = vpop.permute.xlu0 %2896
      %2898 = vrot.lane.b32.xlu0 %v2555, 21
      %v2899 = vpop.permute.xlu0 %2898
      %2900 = vrot.lane.b32.xlu0 %v2569, 21
      %v2901 = vpop.permute.xlu0 %2900
      %2902 = vrot.lane.b32.xlu0 %v2579, 21
      %v2903 = vpop.permute.xlu0 %2902
      %2904 = vrot.lane.b32.xlu0 %v2593, 21
      %v2905 = vpop.permute.xlu0 %2904
      %2906 = vrot.lane.b32.xlu0 %v2603, 21
      %v2907 = vpop.permute.xlu0 %2906
      %2908 = vrot.lane.b32.xlu0 %v2617, 21
      %v2909 = vpop.permute.xlu0 %2908
      %2910 = vrot.lane.b32.xlu0 %v2627, 21
      %v2911 = vpop.permute.xlu0 %2910
      %2912 = vrot.lane.b32.xlu0 %v2641, 21
      %v2913 = vpop.permute.xlu0 %2912
      %2914 = vrot.lane.b32.xlu0 %v2651, 21
      %v2915 = vpop.permute.xlu0 %2914
      %2916 = vrot.lane.b32.xlu0 %v2665, 21
      %v2917 = vpop.permute.xlu0 %2916
      %2918 = vrot.lane.b32.xlu0 %v2675, 21
      %v2919 = vpop.permute.xlu0 %2918
      %2920 = vrot.lane.b32.xlu0 %v2689, 21
      %v2921 = vpop.permute.xlu0 %2920
      %2922 = vrot.lane.b32.xlu0 %v2699, 21
      %v2923 = vpop.permute.xlu0 %2922
      %2924 = vrot.lane.b32.xlu0 %v2713, 21
      %v2925 = vpop.permute.xlu0 %2924
      %2926 = vrot.lane.b32.xlu0 %v2723, 21
      %v2927 = vpop.permute.xlu0 %2926
      %2928 = vrot.lane.b32.xlu0 %v2737, 21
      %v2929 = vpop.permute.xlu0 %2928
      %2930 = vrot.lane.b32.xlu0 %v2747, 21
      %v2931 = vpop.permute.xlu0 %2930
      %2932 = vrot.lane.b32.xlu0 %v2761, 21
      %v2933 = vpop.permute.xlu0 %2932
      %2934 = vrot.lane.b32.xlu0 %v2771, 21
      %v2935 = vpop.permute.xlu0 %2934
      %2936 = vrot.lane.b32.xlu0 %v2785, 21
      %v2937 = vpop.permute.xlu0 %2936
      %2938 = vrot.lane.b32.xlu0 %v2795, 21
      %v2939 = vpop.permute.xlu0 %2938
      %2940 = vrot.lane.b32.xlu0 %v2809, 21
      %v2941 = vpop.permute.xlu0 %2940
      %2942 = vrot.lane.b32.xlu0 %v2819, 21
      %v2943 = vpop.permute.xlu0 %2942
      %2944 = vrot.lane.b32.xlu0 %v2833, 21
      %v2945 = vpop.permute.xlu0 %2944
      %2946 = vrot.lane.b32.xlu0 %v2843, 21
      %v2947 = vpop.permute.xlu0 %2946
      %2948 = vrot.lane.b32.xlu0 %v2857, 21
      %v2949 = vpop.permute.xlu0 %2948
      %2950 = vrot.lane.b32.xlu0 %v2867, 21
      %v2951 = vpop.permute.xlu0 %2950
      %2952 = vrot.lane.b32.xlu0 %v2881, 21
      %v2953 = vpop.permute.xlu0 %2952
      %2954 = vrot.lane.b32.xlu0 %v2891, 21
      %v2955 = vpop.permute.xlu0 %2954
      %vm2988 = vcmask 191656
      %2989 = vst.msk [vmem:[#allocation2] sm:$0xf] %vm2988, %v2893
      %2990 = vst.msk [vmem:[#allocation2 + $0x4] sm:$0xf] %vm2988, %v2895
      %2991 = vst.msk [vmem:[#allocation2 + $0x8] sm:$0xf] %vm2988, %v2897
      %2992 = vst.msk [vmem:[#allocation2 + $0xc] sm:$0xf] %vm2988, %v2899
      %2993 = vst.msk [vmem:[#allocation2 + $0x10] sm:$0xf] %vm2988, %v2901
      %2994 = vst.msk [vmem:[#allocation2 + $0x14] sm:$0xf] %vm2988, %v2903
      %2995 = vst.msk [vmem:[#allocation2 + $0x18] sm:$0xf] %vm2988, %v2905
      %2996 = vst.msk [vmem:[#allocation2 + $0x1c] sm:$0xf] %vm2988, %v2907
      %2997 = vst.msk [vmem:[#allocation2 + $0x20] sm:$0xf] %vm2988, %v2909
      %2998 = vst.msk [vmem:[#allocation2 + $0x24] sm:$0xf] %vm2988, %v2911
      %2999 = vst.msk [vmem:[#allocation2 + $0x28] sm:$0xf] %vm2988, %v2913
      %3000 = vst.msk [vmem:[#allocation2 + $0x2c] sm:$0xf] %vm2988, %v2915
      %3001 = vst.msk [vmem:[#allocation2 + $0x30] sm:$0xf] %vm2988, %v2917
      %3002 = vst.msk [vmem:[#allocation2 + $0x34] sm:$0xf] %vm2988, %v2919
      %3003 = vst.msk [vmem:[#allocation2 + $0x38] sm:$0xf] %vm2988, %v2921
      %3004 = vst.msk [vmem:[#allocation2 + $0x3c] sm:$0xf] %vm2988, %v2923
      %3005 = vst.msk [vmem:[#allocation2 + $0x40] sm:$0xf] %vm2988, %v2925
      %3006 = vst.msk [vmem:[#allocation2 + $0x44] sm:$0xf] %vm2988, %v2927
      %3007 = vst.msk [vmem:[#allocation2 + $0x48] sm:$0xf] %vm2988, %v2929
      %3008 = vst.msk [vmem:[#allocation2 + $0x4c] sm:$0xf] %vm2988, %v2931
      %3009 = vst.msk [vmem:[#allocation2 + $0x50] sm:$0xf] %vm2988, %v2933
      %3010 = vst.msk [vmem:[#allocation2 + $0x54] sm:$0xf] %vm2988, %v2935
      %3011 = vst.msk [vmem:[#allocation2 + $0x58] sm:$0xf] %vm2988, %v2937
      %3012 = vst.msk [vmem:[#allocation2 + $0x5c] sm:$0xf] %vm2988, %v2939
      %3013 = vst.msk [vmem:[#allocation2 + $0x60] sm:$0xf] %vm2988, %v2941
      %3014 = vst.msk [vmem:[#allocation2 + $0x64] sm:$0xf] %vm2988, %v2943
      %3015 = vst.msk [vmem:[#allocation2 + $0x68] sm:$0xf] %vm2988, %v2945
      %3016 = vst.msk [vmem:[#allocation2 + $0x6c] sm:$0xf] %vm2988, %v2947
      %3017 = vst.msk [vmem:[#allocation2 + $0x70] sm:$0xf] %vm2988, %v2949
      %3018 = vst.msk [vmem:[#allocation2 + $0x74] sm:$0xf] %vm2988, %v2951
      %3019 = vst.msk [vmem:[#allocation2 + $0x78] sm:$0xf] %vm2988, %v2953
      %3020 = vst.msk [vmem:[#allocation2 + $0x7c] sm:$0xf] %vm2988, %v2955
      %v3021 = vld [vmem:[%s2266] sm:$0xe]
      %v3022 = vld [vmem:[%s2266 + $0x4] sm:$0xf]
      %v3023 = vld [vmem:[%s2266 + $0x8] sm:$0x1]
      %v3024 = vld [vmem:[%s2266 + $0xc] sm:$0xe]
      %v3025 = vld [vmem:[%s2266 + $0x10] sm:$0xf]
      %v3026 = vld [vmem:[%s2266 + $0x14] sm:$0x1]
      %v3027 = vld [vmem:[%s2266 + $0x18] sm:$0xe]
      %v3028 = vld [vmem:[%s2266 + $0x1c] sm:$0xf]
      %v3029 = vld [vmem:[%s2266 + $0x20] sm:$0x1]
      %v3030 = vld [vmem:[%s2266 + $0x24] sm:$0xe]
      %v3031 = vld [vmem:[%s2266 + $0x28] sm:$0xf]
      %v3032 = vld [vmem:[%s2266 + $0x2c] sm:$0x1]
      %v3033 = vld [vmem:[%s2266 + $0x30] sm:$0xe]
      %v3034 = vld [vmem:[%s2266 + $0x34] sm:$0xf]
      %v3035 = vld [vmem:[%s2266 + $0x38] sm:$0x1]
      %v3036 = vld [vmem:[%s2266 + $0x3c] sm:$0xe]
      %v3037 = vld [vmem:[%s2266 + $0x40] sm:$0xf]
      %v3038 = vld [vmem:[%s2266 + $0x44] sm:$0x1]
      %v3039 = vld [vmem:[%s2266 + $0x48] sm:$0xe]
      %v3040 = vld [vmem:[%s2266 + $0x4c] sm:$0xf]
      %v3041 = vld [vmem:[%s2266 + $0x50] sm:$0x1]
      %v3042 = vld [vmem:[%s2266 + $0x54] sm:$0xe]
      %v3043 = vld [vmem:[%s2266 + $0x58] sm:$0xf]
      %v3044 = vld [vmem:[%s2266 + $0x5c] sm:$0x1]
      %v3045 = vld [vmem:[%s2266 + $0x60] sm:$0xe]
      %v3046 = vld [vmem:[%s2266 + $0x64] sm:$0xf]
      %v3047 = vld [vmem:[%s2266 + $0x68] sm:$0x1]
      %v3048 = vld [vmem:[%s2266 + $0x6c] sm:$0xe]
      %v3049 = vld [vmem:[%s2266 + $0x70] sm:$0xf]
      %v3050 = vld [vmem:[%s2266 + $0x74] sm:$0x1]
      %v3051 = vld [vmem:[%s2266 + $0x78] sm:$0xe]
      %v3052 = vld [vmem:[%s2266 + $0x7c] sm:$0xf]
      %v3053 = vld [vmem:[%s2266 + $0x80] sm:$0x1]
      %v3054 = vld [vmem:[%s2266 + $0x84] sm:$0xe]
      %v3055 = vld [vmem:[%s2266 + $0x88] sm:$0xf]
      %v3056 = vld [vmem:[%s2266 + $0x8c] sm:$0x1]
      %v3057 = vld [vmem:[%s2266 + $0x90] sm:$0xe]
      %v3058 = vld [vmem:[%s2266 + $0x94] sm:$0xf]
      %v3059 = vld [vmem:[%s2266 + $0x98] sm:$0x1]
      %v3060 = vld [vmem:[%s2266 + $0x9c] sm:$0xe]
      %v3061 = vld [vmem:[%s2266 + $0xa0] sm:$0xf]
      %v3062 = vld [vmem:[%s2266 + $0xa4] sm:$0x1]
      %v3063 = vld [vmem:[%s2266 + $0xa8] sm:$0xe]
      %v3064 = vld [vmem:[%s2266 + $0xac] sm:$0xf]
      %v3065 = vld [vmem:[%s2266 + $0xb0] sm:$0x1]
      %v3066 = vld [vmem:[%s2266 + $0xb4] sm:$0xe]
      %v3067 = vld [vmem:[%s2266 + $0xb8] sm:$0xf]
      %v3068 = vld [vmem:[%s2266 + $0xbc] sm:$0x1]
      %v3117 = vrot.slane %v3021, 5
      %v3118 = vrot.slane %v3117, 4
      %v3119 = vrot.slane %v3022, 5
      %v3120 = vsel %vm926, %v3118, %v3119
      %v3121 = vrot.slane %v3119, 4
      %v3122 = vrot.slane %v3023, 5
      %v3123 = vsel %vm926, %v3121, %v3122
      %v3124 = vrot.slane %v3024, 5
      %v3125 = vrot.slane %v3124, 4
      %v3126 = vrot.slane %v3025, 5
      %v3127 = vsel %vm926, %v3125, %v3126
      %v3128 = vrot.slane %v3126, 4
      %v3129 = vrot.slane %v3026, 5
      %v3130 = vsel %vm926, %v3128, %v3129
      %v3131 = vrot.slane %v3027, 5
      %v3132 = vrot.slane %v3131, 4
      %v3133 = vrot.slane %v3028, 5
      %v3134 = vsel %vm926, %v3132, %v3133
      %v3135 = vrot.slane %v3133, 4
      %v3136 = vrot.slane %v3029, 5
      %v3137 = vsel %vm926, %v3135, %v3136
      %v3138 = vrot.slane %v3030, 5
      %v3139 = vrot.slane %v3138, 4
      %v3140 = vrot.slane %v3031, 5
      %v3141 = vsel %vm926, %v3139, %v3140
      %v3142 = vrot.slane %v3140, 4
      %v3143 = vrot.slane %v3032, 5
      %v3144 = vsel %vm926, %v3142, %v3143
      %v3145 = vrot.slane %v3033, 5
      %v3146 = vrot.slane %v3145, 4
      %v3147 = vrot.slane %v3034, 5
      %v3148 = vsel %vm926, %v3146, %v3147
      %v3149 = vrot.slane %v3147, 4
      %v3150 = vrot.slane %v3035, 5
      %v3151 = vsel %vm926, %v3149, %v3150
      %v3152 = vrot.slane %v3036, 5
      %v3153 = vrot.slane %v3152, 4
      %v3154 = vrot.slane %v3037, 5
      %v3155 = vsel %vm926, %v3153, %v3154
      %v3156 = vrot.slane %v3154, 4
      %v3157 = vrot.slane %v3038, 5
      %v3158 = vsel %vm926, %v3156, %v3157
      %v3159 = vrot.slane %v3039, 5
      %v3160 = vrot.slane %v3159, 4
      %v3161 = vrot.slane %v3040, 5
      %v3162 = vsel %vm926, %v3160, %v3161
      %v3163 = vrot.slane %v3161, 4
      %v3164 = vrot.slane %v3041, 5
      %v3165 = vsel %vm926, %v3163, %v3164
      %v3166 = vrot.slane %v3042, 5
      %v3167 = vrot.slane %v3166, 4
      %v3168 = vrot.slane %v3043, 5
      %v3169 = vsel %vm926, %v3167, %v3168
      %v3170 = vrot.slane %v3168, 4
      %v3171 = vrot.slane %v3044, 5
      %v3172 = vsel %vm926, %v3170, %v3171
      %v3173 = vrot.slane %v3045, 5
      %v3174 = vrot.slane %v3173, 4
      %v3175 = vrot.slane %v3046, 5
      %v3176 = vsel %vm926, %v3174, %v3175
      %v3177 = vrot.slane %v3175, 4
      %v3178 = vrot.slane %v3047, 5
      %v3179 = vsel %vm926, %v3177, %v3178
      %v3180 = vrot.slane %v3048, 5
      %v3181 = vrot.slane %v3180, 4
      %v3182 = vrot.slane %v3049, 5
      %v3183 = vsel %vm926, %v3181, %v3182
      %v3184 = vrot.slane %v3182, 4
      %v3185 = vrot.slane %v3050, 5
      %v3186 = vsel %vm926, %v3184, %v3185
      %v3187 = vrot.slane %v3051, 5
      %v3188 = vrot.slane %v3187, 4
      %v3189 = vrot.slane %v3052, 5
      %v3190 = vsel %vm926, %v3188, %v3189
      %v3191 = vrot.slane %v3189, 4
      %v3192 = vrot.slane %v3053, 5
      %v3193 = vsel %vm926, %v3191, %v3192
      %v3194 = vrot.slane %v3054, 5
      %v3195 = vrot.slane %v3194, 4
      %v3196 = vrot.slane %v3055, 5
      %v3197 = vsel %vm926, %v3195, %v3196
      %v3198 = vrot.slane %v3196, 4
      %v3199 = vrot.slane %v3056, 5
      %v3200 = vsel %vm926, %v3198, %v3199
      %v3201 = vrot.slane %v3057, 5
      %v3202 = vrot.slane %v3201, 4
      %v3203 = vrot.slane %v3058, 5
      %v3204 = vsel %vm926, %v3202, %v3203
      %v3205 = vrot.slane %v3203, 4
      %v3206 = vrot.slane %v3059, 5
      %v3207 = vsel %vm926, %v3205, %v3206
      %v3208 = vrot.slane %v3060, 5
      %v3209 = vrot.slane %v3208, 4
      %v3210 = vrot.slane %v3061, 5
      %v3211 = vsel %vm926, %v3209, %v3210
      %v3212 = vrot.slane %v3210, 4
      %v3213 = vrot.slane %v3062, 5
      %v3214 = vsel %vm926, %v3212, %v3213
      %v3215 = vrot.slane %v3063, 5
      %v3216 = vrot.slane %v3215, 4
      %v3217 = vrot.slane %v3064, 5
      %v3218 = vsel %vm926, %v3216, %v3217
      %v3219 = vrot.slane %v3217, 4
      %v3220 = vrot.slane %v3065, 5
      %v3221 = vsel %vm926, %v3219, %v3220
      %v3222 = vrot.slane %v3066, 5
      %v3223 = vrot.slane %v3222, 4
      %v3224 = vrot.slane %v3067, 5
      %v3225 = vsel %vm926, %v3223, %v3224
      %v3226 = vrot.slane %v3224, 4
      %v3227 = vrot.slane %v3068, 5
      %v3228 = vsel %vm926, %v3226, %v3227
      %3229 = vrot.lane.b32.xlu0 %v3120, 24
      %v3230 = vpop.permute.xlu0 %3229
      %3231 = vrot.lane.b32.xlu0 %v3123, 24
      %v3232 = vpop.permute.xlu0 %3231
      %3233 = vrot.lane.b32.xlu0 %v3127, 24
      %v3234 = vpop.permute.xlu0 %3233
      %3235 = vrot.lane.b32.xlu0 %v3130, 24
      %v3236 = vpop.permute.xlu0 %3235
      %3237 = vrot.lane.b32.xlu0 %v3134, 24
      %v3238 = vpop.permute.xlu0 %3237
      %3239 = vrot.lane.b32.xlu0 %v3137, 24
      %v3240 = vpop.permute.xlu0 %3239
      %3241 = vrot.lane.b32.xlu0 %v3141, 24
      %v3242 = vpop.permute.xlu0 %3241
      %3243 = vrot.lane.b32.xlu0 %v3144, 24
      %v3244 = vpop.permute.xlu0 %3243
      %3245 = vrot.lane.b32.xlu0 %v3148, 24
      %v3246 = vpop.permute.xlu0 %3245
      %3247 = vrot.lane.b32.xlu0 %v3151, 24
      %v3248 = vpop.permute.xlu0 %3247
      %3249 = vrot.lane.b32.xlu0 %v3155, 24
      %v3250 = vpop.permute.xlu0 %3249
      %3251 = vrot.lane.b32.xlu0 %v3158, 24
      %v3252 = vpop.permute.xlu0 %3251
      %3253 = vrot.lane.b32.xlu0 %v3162, 24
      %v3254 = vpop.permute.xlu0 %3253
      %3255 = vrot.lane.b32.xlu0 %v3165, 24
      %v3256 = vpop.permute.xlu0 %3255
      %3257 = vrot.lane.b32.xlu0 %v3169, 24
      %v3258 = vpop.permute.xlu0 %3257
      %3259 = vrot.lane.b32.xlu0 %v3172, 24
      %v3260 = vpop.permute.xlu0 %3259
      %3261 = vrot.lane.b32.xlu0 %v3176, 24
      %v3262 = vpop.permute.xlu0 %3261
      %3263 = vrot.lane.b32.xlu0 %v3179, 24
      %v3264 = vpop.permute.xlu0 %3263
      %3265 = vrot.lane.b32.xlu0 %v3183, 24
      %v3266 = vpop.permute.xlu0 %3265
      %3267 = vrot.lane.b32.xlu0 %v3186, 24
      %v3268 = vpop.permute.xlu0 %3267
      %3269 = vrot.lane.b32.xlu0 %v3190, 24
      %v3270 = vpop.permute.xlu0 %3269
      %3271 = vrot.lane.b32.xlu0 %v3193, 24
      %v3272 = vpop.permute.xlu0 %3271
      %3273 = vrot.lane.b32.xlu0 %v3197, 24
      %v3274 = vpop.permute.xlu0 %3273
      %3275 = vrot.lane.b32.xlu0 %v3200, 24
      %v3276 = vpop.permute.xlu0 %3275
      %3277 = vrot.lane.b32.xlu0 %v3204, 24
      %v3278 = vpop.permute.xlu0 %3277
      %3279 = vrot.lane.b32.xlu0 %v3207, 24
      %v3280 = vpop.permute.xlu0 %3279
      %3281 = vrot.lane.b32.xlu0 %v3211, 24
      %v3282 = vpop.permute.xlu0 %3281
      %3283 = vrot.lane.b32.xlu0 %v3214, 24
      %v3284 = vpop.permute.xlu0 %3283
      %3285 = vrot.lane.b32.xlu0 %v3218, 24
      %v3286 = vpop.permute.xlu0 %3285
      %3287 = vrot.lane.b32.xlu0 %v3221, 24
      %v3288 = vpop.permute.xlu0 %3287
      %3289 = vrot.lane.b32.xlu0 %v3225, 24
      %v3290 = vpop.permute.xlu0 %3289
      %3291 = vrot.lane.b32.xlu0 %v3228, 24
      %v3292 = vpop.permute.xlu0 %3291
      %vm3325 = vcmask 216256
      %3326 = vst.msk [vmem:[#allocation2] sm:$0xf] %vm3325, %v3230
      %3327 = vst.msk [vmem:[#allocation2 + $0x4] sm:$0xf] %vm3325, %v3232
      %3328 = vst.msk [vmem:[#allocation2 + $0x8] sm:$0xf] %vm3325, %v3234
      %3329 = vst.msk [vmem:[#allocation2 + $0xc] sm:$0xf] %vm3325, %v3236
      %3330 = vst.msk [vmem:[#allocation2 + $0x10] sm:$0xf] %vm3325, %v3238
      %3331 = vst.msk [vmem:[#allocation2 + $0x14] sm:$0xf] %vm3325, %v3240
      %3332 = vst.msk [vmem:[#allocation2 + $0x18] sm:$0xf] %vm3325, %v3242
      %3333 = vst.msk [vmem:[#allocation2 + $0x1c] sm:$0xf] %vm3325, %v3244
      %3334 = vst.msk [vmem:[#allocation2 + $0x20] sm:$0xf] %vm3325, %v3246
      %3335 = vst.msk [vmem:[#allocation2 + $0x24] sm:$0xf] %vm3325, %v3248
      %3336 = vst.msk [vmem:[#allocation2 + $0x28] sm:$0xf] %vm3325, %v3250
      %3337 = vst.msk [vmem:[#allocation2 + $0x2c] sm:$0xf] %vm3325, %v3252
      %3338 = vst.msk [vmem:[#allocation2 + $0x30] sm:$0xf] %vm3325, %v3254
      %3339 = vst.msk [vmem:[#allocation2 + $0x34] sm:$0xf] %vm3325, %v3256
      %3340 = vst.msk [vmem:[#allocation2 + $0x38] sm:$0xf] %vm3325, %v3258
      %3341 = vst.msk [vmem:[#allocation2 + $0x3c] sm:$0xf] %vm3325, %v3260
      %3342 = vst.msk [vmem:[#allocation2 + $0x40] sm:$0xf] %vm3325, %v3262
      %3343 = vst.msk [vmem:[#allocation2 + $0x44] sm:$0xf] %vm3325, %v3264
      %3344 = vst.msk [vmem:[#allocation2 + $0x48] sm:$0xf] %vm3325, %v3266
      %3345 = vst.msk [vmem:[#allocation2 + $0x4c] sm:$0xf] %vm3325, %v3268
      %3346 = vst.msk [vmem:[#allocation2 + $0x50] sm:$0xf] %vm3325, %v3270
      %3347 = vst.msk [vmem:[#allocation2 + $0x54] sm:$0xf] %vm3325, %v3272
      %3348 = vst.msk [vmem:[#allocation2 + $0x58] sm:$0xf] %vm3325, %v3274
      %3349 = vst.msk [vmem:[#allocation2 + $0x5c] sm:$0xf] %vm3325, %v3276
      %3350 = vst.msk [vmem:[#allocation2 + $0x60] sm:$0xf] %vm3325, %v3278
      %3351 = vst.msk [vmem:[#allocation2 + $0x64] sm:$0xf] %vm3325, %v3280
      %3352 = vst.msk [vmem:[#allocation2 + $0x68] sm:$0xf] %vm3325, %v3282
      %3353 = vst.msk [vmem:[#allocation2 + $0x6c] sm:$0xf] %vm3325, %v3284
      %3354 = vst.msk [vmem:[#allocation2 + $0x70] sm:$0xf] %vm3325, %v3286
      %3355 = vst.msk [vmem:[#allocation2 + $0x74] sm:$0xf] %vm3325, %v3288
      %3356 = vst.msk [vmem:[#allocation2 + $0x78] sm:$0xf] %vm3325, %v3290
      %3357 = vst.msk [vmem:[#allocation2 + $0x7c] sm:$0xf] %vm3325, %v3292
      %v3358 = vld [vmem:[#allocation2] sm:$0xf]
      %v3359 = vld [vmem:[#allocation2 + $0x4] sm:$0xf]
      %v3360 = vld [vmem:[#allocation2 + $0x8] sm:$0xf]
      %v3361 = vld [vmem:[#allocation2 + $0xc] sm:$0xf]
      %v3362 = vld [vmem:[#allocation2 + $0x10] sm:$0xf]
      %v3363 = vld [vmem:[#allocation2 + $0x14] sm:$0xf]
      %v3364 = vld [vmem:[#allocation2 + $0x18] sm:$0xf]
      %v3365 = vld [vmem:[#allocation2 + $0x1c] sm:$0xf]
      %v3366 = vld [vmem:[#allocation2 + $0x20] sm:$0xf]
      %v3367 = vld [vmem:[#allocation2 + $0x24] sm:$0xf]
      %v3368 = vld [vmem:[#allocation2 + $0x28] sm:$0xf]
      %v3369 = vld [vmem:[#allocation2 + $0x2c] sm:$0xf]
      %v3370 = vld [vmem:[#allocation2 + $0x30] sm:$0xf]
      %v3371 = vld [vmem:[#allocation2 + $0x34] sm:$0xf]
      %v3372 = vld [vmem:[#allocation2 + $0x38] sm:$0xf]
      %v3373 = vld [vmem:[#allocation2 + $0x3c] sm:$0xf]
      %v3374 = vld [vmem:[#allocation2 + $0x40] sm:$0xf]
      %v3375 = vld [vmem:[#allocation2 + $0x44] sm:$0xf]
      %v3376 = vld [vmem:[#allocation2 + $0x48] sm:$0xf]
      %v3377 = vld [vmem:[#allocation2 + $0x4c] sm:$0xf]
      %v3378 = vld [vmem:[#allocation2 + $0x50] sm:$0xf]
      %v3379 = vld [vmem:[#allocation2 + $0x54] sm:$0xf]
      %v3380 = vld [vmem:[#allocation2 + $0x58] sm:$0xf]
      %v3381 = vld [vmem:[#allocation2 + $0x5c] sm:$0xf]
      %v3382 = vld [vmem:[#allocation2 + $0x60] sm:$0xf]
      %v3383 = vld [vmem:[#allocation2 + $0x64] sm:$0xf]
      %v3384 = vld [vmem:[#allocation2 + $0x68] sm:$0xf]
      %v3385 = vld [vmem:[#allocation2 + $0x6c] sm:$0xf]
      %v3386 = vld [vmem:[#allocation2 + $0x70] sm:$0xf]
      %v3387 = vld [vmem:[#allocation2 + $0x74] sm:$0xf]
      %v3388 = vld [vmem:[#allocation2 + $0x78] sm:$0xf]
      %v3389 = vld [vmem:[#allocation2 + $0x7c] sm:$0xf]
      %v3390 = vld [vmem:[%s1] sm:$0xf]
      %v3391 = vld [vmem:[%s1 + $0x4] sm:$0xf]
      %v3392 = vld [vmem:[%s1 + $0x8] sm:$0xf]
      %v3393 = vld [vmem:[%s1 + $0xc] sm:$0x3]
      %v3394 = vld [vmem:[%s2] sm:$0x1]
      %v3396 = vperm.slane %v3394, 0
      %v3430 = vunpack.c.l.b16 %v3358
      %v3431 = vunpack.c.l.b16 %v3359
      %v3432 = vunpack.c.l.b16 %v3360
      %v3433 = vunpack.c.l.b16 %v3361
      %v3434 = vunpack.c.l.b16 %v3362
      %v3435 = vunpack.c.l.b16 %v3363
      %v3436 = vunpack.c.l.b16 %v3364
      %v3437 = vunpack.c.l.b16 %v3365
      %v3438 = vunpack.c.l.b16 %v3366
      %v3439 = vunpack.c.l.b16 %v3367
      %v3440 = vunpack.c.l.b16 %v3368
      %v3441 = vunpack.c.l.b16 %v3369
      %v3442 = vunpack.c.l.b16 %v3370
      %v3443 = vunpack.c.l.b16 %v3371
      %v3444 = vunpack.c.l.b16 %v3372
      %v3445 = vunpack.c.l.b16 %v3373
      %v3446 = vunpack.c.l.b16 %v3374
      %v3447 = vunpack.c.l.b16 %v3375
      %v3448 = vunpack.c.l.b16 %v3376
      %v3449 = vunpack.c.l.b16 %v3377
      %v3450 = vunpack.c.l.b16 %v3378
      %v3451 = vunpack.c.l.b16 %v3379
      %v3452 = vunpack.c.l.b16 %v3380
      %v3453 = vunpack.c.l.b16 %v3381
      %v3454 = vunpack.c.l.b16 %v3382
      %v3455 = vunpack.c.l.b16 %v3383
      %v3456 = vunpack.c.l.b16 %v3384
      %v3457 = vunpack.c.l.b16 %v3385
      %v3458 = vunpack.c.l.b16 %v3386
      %v3459 = vunpack.c.l.b16 %v3387
      %v3460 = vunpack.c.l.b16 %v3388
      %v3461 = vunpack.c.l.b16 %v3389
      %v3462 = vpack.c.b16 %v3431, %v3430
      %v3463 = vpack.c.b16 %v3433, %v3432
      %v3464 = vpack.c.b16 %v3435, %v3434
      %v3465 = vpack.c.b16 %v3437, %v3436
      %v3466 = vpack.c.b16 %v3439, %v3438
      %v3467 = vpack.c.b16 %v3441, %v3440
      %v3468 = vpack.c.b16 %v3443, %v3442
      %v3469 = vpack.c.b16 %v3445, %v3444
      %v3470 = vpack.c.b16 %v3447, %v3446
      %v3471 = vpack.c.b16 %v3449, %v3448
      %v3472 = vpack.c.b16 %v3451, %v3450
      %v3473 = vpack.c.b16 %v3453, %v3452
      %v3474 = vpack.c.b16 %v3455, %v3454
      %v3475 = vpack.c.b16 %v3457, %v3456
      %v3476 = vpack.c.b16 %v3459, %v3458
      %v3477 = vpack.c.b16 %v3461, %v3460
      %v3482 = vunpack.c.l.b16 %v3390
      %v3483 = vunpack.c.l.b16 %v3391
      %v3484 = vunpack.c.l.b16 %v3392
      %v3485 = vunpack.c.l.b16 %v3393
      %v3486 = vpack.c.b16 %v3483, %v3482
      %v3487 = vpack.c.b16 %v3485, %v3484
      %vm3489 = vcmask 220160
      %v3491 = vsel %vm3489, %v3462, 0
      %v3494 = vsel %vm3489, %v3463, 0
      %v3497 = vsel %vm3489, %v3464, 0
      %v3500 = vsel %vm3489, %v3465, 0
      %v3503 = vsel %vm3489, %v3466, 0
      %v3506 = vsel %vm3489, %v3467, 0
      %v3509 = vsel %vm3489, %v3468, 0
      %v3512 = vsel %vm3489, %v3469, 0
      %v3515 = vsel %vm3489, %v3470, 0
      %v3518 = vsel %vm3489, %v3471, 0
      %v3521 = vsel %vm3489, %v3472, 0
      %v3524 = vsel %vm3489, %v3473, 0
      %v3527 = vsel %vm3489, %v3474, 0
      %v3530 = vsel %vm3489, %v3475, 0
      %v3533 = vsel %vm3489, %v3476, 0
      %v3536 = vsel %vm3489, %v3477, 0
      %vm3538 = vcmask 1044480
      %vm3539 = vcmask 1045504
      %v3540 = vsel %vm3538, 4294967295, 65535
      %v3541 = vsel %vm3539, %v3540, 0
      %v3543 = vand.u32 %v3487, %v3541
      %3545 = vmatpush.bf16.msra.mxu0 0
      %3546 = vmatpush.bf16.msra.mxu0 0
      %3547 = vmatpush.bf16.msra.mxu0 0
      %3548 = vmatpush.bf16.msra.mxu0 0
      %3549 = vmatpush.bf16.msra.mxu0 0
      %3550 = vmatpush.bf16.msra.mxu0 0
      %3551 = vmatpush.bf16.msra.mxu0 %v3543
      %3552 = vmatpush.bf16.msra.mxu0 %v3486
      %3553 = vmatmul.bf16.gmra.mxu0 %v3491
      %v3554 = vpop.f32.mrf.mxu0
      %v3555 = vadd.f32 %v3396, %v3554
      %v3556 = vpop.f32.mrf.mxu0
      %v3557 = vadd.f32 %v3396, %v3556
      %3558 = vmatmul.bf16.gmra.mxu0 %v3494
      %v3559 = vpop.f32.mrf.mxu0
      %v3560 = vadd.f32 %v3396, %v3559
      %v3561 = vpop.f32.mrf.mxu0
      %v3562 = vadd.f32 %v3396, %v3561
      %3563 = vmatmul.bf16.gmra.mxu0 %v3497
      %v3564 = vpop.f32.mrf.mxu0
      %v3565 = vadd.f32 %v3396, %v3564
      %v3566 = vpop.f32.mrf.mxu0
      %v3567 = vadd.f32 %v3396, %v3566
      %3568 = vmatmul.bf16.gmra.mxu0 %v3500
      %v3569 = vpop.f32.mrf.mxu0
      %v3570 = vadd.f32 %v3396, %v3569
      %v3571 = vpop.f32.mrf.mxu0
      %v3572 = vadd.f32 %v3396, %v3571
      %3573 = vmatmul.bf16.gmra.mxu0 %v3503
      %v3574 = vpop.f32.mrf.mxu0
      %v3575 = vadd.f32 %v3396, %v3574
      %v3576 = vpop.f32.mrf.mxu0
      %v3577 = vadd.f32 %v3396, %v3576
      %3578 = vmatmul.bf16.gmra.mxu0 %v3506
      %v3579 = vpop.f32.mrf.mxu0
      %v3580 = vadd.f32 %v3396, %v3579
      %v3581 = vpop.f32.mrf.mxu0
      %v3582 = vadd.f32 %v3396, %v3581
      %3583 = vmatmul.bf16.gmra.mxu0 %v3509
      %v3584 = vpop.f32.mrf.mxu0
      %v3585 = vadd.f32 %v3396, %v3584
      %v3586 = vpop.f32.mrf.mxu0
      %v3587 = vadd.f32 %v3396, %v3586
      %3588 = vmatmul.bf16.gmra.mxu0 %v3512
      %v3589 = vpop.f32.mrf.mxu0
      %v3590 = vadd.f32 %v3396, %v3589
      %v3591 = vpop.f32.mrf.mxu0
      %v3592 = vadd.f32 %v3396, %v3591
      %3593 = vmatmul.bf16.gmra.mxu0 %v3515
      %v3594 = vpop.f32.mrf.mxu0
      %v3595 = vadd.f32 %v3396, %v3594
      %v3596 = vpop.f32.mrf.mxu0
      %v3597 = vadd.f32 %v3396, %v3596
      %3598 = vmatmul.bf16.gmra.mxu0 %v3518
      %v3599 = vpop.f32.mrf.mxu0
      %v3600 = vadd.f32 %v3396, %v3599
      %v3601 = vpop.f32.mrf.mxu0
      %v3602 = vadd.f32 %v3396, %v3601
      %3603 = vmatmul.bf16.gmra.mxu0 %v3521
      %v3604 = vpop.f32.mrf.mxu0
      %v3605 = vadd.f32 %v3396, %v3604
      %v3606 = vpop.f32.mrf.mxu0
      %v3607 = vadd.f32 %v3396, %v3606
      %3608 = vmatmul.bf16.gmra.mxu0 %v3524
      %v3609 = vpop.f32.mrf.mxu0
      %v3610 = vadd.f32 %v3396, %v3609
      %v3611 = vpop.f32.mrf.mxu0
      %v3612 = vadd.f32 %v3396, %v3611
      %3613 = vmatmul.bf16.gmra.mxu0 %v3527
      %v3614 = vpop.f32.mrf.mxu0
      %v3615 = vadd.f32 %v3396, %v3614
      %v3616 = vpop.f32.mrf.mxu0
      %v3617 = vadd.f32 %v3396, %v3616
      %3618 = vmatmul.bf16.gmra.mxu0 %v3530
      %v3619 = vpop.f32.mrf.mxu0
      %v3620 = vadd.f32 %v3396, %v3619
      %v3621 = vpop.f32.mrf.mxu0
      %v3622 = vadd.f32 %v3396, %v3621
      %3623 = vmatmul.bf16.gmra.mxu0 %v3533
      %v3624 = vpop.f32.mrf.mxu0
      %v3625 = vadd.f32 %v3396, %v3624
      %v3626 = vpop.f32.mrf.mxu0
      %v3627 = vadd.f32 %v3396, %v3626
      %3628 = vmatmul.bf16.gmra.mxu0 %v3536
      %v3629 = vpop.f32.mrf.mxu0
      %v3630 = vadd.f32 %v3396, %v3629
      %v3631 = vpop.f32.mrf.mxu0
      %v3632 = vadd.f32 %v3396, %v3631
      %3633 = vdwg.mxu0
      %v3634 = vmax.f32 %v3555, 0.0
      %v3635 = vmax.f32 %v3557, 0.0
      %v3636 = vmax.f32 %v3560, 0.0
      %v3637 = vmax.f32 %v3562, 0.0
      %v3638 = vmax.f32 %v3565, 0.0
      %v3639 = vmax.f32 %v3567, 0.0
      %v3640 = vmax.f32 %v3570, 0.0
      %v3641 = vmax.f32 %v3572, 0.0
      %v3642 = vmax.f32 %v3575, 0.0
      %v3643 = vmax.f32 %v3577, 0.0
      %v3644 = vmax.f32 %v3580, 0.0
      %v3645 = vmax.f32 %v3582, 0.0
      %v3646 = vmax.f32 %v3585, 0.0
      %v3647 = vmax.f32 %v3587, 0.0
      %v3648 = vmax.f32 %v3590, 0.0
      %v3649 = vmax.f32 %v3592, 0.0
      %v3650 = vmax.f32 %v3595, 0.0
      %v3651 = vmax.f32 %v3597, 0.0
      %v3652 = vmax.f32 %v3600, 0.0
      %v3653 = vmax.f32 %v3602, 0.0
      %v3654 = vmax.f32 %v3605, 0.0
      %v3655 = vmax.f32 %v3607, 0.0
      %v3656 = vmax.f32 %v3610, 0.0
      %v3657 = vmax.f32 %v3612, 0.0
      %v3658 = vmax.f32 %v3615, 0.0
      %v3659 = vmax.f32 %v3617, 0.0
      %v3660 = vmax.f32 %v3620, 0.0
      %v3661 = vmax.f32 %v3622, 0.0
      %v3662 = vmax.f32 %v3625, 0.0
      %v3663 = vmax.f32 %v3627, 0.0
      %v3664 = vmax.f32 %v3630, 0.0
      %v3665 = vmax.f32 %v3632, 0.0
      %v3698 = vrot.slane %v3634, 2
      %v3699 = vrot.slane %v3634, 4
      %v3700 = vrot.slane %v3634, 6
      %v3701 = vrot.slane %v3635, 2
      %v3702 = vrot.slane %v3635, 4
      %v3703 = vrot.slane %v3635, 6
      %v3704 = vrot.slane %v3636, 2
      %v3705 = vrot.slane %v3636, 4
      %v3706 = vrot.slane %v3636, 6
      %v3707 = vrot.slane %v3637, 2
      %v3708 = vrot.slane %v3637, 4
      %v3709 = vrot.slane %v3637, 6
      %v3710 = vrot.slane %v3638, 2
      %v3711 = vrot.slane %v3638, 4
      %v3712 = vrot.slane %v3638, 6
      %v3713 = vrot.slane %v3639, 2
      %v3714 = vrot.slane %v3639, 4
      %v3715 = vrot.slane %v3639, 6
      %v3716 = vrot.slane %v3640, 2
      %v3717 = vrot.slane %v3640, 4
      %v3718 = vrot.slane %v3640, 6
      %v3719 = vrot.slane %v3641, 2
      %v3720 = vrot.slane %v3641, 4
      %v3721 = vrot.slane %v3641, 6
      %v3722 = vrot.slane %v3642, 2
      %v3723 = vrot.slane %v3642, 4
      %v3724 = vrot.slane %v3642, 6
      %v3725 = vrot.slane %v3643, 2
      %v3726 = vrot.slane %v3643, 4
      %v3727 = vrot.slane %v3643, 6
      %v3728 = vrot.slane %v3644, 2
      %v3729 = vrot.slane %v3644, 4
      %v3730 = vrot.slane %v3644, 6
      %v3731 = vrot.slane %v3645, 2
      %v3732 = vrot.slane %v3645, 4
      %v3733 = vrot.slane %v3645, 6
      %v3734 = vrot.slane %v3646, 2
      %v3735 = vrot.slane %v3646, 4
      %v3736 = vrot.slane %v3646, 6
      %v3737 = vrot.slane %v3647, 2
      %v3738 = vrot.slane %v3647, 4
      %v3739 = vrot.slane %v3647, 6
      %v3740 = vrot.slane %v3648, 2
      %v3741 = vrot.slane %v3648, 4
      %v3742 = vrot.slane %v3648, 6
      %v3743 = vrot.slane %v3649, 2
      %v3744 = vrot.slane %v3649, 4
      %v3745 = vrot.slane %v3649, 6
      %v3746 = vrot.slane %v3650, 2
      %v3747 = vrot.slane %v3650, 4
      %v3748 = vrot.slane %v3650, 6
      %v3749 = vrot.slane %v3651, 2
      %v3750 = vrot.slane %v3651, 4
      %v3751 = vrot.slane %v3651, 6
      %v3752 = vrot.slane %v3652, 2
      %v3753 = vrot.slane %v3652, 4
      %v3754 = vrot.slane %v3652, 6
      %v3755 = vrot.slane %v3653, 2
      %v3756 = vrot.slane %v3653, 4
      %v3757 = vrot.slane %v3653, 6
      %v3758 = vrot.slane %v3654, 2
      %v3759 = vrot.slane %v3654, 4
      %v3760 = vrot.slane %v3654, 6
      %v3761 = vrot.slane %v3655, 2
      %v3762 = vrot.slane %v3655, 4
      %v3763 = vrot.slane %v3655, 6
      %v3764 = vrot.slane %v3656, 2
      %v3765 = vrot.slane %v3656, 4
      %v3766 = vrot.slane %v3656, 6
      %v3767 = vrot.slane %v3657, 2
      %v3768 = vrot.slane %v3657, 4
      %v3769 = vrot.slane %v3657, 6
      %v3770 = vrot.slane %v3658, 2
      %v3771 = vrot.slane %v3658, 4
      %v3772 = vrot.slane %v3658, 6
      %v3773 = vrot.slane %v3659, 2
      %v3774 = vrot.slane %v3659, 4
      %v3775 = vrot.slane %v3659, 6
      %v3776 = vrot.slane %v3660, 2
      %v3777 = vrot.slane %v3660, 4
      %v3778 = vrot.slane %v3660, 6
      %v3779 = vrot.slane %v3661, 2
      %v3780 = vrot.slane %v3661, 4
      %v3781 = vrot.slane %v3661, 6
      %v3782 = vrot.slane %v3662, 2
      %v3783 = vrot.slane %v3662, 4
      %v3784 = vrot.slane %v3662, 6
      %v3785 = vrot.slane %v3663, 2
      %v3786 = vrot.slane %v3663, 4
      %v3787 = vrot.slane %v3663, 6
      %v3788 = vrot.slane %v3664, 2
      %v3789 = vrot.slane %v3664, 4
      %v3790 = vrot.slane %v3664, 6
      %v3791 = vrot.slane %v3665, 2
      %v3792 = vrot.slane %v3665, 4
      %v3793 = vrot.slane %v3665, 6
      %v3890 = vmax.f32 %v3634, %v3636
      %v3891 = vmax.f32 %v3698, %v3704
      %v3892 = vmax.f32 %v3699, %v3705
      %v3893 = vmax.f32 %v3700, %v3706
      %v3894 = vmax.f32 %v3635, %v3637
      %v3895 = vmax.f32 %v3701, %v3707
      %v3896 = vmax.f32 %v3702, %v3708
      %v3897 = vmax.f32 %v3703, %v3709
      %v3898 = vmax.f32 %v3638, %v3640
      %v3899 = vmax.f32 %v3710, %v3716
      %v3900 = vmax.f32 %v3711, %v3717
      %v3901 = vmax.f32 %v3712, %v3718
      %v3902 = vmax.f32 %v3639, %v3641
      %v3903 = vmax.f32 %v3713, %v3719
      %v3904 = vmax.f32 %v3714, %v3720
      %v3905 = vmax.f32 %v3715, %v3721
      %v3906 = vmax.f32 %v3642, %v3644
      %v3907 = vmax.f32 %v3722, %v3728
      %v3908 = vmax.f32 %v3723, %v3729
      %v3909 = vmax.f32 %v3724, %v3730
      %v3910 = vmax.f32 %v3643, %v3645
      %v3911 = vmax.f32 %v3725, %v3731
      %v3912 = vmax.f32 %v3726, %v3732
      %v3913 = vmax.f32 %v3727, %v3733
      %v3914 = vmax.f32 %v3646, %v3648
      %v3915 = vmax.f32 %v3734, %v3740
      %v3916 = vmax.f32 %v3735, %v3741
      %v3917 = vmax.f32 %v3736, %v3742
      %v3918 = vmax.f32 %v3647, %v3649
      %v3919 = vmax.f32 %v3737, %v3743
      %v3920 = vmax.f32 %v3738, %v3744
      %v3921 = vmax.f32 %v3739, %v3745
      %v3922 = vmax.f32 %v3650, %v3652
      %v3923 = vmax.f32 %v3746, %v3752
      %v3924 = vmax.f32 %v3747, %v3753
      %v3925 = vmax.f32 %v3748, %v3754
      %v3926 = vmax.f32 %v3651, %v3653
      %v3927 = vmax.f32 %v3749, %v3755
      %v3928 = vmax.f32 %v3750, %v3756
      %v3929 = vmax.f32 %v3751, %v3757
      %v3930 = vmax.f32 %v3654, %v3656
      %v3931 = vmax.f32 %v3758, %v3764
      %v3932 = vmax.f32 %v3759, %v3765
      %v3933 = vmax.f32 %v3760, %v3766
      %v3934 = vmax.f32 %v3655, %v3657
      %v3935 = vmax.f32 %v3761, %v3767
      %v3936 = vmax.f32 %v3762, %v3768
      %v3937 = vmax.f32 %v3763, %v3769
      %v3938 = vmax.f32 %v3658, %v3660
      %v3939 = vmax.f32 %v3770, %v3776
      %v3940 = vmax.f32 %v3771, %v3777
      %v3941 = vmax.f32 %v3772, %v3778
      %v3942 = vmax.f32 %v3659, %v3661
      %v3943 = vmax.f32 %v3773, %v3779
      %v3944 = vmax.f32 %v3774, %v3780
      %v3945 = vmax.f32 %v3775, %v3781
      %v3946 = vmax.f32 %v3662, %v3664
      %v3947 = vmax.f32 %v3782, %v3788
      %v3948 = vmax.f32 %v3783, %v3789
      %v3949 = vmax.f32 %v3784, %v3790
      %v3950 = vmax.f32 %v3663, %v3665
      %v3951 = vmax.f32 %v3785, %v3791
      %v3952 = vmax.f32 %v3786, %v3792
      %v3953 = vmax.f32 %v3787, %v3793
      %v4018 = vrot.slane %v3890, 7
      %v4019 = vrot.slane %v4018, 2
      %v4020 = vrot.slane %v3891, 7
      %v4021 = vrot.slane %v4020, 2
      %v4022 = vrot.slane %v3892, 7
      %v4023 = vrot.slane %v4022, 2
      %v4024 = vrot.slane %v3893, 7
      %v4025 = vrot.slane %v4024, 2
      %v4026 = vrot.slane %v3894, 7
      %v4027 = vrot.slane %v4026, 2
      %v4028 = vrot.slane %v3895, 7
      %v4029 = vrot.slane %v4028, 2
      %v4030 = vrot.slane %v3896, 7
      %v4031 = vrot.slane %v4030, 2
      %v4032 = vrot.slane %v3897, 7
      %v4033 = vrot.slane %v4032, 2
      %v4034 = vrot.slane %v3898, 7
      %v4035 = vrot.slane %v4034, 2
      %v4036 = vrot.slane %v3899, 7
      %v4037 = vrot.slane %v4036, 2
      %v4038 = vrot.slane %v3900, 7
      %v4039 = vrot.slane %v4038, 2
      %v4040 = vrot.slane %v3901, 7
      %v4041 = vrot.slane %v4040, 2
      %v4042 = vrot.slane %v3902, 7
      %v4043 = vrot.slane %v4042, 2
      %v4044 = vrot.slane %v3903, 7
      %v4045 = vrot.slane %v4044, 2
      %v4046 = vrot.slane %v3904, 7
      %v4047 = vrot.slane %v4046, 2
      %v4048 = vrot.slane %v3905, 7
      %v4049 = vrot.slane %v4048, 2
      %v4050 = vrot.slane %v3906, 7
      %v4051 = vrot.slane %v4050, 2
      %v4052 = vrot.slane %v3907, 7
      %v4053 = vrot.slane %v4052, 2
      %v4054 = vrot.slane %v3908, 7
      %v4055 = vrot.slane %v4054, 2
      %v4056 = vrot.slane %v3909, 7
      %v4057 = vrot.slane %v4056, 2
      %v4058 = vrot.slane %v3910, 7
      %v4059 = vrot.slane %v4058, 2
      %v4060 = vrot.slane %v3911, 7
      %v4061 = vrot.slane %v4060, 2
      %v4062 = vrot.slane %v3912, 7
      %v4063 = vrot.slane %v4062, 2
      %v4064 = vrot.slane %v3913, 7
      %v4065 = vrot.slane %v4064, 2
      %v4066 = vrot.slane %v3914, 7
      %v4067 = vrot.slane %v4066, 2
      %v4068 = vrot.slane %v3915, 7
      %v4069 = vrot.slane %v4068, 2
      %v4070 = vrot.slane %v3916, 7
      %v4071 = vrot.slane %v4070, 2
      %v4072 = vrot.slane %v3917, 7
      %v4073 = vrot.slane %v4072, 2
      %v4074 = vrot.slane %v3918, 7
      %v4075 = vrot.slane %v4074, 2
      %v4076 = vrot.slane %v3919, 7
      %v4077 = vrot.slane %v4076, 2
      %v4078 = vrot.slane %v3920, 7
      %v4079 = vrot.slane %v4078, 2
      %v4080 = vrot.slane %v3921, 7
      %v4081 = vrot.slane %v4080, 2
      %v4082 = vrot.slane %v3922, 7
      %v4083 = vrot.slane %v4082, 2
      %v4084 = vrot.slane %v3923, 7
      %v4085 = vrot.slane %v4084, 2
      %v4086 = vrot.slane %v3924, 7
      %v4087 = vrot.slane %v4086, 2
      %v4088 = vrot.slane %v3925, 7
      %v4089 = vrot.slane %v4088, 2
      %v4090 = vrot.slane %v3926, 7
      %v4091 = vrot.slane %v4090, 2
      %v4092 = vrot.slane %v3927, 7
      %v4093 = vrot.slane %v4092, 2
      %v4094 = vrot.slane %v3928, 7
      %v4095 = vrot.slane %v4094, 2
      %v4096 = vrot.slane %v3929, 7
      %v4097 = vrot.slane %v4096, 2
      %v4098 = vrot.slane %v3930, 7
      %v4099 = vrot.slane %v4098, 2
      %v4100 = vrot.slane %v3931, 7
      %v4101 = vrot.slane %v4100, 2
      %v4102 = vrot.slane %v3932, 7
      %v4103 = vrot.slane %v4102, 2
      %v4104 = vrot.slane %v3933, 7
      %v4105 = vrot.slane %v4104, 2
      %v4106 = vrot.slane %v3934, 7
      %v4107 = vrot.slane %v4106, 2
      %v4108 = vrot.slane %v3935, 7
      %v4109 = vrot.slane %v4108, 2
      %v4110 = vrot.slane %v3936, 7
      %v4111 = vrot.slane %v4110, 2
      %v4112 = vrot.slane %v3937, 7
      %v4113 = vrot.slane %v4112, 2
      %v4114 = vrot.slane %v3938, 7
      %v4115 = vrot.slane %v4114, 2
      %v4116 = vrot.slane %v3939, 7
      %v4117 = vrot.slane %v4116, 2
      %v4118 = vrot.slane %v3940, 7
      %v4119 = vrot.slane %v4118, 2
      %v4120 = vrot.slane %v3941, 7
      %v4121 = vrot.slane %v4120, 2
      %v4122 = vrot.slane %v3942, 7
      %v4123 = vrot.slane %v4122, 2
      %v4124 = vrot.slane %v3943, 7
      %v4125 = vrot.slane %v4124, 2
      %v4126 = vrot.slane %v3944, 7
      %v4127 = vrot.slane %v4126, 2
      %v4128 = vrot.slane %v3945, 7
      %v4129 = vrot.slane %v4128, 2
      %v4130 = vrot.slane %v3946, 7
      %v4131 = vrot.slane %v4130, 2
      %v4132 = vrot.slane %v3947, 7
      %v4133 = vrot.slane %v4132, 2
      %v4134 = vrot.slane %v3948, 7
      %v4135 = vrot.slane %v4134, 2
      %v4136 = vrot.slane %v3949, 7
      %v4137 = vrot.slane %v4136, 2
      %v4138 = vrot.slane %v3950, 7
      %v4139 = vrot.slane %v4138, 2
      %v4140 = vrot.slane %v3951, 7
      %v4141 = vrot.slane %v4140, 2
      %v4142 = vrot.slane %v3952, 7
      %v4143 = vrot.slane %v4142, 2
      %v4144 = vrot.slane %v3953, 7
      %v4145 = vrot.slane %v4144, 2
      %v4210 = vmax.f32 %v3890, %v4019
      %v4211 = vmax.f32 %v3891, %v4021
      %v4212 = vmax.f32 %v3892, %v4023
      %v4213 = vmax.f32 %v3893, %v4025
      %v4214 = vmax.f32 %v3894, %v4027
      %v4215 = vmax.f32 %v3895, %v4029
      %v4216 = vmax.f32 %v3896, %v4031
      %v4217 = vmax.f32 %v3897, %v4033
      %v4218 = vmax.f32 %v3898, %v4035
      %v4219 = vmax.f32 %v3899, %v4037
      %v4220 = vmax.f32 %v3900, %v4039
      %v4221 = vmax.f32 %v3901, %v4041
      %v4222 = vmax.f32 %v3902, %v4043
      %v4223 = vmax.f32 %v3903, %v4045
      %v4224 = vmax.f32 %v3904, %v4047
      %v4225 = vmax.f32 %v3905, %v4049
      %v4226 = vmax.f32 %v3906, %v4051
      %v4227 = vmax.f32 %v3907, %v4053
      %v4228 = vmax.f32 %v3908, %v4055
      %v4229 = vmax.f32 %v3909, %v4057
      %v4230 = vmax.f32 %v3910, %v4059
      %v4231 = vmax.f32 %v3911, %v4061
      %v4232 = vmax.f32 %v3912, %v4063
      %v4233 = vmax.f32 %v3913, %v4065
      %v4234 = vmax.f32 %v3914, %v4067
      %v4235 = vmax.f32 %v3915, %v4069
      %v4236 = vmax.f32 %v3916, %v4071
      %v4237 = vmax.f32 %v3917, %v4073
      %v4238 = vmax.f32 %v3918, %v4075
      %v4239 = vmax.f32 %v3919, %v4077
      %v4240 = vmax.f32 %v3920, %v4079
      %v4241 = vmax.f32 %v3921, %v4081
      %v4242 = vmax.f32 %v3922, %v4083
      %v4243 = vmax.f32 %v3923, %v4085
      %v4244 = vmax.f32 %v3924, %v4087
      %v4245 = vmax.f32 %v3925, %v4089
      %v4246 = vmax.f32 %v3926, %v4091
      %v4247 = vmax.f32 %v3927, %v4093
      %v4248 = vmax.f32 %v3928, %v4095
      %v4249 = vmax.f32 %v3929, %v4097
      %v4250 = vmax.f32 %v3930, %v4099
      %v4251 = vmax.f32 %v3931, %v4101
      %v4252 = vmax.f32 %v3932, %v4103
      %v4253 = vmax.f32 %v3933, %v4105
      %v4254 = vmax.f32 %v3934, %v4107
      %v4255 = vmax.f32 %v3935, %v4109
      %v4256 = vmax.f32 %v3936, %v4111
      %v4257 = vmax.f32 %v3937, %v4113
      %v4258 = vmax.f32 %v3938, %v4115
      %v4259 = vmax.f32 %v3939, %v4117
      %v4260 = vmax.f32 %v3940, %v4119
      %v4261 = vmax.f32 %v3941, %v4121
      %v4262 = vmax.f32 %v3942, %v4123
      %v4263 = vmax.f32 %v3943, %v4125
      %v4264 = vmax.f32 %v3944, %v4127
      %v4265 = vmax.f32 %v3945, %v4129
      %v4266 = vmax.f32 %v3946, %v4131
      %v4267 = vmax.f32 %v3947, %v4133
      %v4268 = vmax.f32 %v3948, %v4135
      %v4269 = vmax.f32 %v3949, %v4137
      %v4270 = vmax.f32 %v3950, %v4139
      %v4271 = vmax.f32 %v3951, %v4141
      %v4272 = vmax.f32 %v3952, %v4143
      %v4273 = vmax.f32 %v3953, %v4145
      %v4274 = vpack.c.bf16 %v4210, %v4210
      %v4275 = vpack.c.bf16 %v4211, %v4211
      %v4276 = vpack.c.bf16 %v4212, %v4212
      %v4277 = vpack.c.bf16 %v4213, %v4213
      %v4278 = vpack.c.bf16 %v4214, %v4214
      %v4279 = vpack.c.bf16 %v4215, %v4215
      %v4280 = vpack.c.bf16 %v4216, %v4216
      %v4281 = vpack.c.bf16 %v4217, %v4217
      %v4282 = vpack.c.bf16 %v4218, %v4218
      %v4283 = vpack.c.bf16 %v4219, %v4219
      %v4284 = vpack.c.bf16 %v4220, %v4220
      %v4285 = vpack.c.bf16 %v4221, %v4221
      %v4286 = vpack.c.bf16 %v4222, %v4222
      %v4287 = vpack.c.bf16 %v4223, %v4223
      %v4288 = vpack.c.bf16 %v4224, %v4224
      %v4289 = vpack.c.bf16 %v4225, %v4225
      %v4290 = vpack.c.bf16 %v4226, %v4226
      %v4291 = vpack.c.bf16 %v4227, %v4227
      %v4292 = vpack.c.bf16 %v4228, %v4228
      %v4293 = vpack.c.bf16 %v4229, %v4229
      %v4294 = vpack.c.bf16 %v4230, %v4230
      %v4295 = vpack.c.bf16 %v4231, %v4231
      %v4296 = vpack.c.bf16 %v4232, %v4232
      %v4297 = vpack.c.bf16 %v4233, %v4233
      %v4298 = vpack.c.bf16 %v4234, %v4234
      %v4299 = vpack.c.bf16 %v4235, %v4235
      %v4300 = vpack.c.bf16 %v4236, %v4236
      %v4301 = vpack.c.bf16 %v4237, %v4237
      %v4302 = vpack.c.bf16 %v4238, %v4238
      %v4303 = vpack.c.bf16 %v4239, %v4239
      %v4304 = vpack.c.bf16 %v4240, %v4240
      %v4305 = vpack.c.bf16 %v4241, %v4241
      %v4306 = vpack.c.bf16 %v4242, %v4242
      %v4307 = vpack.c.bf16 %v4243, %v4243
      %v4308 = vpack.c.bf16 %v4244, %v4244
      %v4309 = vpack.c.bf16 %v4245, %v4245
      %v4310 = vpack.c.bf16 %v4246, %v4246
      %v4311 = vpack.c.bf16 %v4247, %v4247
      %v4312 = vpack.c.bf16 %v4248, %v4248
      %v4313 = vpack.c.bf16 %v4249, %v4249
      %v4314 = vpack.c.bf16 %v4250, %v4250
      %v4315 = vpack.c.bf16 %v4251, %v4251
      %v4316 = vpack.c.bf16 %v4252, %v4252
      %v4317 = vpack.c.bf16 %v4253, %v4253
      %v4318 = vpack.c.bf16 %v4254, %v4254
      %v4319 = vpack.c.bf16 %v4255, %v4255
      %v4320 = vpack.c.bf16 %v4256, %v4256
      %v4321 = vpack.c.bf16 %v4257, %v4257
      %v4322 = vpack.c.bf16 %v4258, %v4258
      %v4323 = vpack.c.bf16 %v4259, %v4259
      %v4324 = vpack.c.bf16 %v4260, %v4260
      %v4325 = vpack.c.bf16 %v4261, %v4261
      %v4326 = vpack.c.bf16 %v4262, %v4262
      %v4327 = vpack.c.bf16 %v4263, %v4263
      %v4328 = vpack.c.bf16 %v4264, %v4264
      %v4329 = vpack.c.bf16 %v4265, %v4265
      %v4330 = vpack.c.bf16 %v4266, %v4266
      %v4331 = vpack.c.bf16 %v4267, %v4267
      %v4332 = vpack.c.bf16 %v4268, %v4268
      %v4333 = vpack.c.bf16 %v4269, %v4269
      %v4334 = vpack.c.bf16 %v4270, %v4270
      %v4335 = vpack.c.bf16 %v4271, %v4271
      %v4336 = vpack.c.bf16 %v4272, %v4272
      %v4337 = vpack.c.bf16 %v4273, %v4273
      %v4402 = vunpack.c.l.b16 %v4274
      %v4403 = vunpack.c.l.b16 %v4275
      %v4404 = vunpack.c.l.b16 %v4276
      %v4405 = vunpack.c.l.b16 %v4277
      %v4406 = vunpack.c.l.b16 %v4278
      %v4407 = vunpack.c.l.b16 %v4279
      %v4408 = vunpack.c.l.b16 %v4280
      %v4409 = vunpack.c.l.b16 %v4281
      %v4410 = vunpack.c.l.b16 %v4282
      %v4411 = vunpack.c.l.b16 %v4283
      %v4412 = vunpack.c.l.b16 %v4284
      %v4413 = vunpack.c.l.b16 %v4285
      %v4414 = vunpack.c.l.b16 %v4286
      %v4415 = vunpack.c.l.b16 %v4287
      %v4416 = vunpack.c.l.b16 %v4288
      %v4417 = vunpack.c.l.b16 %v4289
      %v4418 = vunpack.c.l.b16 %v4290
      %v4419 = vunpack.c.l.b16 %v4291
      %v4420 = vunpack.c.l.b16 %v4292
      %v4421 = vunpack.c.l.b16 %v4293
      %v4422 = vunpack.c.l.b16 %v4294
      %v4423 = vunpack.c.l.b16 %v4295
      %v4424 = vunpack.c.l.b16 %v4296
      %v4425 = vunpack.c.l.b16 %v4297
      %v4426 = vunpack.c.l.b16 %v4298
      %v4427 = vunpack.c.l.b16 %v4299
      %v4428 = vunpack.c.l.b16 %v4300
      %v4429 = vunpack.c.l.b16 %v4301
      %v4430 = vunpack.c.l.b16 %v4302
      %v4431 = vunpack.c.l.b16 %v4303
      %v4432 = vunpack.c.l.b16 %v4304
      %v4433 = vunpack.c.l.b16 %v4305
      %v4434 = vunpack.c.l.b16 %v4306
      %v4435 = vunpack.c.l.b16 %v4307
      %v4436 = vunpack.c.l.b16 %v4308
      %v4437 = vunpack.c.l.b16 %v4309
      %v4438 = vunpack.c.l.b16 %v4310
      %v4439 = vunpack.c.l.b16 %v4311
      %v4440 = vunpack.c.l.b16 %v4312
      %v4441 = vunpack.c.l.b16 %v4313
      %v4442 = vunpack.c.l.b16 %v4314
      %v4443 = vunpack.c.l.b16 %v4315
      %v4444 = vunpack.c.l.b16 %v4316
      %v4445 = vunpack.c.l.b16 %v4317
      %v4446 = vunpack.c.l.b16 %v4318
      %v4447 = vunpack.c.l.b16 %v4319
      %v4448 = vunpack.c.l.b16 %v4320
      %v4449 = vunpack.c.l.b16 %v4321
      %v4450 = vunpack.c.l.b16 %v4322
      %v4451 = vunpack.c.l.b16 %v4323
      %v4452 = vunpack.c.l.b16 %v4324
      %v4453 = vunpack.c.l.b16 %v4325
      %v4454 = vunpack.c.l.b16 %v4326
      %v4455 = vunpack.c.l.b16 %v4327
      %v4456 = vunpack.c.l.b16 %v4328
      %v4457 = vunpack.c.l.b16 %v4329
      %v4458 = vunpack.c.l.b16 %v4330
      %v4459 = vunpack.c.l.b16 %v4331
      %v4460 = vunpack.c.l.b16 %v4332
      %v4461 = vunpack.c.l.b16 %v4333
      %v4462 = vunpack.c.l.b16 %v4334
      %v4463 = vunpack.c.l.b16 %v4335
      %v4464 = vunpack.c.l.b16 %v4336
      %v4465 = vunpack.c.l.b16 %v4337
      %v4466 = vrot.slane %v4403, 7
      %vm4467 = vcmask 1041409
      %v4468 = vsel %vm4467, %v4466, %v4402
      %v4469 = vrot.slane %v4404, 6
      %vm4470 = vcmask 1042434
      %v4471 = vsel %vm4470, %v4469, %v4468
      %v4472 = vrot.slane %v4405, 5
      %vm4473 = vcmask 1043459
      %v4474 = vsel %vm4473, %v4472, %v4471
      %v4475 = vrot.slane %v4406, 4
      %vm4476 = vcmask 1044484
      %v4477 = vsel %vm4476, %v4475, %v4474
      %v4478 = vrot.slane %v4407, 3
      %vm4479 = vcmask 1045509
      %v4480 = vsel %vm4479, %v4478, %v4477
      %v4481 = vrot.slane %v4408, 2
      %vm4482 = vcmask 1046534
      %v4483 = vsel %vm4482, %v4481, %v4480
      %v4484 = vrot.slane %v4409, 1
      %vm4485 = vcmask 1047559
      %v4486 = vsel %vm4485, %v4484, %v4483
      %v4487 = vrot.slane %v4411, 7
      %v4488 = vsel %vm4467, %v4487, %v4410
      %v4489 = vrot.slane %v4412, 6
      %v4490 = vsel %vm4470, %v4489, %v4488
      %v4491 = vrot.slane %v4413, 5
      %v4492 = vsel %vm4473, %v4491, %v4490
      %v4493 = vrot.slane %v4414, 4
      %v4494 = vsel %vm4476, %v4493, %v4492
      %v4495 = vrot.slane %v4415, 3
      %v4496 = vsel %vm4479, %v4495, %v4494
      %v4497 = vrot.slane %v4416, 2
      %v4498 = vsel %vm4482, %v4497, %v4496
      %v4499 = vrot.slane %v4417, 1
      %v4500 = vsel %vm4485, %v4499, %v4498
      %v4501 = vrot.slane %v4419, 7
      %v4502 = vsel %vm4467, %v4501, %v4418
      %v4503 = vrot.slane %v4420, 6
      %v4504 = vsel %vm4470, %v4503, %v4502
      %v4505 = vrot.slane %v4421, 5
      %v4506 = vsel %vm4473, %v4505, %v4504
      %v4507 = vrot.slane %v4422, 4
      %v4508 = vsel %vm4476, %v4507, %v4506
      %v4509 = vrot.slane %v4423, 3
      %v4510 = vsel %vm4479, %v4509, %v4508
      %v4511 = vrot.slane %v4424, 2
      %v4512 = vsel %vm4482, %v4511, %v4510
      %v4513 = vrot.slane %v4425, 1
      %v4514 = vsel %vm4485, %v4513, %v4512
      %v4515 = vrot.slane %v4427, 7
      %v4516 = vsel %vm4467, %v4515, %v4426
      %v4517 = vrot.slane %v4428, 6
      %v4518 = vsel %vm4470, %v4517, %v4516
      %v4519 = vrot.slane %v4429, 5
      %v4520 = vsel %vm4473, %v4519, %v4518
      %v4521 = vrot.slane %v4430, 4
      %v4522 = vsel %vm4476, %v4521, %v4520
      %v4523 = vrot.slane %v4431, 3
      %v4524 = vsel %vm4479, %v4523, %v4522
      %v4525 = vrot.slane %v4432, 2
      %v4526 = vsel %vm4482, %v4525, %v4524
      %v4527 = vrot.slane %v4433, 1
      %v4528 = vsel %vm4485, %v4527, %v4526
      %v4529 = vrot.slane %v4435, 7
      %v4530 = vsel %vm4467, %v4529, %v4434
      %v4531 = vrot.slane %v4436, 6
      %v4532 = vsel %vm4470, %v4531, %v4530
      %v4533 = vrot.slane %v4437, 5
      %v4534 = vsel %vm4473, %v4533, %v4532
      %v4535 = vrot.slane %v4438, 4
      %v4536 = vsel %vm4476, %v4535, %v4534
      %v4537 = vrot.slane %v4439, 3
      %v4538 = vsel %vm4479, %v4537, %v4536
      %v4539 = vrot.slane %v4440, 2
      %v4540 = vsel %vm4482, %v4539, %v4538
      %v4541 = vrot.slane %v4441, 1
      %v4542 = vsel %vm4485, %v4541, %v4540
      %v4543 = vrot.slane %v4443, 7
      %v4544 = vsel %vm4467, %v4543, %v4442
      %v4545 = vrot.slane %v4444, 6
      %v4546 = vsel %vm4470, %v4545, %v4544
      %v4547 = vrot.slane %v4445, 5
      %v4548 = vsel %vm4473, %v4547, %v4546
      %v4549 = vrot.slane %v4446, 4
      %v4550 = vsel %vm4476, %v4549, %v4548
      %v4551 = vrot.slane %v4447, 3
      %v4552 = vsel %vm4479, %v4551, %v4550
      %v4553 = vrot.slane %v4448, 2
      %v4554 = vsel %vm4482, %v4553, %v4552
      %v4555 = vrot.slane %v4449, 1
      %v4556 = vsel %vm4485, %v4555, %v4554
      %v4557 = vrot.slane %v4451, 7
      %v4558 = vsel %vm4467, %v4557, %v4450
      %v4559 = vrot.slane %v4452, 6
      %v4560 = vsel %vm4470, %v4559, %v4558
      %v4561 = vrot.slane %v4453, 5
      %v4562 = vsel %vm4473, %v4561, %v4560
      %v4563 = vrot.slane %v4454, 4
      %v4564 = vsel %vm4476, %v4563, %v4562
      %v4565 = vrot.slane %v4455, 3
      %v4566 = vsel %vm4479, %v4565, %v4564
      %v4567 = vrot.slane %v4456, 2
      %v4568 = vsel %vm4482, %v4567, %v4566
      %v4569 = vrot.slane %v4457, 1
      %v4570 = vsel %vm4485, %v4569, %v4568
      %v4571 = vrot.slane %v4459, 7
      %v4572 = vsel %vm4467, %v4571, %v4458
      %v4573 = vrot.slane %v4460, 6
      %v4574 = vsel %vm4470, %v4573, %v4572
      %v4575 = vrot.slane %v4461, 5
      %v4576 = vsel %vm4473, %v4575, %v4574
      %v4577 = vrot.slane %v4462, 4
      %v4578 = vsel %vm4476, %v4577, %v4576
      %v4579 = vrot.slane %v4463, 3
      %v4580 = vsel %vm4479, %v4579, %v4578
      %v4581 = vrot.slane %v4464, 2
      %v4582 = vsel %vm4482, %v4581, %v4580
      %v4583 = vrot.slane %v4465, 1
      %v4584 = vsel %vm4485, %v4583, %v4582
      %v4585 = vpack.c.b16 %v4486, %v4486
      %v4586 = vpack.c.b16 %v4500, %v4500
      %v4587 = vpack.c.b16 %v4514, %v4514
      %v4588 = vpack.c.b16 %v4528, %v4528
      %v4589 = vpack.c.b16 %v4542, %v4542
      %v4590 = vpack.c.b16 %v4556, %v4556
      %v4591 = vpack.c.b16 %v4570, %v4570
      %v4592 = vpack.c.b16 %v4584, %v4584
      %vm4601 = vcmask 257024
      %4602 = vst.msk [vmem:[%s192] sm:$0xf] %vm4601, %v4585
      %4603 = vst.msk [vmem:[%s192 + $0x4] sm:$0xf] %vm4601, %v4586
      %4604 = vst.msk [vmem:[%s192 + $0x8] sm:$0xf] %vm4601, %v4587
      %4605 = vst.msk [vmem:[%s192 + $0xc] sm:$0xf] %vm4601, %v4588
      %4606 = vst.msk [vmem:[%s192 + $0x10] sm:$0xf] %vm4601, %v4589
      %4607 = vst.msk [vmem:[%s192 + $0x14] sm:$0xf] %vm4601, %v4590
      %4608 = vst.msk [vmem:[%s192 + $0x18] sm:$0xf] %vm4601, %v4591
      %4609 = vst.msk [vmem:[%s192 + $0x1c] sm:$0xf] %vm4601, %v4592
      %s4610 = smul.u32 8, %s19
      %p4611 = scmp.lt.s32.totalorder %s18, 1
      %s4612 = scalar_select %p4611, %s18, 1
      %p4613 = scmp.lt.s32.totalorder %s4610, 7
      %s4614 = scalar_select %p4613, %s4610, 7
      %s4615 = smul.addr %s4612, 8
      %s4616 = sadd.s32 %s4614, %s4615
      %s4617 = smul.addr %s4616, 4
      %s4618 = scalar_lea.vmem %s3, %s4617
      // Predicated region
      $region33: #{animal_cnn_forward.4} parent=31 // pred_check
        %p4619 = pneg %p114
      $region34: #{animal_cnn_forward.4} parent=31 // pred_check_branch
        %4621 = sbr.rel (%p4619) target = $region36
      $region35: #{animal_cnn_forward.4} parent=31 // pred_region
        %s4622 = smul.u32 8, %s19
      $region36: #{animal_cnn_forward.4} parent=31 // pred_fallthru
        _
    $region32: #{animal_cnn_forward.4} parent=5 // pred_fallthru
      _
    %p4623 = scmp.le.s32.totalorder 2, %s9
    // Predicated region
    $region37: #{animal_cnn_forward.4} parent=5 // pred_check
      %p4624 = pneg %p4623
    $region38: #{animal_cnn_forward.4} parent=5 // pred_check_branch
      %4626 = sbr.rel (%p4624) target = $region40
    $region39: #{animal_cnn_forward.4} parent=5 // pred_region
      %s4627 = ssub.s32 %s9, 2
      // Predicated region
      $region41: #{animal_cnn_forward.4} parent=39 // pred_check
        %p4628 = pneg %p120
      $region42: #{animal_cnn_forward.4} parent=39 // pred_check_branch
        %4630 = sbr.rel (%p4628) target = $region44
      $region43: #{animal_cnn_forward.4} parent=39 // pred_region
        %s4631 = smul.u32 8, %s21
        %p4632 = scmp.lt.s32.totalorder %s20, 1
        %s4633 = scalar_select %p4632, %s20, 1
        %p4634 = scmp.lt.s32.totalorder %s4631, 7
        %s4635 = scalar_select %p4634, %s4631, 7
        %s4636 = smul.addr %s4633, 8
        %s4637 = sadd.s32 %s4635, %s4636
        %s4638 = smul.addr %s4637, 4
        %s4639 = scalar_lea.vmem %s3, %s4638
      $region44: #{animal_cnn_forward.4} parent=39 // pred_fallthru
        _
    $region40: #{animal_cnn_forward.4} parent=5 // pred_fallthru
      _
  $region6: #{animal_cnn_forward.4} parent=0 // loop_footer
    %s13 = sadd.s32 1, %s9
  $region7: #{animal_cnn_forward.4} parent=0 // loop_footer_branch
    %8 = sbr.rel target = $region3
  $region8: #{animal_cnn_forward.4} parent=0 // loop_exit
    _

</llo_original>
